<compile_context>
chip_gen: v6e
topology: v6e:2x2x1
jax: 0.10.0
libtpu: 0.0.40
codegen_flags: <defaults>
</compile_context>

<pallas_src>
import jax
import jax.numpy as jnp
from jax.experimental import pallas as pl
from jax.experimental.pallas import tpu as pltpu

# ---------------- model config (matches ResnetDiffusionModel defaults) -------
NUM_DIFF_STEPS = 100
N_LAYERS = 4
X_DIM = 2
H_DIM = 128
EMB_DIM = 32
WIDEN = 2
WIDE = H_DIM * WIDEN          # 256
LN_EPS = 1e-5

TB = 256                      # batch tile: multiple of 256 (v6e/v7x) and 128 (v5e)
BATCH = 16                    # small demo batch; kernel scales to thousands of rows


# ------------------------------ helpers ---------------------------------------
def _silu(x):
    # silu(x) = x*sigmoid(x); sigmoid(x) = 0.5*(1 + tanh(x/2))  -> single EUP op.
    return x * (0.5 * jnp.tanh(0.5 * x) + 0.5)


def _first_linear(x_ref, fw_ref, fb_ref):
    # first linear (K=2) as a VPU outer product; an MXU matmul would be wasted.
    x = x_ref[...]                               # [TB, X_DIM] f32
    h = fb_ref[...]                              # [1, H] -> broadcasts
    for k in range(X_DIM):
        h = h + x[:, k:k + 1] * fw_ref[k:k + 1, :]
    return h                                     # [TB, H] f32


def _mlp_blocks(h, emb_all, wh_ref, bhe_ref, wi_ref, bi_ref, wo_ref, bo_ref,
                lg_ref, lb_ref):
    for l in range(N_LAYERS):
        # LayerNorm: var = E[x^2] - E[x]^2 -> two independent XLU reductions.
        mu = jnp.mean(h, axis=-1, keepdims=True)
        ex2 = jnp.mean(h * h, axis=-1, keepdims=True)
        var = jnp.maximum(ex2 - mu * mu, 0.0)
        hn = (h - mu) * jax.lax.rsqrt(var + LN_EPS)
        hn = hn * lg_ref[l:l + 1, :] + lb_ref[l:l + 1, :]

        ho = _silu(hn)
        ho = jnp.dot(ho.astype(jnp.bfloat16), wh_ref[l],
                     preferred_element_type=jnp.float32)
        # bhe = layer_h bias + layer_emb bias (folded at init)
        ho = ho + emb_all[:, l * WIDE:(l + 1) * WIDE] + bhe_ref[l:l + 1, :]
        ho = _silu(ho)
        ho = jnp.dot(ho.astype(jnp.bfloat16), wi_ref[l],
                     preferred_element_type=jnp.float32) + bi_ref[l:l + 1, :]
        ho = _silu(ho)
        ho = jnp.dot(ho.astype(jnp.bfloat16), wo_ref[l],
                     preferred_element_type=jnp.float32) + bo_ref[l:l + 1, :]
        h = h + ho
    return h


# ----------------------------- Pallas kernels ---------------------------------
def _kernel_fused_emb(x_ref, emb_ref, fw_ref, fb_ref, we_ref,
                      wh_ref, bhe_ref, wi_ref, bi_ref, wo_ref, bo_ref,
                      lg_ref, lb_ref, h_ref):
    """emb_ref: [TB, EMB_DIM] bf16; per-layer emb projection done in-kernel."""
    h = _first_linear(x_ref, fw_ref, fb_ref)
    emb_all = jnp.dot(emb_ref[...], we_ref[...],
                      preferred_element_type=jnp.float32)     # [TB, L*WIDE] f32
    h = _mlp_blocks(h, emb_all, wh_ref, bhe_ref, wi_ref, bi_ref, wo_ref, bo_ref,
                    lg_ref, lb_ref)
    h_ref[...] = h.astype(h_ref.dtype)                        # bf16, lane-dense


def _kernel_table_emb(x_ref, embp_ref, fw_ref, fb_ref,
                      wh_ref, bhe_ref, wi_ref, bi_ref, wo_ref, bo_ref,
                      lg_ref, lb_ref, h_ref):
    """embp_ref: [TB, L*WIDE] bf16, precomputed emb projection (v7x path)."""
    h = _first_linear(x_ref, fw_ref, fb_ref)
    emb_all = embp_ref[...]                                    # bf16, promoted on add
    h = _mlp_blocks(h, emb_all, wh_ref, bhe_ref, wi_ref, bi_ref, wo_ref, bo_ref,
                    lg_ref, lb_ref)
    h_ref[...] = h.astype(h_ref.dtype)


# ------------------------------- BlockSpecs -----------------------------------
def _resident_spec(arr):
    """Whole array as one VMEM block, constant index_map -> DMA'd once."""
    nd = arr.ndim
    return pl.BlockSpec(arr.shape, lambda i: (0,) * nd,
                        memory_space=pltpu.MemorySpace.VMEM)


def _batch_spec(tb, feat):
    return pl.BlockSpec((tb, feat), lambda i: (i, 0),
                        memory_space=pltpu.MemorySpace.VMEM)


def _prefer_precomputed_emb():
    # v7x (3.2 TB/s HBM): gathered bf16 emb-projection table beats the in-kernel
    # K=32 matmul (~25% fewer MXU weight-tile passes). v5e/v6e: break-even, keep
    # the in-kernel matmul (less HBM traffic).
    try:
        kind = jax.devices()[0].device_kind.lower()
    except Exception:
        return False
    return "v7" in kind or "7x" in kind


# ------------------------------- wrapper ---------------------------------------
def resnet_diffusion_forward(params, x, t, *, precompute_emb=None, tb=TB):
    """x: [B, X_DIM] float32, t: [B] int32 -> [B, X_DIM] float32."""
    if precompute_emb is None:
        precompute_emb = _prefer_precomputed_emb()

    B = x.shape[0]
    n_tiles = pl.cdiv(B, tb)
    Bp = n_tiles * tb
    pad = Bp - B

    # Embedding gather is XLA glue; the MLP hot path runs in the kernel.
    if precompute_emb:
        emb_in = params["emb_proj_table"][t]                    # [B, L*WIDE] bf16
        kernel = _kernel_table_emb
        weights = (params["first_w"], params["first_b"],
                   params["wh"], params["bhe"], params["wi"], params["bi"],
                   params["wo"], params["bo"], params["ln_g"], params["ln_b"])
    else:
        emb_in = params["emb_table"][t].astype(jnp.bfloat16)    # [B, EMB_DIM] bf16
        kernel = _kernel_fused_emb
        weights = (params["first_w"], params["first_b"], params["we"],
                   params["wh"], params["bhe"], params["wi"], params["bi"],
                   params["wo"], params["bo"], params["ln_g"], params["ln_b"])

    if pad:
        x_p = jnp.pad(x, ((0, pad), (0, 0)))
        emb_p = jnp.pad(emb_in, ((0, pad), (0, 0)))
    else:
        x_p, emb_p = x, emb_in

    h = pl.pallas_call(
        kernel,
        out_shape=jax.ShapeDtypeStruct((Bp, H_DIM), jnp.bfloat16),
        grid=(n_tiles,),
        in_specs=[_batch_spec(tb, X_DIM), _batch_spec(tb, emb_in.shape[-1])]
                 + [_resident_spec(w) for w in weights],
        out_specs=_batch_spec(tb, H_DIM),
        compiler_params=pltpu.CompilerParams(
            dimension_semantics=("parallel",),        # megacore sharding on v7x
            vmem_limit_bytes=32 * 1024 * 1024),
    )(x_p, emb_p, *weights)

    h = h[:B]
    # Final 128 -> 2 projection outside the kernel (avoids a masked 2-lane store
    # and a degenerate N=2 MXU matmul); bf16 inputs, f32 accumulation.
    return (jnp.dot(h, params["out_w"].astype(jnp.bfloat16),
                    preferred_element_type=jnp.float32) + params["out_b"])


# ------------------------ deterministic parameter init -------------------------
def init_params(key):
    keys = jax.random.split(key, 48)
    ki = iter(keys)

    def linear(in_dim, out_dim):
        k = 1.0 / jnp.sqrt(jnp.float32(in_dim))
        w = jax.random.uniform(next(ki), (in_dim, out_dim), jnp.float32, -k, k)
        b = jax.random.uniform(next(ki), (1, out_dim), jnp.float32, -k, k)
        return w, b

    # nn.Embedding default init: N(0, 1)
    emb_table = jax.random.normal(next(ki), (NUM_DIFF_STEPS, EMB_DIM), jnp.float32)
    first_w, first_b = linear(X_DIM, H_DIM)            # tiny -> keep f32

    wh, bh, we, be, wi, bi, wo, bo = ([] for _ in range(8))
    for _ in range(N_LAYERS):
        w, b = linear(H_DIM, WIDE);   wh.append(w.astype(jnp.bfloat16)); bh.append(b[0])
        w, b = linear(EMB_DIM, WIDE); we.append(w.astype(jnp.bfloat16)); be.append(b[0])
        w, b = linear(WIDE, WIDE);    wi.append(w.astype(jnp.bfloat16)); bi.append(b[0])
        w, b = linear(WIDE, H_DIM);   wo.append(w.astype(jnp.bfloat16)); bo.append(b[0])

    out_w, out_b = linear(H_DIM, X_DIM)                # tiny -> keep f32

    # Concatenate the 4 emb-projection weights along the output axis so one
    # [B,32] @ [32, 4*256] matmul serves all layers.
    we_cat = jnp.transpose(jnp.stack(we), (1, 0, 2)).reshape(EMB_DIM, N_LAYERS * WIDE)
    # Fold layer_emb bias into layer_h bias (added at the same point in the block).
    bhe = jnp.stack(bh) + jnp.stack(be)                               # [L, WIDE] f32
    # Precomputed per-timestep emb projection table (bias already in bhe): v7x path.
    emb_proj_table = jnp.dot(emb_table.astype(jnp.bfloat16), we_cat,
                             preferred_element_type=jnp.float32).astype(jnp.bfloat16)

    return {
        "emb_table": emb_table, "emb_proj_table": emb_proj_table,
        "first_w": first_w, "first_b": first_b,
        "wh": jnp.stack(wh), "bhe": bhe,
        "we": we_cat,
        "wi": jnp.stack(wi), "bi": jnp.stack(bi),
        "wo": jnp.stack(wo), "bo": jnp.stack(bo),
        "ln_g": jnp.ones((N_LAYERS, H_DIM), jnp.float32),
        "ln_b": jnp.zeros((N_LAYERS, H_DIM), jnp.float32),
        "out_w": out_w, "out_b": out_b,
    }


# ------------------------------- reference --------------------------------------
def reference_forward(params, x, t, *, precompute_emb=False):
    """Pure-JAX reference mirroring the kernel's precision policy."""
    if precompute_emb:
        emb_all = params["emb_proj_table"][t].astype(jnp.float32)
    else:
        emb = params["emb_table"][t].astype(jnp.bfloat16)
        emb_all = jnp.dot(emb, params["we"], preferred_element_type=jnp.float32)

    h = params["first_b"]
    for k in range(X_DIM):
        h = h + x[:, k:k + 1] * params["first_w"][k:k + 1, :]

    for l in range(N_LAYERS):
        mu = jnp.mean(h, axis=-1, keepdims=True)
        ex2 = jnp.mean(h * h, axis=-1, keepdims=True)
        var = jnp.maximum(ex2 - mu * mu, 0.0)
        hn = (h - mu) * jax.lax.rsqrt(var + LN_EPS)
        hn = hn * params["ln_g"][l] + params["ln_b"][l]
        ho = _silu(hn)
        ho = jnp.dot(ho.astype(jnp.bfloat16), params["wh"][l],
                     preferred_element_type=jnp.float32)
        ho = ho + emb_all[:, l * WIDE:(l + 1) * WIDE] + params["bhe"][l]
        ho = _silu(ho)
        ho = jnp.dot(ho.astype(jnp.bfloat16), params["wi"][l],
                     preferred_element_type=jnp.float32) + params["bi"][l]
        ho = _silu(ho)
        ho = jnp.dot(ho.astype(jnp.bfloat16), params["wo"][l],
                     preferred_element_type=jnp.float32) + params["bo"][l]
        h = h + ho

    h = h.astype(jnp.bfloat16)
    return (jnp.dot(h, params["out_w"].astype(jnp.bfloat16),
                    preferred_element_type=jnp.float32) + params["out_b"])


if __name__ == "__main__":
    key = jax.random.PRNGKey(0)
    k_p, k_x, k_t = jax.random.split(key, 3)

    params = init_params(k_p)
    x = jax.random.normal(k_x, (BATCH, X_DIM), jnp.float32)
    t = jax.random.randint(k_t, (BATCH,), 0, NUM_DIFF_STEPS, jnp.int32)

    # Default path (auto-selected per TPU generation).
    auto = _prefer_precomputed_emb()
    out = resnet_diffusion_forward(params, x, t, precompute_emb=auto)
    out = jax.block_until_ready(out)
    ref = reference_forward(params, x, t, precompute_emb=auto)
    assert out.shape == (BATCH, X_DIM)
    assert jnp.allclose(out, ref, rtol=1e-2, atol=1e-2), "mismatch (auto path)"

    # Also exercise the alternate emb path so both kernels are validated
    # regardless of which generation this runs on.
    other = not auto
    out2 = resnet_diffusion_forward(params, x, t, precompute_emb=other)
    out2 = jax.block_until_ready(out2)
    ref2 = reference_forward(params, x, t, precompute_emb=other)
    assert jnp.allclose(out2, ref2, rtol=1e-2, atol=1e-2), "mismatch (alt path)"

    print("KERNEL_OK")
</pallas_src>

<mosaic_0001>
module attributes {stable_mosaic.version = 11 : i64} {
  func.func @_kernel_fused_emb(%arg0: i32, %arg1: memref<256x2xf32, #tpu.memory_space<vmem>>, %arg2: memref<256x32xbf16, #tpu.memory_space<vmem>>, %arg3: memref<2x128xf32, #tpu.memory_space<vmem>>, %arg4: memref<1x128xf32, #tpu.memory_space<vmem>>, %arg5: memref<32x1024xbf16, #tpu.memory_space<vmem>>, %arg6: memref<4x128x256xbf16, #tpu.memory_space<vmem>>, %arg7: memref<4x256xf32, #tpu.memory_space<vmem>>, %arg8: memref<4x256x256xbf16, #tpu.memory_space<vmem>>, %arg9: memref<4x256xf32, #tpu.memory_space<vmem>>, %arg10: memref<4x256x128xbf16, #tpu.memory_space<vmem>>, %arg11: memref<4x128xf32, #tpu.memory_space<vmem>>, %arg12: memref<4x128xf32, #tpu.memory_space<vmem>>, %arg13: memref<4x128xf32, #tpu.memory_space<vmem>>, %arg14: memref<256x128xbf16, #tpu.memory_space<vmem>>) attributes {dimension_semantics = [#tpu.dimension_semantics<parallel>], iteration_bounds = array<i64: 1>, scalar_prefetch = 0 : i64, scratch_operands = 0 : i64, tpu.core_type = #tpu.core_type<tc>, window_params = [{transform_indices = @transform_0, window_bounds = array<i64: 256, 2>}, {transform_indices = @transform_1, window_bounds = array<i64: 256, 32>}, {pipeline_mode = #tpu.pipeline_mode<synchronous>, transform_indices = @transform_2, window_bounds = array<i64: 2, 128>}, {pipeline_mode = #tpu.pipeline_mode<synchronous>, transform_indices = @transform_3, window_bounds = array<i64: 1, 128>}, {pipeline_mode = #tpu.pipeline_mode<synchronous>, transform_indices = @transform_4, window_bounds = array<i64: 32, 1024>}, {pipeline_mode = #tpu.pipeline_mode<synchronous>, transform_indices = @transform_5, window_bounds = array<i64: 4, 128, 256>}, {pipeline_mode = #tpu.pipeline_mode<synchronous>, transform_indices = @transform_6, window_bounds = array<i64: 4, 256>}, {pipeline_mode = #tpu.pipeline_mode<synchronous>, transform_indices = @transform_7, window_bounds = array<i64: 4, 256, 256>}, {pipeline_mode = #tpu.pipeline_mode<synchronous>, transform_indices = @transform_8, window_bounds = array<i64: 4, 256>}, {pipeline_mode = #tpu.pipeline_mode<synchronous>, transform_indices = @transform_9, window_bounds = array<i64: 4, 256, 128>}, {pipeline_mode = #tpu.pipeline_mode<synchronous>, transform_indices = @transform_10, window_bounds = array<i64: 4, 128>}, {pipeline_mode = #tpu.pipeline_mode<synchronous>, transform_indices = @transform_11, window_bounds = array<i64: 4, 128>}, {pipeline_mode = #tpu.pipeline_mode<synchronous>, transform_indices = @transform_12, window_bounds = array<i64: 4, 128>}, {transform_indices = @transform_13, window_bounds = array<i64: 256, 128>}]} {
    %c0 = arith.constant 0 : index
    %c0_0 = arith.constant 0 : index
    %0 = vector.load %arg1[%c0, %c0_0] : memref<256x2xf32, #tpu.memory_space<vmem>>, vector<256x2xf32>
    %c0_1 = arith.constant 0 : index
    %c0_2 = arith.constant 0 : index
    %1 = vector.load %arg4[%c0_1, %c0_2] : memref<1x128xf32, #tpu.memory_space<vmem>>, vector<1x128xf32>
    %2 = vector.extract_strided_slice %0 {offsets = [0, 0], sizes = [256, 1], strides = [1, 1]} : vector<256x2xf32> to vector<256x1xf32>
    %c0_3 = arith.constant 0 : index
    %c0_4 = arith.constant 0 : index
    %3 = vector.load %arg3[%c0_3, %c0_4] : memref<2x128xf32, #tpu.memory_space<vmem>>, vector<1x128xf32>
    %4 = vector.broadcast %2 : vector<256x1xf32> to vector<256x128xf32>
    %5 = vector.broadcast %3 : vector<1x128xf32> to vector<256x128xf32>
    %6 = arith.mulf %4, %5 : vector<256x128xf32>
    %7 = vector.broadcast %1 : vector<1x128xf32> to vector<256x128xf32>
    %8 = arith.addf %7, %6 : vector<256x128xf32>
    %9 = vector.extract_strided_slice %0 {offsets = [0, 1], sizes = [256, 1], strides = [1, 1]} : vector<256x2xf32> to vector<256x1xf32>
    %c1 = arith.constant 1 : index
    %c0_5 = arith.constant 0 : index
    %10 = vector.load %arg3[%c1, %c0_5] : memref<2x128xf32, #tpu.memory_space<vmem>>, vector<1x128xf32>
    %11 = vector.broadcast %9 : vector<256x1xf32> to vector<256x128xf32>
    %12 = vector.broadcast %10 : vector<1x128xf32> to vector<256x128xf32>
    %13 = arith.mulf %11, %12 : vector<256x128xf32>
    %14 = arith.addf %8, %13 : vector<256x128xf32>
    %c0_6 = arith.constant 0 : index
    %c0_7 = arith.constant 0 : index
    %15 = vector.load %arg2[%c0_6, %c0_7] : memref<256x32xbf16, #tpu.memory_space<vmem>>, vector<256x32xbf16>
    %c0_8 = arith.constant 0 : index
    %c0_9 = arith.constant 0 : index
    %16 = vector.load %arg5[%c0_8, %c0_9] : memref<32x1024xbf16, #tpu.memory_space<vmem>>, vector<32x1024xbf16>
    %cst = arith.constant dense<0.000000e+00> : vector<256x1024xf32>
    %17 = tpu.matmul %15, %16, %cst {dimension_numbers = #tpu.dot_dimension_numbers<[1], [0], [0], [1], [0, 0, 1, 1], [], []>} : vector<256x32xbf16>, vector<32x1024xbf16>, vector<256x1024xf32> -> vector<256x1024xf32>
    %cst_10 = arith.constant dense<0.000000e+00> : vector<256xf32>
    %18 = vector.multi_reduction <add>, %14, %cst_10 [1] : vector<256x128xf32> to vector<256xf32>
    %19 = vector.shape_cast %18 : vector<256xf32> to vector<256x1xf32>
    %cst_11 = arith.constant 1.280000e+02 : f32
    %20 = vector.broadcast %cst_11 : f32 to vector<256x1xf32>
    %21 = arith.divf %19, %20 : vector<256x1xf32>
    %22 = arith.mulf %14, %14 : vector<256x128xf32>
    %cst_12 = arith.constant dense<0.000000e+00> : vector<256xf32>
    %23 = vector.multi_reduction <add>, %22, %cst_12 [1] : vector<256x128xf32> to vector<256xf32>
    %24 = vector.shape_cast %23 : vector<256xf32> to vector<256x1xf32>
    %cst_13 = arith.constant 1.280000e+02 : f32
    %25 = vector.broadcast %cst_13 : f32 to vector<256x1xf32>
    %26 = arith.divf %24, %25 : vector<256x1xf32>
    %27 = arith.mulf %21, %21 : vector<256x1xf32>
    %28 = arith.subf %26, %27 : vector<256x1xf32>
    %cst_14 = arith.constant 0.000000e+00 : f32
    %29 = vector.broadcast %cst_14 : f32 to vector<256x1xf32>
    %30 = arith.maximumf %28, %29 : vector<256x1xf32>
    %31 = vector.broadcast %21 : vector<256x1xf32> to vector<256x128xf32>
    %32 = arith.subf %14, %31 : vector<256x128xf32>
    %cst_15 = arith.constant 9.99999974E-6 : f32
    %33 = vector.broadcast %cst_15 : f32 to vector<256x1xf32>
    %34 = arith.addf %30, %33 : vector<256x1xf32>
    %35 = math.rsqrt %34 : vector<256x1xf32>
    %36 = vector.broadcast %35 : vector<256x1xf32> to vector<256x128xf32>
    %37 = arith.mulf %32, %36 : vector<256x128xf32>
    %c0_16 = arith.constant 0 : index
    %c0_17 = arith.constant 0 : index
    %38 = vector.load %arg12[%c0_16, %c0_17] : memref<4x128xf32, #tpu.memory_space<vmem>>, vector<1x128xf32>
    %39 = vector.broadcast %38 : vector<1x128xf32> to vector<256x128xf32>
    %40 = arith.mulf %37, %39 : vector<256x128xf32>
    %c0_18 = arith.constant 0 : index
    %c0_19 = arith.constant 0 : index
    %41 = vector.load %arg13[%c0_18, %c0_19] : memref<4x128xf32, #tpu.memory_space<vmem>>, vector<1x128xf32>
    %42 = vector.broadcast %41 : vector<1x128xf32> to vector<256x128xf32>
    %43 = arith.addf %40, %42 : vector<256x128xf32>
    %cst_20 = arith.constant 5.000000e-01 : f32
    %44 = vector.broadcast %cst_20 : f32 to vector<256x128xf32>
    %45 = arith.mulf %44, %43 : vector<256x128xf32>
    %46 = math.tanh %45 : vector<256x128xf32>
    %cst_21 = arith.constant 5.000000e-01 : f32
    %47 = vector.broadcast %cst_21 : f32 to vector<256x128xf32>
    %48 = arith.mulf %47, %46 : vector<256x128xf32>
    %cst_22 = arith.constant 5.000000e-01 : f32
    %49 = vector.broadcast %cst_22 : f32 to vector<256x128xf32>
    %50 = arith.addf %48, %49 : vector<256x128xf32>
    %51 = arith.mulf %43, %50 : vector<256x128xf32>
    %52 = arith.truncf %51 : vector<256x128xf32> to vector<256x128xbf16>
    %c0_23 = arith.constant 0 : index
    %c0_24 = arith.constant 0 : index
    %c0_25 = arith.constant 0 : index
    %53 = vector.load %arg6[%c0_23, %c0_24, %c0_25] : memref<4x128x256xbf16, #tpu.memory_space<vmem>>, vector<1x128x256xbf16>
    %54 = vector.shape_cast %53 : vector<1x128x256xbf16> to vector<128x256xbf16>
    %cst_26 = arith.constant dense<0.000000e+00> : vector<256x256xf32>
    %55 = tpu.matmul %52, %54, %cst_26 {dimension_numbers = #tpu.dot_dimension_numbers<[1], [0], [0], [1], [0, 0, 1, 1], [], []>} : vector<256x128xbf16>, vector<128x256xbf16>, vector<256x256xf32> -> vector<256x256xf32>
    %56 = vector.extract_strided_slice %17 {offsets = [0, 0], sizes = [256, 256], strides = [1, 1]} : vector<256x1024xf32> to vector<256x256xf32>
    %57 = arith.addf %55, %56 : vector<256x256xf32>
    %c0_27 = arith.constant 0 : index
    %c0_28 = arith.constant 0 : index
    %58 = vector.load %arg7[%c0_27, %c0_28] : memref<4x256xf32, #tpu.memory_space<vmem>>, vector<1x256xf32>
    %59 = vector.broadcast %58 : vector<1x256xf32> to vector<256x256xf32>
    %60 = arith.addf %57, %59 : vector<256x256xf32>
    %cst_29 = arith.constant 5.000000e-01 : f32
    %61 = vector.broadcast %cst_29 : f32 to vector<256x256xf32>
    %62 = arith.mulf %61, %60 : vector<256x256xf32>
    %63 = math.tanh %62 : vector<256x256xf32>
    %cst_30 = arith.constant 5.000000e-01 : f32
    %64 = vector.broadcast %cst_30 : f32 to vector<256x256xf32>
    %65 = arith.mulf %64, %63 : vector<256x256xf32>
    %cst_31 = arith.constant 5.000000e-01 : f32
    %66 = vector.broadcast %cst_31 : f32 to vector<256x256xf32>
    %67 = arith.addf %65, %66 : vector<256x256xf32>
    %68 = arith.mulf %60, %67 : vector<256x256xf32>
    %69 = arith.truncf %68 : vector<256x256xf32> to vector<256x256xbf16>
    %c0_32 = arith.constant 0 : index
    %c0_33 = arith.constant 0 : index
    %c0_34 = arith.constant 0 : index
    %70 = vector.load %arg8[%c0_32, %c0_33, %c0_34] : memref<4x256x256xbf16, #tpu.memory_space<vmem>>, vector<1x256x256xbf16>
    %71 = vector.shape_cast %70 : vector<1x256x256xbf16> to vector<256x256xbf16>
    %cst_35 = arith.constant dense<0.000000e+00> : vector<256x256xf32>
    %72 = tpu.matmul %69, %71, %cst_35 {dimension_numbers = #tpu.dot_dimension_numbers<[1], [0], [0], [1], [0, 0, 1, 1], [], []>} : vector<256x256xbf16>, vector<256x256xbf16>, vector<256x256xf32> -> vector<256x256xf32>
    %c0_36 = arith.constant 0 : index
    %c0_37 = arith.constant 0 : index
    %73 = vector.load %arg9[%c0_36, %c0_37] : memref<4x256xf32, #tpu.memory_space<vmem>>, vector<1x256xf32>
    %74 = vector.broadcast %73 : vector<1x256xf32> to vector<256x256xf32>
    %75 = arith.addf %72, %74 : vector<256x256xf32>
    %cst_38 = arith.constant 5.000000e-01 : f32
    %76 = vector.broadcast %cst_38 : f32 to vector<256x256xf32>
    %77 = arith.mulf %76, %75 : vector<256x256xf32>
    %78 = math.tanh %77 : vector<256x256xf32>
    %cst_39 = arith.constant 5.000000e-01 : f32
    %79 = vector.broadcast %cst_39 : f32 to vector<256x256xf32>
    %80 = arith.mulf %79, %78 : vector<256x256xf32>
    %cst_40 = arith.constant 5.000000e-01 : f32
    %81 = vector.broadcast %cst_40 : f32 to vector<256x256xf32>
    %82 = arith.addf %80, %81 : vector<256x256xf32>
    %83 = arith.mulf %75, %82 : vector<256x256xf32>
    %84 = arith.truncf %83 : vector<256x256xf32> to vector<256x256xbf16>
    %c0_41 = arith.constant 0 : index
    %c0_42 = arith.constant 0 : index
    %c0_43 = arith.constant 0 : index
    %85 = vector.load %arg10[%c0_41, %c0_42, %c0_43] : memref<4x256x128xbf16, #tpu.memory_space<vmem>>, vector<1x256x128xbf16>
    %86 = vector.shape_cast %85 : vector<1x256x128xbf16> to vector<256x128xbf16>
    %cst_44 = arith.constant dense<0.000000e+00> : vector<256x128xf32>
    %87 = tpu.matmul %84, %86, %cst_44 {dimension_numbers = #tpu.dot_dimension_numbers<[1], [0], [0], [1], [0, 0, 1, 1], [], []>} : vector<256x256xbf16>, vector<256x128xbf16>, vector<256x128xf32> -> vector<256x128xf32>
    %c0_45 = arith.constant 0 : index
    %c0_46 = arith.constant 0 : index
    %88 = vector.load %arg11[%c0_45, %c0_46] : memref<4x128xf32, #tpu.memory_space<vmem>>, vector<1x128xf32>
    %89 = vector.broadcast %88 : vector<1x128xf32> to vector<256x128xf32>
    %90 = arith.addf %87, %89 : vector<256x128xf32>
    %91 = arith.addf %14, %90 : vector<256x128xf32>
    %cst_47 = arith.constant dense<0.000000e+00> : vector<256xf32>
    %92 = vector.multi_reduction <add>, %91, %cst_47 [1] : vector<256x128xf32> to vector<256xf32>
    %93 = vector.shape_cast %92 : vector<256xf32> to vector<256x1xf32>
    %cst_48 = arith.constant 1.280000e+02 : f32
    %94 = vector.broadcast %cst_48 : f32 to vector<256x1xf32>
    %95 = arith.divf %93, %94 : vector<256x1xf32>
    %96 = arith.mulf %91, %91 : vector<256x128xf32>
    %cst_49 = arith.constant dense<0.000000e+00> : vector<256xf32>
    %97 = vector.multi_reduction <add>, %96, %cst_49 [1] : vector<256x128xf32> to vector<256xf32>
    %98 = vector.shape_cast %97 : vector<256xf32> to vector<256x1xf32>
    %cst_50 = arith.constant 1.280000e+02 : f32
    %99 = vector.broadcast %cst_50 : f32 to vector<256x1xf32>
    %100 = arith.divf %98, %99 : vector<256x1xf32>
    %101 = arith.mulf %95, %95 : vector<256x1xf32>
    %102 = arith.subf %100, %101 : vector<256x1xf32>
    %cst_51 = arith.constant 0.000000e+00 : f32
    %103 = vector.broadcast %cst_51 : f32 to vector<256x1xf32>
    %104 = arith.maximumf %102, %103 : vector<256x1xf32>
    %105 = vector.broadcast %95 : vector<256x1xf32> to vector<256x128xf32>
    %106 = arith.subf %91, %105 : vector<256x128xf32>
    %cst_52 = arith.constant 9.99999974E-6 : f32
    %107 = vector.broadcast %cst_52 : f32 to vector<256x1xf32>
    %108 = arith.addf %104, %107 : vector<256x1xf32>
    %109 = math.rsqrt %108 : vector<256x1xf32>
    %110 = vector.broadcast %109 : vector<256x1xf32> to vector<256x128xf32>
    %111 = arith.mulf %106, %110 : vector<256x128xf32>
    %c1_53 = arith.constant 1 : index
    %c0_54 = arith.constant 0 : index
    %112 = vector.load %arg12[%c1_53, %c0_54] : memref<4x128xf32, #tpu.memory_space<vmem>>, vector<1x128xf32>
    %113 = vector.broadcast %112 : vector<1x128xf32> to vector<256x128xf32>
    %114 = arith.mulf %111, %113 : vector<256x128xf32>
    %c1_55 = arith.constant 1 : index
    %c0_56 = arith.constant 0 : index
    %115 = vector.load %arg13[%c1_55, %c0_56] : memref<4x128xf32, #tpu.memory_space<vmem>>, vector<1x128xf32>
    %116 = vector.broadcast %115 : vector<1x128xf32> to vector<256x128xf32>
    %117 = arith.addf %114, %116 : vector<256x128xf32>
    %cst_57 = arith.constant 5.000000e-01 : f32
    %118 = vector.broadcast %cst_57 : f32 to vector<256x128xf32>
    %119 = arith.mulf %118, %117 : vector<256x128xf32>
    %120 = math.tanh %119 : vector<256x128xf32>
    %cst_58 = arith.constant 5.000000e-01 : f32
    %121 = vector.broadcast %cst_58 : f32 to vector<256x128xf32>
    %122 = arith.mulf %121, %120 : vector<256x128xf32>
    %cst_59 = arith.constant 5.000000e-01 : f32
    %123 = vector.broadcast %cst_59 : f32 to vector<256x128xf32>
    %124 = arith.addf %122, %123 : vector<256x128xf32>
    %125 = arith.mulf %117, %124 : vector<256x128xf32>
    %126 = arith.truncf %125 : vector<256x128xf32> to vector<256x128xbf16>
    %c1_60 = arith.constant 1 : index
    %c0_61 = arith.constant 0 : index
    %c0_62 = arith.constant 0 : index
    %127 = vector.load %arg6[%c1_60, %c0_61, %c0_62] : memref<4x128x256xbf16, #tpu.memory_space<vmem>>, vector<1x128x256xbf16>
    %128 = vector.shape_cast %127 : vector<1x128x256xbf16> to vector<128x256xbf16>
    %cst_63 = arith.constant dense<0.000000e+00> : vector<256x256xf32>
    %129 = tpu.matmul %126, %128, %cst_63 {dimension_numbers = #tpu.dot_dimension_numbers<[1], [0], [0], [1], [0, 0, 1, 1], [], []>} : vector<256x128xbf16>, vector<128x256xbf16>, vector<256x256xf32> -> vector<256x256xf32>
    %130 = vector.extract_strided_slice %17 {offsets = [0, 256], sizes = [256, 256], strides = [1, 1]} : vector<256x1024xf32> to vector<256x256xf32>
    %131 = arith.addf %129, %130 : vector<256x256xf32>
    %c1_64 = arith.constant 1 : index
    %c0_65 = arith.constant 0 : index
    %132 = vector.load %arg7[%c1_64, %c0_65] : memref<4x256xf32, #tpu.memory_space<vmem>>, vector<1x256xf32>
    %133 = vector.broadcast %132 : vector<1x256xf32> to vector<256x256xf32>
    %134 = arith.addf %131, %133 : vector<256x256xf32>
    %cst_66 = arith.constant 5.000000e-01 : f32
    %135 = vector.broadcast %cst_66 : f32 to vector<256x256xf32>
    %136 = arith.mulf %135, %134 : vector<256x256xf32>
    %137 = math.tanh %136 : vector<256x256xf32>
    %cst_67 = arith.constant 5.000000e-01 : f32
    %138 = vector.broadcast %cst_67 : f32 to vector<256x256xf32>
    %139 = arith.mulf %138, %137 : vector<256x256xf32>
    %cst_68 = arith.constant 5.000000e-01 : f32
    %140 = vector.broadcast %cst_68 : f32 to vector<256x256xf32>
    %141 = arith.addf %139, %140 : vector<256x256xf32>
    %142 = arith.mulf %134, %141 : vector<256x256xf32>
    %143 = arith.truncf %142 : vector<256x256xf32> to vector<256x256xbf16>
    %c1_69 = arith.constant 1 : index
    %c0_70 = arith.constant 0 : index
    %c0_71 = arith.constant 0 : index
    %144 = vector.load %arg8[%c1_69, %c0_70, %c0_71] : memref<4x256x256xbf16, #tpu.memory_space<vmem>>, vector<1x256x256xbf16>
    %145 = vector.shape_cast %144 : vector<1x256x256xbf16> to vector<256x256xbf16>
    %cst_72 = arith.constant dense<0.000000e+00> : vector<256x256xf32>
    %146 = tpu.matmul %143, %145, %cst_72 {dimension_numbers = #tpu.dot_dimension_numbers<[1], [0], [0], [1], [0, 0, 1, 1], [], []>} : vector<256x256xbf16>, vector<256x256xbf16>, vector<256x256xf32> -> vector<256x256xf32>
    %c1_73 = arith.constant 1 : index
    %c0_74 = arith.constant 0 : index
    %147 = vector.load %arg9[%c1_73, %c0_74] : memref<4x256xf32, #tpu.memory_space<vmem>>, vector<1x256xf32>
    %148 = vector.broadcast %147 : vector<1x256xf32> to vector<256x256xf32>
    %149 = arith.addf %146, %148 : vector<256x256xf32>
    %cst_75 = arith.constant 5.000000e-01 : f32
    %150 = vector.broadcast %cst_75 : f32 to vector<256x256xf32>
    %151 = arith.mulf %150, %149 : vector<256x256xf32>
    %152 = math.tanh %151 : vector<256x256xf32>
    %cst_76 = arith.constant 5.000000e-01 : f32
    %153 = vector.broadcast %cst_76 : f32 to vector<256x256xf32>
    %154 = arith.mulf %153, %152 : vector<256x256xf32>
    %cst_77 = arith.constant 5.000000e-01 : f32
    %155 = vector.broadcast %cst_77 : f32 to vector<256x256xf32>
    %156 = arith.addf %154, %155 : vector<256x256xf32>
    %157 = arith.mulf %149, %156 : vector<256x256xf32>
    %158 = arith.truncf %157 : vector<256x256xf32> to vector<256x256xbf16>
    %c1_78 = arith.constant 1 : index
    %c0_79 = arith.constant 0 : index
    %c0_80 = arith.constant 0 : index
    %159 = vector.load %arg10[%c1_78, %c0_79, %c0_80] : memref<4x256x128xbf16, #tpu.memory_space<vmem>>, vector<1x256x128xbf16>
    %160 = vector.shape_cast %159 : vector<1x256x128xbf16> to vector<256x128xbf16>
    %cst_81 = arith.constant dense<0.000000e+00> : vector<256x128xf32>
    %161 = tpu.matmul %158, %160, %cst_81 {dimension_numbers = #tpu.dot_dimension_numbers<[1], [0], [0], [1], [0, 0, 1, 1], [], []>} : vector<256x256xbf16>, vector<256x128xbf16>, vector<256x128xf32> -> vector<256x128xf32>
    %c1_82 = arith.constant 1 : index
    %c0_83 = arith.constant 0 : index
    %162 = vector.load %arg11[%c1_82, %c0_83] : memref<4x128xf32, #tpu.memory_space<vmem>>, vector<1x128xf32>
    %163 = vector.broadcast %162 : vector<1x128xf32> to vector<256x128xf32>
    %164 = arith.addf %161, %163 : vector<256x128xf32>
    %165 = arith.addf %91, %164 : vector<256x128xf32>
    %cst_84 = arith.constant dense<0.000000e+00> : vector<256xf32>
    %166 = vector.multi_reduction <add>, %165, %cst_84 [1] : vector<256x128xf32> to vector<256xf32>
    %167 = vector.shape_cast %166 : vector<256xf32> to vector<256x1xf32>
    %cst_85 = arith.constant 1.280000e+02 : f32
    %168 = vector.broadcast %cst_85 : f32 to vector<256x1xf32>
    %169 = arith.divf %167, %168 : vector<256x1xf32>
    %170 = arith.mulf %165, %165 : vector<256x128xf32>
    %cst_86 = arith.constant dense<0.000000e+00> : vector<256xf32>
    %171 = vector.multi_reduction <add>, %170, %cst_86 [1] : vector<256x128xf32> to vector<256xf32>
    %172 = vector.shape_cast %171 : vector<256xf32> to vector<256x1xf32>
    %cst_87 = arith.constant 1.280000e+02 : f32
    %173 = vector.broadcast %cst_87 : f32 to vector<256x1xf32>
    %174 = arith.divf %172, %173 : vector<256x1xf32>
    %175 = arith.mulf %169, %169 : vector<256x1xf32>
    %176 = arith.subf %174, %175 : vector<256x1xf32>
    %cst_88 = arith.constant 0.000000e+00 : f32
    %177 = vector.broadcast %cst_88 : f32 to vector<256x1xf32>
    %178 = arith.maximumf %176, %177 : vector<256x1xf32>
    %179 = vector.broadcast %169 : vector<256x1xf32> to vector<256x128xf32>
    %180 = arith.subf %165, %179 : vector<256x128xf32>
    %cst_89 = arith.constant 9.99999974E-6 : f32
    %181 = vector.broadcast %cst_89 : f32 to vector<256x1xf32>
    %182 = arith.addf %178, %181 : vector<256x1xf32>
    %183 = math.rsqrt %182 : vector<256x1xf32>
    %184 = vector.broadcast %183 : vector<256x1xf32> to vector<256x128xf32>
    %185 = arith.mulf %180, %184 : vector<256x128xf32>
    %c2 = arith.constant 2 : index
    %c0_90 = arith.constant 0 : index
    %186 = vector.load %arg12[%c2, %c0_90] : memref<4x128xf32, #tpu.memory_space<vmem>>, vector<1x128xf32>
    %187 = vector.broadcast %186 : vector<1x128xf32> to vector<256x128xf32>
    %188 = arith.mulf %185, %187 : vector<256x128xf32>
    %c2_91 = arith.constant 2 : index
    %c0_92 = arith.constant 0 : index
    %189 = vector.load %arg13[%c2_91, %c0_92] : memref<4x128xf32, #tpu.memory_space<vmem>>, vector<1x128xf32>
    %190 = vector.broadcast %189 : vector<1x128xf32> to vector<256x128xf32>
    %191 = arith.addf %188, %190 : vector<256x128xf32>
    %cst_93 = arith.constant 5.000000e-01 : f32
    %192 = vector.broadcast %cst_93 : f32 to vector<256x128xf32>
    %193 = arith.mulf %192, %191 : vector<256x128xf32>
    %194 = math.tanh %193 : vector<256x128xf32>
    %cst_94 = arith.constant 5.000000e-01 : f32
    %195 = vector.broadcast %cst_94 : f32 to vector<256x128xf32>
    %196 = arith.mulf %195, %194 : vector<256x128xf32>
    %cst_95 = arith.constant 5.000000e-01 : f32
    %197 = vector.broadcast %cst_95 : f32 to vector<256x128xf32>
    %198 = arith.addf %196, %197 : vector<256x128xf32>
    %199 = arith.mulf %191, %198 : vector<256x128xf32>
    %200 = arith.truncf %199 : vector<256x128xf32> to vector<256x128xbf16>
    %c2_96 = arith.constant 2 : index
    %c0_97 = arith.constant 0 : index
    %c0_98 = arith.constant 0 : index
    %201 = vector.load %arg6[%c2_96, %c0_97, %c0_98] : memref<4x128x256xbf16, #tpu.memory_space<vmem>>, vector<1x128x256xbf16>
    %202 = vector.shape_cast %201 : vector<1x128x256xbf16> to vector<128x256xbf16>
    %cst_99 = arith.constant dense<0.000000e+00> : vector<256x256xf32>
    %203 = tpu.matmul %200, %202, %cst_99 {dimension_numbers = #tpu.dot_dimension_numbers<[1], [0], [0], [1], [0, 0, 1, 1], [], []>} : vector<256x128xbf16>, vector<128x256xbf16>, vector<256x256xf32> -> vector<256x256xf32>
    %204 = vector.extract_strided_slice %17 {offsets = [0, 512], sizes = [256, 256], strides = [1, 1]} : vector<256x1024xf32> to vector<256x256xf32>
    %205 = arith.addf %203, %204 : vector<256x256xf32>
    %c2_100 = arith.constant 2 : index
    %c0_101 = arith.constant 0 : index
    %206 = vector.load %arg7[%c2_100, %c0_101] : memref<4x256xf32, #tpu.memory_space<vmem>>, vector<1x256xf32>
    %207 = vector.broadcast %206 : vector<1x256xf32> to vector<256x256xf32>
    %208 = arith.addf %205, %207 : vector<256x256xf32>
    %cst_102 = arith.constant 5.000000e-01 : f32
    %209 = vector.broadcast %cst_102 : f32 to vector<256x256xf32>
    %210 = arith.mulf %209, %208 : vector<256x256xf32>
    %211 = math.tanh %210 : vector<256x256xf32>
    %cst_103 = arith.constant 5.000000e-01 : f32
    %212 = vector.broadcast %cst_103 : f32 to vector<256x256xf32>
    %213 = arith.mulf %212, %211 : vector<256x256xf32>
    %cst_104 = arith.constant 5.000000e-01 : f32
    %214 = vector.broadcast %cst_104 : f32 to vector<256x256xf32>
    %215 = arith.addf %213, %214 : vector<256x256xf32>
    %216 = arith.mulf %208, %215 : vector<256x256xf32>
    %217 = arith.truncf %216 : vector<256x256xf32> to vector<256x256xbf16>
    %c2_105 = arith.constant 2 : index
    %c0_106 = arith.constant 0 : index
    %c0_107 = arith.constant 0 : index
    %218 = vector.load %arg8[%c2_105, %c0_106, %c0_107] : memref<4x256x256xbf16, #tpu.memory_space<vmem>>, vector<1x256x256xbf16>
    %219 = vector.shape_cast %218 : vector<1x256x256xbf16> to vector<256x256xbf16>
    %cst_108 = arith.constant dense<0.000000e+00> : vector<256x256xf32>
    %220 = tpu.matmul %217, %219, %cst_108 {dimension_numbers = #tpu.dot_dimension_numbers<[1], [0], [0], [1], [0, 0, 1, 1], [], []>} : vector<256x256xbf16>, vector<256x256xbf16>, vector<256x256xf32> -> vector<256x256xf32>
    %c2_109 = arith.constant 2 : index
    %c0_110 = arith.constant 0 : index
    %221 = vector.load %arg9[%c2_109, %c0_110] : memref<4x256xf32, #tpu.memory_space<vmem>>, vector<1x256xf32>
    %222 = vector.broadcast %221 : vector<1x256xf32> to vector<256x256xf32>
    %223 = arith.addf %220, %222 : vector<256x256xf32>
    %cst_111 = arith.constant 5.000000e-01 : f32
    %224 = vector.broadcast %cst_111 : f32 to vector<256x256xf32>
    %225 = arith.mulf %224, %223 : vector<256x256xf32>
    %226 = math.tanh %225 : vector<256x256xf32>
    %cst_112 = arith.constant 5.000000e-01 : f32
    %227 = vector.broadcast %cst_112 : f32 to vector<256x256xf32>
    %228 = arith.mulf %227, %226 : vector<256x256xf32>
    %cst_113 = arith.constant 5.000000e-01 : f32
    %229 = vector.broadcast %cst_113 : f32 to vector<256x256xf32>
    %230 = arith.addf %228, %229 : vector<256x256xf32>
    %231 = arith.mulf %223, %230 : vector<256x256xf32>
    %232 = arith.truncf %231 : vector<256x256xf32> to vector<256x256xbf16>
    %c2_114 = arith.constant 2 : index
    %c0_115 = arith.constant 0 : index
    %c0_116 = arith.constant 0 : index
    %233 = vector.load %arg10[%c2_114, %c0_115, %c0_116] : memref<4x256x128xbf16, #tpu.memory_space<vmem>>, vector<1x256x128xbf16>
    %234 = vector.shape_cast %233 : vector<1x256x128xbf16> to vector<256x128xbf16>
    %cst_117 = arith.constant dense<0.000000e+00> : vector<256x128xf32>
    %235 = tpu.matmul %232, %234, %cst_117 {dimension_numbers = #tpu.dot_dimension_numbers<[1], [0], [0], [1], [0, 0, 1, 1], [], []>} : vector<256x256xbf16>, vector<256x128xbf16>, vector<256x128xf32> -> vector<256x128xf32>
    %c2_118 = arith.constant 2 : index
    %c0_119 = arith.constant 0 : index
    %236 = vector.load %arg11[%c2_118, %c0_119] : memref<4x128xf32, #tpu.memory_space<vmem>>, vector<1x128xf32>
    %237 = vector.broadcast %236 : vector<1x128xf32> to vector<256x128xf32>
    %238 = arith.addf %235, %237 : vector<256x128xf32>
    %239 = arith.addf %165, %238 : vector<256x128xf32>
    %cst_120 = arith.constant dense<0.000000e+00> : vector<256xf32>
    %240 = vector.multi_reduction <add>, %239, %cst_120 [1] : vector<256x128xf32> to vector<256xf32>
    %241 = vector.shape_cast %240 : vector<256xf32> to vector<256x1xf32>
    %cst_121 = arith.constant 1.280000e+02 : f32
    %242 = vector.broadcast %cst_121 : f32 to vector<256x1xf32>
    %243 = arith.divf %241, %242 : vector<256x1xf32>
    %244 = arith.mulf %239, %239 : vector<256x128xf32>
    %cst_122 = arith.constant dense<0.000000e+00> : vector<256xf32>
    %245 = vector.multi_reduction <add>, %244, %cst_122 [1] : vector<256x128xf32> to vector<256xf32>
    %246 = vector.shape_cast %245 : vector<256xf32> to vector<256x1xf32>
    %cst_123 = arith.constant 1.280000e+02 : f32
    %247 = vector.broadcast %cst_123 : f32 to vector<256x1xf32>
    %248 = arith.divf %246, %247 : vector<256x1xf32>
    %249 = arith.mulf %243, %243 : vector<256x1xf32>
    %250 = arith.subf %248, %249 : vector<256x1xf32>
    %cst_124 = arith.constant 0.000000e+00 : f32
    %251 = vector.broadcast %cst_124 : f32 to vector<256x1xf32>
    %252 = arith.maximumf %250, %251 : vector<256x1xf32>
    %253 = vector.broadcast %243 : vector<256x1xf32> to vector<256x128xf32>
    %254 = arith.subf %239, %253 : vector<256x128xf32>
    %cst_125 = arith.constant 9.99999974E-6 : f32
    %255 = vector.broadcast %cst_125 : f32 to vector<256x1xf32>
    %256 = arith.addf %252, %255 : vector<256x1xf32>
    %257 = math.rsqrt %256 : vector<256x1xf32>
    %258 = vector.broadcast %257 : vector<256x1xf32> to vector<256x128xf32>
    %259 = arith.mulf %254, %258 : vector<256x128xf32>
    %c3 = arith.constant 3 : index
    %c0_126 = arith.constant 0 : index
    %260 = vector.load %arg12[%c3, %c0_126] : memref<4x128xf32, #tpu.memory_space<vmem>>, vector<1x128xf32>
    %261 = vector.broadcast %260 : vector<1x128xf32> to vector<256x128xf32>
    %262 = arith.mulf %259, %261 : vector<256x128xf32>
    %c3_127 = arith.constant 3 : index
    %c0_128 = arith.constant 0 : index
    %263 = vector.load %arg13[%c3_127, %c0_128] : memref<4x128xf32, #tpu.memory_space<vmem>>, vector<1x128xf32>
    %264 = vector.broadcast %263 : vector<1x128xf32> to vector<256x128xf32>
    %265 = arith.addf %262, %264 : vector<256x128xf32>
    %cst_129 = arith.constant 5.000000e-01 : f32
    %266 = vector.broadcast %cst_129 : f32 to vector<256x128xf32>
    %267 = arith.mulf %266, %265 : vector<256x128xf32>
    %268 = math.tanh %267 : vector<256x128xf32>
    %cst_130 = arith.constant 5.000000e-01 : f32
    %269 = vector.broadcast %cst_130 : f32 to vector<256x128xf32>
    %270 = arith.mulf %269, %268 : vector<256x128xf32>
    %cst_131 = arith.constant 5.000000e-01 : f32
    %271 = vector.broadcast %cst_131 : f32 to vector<256x128xf32>
    %272 = arith.addf %270, %271 : vector<256x128xf32>
    %273 = arith.mulf %265, %272 : vector<256x128xf32>
    %274 = arith.truncf %273 : vector<256x128xf32> to vector<256x128xbf16>
    %c3_132 = arith.constant 3 : index
    %c0_133 = arith.constant 0 : index
    %c0_134 = arith.constant 0 : index
    %275 = vector.load %arg6[%c3_132, %c0_133, %c0_134] : memref<4x128x256xbf16, #tpu.memory_space<vmem>>, vector<1x128x256xbf16>
    %276 = vector.shape_cast %275 : vector<1x128x256xbf16> to vector<128x256xbf16>
    %cst_135 = arith.constant dense<0.000000e+00> : vector<256x256xf32>
    %277 = tpu.matmul %274, %276, %cst_135 {dimension_numbers = #tpu.dot_dimension_numbers<[1], [0], [0], [1], [0, 0, 1, 1], [], []>} : vector<256x128xbf16>, vector<128x256xbf16>, vector<256x256xf32> -> vector<256x256xf32>
    %278 = vector.extract_strided_slice %17 {offsets = [0, 768], sizes = [256, 256], strides = [1, 1]} : vector<256x1024xf32> to vector<256x256xf32>
    %279 = arith.addf %277, %278 : vector<256x256xf32>
    %c3_136 = arith.constant 3 : index
    %c0_137 = arith.constant 0 : index
    %280 = vector.load %arg7[%c3_136, %c0_137] : memref<4x256xf32, #tpu.memory_space<vmem>>, vector<1x256xf32>
    %281 = vector.broadcast %280 : vector<1x256xf32> to vector<256x256xf32>
    %282 = arith.addf %279, %281 : vector<256x256xf32>
    %cst_138 = arith.constant 5.000000e-01 : f32
    %283 = vector.broadcast %cst_138 : f32 to vector<256x256xf32>
    %284 = arith.mulf %283, %282 : vector<256x256xf32>
    %285 = math.tanh %284 : vector<256x256xf32>
    %cst_139 = arith.constant 5.000000e-01 : f32
    %286 = vector.broadcast %cst_139 : f32 to vector<256x256xf32>
    %287 = arith.mulf %286, %285 : vector<256x256xf32>
    %cst_140 = arith.constant 5.000000e-01 : f32
    %288 = vector.broadcast %cst_140 : f32 to vector<256x256xf32>
    %289 = arith.addf %287, %288 : vector<256x256xf32>
    %290 = arith.mulf %282, %289 : vector<256x256xf32>
    %291 = arith.truncf %290 : vector<256x256xf32> to vector<256x256xbf16>
    %c3_141 = arith.constant 3 : index
    %c0_142 = arith.constant 0 : index
    %c0_143 = arith.constant 0 : index
    %292 = vector.load %arg8[%c3_141, %c0_142, %c0_143] : memref<4x256x256xbf16, #tpu.memory_space<vmem>>, vector<1x256x256xbf16>
    %293 = vector.shape_cast %292 : vector<1x256x256xbf16> to vector<256x256xbf16>
    %cst_144 = arith.constant dense<0.000000e+00> : vector<256x256xf32>
    %294 = tpu.matmul %291, %293, %cst_144 {dimension_numbers = #tpu.dot_dimension_numbers<[1], [0], [0], [1], [0, 0, 1, 1], [], []>} : vector<256x256xbf16>, vector<256x256xbf16>, vector<256x256xf32> -> vector<256x256xf32>
    %c3_145 = arith.constant 3 : index
    %c0_146 = arith.constant 0 : index
    %295 = vector.load %arg9[%c3_145, %c0_146] : memref<4x256xf32, #tpu.memory_space<vmem>>, vector<1x256xf32>
    %296 = vector.broadcast %295 : vector<1x256xf32> to vector<256x256xf32>
    %297 = arith.addf %294, %296 : vector<256x256xf32>
    %cst_147 = arith.constant 5.000000e-01 : f32
    %298 = vector.broadcast %cst_147 : f32 to vector<256x256xf32>
    %299 = arith.mulf %298, %297 : vector<256x256xf32>
    %300 = math.tanh %299 : vector<256x256xf32>
    %cst_148 = arith.constant 5.000000e-01 : f32
    %301 = vector.broadcast %cst_148 : f32 to vector<256x256xf32>
    %302 = arith.mulf %301, %300 : vector<256x256xf32>
    %cst_149 = arith.constant 5.000000e-01 : f32
    %303 = vector.broadcast %cst_149 : f32 to vector<256x256xf32>
    %304 = arith.addf %302, %303 : vector<256x256xf32>
    %305 = arith.mulf %297, %304 : vector<256x256xf32>
    %306 = arith.truncf %305 : vector<256x256xf32> to vector<256x256xbf16>
    %c3_150 = arith.constant 3 : index
    %c0_151 = arith.constant 0 : index
    %c0_152 = arith.constant 0 : index
    %307 = vector.load %arg10[%c3_150, %c0_151, %c0_152] : memref<4x256x128xbf16, #tpu.memory_space<vmem>>, vector<1x256x128xbf16>
    %308 = vector.shape_cast %307 : vector<1x256x128xbf16> to vector<256x128xbf16>
    %cst_153 = arith.constant dense<0.000000e+00> : vector<256x128xf32>
    %309 = tpu.matmul %306, %308, %cst_153 {dimension_numbers = #tpu.dot_dimension_numbers<[1], [0], [0], [1], [0, 0, 1, 1], [], []>} : vector<256x256xbf16>, vector<256x128xbf16>, vector<256x128xf32> -> vector<256x128xf32>
    %c3_154 = arith.constant 3 : index
    %c0_155 = arith.constant 0 : index
    %310 = vector.load %arg11[%c3_154, %c0_155] : memref<4x128xf32, #tpu.memory_space<vmem>>, vector<1x128xf32>
    %311 = vector.broadcast %310 : vector<1x128xf32> to vector<256x128xf32>
    %312 = arith.addf %309, %311 : vector<256x128xf32>
    %313 = arith.addf %239, %312 : vector<256x128xf32>
    %314 = arith.truncf %313 : vector<256x128xf32> to vector<256x128xbf16>
    %c0_156 = arith.constant 0 : index
    %c0_157 = arith.constant 0 : index
    %315 = vector.load %arg14[%c0_156, %c0_157] : memref<256x128xbf16, #tpu.memory_space<vmem>>, vector<256x128xbf16>
    tpu.vector_store %arg14[%c0_156, %c0_157], %314 {strides = array<i32>} : memref<256x128xbf16, #tpu.memory_space<vmem>>, vector<256x128xbf16>,
    return
  }
  func.func @transform_0(%arg0: i32) -> (i32, i32) {
    %c0_i32 = arith.constant 0 : i32
    %c0_i32_0 = arith.constant 0 : i32
    return %arg0, %c0_i32 : i32, i32
  }
  func.func @transform_1(%arg0: i32) -> (i32, i32) {
    %c0_i32 = arith.constant 0 : i32
    %c0_i32_0 = arith.constant 0 : i32
    return %arg0, %c0_i32 : i32, i32
  }
  func.func @transform_2(%arg0: i32) -> (i32, i32) {
    %c0_i32 = arith.constant 0 : i32
    %c0_i32_0 = arith.constant 0 : i32
    %c0_i32_1 = arith.constant 0 : i32
    return %c0_i32, %c0_i32_0 : i32, i32
  }
  func.func @transform_3(%arg0: i32) -> (i32, i32) {
    %c0_i32 = arith.constant 0 : i32
    %c0_i32_0 = arith.constant 0 : i32
    %c0_i32_1 = arith.constant 0 : i32
    return %c0_i32, %c0_i32_0 : i32, i32
  }
  func.func @transform_4(%arg0: i32) -> (i32, i32) {
    %c0_i32 = arith.constant 0 : i32
    %c0_i32_0 = arith.constant 0 : i32
    %c0_i32_1 = arith.constant 0 : i32
    return %c0_i32, %c0_i32_0 : i32, i32
  }
  func.func @transform_5(%arg0: i32) -> (i32, i32, i32) {
    %c0_i32 = arith.constant 0 : i32
    %c0_i32_0 = arith.constant 0 : i32
    %c0_i32_1 = arith.constant 0 : i32
    %c0_i32_2 = arith.constant 0 : i32
    return %c0_i32, %c0_i32_0, %c0_i32_1 : i32, i32, i32
  }
  func.func @transform_6(%arg0: i32) -> (i32, i32) {
    %c0_i32 = arith.constant 0 : i32
    %c0_i32_0 = arith.constant 0 : i32
    %c0_i32_1 = arith.constant 0 : i32
    return %c0_i32, %c0_i32_0 : i32, i32
  }
  func.func @transform_7(%arg0: i32) -> (i32, i32, i32) {
    %c0_i32 = arith.constant 0 : i32
    %c0_i32_0 = arith.constant 0 : i32
    %c0_i32_1 = arith.constant 0 : i32
    %c0_i32_2 = arith.constant 0 : i32
    return %c0_i32, %c0_i32_0, %c0_i32_1 : i32, i32, i32
  }
  func.func @transform_8(%arg0: i32) -> (i32, i32) {
    %c0_i32 = arith.constant 0 : i32
    %c0_i32_0 = arith.constant 0 : i32
    %c0_i32_1 = arith.constant 0 : i32
    return %c0_i32, %c0_i32_0 : i32, i32
  }
  func.func @transform_9(%arg0: i32) -> (i32, i32, i32) {
    %c0_i32 = arith.constant 0 : i32
    %c0_i32_0 = arith.constant 0 : i32
    %c0_i32_1 = arith.constant 0 : i32
    %c0_i32_2 = arith.constant 0 : i32
    return %c0_i32, %c0_i32_0, %c0_i32_1 : i32, i32, i32
  }
  func.func @transform_10(%arg0: i32) -> (i32, i32) {
    %c0_i32 = arith.constant 0 : i32
    %c0_i32_0 = arith.constant 0 : i32
    %c0_i32_1 = arith.constant 0 : i32
    return %c0_i32, %c0_i32_0 : i32, i32
  }
  func.func @transform_11(%arg0: i32) -> (i32, i32) {
    %c0_i32 = arith.constant 0 : i32
    %c0_i32_0 = arith.constant 0 : i32
    %c0_i32_1 = arith.constant 0 : i32
    return %c0_i32, %c0_i32_0 : i32, i32
  }
  func.func @transform_12(%arg0: i32) -> (i32, i32) {
    %c0_i32 = arith.constant 0 : i32
    %c0_i32_0 = arith.constant 0 : i32
    %c0_i32_1 = arith.constant 0 : i32
    return %c0_i32, %c0_i32_0 : i32, i32
  }
  func.func @transform_13(%arg0: i32) -> (i32, i32) {
    %c0_i32 = arith.constant 0 : i32
    %c0_i32_0 = arith.constant 0 : i32
    return %arg0, %c0_i32 : i32, i32
  }
}

</mosaic_0001>

<llo_original>
// kernel: tpu_custom_call.1
$region0: #{tpu_custom_call.1}
  #allocation0 [shape = 'u32[]', space=smem, size = 0x4, offset = 0x4, fixed_abs, tag = 'smem constant byte address 0x4 - core index']
  #allocation1 [shape = 'u32[144,128]{1,0:T(1,128)}', space=vmem, size = 0x12000, scoped, tag = 'internal scratch']
  %s0 = inlined_call_operand.vmem [shape: f32[256,2], index: 0, kind: input, shape index: {}]
  %s1 = inlined_call_operand.vmem [shape: bf16[256,32], index: 1, kind: input, shape index: {}]
  %s2 = inlined_call_operand.vmem [shape: f32[2,128], index: 2, kind: input, shape index: {}]
  %s3 = inlined_call_operand.vmem [shape: f32[1,128], index: 3, kind: input, shape index: {}]
  %s4 = inlined_call_operand.vmem [shape: bf16[32,1024], index: 4, kind: input, shape index: {}]
  %s5 = inlined_call_operand.hbm [shape: bf16[4,128,256], index: 5, kind: input, shape index: {}]
  %s6 = inlined_call_operand.vmem [shape: f32[4,256], index: 6, kind: input, shape index: {}]
  %s7 = inlined_call_operand.hbm [shape: bf16[4,256,256], index: 7, kind: input, shape index: {}]
  %s8 = inlined_call_operand.vmem [shape: f32[4,256], index: 8, kind: input, shape index: {}]
  %s9 = inlined_call_operand.hbm [shape: bf16[4,256,128], index: 9, kind: input, shape index: {}]
  %s10 = inlined_call_operand.vmem [shape: f32[4,128], index: 10, kind: input, shape index: {}]
  %s11 = inlined_call_operand.vmem [shape: f32[4,128], index: 11, kind: input, shape index: {}]
  %s12 = inlined_call_operand.vmem [shape: f32[4,128], index: 12, kind: input, shape index: {}]
  %s13 = inlined_call_operand.hbm [shape: bf16[256,128], index: 13, kind: output, shape index: {}]
  %s14 = sld [smem:[#allocation0]]
  $region74: #{tpu_custom_call.1} parent=0
    _
  %s16 = ssub.s32 1, %s14
  %s17 = scalar_select 0, %s16, %s14
  $region1: #{tpu_custom_call.1} parent=0
    #allocation2 [shape = 'u8[262144]{0}', space=vmem, size = 0x40000, scoped, tag = 'input window, operand 5, single buffered']
    #allocation3 [shape = 's32[1]{0}', space=sflag, size = 0x4, scoped, tag = 'scoped memory for tpu_custom_call.1']
    #allocation4 [shape = 's32[1]{0}', space=sflag, size = 0x4, scoped, tag = 'scoped memory for tpu_custom_call.1']
    #allocation5 [shape = 'u8[524288]{0}', space=vmem, size = 0x80000, scoped, tag = 'input window, operand 7, single buffered']
    #allocation6 [shape = 's32[1]{0}', space=sflag, size = 0x4, scoped, tag = 'scoped memory for tpu_custom_call.1']
    #allocation7 [shape = 'u8[262144]{0}', space=vmem, size = 0x40000, scoped, tag = 'input window, operand 9, single buffered']
    #allocation8 [shape = 'u8[65536]{0}', space=vmem, size = 0x10000, scoped, tag = 'output window, operand 0, single buffered']
    %18 = vsyncpa [#allocation3], 0
    %19 = vsyncpa [#allocation6], 0
    %20 = vsyncpa [#allocation4], 0
    // Predicated region
    $region2: #{tpu_custom_call.1} parent=1 // pred_check
      _
    $region3: #{tpu_custom_call.1} parent=1 // pred_check_branch
      %22 = sbr.rel (0) target = $region5
    $region4: #{tpu_custom_call.1} parent=1 // pred_region
      _
    $region5: #{tpu_custom_call.1} parent=1 // pred_fallthru
      _
    // Predicated region
    $region6: #{tpu_custom_call.1} parent=1 // pred_check
      _
    $region7: #{tpu_custom_call.1} parent=1 // pred_check_branch
      %24 = sbr.rel (0) target = $region9
    $region8: #{tpu_custom_call.1} parent=1 // pred_region
      _
    $region9: #{tpu_custom_call.1} parent=1 // pred_fallthru
      _
    // Predicated region
    $region10: #{tpu_custom_call.1} parent=1 // pred_check
      _
    $region11: #{tpu_custom_call.1} parent=1 // pred_check_branch
      %26 = sbr.rel (0) target = $region13
    $region12: #{tpu_custom_call.1} parent=1 // pred_region
      _
    $region13: #{tpu_custom_call.1} parent=1 // pred_fallthru
      _
    // Predicated region
    $region14: #{tpu_custom_call.1} parent=1 // pred_check
      _
    $region15: #{tpu_custom_call.1} parent=1 // pred_check_branch
      %28 = sbr.rel (0) target = $region17
    $region16: #{tpu_custom_call.1} parent=1 // pred_region
      _
    $region17: #{tpu_custom_call.1} parent=1 // pred_fallthru
      _
    // Predicated region
    $region18: #{tpu_custom_call.1} parent=1 // pred_check
      _
    $region19: #{tpu_custom_call.1} parent=1 // pred_check_branch
      %30 = sbr.rel (0) target = $region21
    $region20: #{tpu_custom_call.1} parent=1 // pred_region
      _
    $region21: #{tpu_custom_call.1} parent=1 // pred_fallthru
      _
    // Predicated region
    $region22: #{tpu_custom_call.1} parent=1 // pred_check
      _
    $region23: #{tpu_custom_call.1} parent=1 // pred_check_branch
      %32 = sbr.rel (0) target = $region25
    $region24: #{tpu_custom_call.1} parent=1 // pred_region
      %s34 = ssub.s32 8192, 8192
      %35 = vsyncadd [#allocation3], %s34
      %s36 = sshll.u32 [#allocation2], 4
      %s37 = int_to_ptr.vmem [resolvable:$true] %s36
      %42 = dma.hbm_to_vmem [thread:$0]  %s5, 8192, %s37, [#allocation3], 128, 128, 8
    $region25: #{tpu_custom_call.1} parent=1 // pred_fallthru
      _
    // Predicated region
    $region26: #{tpu_custom_call.1} parent=1 // pred_check
      _
    $region27: #{tpu_custom_call.1} parent=1 // pred_check_branch
      %44 = sbr.rel (0) target = $region29
    $region28: #{tpu_custom_call.1} parent=1 // pred_region
      _
    $region29: #{tpu_custom_call.1} parent=1 // pred_fallthru
      _
    // Predicated region
    $region30: #{tpu_custom_call.1} parent=1 // pred_check
      _
    $region31: #{tpu_custom_call.1} parent=1 // pred_check_branch
      %46 = sbr.rel (0) target = $region33
    $region32: #{tpu_custom_call.1} parent=1 // pred_region
      %s48 = ssub.s32 16384, 16384
      %49 = vsyncadd [#allocation6], %s48
      %s50 = sshll.u32 [#allocation5], 4
      %s51 = int_to_ptr.vmem [resolvable:$true] %s50
      %56 = dma.hbm_to_vmem [thread:$0]  %s7, 16384, %s51, [#allocation6], 128, 128, 8
    $region33: #{tpu_custom_call.1} parent=1 // pred_fallthru
      _
    // Predicated region
    $region34: #{tpu_custom_call.1} parent=1 // pred_check
      _
    $region35: #{tpu_custom_call.1} parent=1 // pred_check_branch
      %58 = sbr.rel (0) target = $region37
    $region36: #{tpu_custom_call.1} parent=1 // pred_region
      _
    $region37: #{tpu_custom_call.1} parent=1 // pred_fallthru
      _
    // Predicated region
    $region38: #{tpu_custom_call.1} parent=1 // pred_check
      _
    $region39: #{tpu_custom_call.1} parent=1 // pred_check_branch
      %60 = sbr.rel (0) target = $region41
    $region40: #{tpu_custom_call.1} parent=1 // pred_region
      %s62 = ssub.s32 8192, 8192
      %63 = vsyncadd [#allocation6], %s62
      %s64 = sshll.u32 [#allocation7], 4
      %s65 = int_to_ptr.vmem [resolvable:$true] %s64
      %70 = dma.hbm_to_vmem [thread:$0]  %s9, 8192, %s65, [#allocation6], 64, 64, 4
    $region41: #{tpu_custom_call.1} parent=1 // pred_fallthru
      _
    // Predicated region
    $region42: #{tpu_custom_call.1} parent=1 // pred_check
      _
    $region43: #{tpu_custom_call.1} parent=1 // pred_check_branch
      %72 = sbr.rel (0) target = $region45
    $region44: #{tpu_custom_call.1} parent=1 // pred_region
      _
    $region45: #{tpu_custom_call.1} parent=1 // pred_fallthru
      _
    // Predicated region
    $region46: #{tpu_custom_call.1} parent=1 // pred_check
      _
    $region47: #{tpu_custom_call.1} parent=1 // pred_check_branch
      %74 = sbr.rel (0) target = $region49
    $region48: #{tpu_custom_call.1} parent=1 // pred_region
      _
    $region49: #{tpu_custom_call.1} parent=1 // pred_fallthru
      _
    // Predicated region
    $region50: #{tpu_custom_call.1} parent=1 // pred_check
      _
    $region51: #{tpu_custom_call.1} parent=1 // pred_check_branch
      %76 = sbr.rel (0) target = $region53
    $region52: #{tpu_custom_call.1} parent=1 // pred_region
      _
    $region53: #{tpu_custom_call.1} parent=1 // pred_fallthru
      _
    // Predicated region
    $region54: #{tpu_custom_call.1} parent=1 // pred_check
      _
    $region55: #{tpu_custom_call.1} parent=1 // pred_check_branch
      %78 = sbr.rel (0) target = $region57
    $region56: #{tpu_custom_call.1} parent=1 // pred_region
      %79 = dma.done [#allocation3], 8192
    $region57: #{tpu_custom_call.1} parent=1 // pred_fallthru
      _
    // Predicated region
    $region58: #{tpu_custom_call.1} parent=1 // pred_check
      _
    $region59: #{tpu_custom_call.1} parent=1 // pred_check_branch
      %81 = sbr.rel (0) target = $region61
    $region60: #{tpu_custom_call.1} parent=1 // pred_region
      %82 = dma.done [#allocation6], 16384
    $region61: #{tpu_custom_call.1} parent=1 // pred_fallthru
      _
    // Predicated region
    $region62: #{tpu_custom_call.1} parent=1 // pred_check
      _
    $region63: #{tpu_custom_call.1} parent=1 // pred_check_branch
      %84 = sbr.rel (0) target = $region65
    $region64: #{tpu_custom_call.1} parent=1 // pred_region
      %85 = dma.done [#allocation6], 8192
    $region65: #{tpu_custom_call.1} parent=1 // pred_fallthru
      _
    %v87 = vld [vmem:[%s0] sm:$0xff]
    %v88 = vld [vmem:[%s0 + $0x8] sm:$0xff]
    %v89 = vld [vmem:[%s0 + $0x10] sm:$0xff]
    %v90 = vld [vmem:[%s0 + $0x18] sm:$0xff]
    %v91 = vld [vmem:[%s0 + $0x20] sm:$0xff]
    %v92 = vld [vmem:[%s0 + $0x28] sm:$0xff]
    %v93 = vld [vmem:[%s0 + $0x30] sm:$0xff]
    %v94 = vld [vmem:[%s0 + $0x38] sm:$0xff]
    %v95 = vld [vmem:[%s0 + $0x40] sm:$0xff]
    %v96 = vld [vmem:[%s0 + $0x48] sm:$0xff]
    %v97 = vld [vmem:[%s0 + $0x50] sm:$0xff]
    %v98 = vld [vmem:[%s0 + $0x58] sm:$0xff]
    %v99 = vld [vmem:[%s0 + $0x60] sm:$0xff]
    %v100 = vld [vmem:[%s0 + $0x68] sm:$0xff]
    %v101 = vld [vmem:[%s0 + $0x70] sm:$0xff]
    %v102 = vld [vmem:[%s0 + $0x78] sm:$0xff]
    %v103 = vld [vmem:[%s0 + $0x80] sm:$0xff]
    %v104 = vld [vmem:[%s0 + $0x88] sm:$0xff]
    %v105 = vld [vmem:[%s0 + $0x90] sm:$0xff]
    %v106 = vld [vmem:[%s0 + $0x98] sm:$0xff]
    %v107 = vld [vmem:[%s0 + $0xa0] sm:$0xff]
    %v108 = vld [vmem:[%s0 + $0xa8] sm:$0xff]
    %v109 = vld [vmem:[%s0 + $0xb0] sm:$0xff]
    %v110 = vld [vmem:[%s0 + $0xb8] sm:$0xff]
    %v111 = vld [vmem:[%s0 + $0xc0] sm:$0xff]
    %v112 = vld [vmem:[%s0 + $0xc8] sm:$0xff]
    %v113 = vld [vmem:[%s0 + $0xd0] sm:$0xff]
    %v114 = vld [vmem:[%s0 + $0xd8] sm:$0xff]
    %v115 = vld [vmem:[%s0 + $0xe0] sm:$0xff]
    %v116 = vld [vmem:[%s0 + $0xe8] sm:$0xff]
    %v117 = vld [vmem:[%s0 + $0xf0] sm:$0xff]
    %v118 = vld [vmem:[%s0 + $0xf8] sm:$0xff]
    %v119 = vld [vmem:[%s3] sm:$0x1]
    %v120 = vld [vmem:[%s2] sm:$0x1]
    %122 = vset.pattern.permute.xlu0 0
    %123 = vperm.xlu0 %122, %v87
    %v124 = vpop.permute.xlu0 %123
    %127 = vset.pattern.permute.xlu0 0
    %128 = vperm.xlu0 %127, %v88
    %v129 = vpop.permute.xlu0 %128
    %132 = vset.pattern.permute.xlu0 0
    %133 = vperm.xlu0 %132, %v89
    %v134 = vpop.permute.xlu0 %133
    %137 = vset.pattern.permute.xlu0 0
    %138 = vperm.xlu0 %137, %v90
    %v139 = vpop.permute.xlu0 %138
    %142 = vset.pattern.permute.xlu0 0
    %143 = vperm.xlu0 %142, %v91
    %v144 = vpop.permute.xlu0 %143
    %147 = vset.pattern.permute.xlu0 0
    %148 = vperm.xlu0 %147, %v92
    %v149 = vpop.permute.xlu0 %148
    %152 = vset.pattern.permute.xlu0 0
    %153 = vperm.xlu0 %152, %v93
    %v154 = vpop.permute.xlu0 %153
    %157 = vset.pattern.permute.xlu0 0
    %158 = vperm.xlu0 %157, %v94
    %v159 = vpop.permute.xlu0 %158
    %162 = vset.pattern.permute.xlu0 0
    %163 = vperm.xlu0 %162, %v95
    %v164 = vpop.permute.xlu0 %163
    %167 = vset.pattern.permute.xlu0 0
    %168 = vperm.xlu0 %167, %v96
    %v169 = vpop.permute.xlu0 %168
    %172 = vset.pattern.permute.xlu0 0
    %173 = vperm.xlu0 %172, %v97
    %v174 = vpop.permute.xlu0 %173
    %177 = vset.pattern.permute.xlu0 0
    %178 = vperm.xlu0 %177, %v98
    %v179 = vpop.permute.xlu0 %178
    %182 = vset.pattern.permute.xlu0 0
    %183 = vperm.xlu0 %182, %v99
    %v184 = vpop.permute.xlu0 %183
    %187 = vset.pattern.permute.xlu0 0
    %188 = vperm.xlu0 %187, %v100
    %v189 = vpop.permute.xlu0 %188
    %192 = vset.pattern.permute.xlu0 0
    %193 = vperm.xlu0 %192, %v101
    %v194 = vpop.permute.xlu0 %193
    %197 = vset.pattern.permute.xlu0 0
    %198 = vperm.xlu0 %197, %v102
    %v199 = vpop.permute.xlu0 %198
    %202 = vset.pattern.permute.xlu0 0
    %203 = vperm.xlu0 %202, %v103
    %v204 = vpop.permute.xlu0 %203
    %207 = vset.pattern.permute.xlu0 0
    %208 = vperm.xlu0 %207, %v104
    %v209 = vpop.permute.xlu0 %208
    %212 = vset.pattern.permute.xlu0 0
    %213 = vperm.xlu0 %212, %v105
    %v214 = vpop.permute.xlu0 %213
    %217 = vset.pattern.permute.xlu0 0
    %218 = vperm.xlu0 %217, %v106
    %v219 = vpop.permute.xlu0 %218
    %222 = vset.pattern.permute.xlu0 0
    %223 = vperm.xlu0 %222, %v107
    %v224 = vpop.permute.xlu0 %223
    %227 = vset.pattern.permute.xlu0 0
    %228 = vperm.xlu0 %227, %v108
    %v229 = vpop.permute.xlu0 %228
    %232 = vset.pattern.permute.xlu0 0
    %233 = vperm.xlu0 %232, %v109
    %v234 = vpop.permute.xlu0 %233
    %237 = vset.pattern.permute.xlu0 0
    %238 = vperm.xlu0 %237, %v110
    %v239 = vpop.permute.xlu0 %238
    %242 = vset.pattern.permute.xlu0 0
    %243 = vperm.xlu0 %242, %v111
    %v244 = vpop.permute.xlu0 %243
    %247 = vset.pattern.permute.xlu0 0
    %248 = vperm.xlu0 %247, %v112
    %v249 = vpop.permute.xlu0 %248
    %252 = vset.pattern.permute.xlu0 0
    %253 = vperm.xlu0 %252, %v113
    %v254 = vpop.permute.xlu0 %253
    %257 = vset.pattern.permute.xlu0 0
    %258 = vperm.xlu0 %257, %v114
    %v259 = vpop.permute.xlu0 %258
    %262 = vset.pattern.permute.xlu0 0
    %263 = vperm.xlu0 %262, %v115
    %v264 = vpop.permute.xlu0 %263
    %267 = vset.pattern.permute.xlu0 0
    %268 = vperm.xlu0 %267, %v116
    %v269 = vpop.permute.xlu0 %268
    %272 = vset.pattern.permute.xlu0 0
    %273 = vperm.xlu0 %272, %v117
    %v274 = vpop.permute.xlu0 %273
    %277 = vset.pattern.permute.xlu0 0
    %278 = vperm.xlu0 %277, %v118
    %v279 = vpop.permute.xlu0 %278
    %v281 = vlaneseq
    %v282 = vshrl.u32 %v281, 7
    %v283 = vsub.s32 0, %v282
    %v284 = vrot.slane %v120, %v283
    %v285 = vmul.f32 %v124, %v284
    %v286 = vmul.f32 %v129, %v284
    %v287 = vmul.f32 %v134, %v284
    %v288 = vmul.f32 %v139, %v284
    %v289 = vmul.f32 %v144, %v284
    %v290 = vmul.f32 %v149, %v284
    %v291 = vmul.f32 %v154, %v284
    %v292 = vmul.f32 %v159, %v284
    %v293 = vmul.f32 %v164, %v284
    %v294 = vmul.f32 %v169, %v284
    %v295 = vmul.f32 %v174, %v284
    %v296 = vmul.f32 %v179, %v284
    %v297 = vmul.f32 %v184, %v284
    %v298 = vmul.f32 %v189, %v284
    %v299 = vmul.f32 %v194, %v284
    %v300 = vmul.f32 %v199, %v284
    %v301 = vmul.f32 %v204, %v284
    %v302 = vmul.f32 %v209, %v284
    %v303 = vmul.f32 %v214, %v284
    %v304 = vmul.f32 %v219, %v284
    %v305 = vmul.f32 %v224, %v284
    %v306 = vmul.f32 %v229, %v284
    %v307 = vmul.f32 %v234, %v284
    %v308 = vmul.f32 %v239, %v284
    %v309 = vmul.f32 %v244, %v284
    %v310 = vmul.f32 %v249, %v284
    %v311 = vmul.f32 %v254, %v284
    %v312 = vmul.f32 %v259, %v284
    %v313 = vmul.f32 %v264, %v284
    %v314 = vmul.f32 %v269, %v284
    %v315 = vmul.f32 %v274, %v284
    %v316 = vmul.f32 %v279, %v284
    %v318 = vlaneseq
    %v319 = vshrl.u32 %v318, 7
    %v320 = vsub.s32 0, %v319
    %v321 = vrot.slane %v119, %v320
    %v323 = vadd.f32 %v321, %v285
    %v324 = vadd.f32 %v321, %v286
    %v325 = vadd.f32 %v321, %v287
    %v326 = vadd.f32 %v321, %v288
    %v327 = vadd.f32 %v321, %v289
    %v328 = vadd.f32 %v321, %v290
    %v329 = vadd.f32 %v321, %v291
    %v330 = vadd.f32 %v321, %v292
    %v331 = vadd.f32 %v321, %v293
    %v332 = vadd.f32 %v321, %v294
    %v333 = vadd.f32 %v321, %v295
    %v334 = vadd.f32 %v321, %v296
    %v335 = vadd.f32 %v321, %v297
    %v336 = vadd.f32 %v321, %v298
    %v337 = vadd.f32 %v321, %v299
    %v338 = vadd.f32 %v321, %v300
    %v339 = vadd.f32 %v321, %v301
    %v340 = vadd.f32 %v321, %v302
    %v341 = vadd.f32 %v321, %v303
    %v342 = vadd.f32 %v321, %v304
    %v343 = vadd.f32 %v321, %v305
    %v344 = vadd.f32 %v321, %v306
    %v345 = vadd.f32 %v321, %v307
    %v346 = vadd.f32 %v321, %v308
    %v347 = vadd.f32 %v321, %v309
    %v348 = vadd.f32 %v321, %v310
    %v349 = vadd.f32 %v321, %v311
    %v350 = vadd.f32 %v321, %v312
    %v351 = vadd.f32 %v321, %v313
    %v352 = vadd.f32 %v321, %v314
    %v353 = vadd.f32 %v321, %v315
    %v354 = vadd.f32 %v321, %v316
    %v355 = vld [vmem:[%s2 + $0x1] sm:$0x1]
    %356 = vset.pattern.permute.xlu0 1
    %357 = vperm.xlu0 %356, %v87
    %v358 = vpop.permute.xlu0 %357
    %360 = vset.pattern.permute.xlu0 1
    %361 = vperm.xlu0 %360, %v88
    %v362 = vpop.permute.xlu0 %361
    %364 = vset.pattern.permute.xlu0 1
    %365 = vperm.xlu0 %364, %v89
    %v366 = vpop.permute.xlu0 %365
    %368 = vset.pattern.permute.xlu0 1
    %369 = vperm.xlu0 %368, %v90
    %v370 = vpop.permute.xlu0 %369
    %372 = vset.pattern.permute.xlu0 1
    %373 = vperm.xlu0 %372, %v91
    %v374 = vpop.permute.xlu0 %373
    %376 = vset.pattern.permute.xlu0 1
    %377 = vperm.xlu0 %376, %v92
    %v378 = vpop.permute.xlu0 %377
    %380 = vset.pattern.permute.xlu0 1
    %381 = vperm.xlu0 %380, %v93
    %v382 = vpop.permute.xlu0 %381
    %384 = vset.pattern.permute.xlu0 1
    %385 = vperm.xlu0 %384, %v94
    %v386 = vpop.permute.xlu0 %385
    %388 = vset.pattern.permute.xlu0 1
    %389 = vperm.xlu0 %388, %v95
    %v390 = vpop.permute.xlu0 %389
    %392 = vset.pattern.permute.xlu0 1
    %393 = vperm.xlu0 %392, %v96
    %v394 = vpop.permute.xlu0 %393
    %396 = vset.pattern.permute.xlu0 1
    %397 = vperm.xlu0 %396, %v97
    %v398 = vpop.permute.xlu0 %397
    %400 = vset.pattern.permute.xlu0 1
    %401 = vperm.xlu0 %400, %v98
    %v402 = vpop.permute.xlu0 %401
    %404 = vset.pattern.permute.xlu0 1
    %405 = vperm.xlu0 %404, %v99
    %v406 = vpop.permute.xlu0 %405
    %408 = vset.pattern.permute.xlu0 1
    %409 = vperm.xlu0 %408, %v100
    %v410 = vpop.permute.xlu0 %409
    %412 = vset.pattern.permute.xlu0 1
    %413 = vperm.xlu0 %412, %v101
    %v414 = vpop.permute.xlu0 %413
    %416 = vset.pattern.permute.xlu0 1
    %417 = vperm.xlu0 %416, %v102
    %v418 = vpop.permute.xlu0 %417
    %420 = vset.pattern.permute.xlu0 1
    %421 = vperm.xlu0 %420, %v103
    %v422 = vpop.permute.xlu0 %421
    %424 = vset.pattern.permute.xlu0 1
    %425 = vperm.xlu0 %424, %v104
    %v426 = vpop.permute.xlu0 %425
    %428 = vset.pattern.permute.xlu0 1
    %429 = vperm.xlu0 %428, %v105
    %v430 = vpop.permute.xlu0 %429
    %432 = vset.pattern.permute.xlu0 1
    %433 = vperm.xlu0 %432, %v106
    %v434 = vpop.permute.xlu0 %433
    %436 = vset.pattern.permute.xlu0 1
    %437 = vperm.xlu0 %436, %v107
    %v438 = vpop.permute.xlu0 %437
    %440 = vset.pattern.permute.xlu0 1
    %441 = vperm.xlu0 %440, %v108
    %v442 = vpop.permute.xlu0 %441
    %444 = vset.pattern.permute.xlu0 1
    %445 = vperm.xlu0 %444, %v109
    %v446 = vpop.permute.xlu0 %445
    %448 = vset.pattern.permute.xlu0 1
    %449 = vperm.xlu0 %448, %v110
    %v450 = vpop.permute.xlu0 %449
    %452 = vset.pattern.permute.xlu0 1
    %453 = vperm.xlu0 %452, %v111
    %v454 = vpop.permute.xlu0 %453
    %456 = vset.pattern.permute.xlu0 1
    %457 = vperm.xlu0 %456, %v112
    %v458 = vpop.permute.xlu0 %457
    %460 = vset.pattern.permute.xlu0 1
    %461 = vperm.xlu0 %460, %v113
    %v462 = vpop.permute.xlu0 %461
    %464 = vset.pattern.permute.xlu0 1
    %465 = vperm.xlu0 %464, %v114
    %v466 = vpop.permute.xlu0 %465
    %468 = vset.pattern.permute.xlu0 1
    %469 = vperm.xlu0 %468, %v115
    %v470 = vpop.permute.xlu0 %469
    %472 = vset.pattern.permute.xlu0 1
    %473 = vperm.xlu0 %472, %v116
    %v474 = vpop.permute.xlu0 %473
    %476 = vset.pattern.permute.xlu0 1
    %477 = vperm.xlu0 %476, %v117
    %v478 = vpop.permute.xlu0 %477
    %480 = vset.pattern.permute.xlu0 1
    %481 = vperm.xlu0 %480, %v118
    %v482 = vpop.permute.xlu0 %481
    %v484 = vlaneseq
    %v485 = vshrl.u32 %v484, 7
    %v486 = vsub.s32 0, %v485
    %v487 = vrot.slane %v355, %v486
    %v488 = vmul.f32 %v358, %v487
    %v489 = vmul.f32 %v362, %v487
    %v490 = vmul.f32 %v366, %v487
    %v491 = vmul.f32 %v370, %v487
    %v492 = vmul.f32 %v374, %v487
    %v493 = vmul.f32 %v378, %v487
    %v494 = vmul.f32 %v382, %v487
    %v495 = vmul.f32 %v386, %v487
    %v496 = vmul.f32 %v390, %v487
    %v497 = vmul.f32 %v394, %v487
    %v498 = vmul.f32 %v398, %v487
    %v499 = vmul.f32 %v402, %v487
    %v500 = vmul.f32 %v406, %v487
    %v501 = vmul.f32 %v410, %v487
    %v502 = vmul.f32 %v414, %v487
    %v503 = vmul.f32 %v418, %v487
    %v504 = vmul.f32 %v422, %v487
    %v505 = vmul.f32 %v426, %v487
    %v506 = vmul.f32 %v430, %v487
    %v507 = vmul.f32 %v434, %v487
    %v508 = vmul.f32 %v438, %v487
    %v509 = vmul.f32 %v442, %v487
    %v510 = vmul.f32 %v446, %v487
    %v511 = vmul.f32 %v450, %v487
    %v512 = vmul.f32 %v454, %v487
    %v513 = vmul.f32 %v458, %v487
    %v514 = vmul.f32 %v462, %v487
    %v515 = vmul.f32 %v466, %v487
    %v516 = vmul.f32 %v470, %v487
    %v517 = vmul.f32 %v474, %v487
    %v518 = vmul.f32 %v478, %v487
    %v519 = vmul.f32 %v482, %v487
    %v520 = vadd.f32 %v323, %v488
    %v521 = vadd.f32 %v324, %v489
    %v522 = vadd.f32 %v325, %v490
    %v523 = vadd.f32 %v326, %v491
    %v524 = vadd.f32 %v327, %v492
    %v525 = vadd.f32 %v328, %v493
    %v526 = vadd.f32 %v329, %v494
    %v527 = vadd.f32 %v330, %v495
    %v528 = vadd.f32 %v331, %v496
    %v529 = vadd.f32 %v332, %v497
    %v530 = vadd.f32 %v333, %v498
    %v531 = vadd.f32 %v334, %v499
    %v532 = vadd.f32 %v335, %v500
    %v533 = vadd.f32 %v336, %v501
    %v534 = vadd.f32 %v337, %v502
    %v535 = vadd.f32 %v338, %v503
    %v536 = vadd.f32 %v339, %v504
    %v537 = vadd.f32 %v340, %v505
    %v538 = vadd.f32 %v341, %v506
    %v539 = vadd.f32 %v342, %v507
    %v540 = vadd.f32 %v343, %v508
    %v541 = vadd.f32 %v344, %v509
    %v542 = vadd.f32 %v345, %v510
    %v543 = vadd.f32 %v346, %v511
    %v544 = vadd.f32 %v347, %v512
    %v545 = vadd.f32 %v348, %v513
    %v546 = vadd.f32 %v349, %v514
    %v547 = vadd.f32 %v350, %v515
    %v548 = vadd.f32 %v351, %v516
    %v549 = vadd.f32 %v352, %v517
    %v550 = vadd.f32 %v353, %v518
    %v551 = vadd.f32 %v354, %v519
    %v552 = vld [vmem:[%s1] sm:$0xf]
    %v553 = vld [vmem:[%s1 + $0x4] sm:$0xf]
    %v554 = vld [vmem:[%s1 + $0x8] sm:$0xf]
    %v555 = vld [vmem:[%s1 + $0xc] sm:$0xf]
    %v556 = vld [vmem:[%s1 + $0x10] sm:$0xf]
    %v557 = vld [vmem:[%s1 + $0x14] sm:$0xf]
    %v558 = vld [vmem:[%s1 + $0x18] sm:$0xf]
    %v559 = vld [vmem:[%s1 + $0x1c] sm:$0xf]
    %v560 = vld [vmem:[%s1 + $0x20] sm:$0xf]
    %v561 = vld [vmem:[%s1 + $0x24] sm:$0xf]
    %v562 = vld [vmem:[%s1 + $0x28] sm:$0xf]
    %v563 = vld [vmem:[%s1 + $0x2c] sm:$0xf]
    %v564 = vld [vmem:[%s1 + $0x30] sm:$0xf]
    %v565 = vld [vmem:[%s1 + $0x34] sm:$0xf]
    %v566 = vld [vmem:[%s1 + $0x38] sm:$0xf]
    %v567 = vld [vmem:[%s1 + $0x3c] sm:$0xf]
    %v568 = vld [vmem:[%s1 + $0x40] sm:$0xf]
    %v569 = vld [vmem:[%s1 + $0x44] sm:$0xf]
    %v570 = vld [vmem:[%s1 + $0x48] sm:$0xf]
    %v571 = vld [vmem:[%s1 + $0x4c] sm:$0xf]
    %v572 = vld [vmem:[%s1 + $0x50] sm:$0xf]
    %v573 = vld [vmem:[%s1 + $0x54] sm:$0xf]
    %v574 = vld [vmem:[%s1 + $0x58] sm:$0xf]
    %v575 = vld [vmem:[%s1 + $0x5c] sm:$0xf]
    %v576 = vld [vmem:[%s1 + $0x60] sm:$0xf]
    %v577 = vld [vmem:[%s1 + $0x64] sm:$0xf]
    %v578 = vld [vmem:[%s1 + $0x68] sm:$0xf]
    %v579 = vld [vmem:[%s1 + $0x6c] sm:$0xf]
    %v580 = vld [vmem:[%s1 + $0x70] sm:$0xf]
    %v581 = vld [vmem:[%s1 + $0x74] sm:$0xf]
    %v582 = vld [vmem:[%s1 + $0x78] sm:$0xf]
    %v583 = vld [vmem:[%s1 + $0x7c] sm:$0xf]
    %v584 = vld [vmem:[%s4] sm:$0xff]
    %v585 = vld [vmem:[%s4 + $0x8] sm:$0xff]
    %v586 = vld [vmem:[%s4 + $0x10] sm:$0xff]
    %v587 = vld [vmem:[%s4 + $0x18] sm:$0xff]
    %v588 = vld [vmem:[%s4 + $0x20] sm:$0xff]
    %v589 = vld [vmem:[%s4 + $0x28] sm:$0xff]
    %v590 = vld [vmem:[%s4 + $0x30] sm:$0xff]
    %v591 = vld [vmem:[%s4 + $0x38] sm:$0xff]
    %v592 = vld [vmem:[%s4 + $0x40] sm:$0xff]
    %v593 = vld [vmem:[%s4 + $0x48] sm:$0xff]
    %v594 = vld [vmem:[%s4 + $0x50] sm:$0xff]
    %v595 = vld [vmem:[%s4 + $0x58] sm:$0xff]
    %v596 = vld [vmem:[%s4 + $0x60] sm:$0xff]
    %v597 = vld [vmem:[%s4 + $0x68] sm:$0xff]
    %v598 = vld [vmem:[%s4 + $0x70] sm:$0xff]
    %v599 = vld [vmem:[%s4 + $0x78] sm:$0xff]
    %v632 = vunpack.c.l.b16 %v552
    %v633 = vunpack.c.l.b16 %v553
    %v634 = vunpack.c.l.b16 %v554
    %v635 = vunpack.c.l.b16 %v555
    %v636 = vunpack.c.l.b16 %v556
    %v637 = vunpack.c.l.b16 %v557
    %v638 = vunpack.c.l.b16 %v558
    %v639 = vunpack.c.l.b16 %v559
    %v640 = vunpack.c.l.b16 %v560
    %v641 = vunpack.c.l.b16 %v561
    %v642 = vunpack.c.l.b16 %v562
    %v643 = vunpack.c.l.b16 %v563
    %v644 = vunpack.c.l.b16 %v564
    %v645 = vunpack.c.l.b16 %v565
    %v646 = vunpack.c.l.b16 %v566
    %v647 = vunpack.c.l.b16 %v567
    %v648 = vunpack.c.l.b16 %v568
    %v649 = vunpack.c.l.b16 %v569
    %v650 = vunpack.c.l.b16 %v570
    %v651 = vunpack.c.l.b16 %v571
    %v652 = vunpack.c.l.b16 %v572
    %v653 = vunpack.c.l.b16 %v573
    %v654 = vunpack.c.l.b16 %v574
    %v655 = vunpack.c.l.b16 %v575
    %v656 = vunpack.c.l.b16 %v576
    %v657 = vunpack.c.l.b16 %v577
    %v658 = vunpack.c.l.b16 %v578
    %v659 = vunpack.c.l.b16 %v579
    %v660 = vunpack.c.l.b16 %v580
    %v661 = vunpack.c.l.b16 %v581
    %v662 = vunpack.c.l.b16 %v582
    %v663 = vunpack.c.l.b16 %v583
    %v664 = vpack.c.b16 %v633, %v632
    %v665 = vpack.c.b16 %v635, %v634
    %v666 = vpack.c.b16 %v637, %v636
    %v667 = vpack.c.b16 %v639, %v638
    %v668 = vpack.c.b16 %v641, %v640
    %v669 = vpack.c.b16 %v643, %v642
    %v670 = vpack.c.b16 %v645, %v644
    %v671 = vpack.c.b16 %v647, %v646
    %v672 = vpack.c.b16 %v649, %v648
    %v673 = vpack.c.b16 %v651, %v650
    %v674 = vpack.c.b16 %v653, %v652
    %v675 = vpack.c.b16 %v655, %v654
    %v676 = vpack.c.b16 %v657, %v656
    %v677 = vpack.c.b16 %v659, %v658
    %v678 = vpack.c.b16 %v661, %v660
    %v679 = vpack.c.b16 %v663, %v662
    %v696 = vunpack.c.l.b16 %v584
    %v697 = vunpack.c.h.b16 %v584
    %v698 = vunpack.c.l.b16 %v585
    %v699 = vunpack.c.h.b16 %v585
    %v700 = vunpack.c.l.b16 %v586
    %v701 = vunpack.c.h.b16 %v586
    %v702 = vunpack.c.l.b16 %v587
    %v703 = vunpack.c.h.b16 %v587
    %v704 = vunpack.c.l.b16 %v588
    %v705 = vunpack.c.h.b16 %v588
    %v706 = vunpack.c.l.b16 %v589
    %v707 = vunpack.c.h.b16 %v589
    %v708 = vunpack.c.l.b16 %v590
    %v709 = vunpack.c.h.b16 %v590
    %v710 = vunpack.c.l.b16 %v591
    %v711 = vunpack.c.h.b16 %v591
    %v712 = vunpack.c.l.b16 %v592
    %v713 = vunpack.c.h.b16 %v592
    %v714 = vunpack.c.l.b16 %v593
    %v715 = vunpack.c.h.b16 %v593
    %v716 = vunpack.c.l.b16 %v594
    %v717 = vunpack.c.h.b16 %v594
    %v718 = vunpack.c.l.b16 %v595
    %v719 = vunpack.c.h.b16 %v595
    %v720 = vunpack.c.l.b16 %v596
    %v721 = vunpack.c.h.b16 %v596
    %v722 = vunpack.c.l.b16 %v597
    %v723 = vunpack.c.h.b16 %v597
    %v724 = vunpack.c.l.b16 %v598
    %v725 = vunpack.c.h.b16 %v598
    %v726 = vunpack.c.l.b16 %v599
    %v727 = vunpack.c.h.b16 %v599
    %v728 = vpack.c.b16 %v704, %v696
    %v729 = vpack.c.b16 %v705, %v697
    %v730 = vpack.c.b16 %v706, %v698
    %v731 = vpack.c.b16 %v707, %v699
    %v732 = vpack.c.b16 %v708, %v700
    %v733 = vpack.c.b16 %v709, %v701
    %v734 = vpack.c.b16 %v710, %v702
    %v735 = vpack.c.b16 %v711, %v703
    %v736 = vpack.c.b16 %v720, %v712
    %v737 = vpack.c.b16 %v721, %v713
    %v738 = vpack.c.b16 %v722, %v714
    %v739 = vpack.c.b16 %v723, %v715
    %v740 = vpack.c.b16 %v724, %v716
    %v741 = vpack.c.b16 %v725, %v717
    %v742 = vpack.c.b16 %v726, %v718
    %v743 = vpack.c.b16 %v727, %v719
    %vm760 = vcmask 261120
    %v762 = vsel %vm760, %v664, 0
    %v765 = vsel %vm760, %v665, 0
    %v768 = vsel %vm760, %v666, 0
    %v771 = vsel %vm760, %v667, 0
    %v774 = vsel %vm760, %v668, 0
    %v777 = vsel %vm760, %v669, 0
    %v780 = vsel %vm760, %v670, 0
    %v783 = vsel %vm760, %v671, 0
    %v786 = vsel %vm760, %v672, 0
    %v789 = vsel %vm760, %v673, 0
    %v792 = vsel %vm760, %v674, 0
    %v795 = vsel %vm760, %v675, 0
    %v798 = vsel %vm760, %v676, 0
    %v801 = vsel %vm760, %v677, 0
    %v804 = vsel %vm760, %v678, 0
    %v807 = vsel %vm760, %v679, 0
    %809 = vmatprep.subr.bf16.mxu0 0
    %810 = vmatpush1.bf16.msra.mxu0 0
    %811 = vmatprep.subr.bf16.mxu0 0
    %812 = vmatpush1.bf16.msra.mxu0 0
    %813 = vmatprep.subr.bf16.mxu0 0
    %814 = vmatpush1.bf16.msra.mxu0 0
    %815 = vmatprep.subr.bf16.mxu0 0
    %816 = vmatpush1.bf16.msra.mxu0 0
    %817 = vmatprep.subr.bf16.mxu0 0
    %818 = vmatpush1.bf16.msra.mxu0 0
    %819 = vmatprep.subr.bf16.mxu0 0
    %820 = vmatpush1.bf16.msra.mxu0 0
    %821 = vmatprep.subr.bf16.mxu0 %v737
    %822 = vmatpush1.bf16.msra.mxu0 %v736
    %823 = vmatprep.subr.bf16.mxu0 %v729
    %824 = vmatpush1.bf16.msra.mxu0 %v728
    %825 = vmatprep.subr.bf16.mxu0 0
    %826 = vmatpush2.bf16.msra.mxu0 0
    %827 = vmatprep.subr.bf16.mxu0 0
    %828 = vmatpush2.bf16.msra.mxu0 0
    %829 = vmatprep.subr.bf16.mxu0 0
    %830 = vmatpush2.bf16.msra.mxu0 0
    %831 = vmatprep.subr.bf16.mxu0 0
    %832 = vmatpush2.bf16.msra.mxu0 0
    %833 = vmatprep.subr.bf16.mxu0 0
    %834 = vmatpush2.bf16.msra.mxu0 0
    %835 = vmatprep.subr.bf16.mxu0 0
    %836 = vmatpush2.bf16.msra.mxu0 0
    %837 = vmatprep.subr.bf16.mxu0 0
    %838 = vmatpush2.bf16.msra.mxu0 0
    %839 = vmatprep.subr.bf16.mxu0 0
    %840 = vmatpush2.bf16.msra.mxu0 0
    %841 = vmatprep.mubr.bf16.mxu0 0
    %842 = vmatmul.mubr.bf16.gmra.mxu0 %v762
    %v843 = vpop.f32.mrf.mxu0
    %v844 = vadd.f32 0.0, %v843
    %v845 = vpop.f32.mrf.mxu0
    %v846 = vadd.f32 0.0, %v845
    %v847 = vpop.f32.mrf.mxu0
    %v848 = vadd.f32 0.0, %v847
    %v849 = vpop.f32.mrf.mxu0
    %v850 = vadd.f32 0.0, %v849
    %851 = vmatprep.mubr.bf16.mxu0 0
    %852 = vmatmul.mubr.bf16.gmra.mxu0 %v765
    %v853 = vpop.f32.mrf.mxu0
    %v854 = vadd.f32 0.0, %v853
    %v855 = vpop.f32.mrf.mxu0
    %v856 = vadd.f32 0.0, %v855
    %v857 = vpop.f32.mrf.mxu0
    %v858 = vadd.f32 0.0, %v857
    %v859 = vpop.f32.mrf.mxu0
    %v860 = vadd.f32 0.0, %v859
    %861 = vmatprep.mubr.bf16.mxu0 0
    %862 = vmatmul.mubr.bf16.gmra.mxu0 %v768
    %v863 = vpop.f32.mrf.mxu0
    %v864 = vadd.f32 0.0, %v863
    %v865 = vpop.f32.mrf.mxu0
    %v866 = vadd.f32 0.0, %v865
    %v867 = vpop.f32.mrf.mxu0
    %v868 = vadd.f32 0.0, %v867
    %v869 = vpop.f32.mrf.mxu0
    %v870 = vadd.f32 0.0, %v869
    %871 = vmatprep.mubr.bf16.mxu0 0
    %872 = vmatmul.mubr.bf16.gmra.mxu0 %v771
    %v873 = vpop.f32.mrf.mxu0
    %v874 = vadd.f32 0.0, %v873
    %v875 = vpop.f32.mrf.mxu0
    %v876 = vadd.f32 0.0, %v875
    %v877 = vpop.f32.mrf.mxu0
    %v878 = vadd.f32 0.0, %v877
    %v879 = vpop.f32.mrf.mxu0
    %v880 = vadd.f32 0.0, %v879
    %881 = vmatprep.mubr.bf16.mxu0 0
    %882 = vmatmul.mubr.bf16.gmra.mxu0 %v774
    %v883 = vpop.f32.mrf.mxu0
    %v884 = vadd.f32 0.0, %v883
    %v885 = vpop.f32.mrf.mxu0
    %v886 = vadd.f32 0.0, %v885
    %v887 = vpop.f32.mrf.mxu0
    %v888 = vadd.f32 0.0, %v887
    %v889 = vpop.f32.mrf.mxu0
    %v890 = vadd.f32 0.0, %v889
    %891 = vmatprep.mubr.bf16.mxu0 0
    %892 = vmatmul.mubr.bf16.gmra.mxu0 %v777
    %v893 = vpop.f32.mrf.mxu0
    %v894 = vadd.f32 0.0, %v893
    %v895 = vpop.f32.mrf.mxu0
    %v896 = vadd.f32 0.0, %v895
    %v897 = vpop.f32.mrf.mxu0
    %v898 = vadd.f32 0.0, %v897
    %v899 = vpop.f32.mrf.mxu0
    %v900 = vadd.f32 0.0, %v899
    %901 = vmatprep.mubr.bf16.mxu0 0
    %902 = vmatmul.mubr.bf16.gmra.mxu0 %v780
    %v903 = vpop.f32.mrf.mxu0
    %v904 = vadd.f32 0.0, %v903
    %v905 = vpop.f32.mrf.mxu0
    %v906 = vadd.f32 0.0, %v905
    %v907 = vpop.f32.mrf.mxu0
    %v908 = vadd.f32 0.0, %v907
    %v909 = vpop.f32.mrf.mxu0
    %v910 = vadd.f32 0.0, %v909
    %911 = vmatprep.mubr.bf16.mxu0 0
    %912 = vmatmul.mubr.bf16.gmra.mxu0 %v783
    %v913 = vpop.f32.mrf.mxu0
    %v914 = vadd.f32 0.0, %v913
    %v915 = vpop.f32.mrf.mxu0
    %v916 = vadd.f32 0.0, %v915
    %v917 = vpop.f32.mrf.mxu0
    %v918 = vadd.f32 0.0, %v917
    %v919 = vpop.f32.mrf.mxu0
    %v920 = vadd.f32 0.0, %v919
    %921 = vmatprep.mubr.bf16.mxu0 0
    %922 = vmatmul.mubr.bf16.gmra.mxu0 %v786
    %v923 = vpop.f32.mrf.mxu0
    %v924 = vadd.f32 0.0, %v923
    %v925 = vpop.f32.mrf.mxu0
    %v926 = vadd.f32 0.0, %v925
    %v927 = vpop.f32.mrf.mxu0
    %v928 = vadd.f32 0.0, %v927
    %v929 = vpop.f32.mrf.mxu0
    %v930 = vadd.f32 0.0, %v929
    %931 = vmatprep.mubr.bf16.mxu0 0
    %932 = vmatmul.mubr.bf16.gmra.mxu0 %v789
    %v933 = vpop.f32.mrf.mxu0
    %v934 = vadd.f32 0.0, %v933
    %v935 = vpop.f32.mrf.mxu0
    %v936 = vadd.f32 0.0, %v935
    %v937 = vpop.f32.mrf.mxu0
    %v938 = vadd.f32 0.0, %v937
    %v939 = vpop.f32.mrf.mxu0
    %v940 = vadd.f32 0.0, %v939
    %941 = vmatprep.mubr.bf16.mxu0 0
    %942 = vmatmul.mubr.bf16.gmra.mxu0 %v792
    %v943 = vpop.f32.mrf.mxu0
    %v944 = vadd.f32 0.0, %v943
    %v945 = vpop.f32.mrf.mxu0
    %v946 = vadd.f32 0.0, %v945
    %v947 = vpop.f32.mrf.mxu0
    %v948 = vadd.f32 0.0, %v947
    %v949 = vpop.f32.mrf.mxu0
    %v950 = vadd.f32 0.0, %v949
    %951 = vmatprep.mubr.bf16.mxu0 0
    %952 = vmatmul.mubr.bf16.gmra.mxu0 %v795
    %v953 = vpop.f32.mrf.mxu0
    %v954 = vadd.f32 0.0, %v953
    %v955 = vpop.f32.mrf.mxu0
    %v956 = vadd.f32 0.0, %v955
    %v957 = vpop.f32.mrf.mxu0
    %v958 = vadd.f32 0.0, %v957
    %v959 = vpop.f32.mrf.mxu0
    %v960 = vadd.f32 0.0, %v959
    %961 = vmatprep.mubr.bf16.mxu0 0
    %962 = vmatmul.mubr.bf16.gmra.mxu0 %v798
    %v963 = vpop.f32.mrf.mxu0
    %v964 = vadd.f32 0.0, %v963
    %v965 = vpop.f32.mrf.mxu0
    %v966 = vadd.f32 0.0, %v965
    %v967 = vpop.f32.mrf.mxu0
    %v968 = vadd.f32 0.0, %v967
    %v969 = vpop.f32.mrf.mxu0
    %v970 = vadd.f32 0.0, %v969
    %971 = vmatprep.mubr.bf16.mxu0 0
    %972 = vmatmul.mubr.bf16.gmra.mxu0 %v801
    %v973 = vpop.f32.mrf.mxu0
    %v974 = vadd.f32 0.0, %v973
    %v975 = vpop.f32.mrf.mxu0
    %v976 = vadd.f32 0.0, %v975
    %v977 = vpop.f32.mrf.mxu0
    %v978 = vadd.f32 0.0, %v977
    %v979 = vpop.f32.mrf.mxu0
    %v980 = vadd.f32 0.0, %v979
    %981 = vmatprep.mubr.bf16.mxu0 0
    %982 = vmatmul.mubr.bf16.gmra.mxu0 %v804
    %v983 = vpop.f32.mrf.mxu0
    %v984 = vadd.f32 0.0, %v983
    %v985 = vpop.f32.mrf.mxu0
    %v986 = vadd.f32 0.0, %v985
    %v987 = vpop.f32.mrf.mxu0
    %v988 = vadd.f32 0.0, %v987
    %v989 = vpop.f32.mrf.mxu0
    %v990 = vadd.f32 0.0, %v989
    %991 = vmatprep.mubr.bf16.mxu0 0
    %992 = vmatmul.mubr.bf16.gmra.mxu0 %v807
    %v993 = vpop.f32.mrf.mxu0
    %v994 = vadd.f32 0.0, %v993
    %v995 = vpop.f32.mrf.mxu0
    %v996 = vadd.f32 0.0, %v995
    %v997 = vpop.f32.mrf.mxu0
    %v998 = vadd.f32 0.0, %v997
    %v999 = vpop.f32.mrf.mxu0
    %v1000 = vadd.f32 0.0, %v999
    %1001 = vdwg.mxu0
    %1002 = vmatprep.subr.bf16.mxu0 0
    %1003 = vmatpush1.bf16.msra.mxu0 0
    %1004 = vmatprep.subr.bf16.mxu0 0
    %1005 = vmatpush1.bf16.msra.mxu0 0
    %1006 = vmatprep.subr.bf16.mxu0 0
    %1007 = vmatpush1.bf16.msra.mxu0 0
    %1008 = vmatprep.subr.bf16.mxu0 0
    %1009 = vmatpush1.bf16.msra.mxu0 0
    %1010 = vmatprep.subr.bf16.mxu0 0
    %1011 = vmatpush1.bf16.msra.mxu0 0
    %1012 = vmatprep.subr.bf16.mxu0 0
    %1013 = vmatpush1.bf16.msra.mxu0 0
    %1014 = vmatprep.subr.bf16.mxu0 %v739
    %1015 = vmatpush1.bf16.msra.mxu0 %v738
    %1016 = vmatprep.subr.bf16.mxu0 %v731
    %1017 = vmatpush1.bf16.msra.mxu0 %v730
    %1018 = vmatprep.subr.bf16.mxu0 0
    %1019 = vmatpush2.bf16.msra.mxu0 0
    %1020 = vmatprep.subr.bf16.mxu0 0
    %1021 = vmatpush2.bf16.msra.mxu0 0
    %1022 = vmatprep.subr.bf16.mxu0 0
    %1023 = vmatpush2.bf16.msra.mxu0 0
    %1024 = vmatprep.subr.bf16.mxu0 0
    %1025 = vmatpush2.bf16.msra.mxu0 0
    %1026 = vmatprep.subr.bf16.mxu0 0
    %1027 = vmatpush2.bf16.msra.mxu0 0
    %1028 = vmatprep.subr.bf16.mxu0 0
    %1029 = vmatpush2.bf16.msra.mxu0 0
    %1030 = vmatprep.subr.bf16.mxu0 0
    %1031 = vmatpush2.bf16.msra.mxu0 0
    %1032 = vmatprep.subr.bf16.mxu0 0
    %1033 = vmatpush2.bf16.msra.mxu0 0
    %1034 = vmatprep.mubr.bf16.mxu0 0
    %1035 = vmatmul.mubr.bf16.gmra.mxu0 %v762
    %v1036 = vpop.f32.mrf.mxu0
    %v1037 = vadd.f32 0.0, %v1036
    %v1038 = vpop.f32.mrf.mxu0
    %v1039 = vadd.f32 0.0, %v1038
    %v1040 = vpop.f32.mrf.mxu0
    %v1041 = vadd.f32 0.0, %v1040
    %v1042 = vpop.f32.mrf.mxu0
    %v1043 = vadd.f32 0.0, %v1042
    %1044 = vmatprep.mubr.bf16.mxu0 0
    %1045 = vmatmul.mubr.bf16.gmra.mxu0 %v765
    %v1046 = vpop.f32.mrf.mxu0
    %v1047 = vadd.f32 0.0, %v1046
    %v1048 = vpop.f32.mrf.mxu0
    %v1049 = vadd.f32 0.0, %v1048
    %v1050 = vpop.f32.mrf.mxu0
    %v1051 = vadd.f32 0.0, %v1050
    %v1052 = vpop.f32.mrf.mxu0
    %v1053 = vadd.f32 0.0, %v1052
    %1054 = vmatprep.mubr.bf16.mxu0 0
    %1055 = vmatmul.mubr.bf16.gmra.mxu0 %v768
    %v1056 = vpop.f32.mrf.mxu0
    %v1057 = vadd.f32 0.0, %v1056
    %v1058 = vpop.f32.mrf.mxu0
    %v1059 = vadd.f32 0.0, %v1058
    %v1060 = vpop.f32.mrf.mxu0
    %v1061 = vadd.f32 0.0, %v1060
    %v1062 = vpop.f32.mrf.mxu0
    %v1063 = vadd.f32 0.0, %v1062
    %1064 = vmatprep.mubr.bf16.mxu0 0
    %1065 = vmatmul.mubr.bf16.gmra.mxu0 %v771
    %v1066 = vpop.f32.mrf.mxu0
    %v1067 = vadd.f32 0.0, %v1066
    %v1068 = vpop.f32.mrf.mxu0
    %v1069 = vadd.f32 0.0, %v1068
    %v1070 = vpop.f32.mrf.mxu0
    %v1071 = vadd.f32 0.0, %v1070
    %v1072 = vpop.f32.mrf.mxu0
    %v1073 = vadd.f32 0.0, %v1072
    %1074 = vmatprep.mubr.bf16.mxu0 0
    %1075 = vmatmul.mubr.bf16.gmra.mxu0 %v774
    %v1076 = vpop.f32.mrf.mxu0
    %v1077 = vadd.f32 0.0, %v1076
    %v1078 = vpop.f32.mrf.mxu0
    %v1079 = vadd.f32 0.0, %v1078
    %v1080 = vpop.f32.mrf.mxu0
    %v1081 = vadd.f32 0.0, %v1080
    %v1082 = vpop.f32.mrf.mxu0
    %v1083 = vadd.f32 0.0, %v1082
    %1084 = vmatprep.mubr.bf16.mxu0 0
    %1085 = vmatmul.mubr.bf16.gmra.mxu0 %v777
    %v1086 = vpop.f32.mrf.mxu0
    %v1087 = vadd.f32 0.0, %v1086
    %v1088 = vpop.f32.mrf.mxu0
    %v1089 = vadd.f32 0.0, %v1088
    %v1090 = vpop.f32.mrf.mxu0
    %v1091 = vadd.f32 0.0, %v1090
    %v1092 = vpop.f32.mrf.mxu0
    %v1093 = vadd.f32 0.0, %v1092
    %1094 = vmatprep.mubr.bf16.mxu0 0
    %1095 = vmatmul.mubr.bf16.gmra.mxu0 %v780
    %v1096 = vpop.f32.mrf.mxu0
    %v1097 = vadd.f32 0.0, %v1096
    %v1098 = vpop.f32.mrf.mxu0
    %v1099 = vadd.f32 0.0, %v1098
    %v1100 = vpop.f32.mrf.mxu0
    %v1101 = vadd.f32 0.0, %v1100
    %v1102 = vpop.f32.mrf.mxu0
    %v1103 = vadd.f32 0.0, %v1102
    %1104 = vmatprep.mubr.bf16.mxu0 0
    %1105 = vmatmul.mubr.bf16.gmra.mxu0 %v783
    %v1106 = vpop.f32.mrf.mxu0
    %v1107 = vadd.f32 0.0, %v1106
    %v1108 = vpop.f32.mrf.mxu0
    %v1109 = vadd.f32 0.0, %v1108
    %v1110 = vpop.f32.mrf.mxu0
    %v1111 = vadd.f32 0.0, %v1110
    %v1112 = vpop.f32.mrf.mxu0
    %v1113 = vadd.f32 0.0, %v1112
    %1114 = vmatprep.mubr.bf16.mxu0 0
    %1115 = vmatmul.mubr.bf16.gmra.mxu0 %v786
    %v1116 = vpop.f32.mrf.mxu0
    %v1117 = vadd.f32 0.0, %v1116
    %v1118 = vpop.f32.mrf.mxu0
    %v1119 = vadd.f32 0.0, %v1118
    %v1120 = vpop.f32.mrf.mxu0
    %v1121 = vadd.f32 0.0, %v1120
    %v1122 = vpop.f32.mrf.mxu0
    %v1123 = vadd.f32 0.0, %v1122
    %1124 = vmatprep.mubr.bf16.mxu0 0
    %1125 = vmatmul.mubr.bf16.gmra.mxu0 %v789
    %v1126 = vpop.f32.mrf.mxu0
    %v1127 = vadd.f32 0.0, %v1126
    %v1128 = vpop.f32.mrf.mxu0
    %v1129 = vadd.f32 0.0, %v1128
    %v1130 = vpop.f32.mrf.mxu0
    %v1131 = vadd.f32 0.0, %v1130
    %v1132 = vpop.f32.mrf.mxu0
    %v1133 = vadd.f32 0.0, %v1132
    %1134 = vmatprep.mubr.bf16.mxu0 0
    %1135 = vmatmul.mubr.bf16.gmra.mxu0 %v792
    %v1136 = vpop.f32.mrf.mxu0
    %v1137 = vadd.f32 0.0, %v1136
    %v1138 = vpop.f32.mrf.mxu0
    %v1139 = vadd.f32 0.0, %v1138
    %v1140 = vpop.f32.mrf.mxu0
    %v1141 = vadd.f32 0.0, %v1140
    %v1142 = vpop.f32.mrf.mxu0
    %v1143 = vadd.f32 0.0, %v1142
    %1144 = vmatprep.mubr.bf16.mxu0 0
    %1145 = vmatmul.mubr.bf16.gmra.mxu0 %v795
    %v1146 = vpop.f32.mrf.mxu0
    %v1147 = vadd.f32 0.0, %v1146
    %v1148 = vpop.f32.mrf.mxu0
    %v1149 = vadd.f32 0.0, %v1148
    %v1150 = vpop.f32.mrf.mxu0
    %v1151 = vadd.f32 0.0, %v1150
    %v1152 = vpop.f32.mrf.mxu0
    %v1153 = vadd.f32 0.0, %v1152
    %1154 = vmatprep.mubr.bf16.mxu0 0
    %1155 = vmatmul.mubr.bf16.gmra.mxu0 %v798
    %v1156 = vpop.f32.mrf.mxu0
    %v1157 = vadd.f32 0.0, %v1156
    %v1158 = vpop.f32.mrf.mxu0
    %v1159 = vadd.f32 0.0, %v1158
    %v1160 = vpop.f32.mrf.mxu0
    %v1161 = vadd.f32 0.0, %v1160
    %v1162 = vpop.f32.mrf.mxu0
    %v1163 = vadd.f32 0.0, %v1162
    %1164 = vmatprep.mubr.bf16.mxu0 0
    %1165 = vmatmul.mubr.bf16.gmra.mxu0 %v801
    %v1166 = vpop.f32.mrf.mxu0
    %v1167 = vadd.f32 0.0, %v1166
    %v1168 = vpop.f32.mrf.mxu0
    %v1169 = vadd.f32 0.0, %v1168
    %v1170 = vpop.f32.mrf.mxu0
    %v1171 = vadd.f32 0.0, %v1170
    %v1172 = vpop.f32.mrf.mxu0
    %v1173 = vadd.f32 0.0, %v1172
    %1174 = vmatprep.mubr.bf16.mxu0 0
    %1175 = vmatmul.mubr.bf16.gmra.mxu0 %v804
    %v1176 = vpop.f32.mrf.mxu0
    %v1177 = vadd.f32 0.0, %v1176
    %v1178 = vpop.f32.mrf.mxu0
    %v1179 = vadd.f32 0.0, %v1178
    %v1180 = vpop.f32.mrf.mxu0
    %v1181 = vadd.f32 0.0, %v1180
    %v1182 = vpop.f32.mrf.mxu0
    %v1183 = vadd.f32 0.0, %v1182
    %1184 = vmatprep.mubr.bf16.mxu0 0
    %1185 = vmatmul.mubr.bf16.gmra.mxu0 %v807
    %v1186 = vpop.f32.mrf.mxu0
    %v1187 = vadd.f32 0.0, %v1186
    %v1188 = vpop.f32.mrf.mxu0
    %v1189 = vadd.f32 0.0, %v1188
    %v1190 = vpop.f32.mrf.mxu0
    %v1191 = vadd.f32 0.0, %v1190
    %v1192 = vpop.f32.mrf.mxu0
    %v1193 = vadd.f32 0.0, %v1192
    %1194 = vdwg.mxu0
    %1195 = vmatprep.subr.bf16.mxu0 0
    %1196 = vmatpush1.bf16.msra.mxu0 0
    %1197 = vmatprep.subr.bf16.mxu0 0
    %1198 = vmatpush1.bf16.msra.mxu0 0
    %1199 = vmatprep.subr.bf16.mxu0 0
    %1200 = vmatpush1.bf16.msra.mxu0 0
    %1201 = vmatprep.subr.bf16.mxu0 0
    %1202 = vmatpush1.bf16.msra.mxu0 0
    %1203 = vmatprep.subr.bf16.mxu0 0
    %1204 = vmatpush1.bf16.msra.mxu0 0
    %1205 = vmatprep.subr.bf16.mxu0 0
    %1206 = vmatpush1.bf16.msra.mxu0 0
    %1207 = vmatprep.subr.bf16.mxu0 %v741
    %1208 = vmatpush1.bf16.msra.mxu0 %v740
    %1209 = vmatprep.subr.bf16.mxu0 %v733
    %1210 = vmatpush1.bf16.msra.mxu0 %v732
    %1211 = vmatprep.subr.bf16.mxu0 0
    %1212 = vmatpush2.bf16.msra.mxu0 0
    %1213 = vmatprep.subr.bf16.mxu0 0
    %1214 = vmatpush2.bf16.msra.mxu0 0
    %1215 = vmatprep.subr.bf16.mxu0 0
    %1216 = vmatpush2.bf16.msra.mxu0 0
    %1217 = vmatprep.subr.bf16.mxu0 0
    %1218 = vmatpush2.bf16.msra.mxu0 0
    %1219 = vmatprep.subr.bf16.mxu0 0
    %1220 = vmatpush2.bf16.msra.mxu0 0
    %1221 = vmatprep.subr.bf16.mxu0 0
    %1222 = vmatpush2.bf16.msra.mxu0 0
    %1223 = vmatprep.subr.bf16.mxu0 0
    %1224 = vmatpush2.bf16.msra.mxu0 0
    %1225 = vmatprep.subr.bf16.mxu0 0
    %1226 = vmatpush2.bf16.msra.mxu0 0
    %1227 = vmatprep.mubr.bf16.mxu0 0
    %1228 = vmatmul.mubr.bf16.gmra.mxu0 %v762
    %v1229 = vpop.f32.mrf.mxu0
    %v1230 = vadd.f32 0.0, %v1229
    %v1231 = vpop.f32.mrf.mxu0
    %v1232 = vadd.f32 0.0, %v1231
    %v1233 = vpop.f32.mrf.mxu0
    %v1234 = vadd.f32 0.0, %v1233
    %v1235 = vpop.f32.mrf.mxu0
    %v1236 = vadd.f32 0.0, %v1235
    %1237 = vmatprep.mubr.bf16.mxu0 0
    %1238 = vmatmul.mubr.bf16.gmra.mxu0 %v765
    %v1239 = vpop.f32.mrf.mxu0
    %v1240 = vadd.f32 0.0, %v1239
    %v1241 = vpop.f32.mrf.mxu0
    %v1242 = vadd.f32 0.0, %v1241
    %v1243 = vpop.f32.mrf.mxu0
    %v1244 = vadd.f32 0.0, %v1243
    %v1245 = vpop.f32.mrf.mxu0
    %v1246 = vadd.f32 0.0, %v1245
    %1247 = vmatprep.mubr.bf16.mxu0 0
    %1248 = vmatmul.mubr.bf16.gmra.mxu0 %v768
    %v1249 = vpop.f32.mrf.mxu0
    %v1250 = vadd.f32 0.0, %v1249
    %v1251 = vpop.f32.mrf.mxu0
    %v1252 = vadd.f32 0.0, %v1251
    %v1253 = vpop.f32.mrf.mxu0
    %v1254 = vadd.f32 0.0, %v1253
    %v1255 = vpop.f32.mrf.mxu0
    %v1256 = vadd.f32 0.0, %v1255
    %1257 = vmatprep.mubr.bf16.mxu0 0
    %1258 = vmatmul.mubr.bf16.gmra.mxu0 %v771
    %v1259 = vpop.f32.mrf.mxu0
    %v1260 = vadd.f32 0.0, %v1259
    %v1261 = vpop.f32.mrf.mxu0
    %v1262 = vadd.f32 0.0, %v1261
    %v1263 = vpop.f32.mrf.mxu0
    %v1264 = vadd.f32 0.0, %v1263
    %v1265 = vpop.f32.mrf.mxu0
    %v1266 = vadd.f32 0.0, %v1265
    %1267 = vmatprep.mubr.bf16.mxu0 0
    %1268 = vmatmul.mubr.bf16.gmra.mxu0 %v774
    %v1269 = vpop.f32.mrf.mxu0
    %v1270 = vadd.f32 0.0, %v1269
    %v1271 = vpop.f32.mrf.mxu0
    %v1272 = vadd.f32 0.0, %v1271
    %v1273 = vpop.f32.mrf.mxu0
    %v1274 = vadd.f32 0.0, %v1273
    %v1275 = vpop.f32.mrf.mxu0
    %v1276 = vadd.f32 0.0, %v1275
    %1277 = vmatprep.mubr.bf16.mxu0 0
    %1278 = vmatmul.mubr.bf16.gmra.mxu0 %v777
    %v1279 = vpop.f32.mrf.mxu0
    %v1280 = vadd.f32 0.0, %v1279
    %v1281 = vpop.f32.mrf.mxu0
    %v1282 = vadd.f32 0.0, %v1281
    %v1283 = vpop.f32.mrf.mxu0
    %v1284 = vadd.f32 0.0, %v1283
    %v1285 = vpop.f32.mrf.mxu0
    %v1286 = vadd.f32 0.0, %v1285
    %1287 = vmatprep.mubr.bf16.mxu0 0
    %1288 = vmatmul.mubr.bf16.gmra.mxu0 %v780
    %v1289 = vpop.f32.mrf.mxu0
    %v1290 = vadd.f32 0.0, %v1289
    %v1291 = vpop.f32.mrf.mxu0
    %v1292 = vadd.f32 0.0, %v1291
    %v1293 = vpop.f32.mrf.mxu0
    %v1294 = vadd.f32 0.0, %v1293
    %v1295 = vpop.f32.mrf.mxu0
    %v1296 = vadd.f32 0.0, %v1295
    %1297 = vmatprep.mubr.bf16.mxu0 0
    %1298 = vmatmul.mubr.bf16.gmra.mxu0 %v783
    %v1299 = vpop.f32.mrf.mxu0
    %v1300 = vadd.f32 0.0, %v1299
    %v1301 = vpop.f32.mrf.mxu0
    %v1302 = vadd.f32 0.0, %v1301
    %v1303 = vpop.f32.mrf.mxu0
    %v1304 = vadd.f32 0.0, %v1303
    %v1305 = vpop.f32.mrf.mxu0
    %v1306 = vadd.f32 0.0, %v1305
    %1307 = vmatprep.mubr.bf16.mxu0 0
    %1308 = vmatmul.mubr.bf16.gmra.mxu0 %v786
    %v1309 = vpop.f32.mrf.mxu0
    %v1310 = vadd.f32 0.0, %v1309
    %v1311 = vpop.f32.mrf.mxu0
    %v1312 = vadd.f32 0.0, %v1311
    %v1313 = vpop.f32.mrf.mxu0
    %v1314 = vadd.f32 0.0, %v1313
    %v1315 = vpop.f32.mrf.mxu0
    %v1316 = vadd.f32 0.0, %v1315
    %1317 = vmatprep.mubr.bf16.mxu0 0
    %1318 = vmatmul.mubr.bf16.gmra.mxu0 %v789
    %v1319 = vpop.f32.mrf.mxu0
    %v1320 = vadd.f32 0.0, %v1319
    %v1321 = vpop.f32.mrf.mxu0
    %v1322 = vadd.f32 0.0, %v1321
    %v1323 = vpop.f32.mrf.mxu0
    %v1324 = vadd.f32 0.0, %v1323
    %v1325 = vpop.f32.mrf.mxu0
    %v1326 = vadd.f32 0.0, %v1325
    %1327 = vmatprep.mubr.bf16.mxu0 0
    %1328 = vmatmul.mubr.bf16.gmra.mxu0 %v792
    %v1329 = vpop.f32.mrf.mxu0
    %v1330 = vadd.f32 0.0, %v1329
    %v1331 = vpop.f32.mrf.mxu0
    %v1332 = vadd.f32 0.0, %v1331
    %v1333 = vpop.f32.mrf.mxu0
    %v1334 = vadd.f32 0.0, %v1333
    %v1335 = vpop.f32.mrf.mxu0
    %v1336 = vadd.f32 0.0, %v1335
    %1337 = vmatprep.mubr.bf16.mxu0 0
    %1338 = vmatmul.mubr.bf16.gmra.mxu0 %v795
    %v1339 = vpop.f32.mrf.mxu0
    %v1340 = vadd.f32 0.0, %v1339
    %v1341 = vpop.f32.mrf.mxu0
    %v1342 = vadd.f32 0.0, %v1341
    %v1343 = vpop.f32.mrf.mxu0
    %v1344 = vadd.f32 0.0, %v1343
    %v1345 = vpop.f32.mrf.mxu0
    %v1346 = vadd.f32 0.0, %v1345
    %1347 = vmatprep.mubr.bf16.mxu0 0
    %1348 = vmatmul.mubr.bf16.gmra.mxu0 %v798
    %v1349 = vpop.f32.mrf.mxu0
    %v1350 = vadd.f32 0.0, %v1349
    %v1351 = vpop.f32.mrf.mxu0
    %v1352 = vadd.f32 0.0, %v1351
    %v1353 = vpop.f32.mrf.mxu0
    %v1354 = vadd.f32 0.0, %v1353
    %v1355 = vpop.f32.mrf.mxu0
    %v1356 = vadd.f32 0.0, %v1355
    %1357 = vmatprep.mubr.bf16.mxu0 0
    %1358 = vmatmul.mubr.bf16.gmra.mxu0 %v801
    %v1359 = vpop.f32.mrf.mxu0
    %v1360 = vadd.f32 0.0, %v1359
    %v1361 = vpop.f32.mrf.mxu0
    %v1362 = vadd.f32 0.0, %v1361
    %v1363 = vpop.f32.mrf.mxu0
    %v1364 = vadd.f32 0.0, %v1363
    %v1365 = vpop.f32.mrf.mxu0
    %v1366 = vadd.f32 0.0, %v1365
    %1367 = vmatprep.mubr.bf16.mxu0 0
    %1368 = vmatmul.mubr.bf16.gmra.mxu0 %v804
    %v1369 = vpop.f32.mrf.mxu0
    %v1370 = vadd.f32 0.0, %v1369
    %v1371 = vpop.f32.mrf.mxu0
    %v1372 = vadd.f32 0.0, %v1371
    %v1373 = vpop.f32.mrf.mxu0
    %v1374 = vadd.f32 0.0, %v1373
    %v1375 = vpop.f32.mrf.mxu0
    %v1376 = vadd.f32 0.0, %v1375
    %1377 = vmatprep.mubr.bf16.mxu0 0
    %1378 = vmatmul.mubr.bf16.gmra.mxu0 %v807
    %v1379 = vpop.f32.mrf.mxu0
    %v1380 = vadd.f32 0.0, %v1379
    %v1381 = vpop.f32.mrf.mxu0
    %v1382 = vadd.f32 0.0, %v1381
    %v1383 = vpop.f32.mrf.mxu0
    %v1384 = vadd.f32 0.0, %v1383
    %v1385 = vpop.f32.mrf.mxu0
    %v1386 = vadd.f32 0.0, %v1385
    %1387 = vdwg.mxu0
    %1388 = vmatprep.subr.bf16.mxu0 0
    %1389 = vmatpush1.bf16.msra.mxu0 0
    %1390 = vmatprep.subr.bf16.mxu0 0
    %1391 = vmatpush1.bf16.msra.mxu0 0
    %1392 = vmatprep.subr.bf16.mxu0 0
    %1393 = vmatpush1.bf16.msra.mxu0 0
    %1394 = vmatprep.subr.bf16.mxu0 0
    %1395 = vmatpush1.bf16.msra.mxu0 0
    %1396 = vmatprep.subr.bf16.mxu0 0
    %1397 = vmatpush1.bf16.msra.mxu0 0
    %1398 = vmatprep.subr.bf16.mxu0 0
    %1399 = vmatpush1.bf16.msra.mxu0 0
    %1400 = vmatprep.subr.bf16.mxu0 %v743
    %1401 = vmatpush1.bf16.msra.mxu0 %v742
    %1402 = vmatprep.subr.bf16.mxu0 %v735
    %1403 = vmatpush1.bf16.msra.mxu0 %v734
    %1404 = vmatprep.subr.bf16.mxu0 0
    %1405 = vmatpush2.bf16.msra.mxu0 0
    %1406 = vmatprep.subr.bf16.mxu0 0
    %1407 = vmatpush2.bf16.msra.mxu0 0
    %1408 = vmatprep.subr.bf16.mxu0 0
    %1409 = vmatpush2.bf16.msra.mxu0 0
    %1410 = vmatprep.subr.bf16.mxu0 0
    %1411 = vmatpush2.bf16.msra.mxu0 0
    %1412 = vmatprep.subr.bf16.mxu0 0
    %1413 = vmatpush2.bf16.msra.mxu0 0
    %1414 = vmatprep.subr.bf16.mxu0 0
    %1415 = vmatpush2.bf16.msra.mxu0 0
    %1416 = vmatprep.subr.bf16.mxu0 0
    %1417 = vmatpush2.bf16.msra.mxu0 0
    %1418 = vmatprep.subr.bf16.mxu0 0
    %1419 = vmatpush2.bf16.msra.mxu0 0
    %1420 = vmatprep.mubr.bf16.mxu0 0
    %1421 = vmatmul.mubr.bf16.gmra.mxu0 %v762
    %v1422 = vpop.f32.mrf.mxu0
    %v1423 = vadd.f32 0.0, %v1422
    %v1424 = vpop.f32.mrf.mxu0
    %v1425 = vadd.f32 0.0, %v1424
    %v1426 = vpop.f32.mrf.mxu0
    %v1427 = vadd.f32 0.0, %v1426
    %v1428 = vpop.f32.mrf.mxu0
    %v1429 = vadd.f32 0.0, %v1428
    %1430 = vmatprep.mubr.bf16.mxu0 0
    %1431 = vmatmul.mubr.bf16.gmra.mxu0 %v765
    %v1432 = vpop.f32.mrf.mxu0
    %v1433 = vadd.f32 0.0, %v1432
    %v1434 = vpop.f32.mrf.mxu0
    %v1435 = vadd.f32 0.0, %v1434
    %v1436 = vpop.f32.mrf.mxu0
    %v1437 = vadd.f32 0.0, %v1436
    %v1438 = vpop.f32.mrf.mxu0
    %v1439 = vadd.f32 0.0, %v1438
    %1440 = vmatprep.mubr.bf16.mxu0 0
    %1441 = vmatmul.mubr.bf16.gmra.mxu0 %v768
    %v1442 = vpop.f32.mrf.mxu0
    %v1443 = vadd.f32 0.0, %v1442
    %v1444 = vpop.f32.mrf.mxu0
    %v1445 = vadd.f32 0.0, %v1444
    %v1446 = vpop.f32.mrf.mxu0
    %v1447 = vadd.f32 0.0, %v1446
    %v1448 = vpop.f32.mrf.mxu0
    %v1449 = vadd.f32 0.0, %v1448
    %1450 = vmatprep.mubr.bf16.mxu0 0
    %1451 = vmatmul.mubr.bf16.gmra.mxu0 %v771
    %v1452 = vpop.f32.mrf.mxu0
    %v1453 = vadd.f32 0.0, %v1452
    %v1454 = vpop.f32.mrf.mxu0
    %v1455 = vadd.f32 0.0, %v1454
    %v1456 = vpop.f32.mrf.mxu0
    %v1457 = vadd.f32 0.0, %v1456
    %v1458 = vpop.f32.mrf.mxu0
    %v1459 = vadd.f32 0.0, %v1458
    %1460 = vmatprep.mubr.bf16.mxu0 0
    %1461 = vmatmul.mubr.bf16.gmra.mxu0 %v774
    %v1462 = vpop.f32.mrf.mxu0
    %v1463 = vadd.f32 0.0, %v1462
    %v1464 = vpop.f32.mrf.mxu0
    %v1465 = vadd.f32 0.0, %v1464
    %v1466 = vpop.f32.mrf.mxu0
    %v1467 = vadd.f32 0.0, %v1466
    %v1468 = vpop.f32.mrf.mxu0
    %v1469 = vadd.f32 0.0, %v1468
    %1470 = vmatprep.mubr.bf16.mxu0 0
    %1471 = vmatmul.mubr.bf16.gmra.mxu0 %v777
    %v1472 = vpop.f32.mrf.mxu0
    %v1473 = vadd.f32 0.0, %v1472
    %v1474 = vpop.f32.mrf.mxu0
    %v1475 = vadd.f32 0.0, %v1474
    %v1476 = vpop.f32.mrf.mxu0
    %v1477 = vadd.f32 0.0, %v1476
    %v1478 = vpop.f32.mrf.mxu0
    %v1479 = vadd.f32 0.0, %v1478
    %1480 = vmatprep.mubr.bf16.mxu0 0
    %1481 = vmatmul.mubr.bf16.gmra.mxu0 %v780
    %v1482 = vpop.f32.mrf.mxu0
    %v1483 = vadd.f32 0.0, %v1482
    %v1484 = vpop.f32.mrf.mxu0
    %v1485 = vadd.f32 0.0, %v1484
    %v1486 = vpop.f32.mrf.mxu0
    %v1487 = vadd.f32 0.0, %v1486
    %v1488 = vpop.f32.mrf.mxu0
    %v1489 = vadd.f32 0.0, %v1488
    %1490 = vmatprep.mubr.bf16.mxu0 0
    %1491 = vmatmul.mubr.bf16.gmra.mxu0 %v783
    %v1492 = vpop.f32.mrf.mxu0
    %v1493 = vadd.f32 0.0, %v1492
    %v1494 = vpop.f32.mrf.mxu0
    %v1495 = vadd.f32 0.0, %v1494
    %v1496 = vpop.f32.mrf.mxu0
    %v1497 = vadd.f32 0.0, %v1496
    %v1498 = vpop.f32.mrf.mxu0
    %v1499 = vadd.f32 0.0, %v1498
    %1500 = vmatprep.mubr.bf16.mxu0 0
    %1501 = vmatmul.mubr.bf16.gmra.mxu0 %v786
    %v1502 = vpop.f32.mrf.mxu0
    %v1503 = vadd.f32 0.0, %v1502
    %v1504 = vpop.f32.mrf.mxu0
    %v1505 = vadd.f32 0.0, %v1504
    %v1506 = vpop.f32.mrf.mxu0
    %v1507 = vadd.f32 0.0, %v1506
    %v1508 = vpop.f32.mrf.mxu0
    %v1509 = vadd.f32 0.0, %v1508
    %1510 = vmatprep.mubr.bf16.mxu0 0
    %1511 = vmatmul.mubr.bf16.gmra.mxu0 %v789
    %v1512 = vpop.f32.mrf.mxu0
    %v1513 = vadd.f32 0.0, %v1512
    %v1514 = vpop.f32.mrf.mxu0
    %v1515 = vadd.f32 0.0, %v1514
    %v1516 = vpop.f32.mrf.mxu0
    %v1517 = vadd.f32 0.0, %v1516
    %v1518 = vpop.f32.mrf.mxu0
    %v1519 = vadd.f32 0.0, %v1518
    %1520 = vmatprep.mubr.bf16.mxu0 0
    %1521 = vmatmul.mubr.bf16.gmra.mxu0 %v792
    %v1522 = vpop.f32.mrf.mxu0
    %v1523 = vadd.f32 0.0, %v1522
    %v1524 = vpop.f32.mrf.mxu0
    %v1525 = vadd.f32 0.0, %v1524
    %v1526 = vpop.f32.mrf.mxu0
    %v1527 = vadd.f32 0.0, %v1526
    %v1528 = vpop.f32.mrf.mxu0
    %v1529 = vadd.f32 0.0, %v1528
    %1530 = vmatprep.mubr.bf16.mxu0 0
    %1531 = vmatmul.mubr.bf16.gmra.mxu0 %v795
    %v1532 = vpop.f32.mrf.mxu0
    %v1533 = vadd.f32 0.0, %v1532
    %v1534 = vpop.f32.mrf.mxu0
    %v1535 = vadd.f32 0.0, %v1534
    %v1536 = vpop.f32.mrf.mxu0
    %v1537 = vadd.f32 0.0, %v1536
    %v1538 = vpop.f32.mrf.mxu0
    %v1539 = vadd.f32 0.0, %v1538
    %1540 = vmatprep.mubr.bf16.mxu0 0
    %1541 = vmatmul.mubr.bf16.gmra.mxu0 %v798
    %v1542 = vpop.f32.mrf.mxu0
    %v1543 = vadd.f32 0.0, %v1542
    %v1544 = vpop.f32.mrf.mxu0
    %v1545 = vadd.f32 0.0, %v1544
    %v1546 = vpop.f32.mrf.mxu0
    %v1547 = vadd.f32 0.0, %v1546
    %v1548 = vpop.f32.mrf.mxu0
    %v1549 = vadd.f32 0.0, %v1548
    %1550 = vmatprep.mubr.bf16.mxu0 0
    %1551 = vmatmul.mubr.bf16.gmra.mxu0 %v801
    %v1552 = vpop.f32.mrf.mxu0
    %v1553 = vadd.f32 0.0, %v1552
    %v1554 = vpop.f32.mrf.mxu0
    %v1555 = vadd.f32 0.0, %v1554
    %v1556 = vpop.f32.mrf.mxu0
    %v1557 = vadd.f32 0.0, %v1556
    %v1558 = vpop.f32.mrf.mxu0
    %v1559 = vadd.f32 0.0, %v1558
    %1560 = vmatprep.mubr.bf16.mxu0 0
    %1561 = vmatmul.mubr.bf16.gmra.mxu0 %v804
    %v1562 = vpop.f32.mrf.mxu0
    %v1563 = vadd.f32 0.0, %v1562
    %v1564 = vpop.f32.mrf.mxu0
    %v1565 = vadd.f32 0.0, %v1564
    %v1566 = vpop.f32.mrf.mxu0
    %v1567 = vadd.f32 0.0, %v1566
    %v1568 = vpop.f32.mrf.mxu0
    %v1569 = vadd.f32 0.0, %v1568
    %1570 = vmatprep.mubr.bf16.mxu0 0
    %1571 = vmatmul.mubr.bf16.gmra.mxu0 %v807
    %v1572 = vpop.f32.mrf.mxu0
    %v1573 = vadd.f32 0.0, %v1572
    %v1574 = vpop.f32.mrf.mxu0
    %v1575 = vadd.f32 0.0, %v1574
    %v1576 = vpop.f32.mrf.mxu0
    %v1577 = vadd.f32 0.0, %v1576
    %v1578 = vpop.f32.mrf.mxu0
    %v1579 = vadd.f32 0.0, %v1578
    %1580 = vdwg.mxu0
    %1581 = vadd.xlane.f32.xlu0 %v520
    %v1582 = vpop.xlane.xlu0 %1581
    %1583 = vadd.xlane.f32.xlu0 %v521
    %v1584 = vpop.xlane.xlu0 %1583
    %1585 = vadd.xlane.f32.xlu0 %v522
    %v1586 = vpop.xlane.xlu0 %1585
    %1587 = vadd.xlane.f32.xlu0 %v523
    %v1588 = vpop.xlane.xlu0 %1587
    %1589 = vadd.xlane.f32.xlu0 %v524
    %v1590 = vpop.xlane.xlu0 %1589
    %1591 = vadd.xlane.f32.xlu0 %v525
    %v1592 = vpop.xlane.xlu0 %1591
    %1593 = vadd.xlane.f32.xlu0 %v526
    %v1594 = vpop.xlane.xlu0 %1593
    %1595 = vadd.xlane.f32.xlu0 %v527
    %v1596 = vpop.xlane.xlu0 %1595
    %1597 = vadd.xlane.f32.xlu0 %v528
    %v1598 = vpop.xlane.xlu0 %1597
    %1599 = vadd.xlane.f32.xlu0 %v529
    %v1600 = vpop.xlane.xlu0 %1599
    %1601 = vadd.xlane.f32.xlu0 %v530
    %v1602 = vpop.xlane.xlu0 %1601
    %1603 = vadd.xlane.f32.xlu0 %v531
    %v1604 = vpop.xlane.xlu0 %1603
    %1605 = vadd.xlane.f32.xlu0 %v532
    %v1606 = vpop.xlane.xlu0 %1605
    %1607 = vadd.xlane.f32.xlu0 %v533
    %v1608 = vpop.xlane.xlu0 %1607
    %1609 = vadd.xlane.f32.xlu0 %v534
    %v1610 = vpop.xlane.xlu0 %1609
    %1611 = vadd.xlane.f32.xlu0 %v535
    %v1612 = vpop.xlane.xlu0 %1611
    %1613 = vadd.xlane.f32.xlu0 %v536
    %v1614 = vpop.xlane.xlu0 %1613
    %1615 = vadd.xlane.f32.xlu0 %v537
    %v1616 = vpop.xlane.xlu0 %1615
    %1617 = vadd.xlane.f32.xlu0 %v538
    %v1618 = vpop.xlane.xlu0 %1617
    %1619 = vadd.xlane.f32.xlu0 %v539
    %v1620 = vpop.xlane.xlu0 %1619
    %1621 = vadd.xlane.f32.xlu0 %v540
    %v1622 = vpop.xlane.xlu0 %1621
    %1623 = vadd.xlane.f32.xlu0 %v541
    %v1624 = vpop.xlane.xlu0 %1623
    %1625 = vadd.xlane.f32.xlu0 %v542
    %v1626 = vpop.xlane.xlu0 %1625
    %1627 = vadd.xlane.f32.xlu0 %v543
    %v1628 = vpop.xlane.xlu0 %1627
    %1629 = vadd.xlane.f32.xlu0 %v544
    %v1630 = vpop.xlane.xlu0 %1629
    %1631 = vadd.xlane.f32.xlu0 %v545
    %v1632 = vpop.xlane.xlu0 %1631
    %1633 = vadd.xlane.f32.xlu0 %v546
    %v1634 = vpop.xlane.xlu0 %1633
    %1635 = vadd.xlane.f32.xlu0 %v547
    %v1636 = vpop.xlane.xlu0 %1635
    %1637 = vadd.xlane.f32.xlu0 %v548
    %v1638 = vpop.xlane.xlu0 %1637
    %1639 = vadd.xlane.f32.xlu0 %v549
    %v1640 = vpop.xlane.xlu0 %1639
    %1641 = vadd.xlane.f32.xlu0 %v550
    %v1642 = vpop.xlane.xlu0 %1641
    %1643 = vadd.xlane.f32.xlu0 %v551
    %v1644 = vpop.xlane.xlu0 %1643
    %v1645 = vrcp.pop 128.0
    %v1646 = vmul.f32 %v1582, %v1645
    %v1647 = vmul.f32 %v1584, %v1645
    %v1648 = vmul.f32 %v1586, %v1645
    %v1649 = vmul.f32 %v1588, %v1645
    %v1650 = vmul.f32 %v1590, %v1645
    %v1651 = vmul.f32 %v1592, %v1645
    %v1652 = vmul.f32 %v1594, %v1645
    %v1653 = vmul.f32 %v1596, %v1645
    %v1654 = vmul.f32 %v1598, %v1645
    %v1655 = vmul.f32 %v1600, %v1645
    %v1656 = vmul.f32 %v1602, %v1645
    %v1657 = vmul.f32 %v1604, %v1645
    %v1658 = vmul.f32 %v1606, %v1645
    %v1659 = vmul.f32 %v1608, %v1645
    %v1660 = vmul.f32 %v1610, %v1645
    %v1661 = vmul.f32 %v1612, %v1645
    %v1662 = vmul.f32 %v1614, %v1645
    %v1663 = vmul.f32 %v1616, %v1645
    %v1664 = vmul.f32 %v1618, %v1645
    %v1665 = vmul.f32 %v1620, %v1645
    %v1666 = vmul.f32 %v1622, %v1645
    %v1667 = vmul.f32 %v1624, %v1645
    %v1668 = vmul.f32 %v1626, %v1645
    %v1669 = vmul.f32 %v1628, %v1645
    %v1670 = vmul.f32 %v1630, %v1645
    %v1671 = vmul.f32 %v1632, %v1645
    %v1672 = vmul.f32 %v1634, %v1645
    %v1673 = vmul.f32 %v1636, %v1645
    %v1674 = vmul.f32 %v1638, %v1645
    %v1675 = vmul.f32 %v1640, %v1645
    %v1676 = vmul.f32 %v1642, %v1645
    %v1677 = vmul.f32 %v1644, %v1645
    %v1678 = vmul.f32 %v520, %v520
    %v1679 = vmul.f32 %v521, %v521
    %v1680 = vmul.f32 %v522, %v522
    %v1681 = vmul.f32 %v523, %v523
    %v1682 = vmul.f32 %v524, %v524
    %v1683 = vmul.f32 %v525, %v525
    %v1684 = vmul.f32 %v526, %v526
    %v1685 = vmul.f32 %v527, %v527
    %v1686 = vmul.f32 %v528, %v528
    %v1687 = vmul.f32 %v529, %v529
    %v1688 = vmul.f32 %v530, %v530
    %v1689 = vmul.f32 %v531, %v531
    %v1690 = vmul.f32 %v532, %v532
    %v1691 = vmul.f32 %v533, %v533
    %v1692 = vmul.f32 %v534, %v534
    %v1693 = vmul.f32 %v535, %v535
    %v1694 = vmul.f32 %v536, %v536
    %v1695 = vmul.f32 %v537, %v537
    %v1696 = vmul.f32 %v538, %v538
    %v1697 = vmul.f32 %v539, %v539
    %v1698 = vmul.f32 %v540, %v540
    %v1699 = vmul.f32 %v541, %v541
    %v1700 = vmul.f32 %v542, %v542
    %v1701 = vmul.f32 %v543, %v543
    %v1702 = vmul.f32 %v544, %v544
    %v1703 = vmul.f32 %v545, %v545
    %v1704 = vmul.f32 %v546, %v546
    %v1705 = vmul.f32 %v547, %v547
    %v1706 = vmul.f32 %v548, %v548
    %v1707 = vmul.f32 %v549, %v549
    %v1708 = vmul.f32 %v550, %v550
    %v1709 = vmul.f32 %v551, %v551
    %1710 = vadd.xlane.f32.xlu0 %v1678
    %v1711 = vpop.xlane.xlu0 %1710
    %1712 = vadd.xlane.f32.xlu0 %v1679
    %v1713 = vpop.xlane.xlu0 %1712
    %1714 = vadd.xlane.f32.xlu0 %v1680
    %v1715 = vpop.xlane.xlu0 %1714
    %1716 = vadd.xlane.f32.xlu0 %v1681
    %v1717 = vpop.xlane.xlu0 %1716
    %1718 = vadd.xlane.f32.xlu0 %v1682
    %v1719 = vpop.xlane.xlu0 %1718
    %1720 = vadd.xlane.f32.xlu0 %v1683
    %v1721 = vpop.xlane.xlu0 %1720
    %1722 = vadd.xlane.f32.xlu0 %v1684
    %v1723 = vpop.xlane.xlu0 %1722
    %1724 = vadd.xlane.f32.xlu0 %v1685
    %v1725 = vpop.xlane.xlu0 %1724
    %1726 = vadd.xlane.f32.xlu0 %v1686
    %v1727 = vpop.xlane.xlu0 %1726
    %1728 = vadd.xlane.f32.xlu0 %v1687
    %v1729 = vpop.xlane.xlu0 %1728
    %1730 = vadd.xlane.f32.xlu0 %v1688
    %v1731 = vpop.xlane.xlu0 %1730
    %1732 = vadd.xlane.f32.xlu0 %v1689
    %v1733 = vpop.xlane.xlu0 %1732
    %1734 = vadd.xlane.f32.xlu0 %v1690
    %v1735 = vpop.xlane.xlu0 %1734
    %1736 = vadd.xlane.f32.xlu0 %v1691
    %v1737 = vpop.xlane.xlu0 %1736
    %1738 = vadd.xlane.f32.xlu0 %v1692
    %v1739 = vpop.xlane.xlu0 %1738
    %1740 = vadd.xlane.f32.xlu0 %v1693
    %v1741 = vpop.xlane.xlu0 %1740
    %1742 = vadd.xlane.f32.xlu0 %v1694
    %v1743 = vpop.xlane.xlu0 %1742
    %1744 = vadd.xlane.f32.xlu0 %v1695
    %v1745 = vpop.xlane.xlu0 %1744
    %1746 = vadd.xlane.f32.xlu0 %v1696
    %v1747 = vpop.xlane.xlu0 %1746
    %1748 = vadd.xlane.f32.xlu0 %v1697
    %v1749 = vpop.xlane.xlu0 %1748
    %1750 = vadd.xlane.f32.xlu0 %v1698
    %v1751 = vpop.xlane.xlu0 %1750
    %1752 = vadd.xlane.f32.xlu0 %v1699
    %v1753 = vpop.xlane.xlu0 %1752
    %1754 = vadd.xlane.f32.xlu0 %v1700
    %v1755 = vpop.xlane.xlu0 %1754
    %1756 = vadd.xlane.f32.xlu0 %v1701
    %v1757 = vpop.xlane.xlu0 %1756
    %1758 = vadd.xlane.f32.xlu0 %v1702
    %v1759 = vpop.xlane.xlu0 %1758
    %1760 = vadd.xlane.f32.xlu0 %v1703
    %v1761 = vpop.xlane.xlu0 %1760
    %1762 = vadd.xlane.f32.xlu0 %v1704
    %v1763 = vpop.xlane.xlu0 %1762
    %1764 = vadd.xlane.f32.xlu0 %v1705
    %v1765 = vpop.xlane.xlu0 %1764
    %1766 = vadd.xlane.f32.xlu0 %v1706
    %v1767 = vpop.xlane.xlu0 %1766
    %1768 = vadd.xlane.f32.xlu0 %v1707
    %v1769 = vpop.xlane.xlu0 %1768
    %1770 = vadd.xlane.f32.xlu0 %v1708
    %v1771 = vpop.xlane.xlu0 %1770
    %1772 = vadd.xlane.f32.xlu0 %v1709
    %v1773 = vpop.xlane.xlu0 %1772
    %v1774 = vmul.f32 %v1711, %v1645
    %v1775 = vmul.f32 %v1713, %v1645
    %v1776 = vmul.f32 %v1715, %v1645
    %v1777 = vmul.f32 %v1717, %v1645
    %v1778 = vmul.f32 %v1719, %v1645
    %v1779 = vmul.f32 %v1721, %v1645
    %v1780 = vmul.f32 %v1723, %v1645
    %v1781 = vmul.f32 %v1725, %v1645
    %v1782 = vmul.f32 %v1727, %v1645
    %v1783 = vmul.f32 %v1729, %v1645
    %v1784 = vmul.f32 %v1731, %v1645
    %v1785 = vmul.f32 %v1733, %v1645
    %v1786 = vmul.f32 %v1735, %v1645
    %v1787 = vmul.f32 %v1737, %v1645
    %v1788 = vmul.f32 %v1739, %v1645
    %v1789 = vmul.f32 %v1741, %v1645
    %v1790 = vmul.f32 %v1743, %v1645
    %v1791 = vmul.f32 %v1745, %v1645
    %v1792 = vmul.f32 %v1747, %v1645
    %v1793 = vmul.f32 %v1749, %v1645
    %v1794 = vmul.f32 %v1751, %v1645
    %v1795 = vmul.f32 %v1753, %v1645
    %v1796 = vmul.f32 %v1755, %v1645
    %v1797 = vmul.f32 %v1757, %v1645
    %v1798 = vmul.f32 %v1759, %v1645
    %v1799 = vmul.f32 %v1761, %v1645
    %v1800 = vmul.f32 %v1763, %v1645
    %v1801 = vmul.f32 %v1765, %v1645
    %v1802 = vmul.f32 %v1767, %v1645
    %v1803 = vmul.f32 %v1769, %v1645
    %v1804 = vmul.f32 %v1771, %v1645
    %v1805 = vmul.f32 %v1773, %v1645
    %v1806 = vmul.f32 %v1646, %v1646
    %v1807 = vmul.f32 %v1647, %v1647
    %v1808 = vmul.f32 %v1648, %v1648
    %v1809 = vmul.f32 %v1649, %v1649
    %v1810 = vmul.f32 %v1650, %v1650
    %v1811 = vmul.f32 %v1651, %v1651
    %v1812 = vmul.f32 %v1652, %v1652
    %v1813 = vmul.f32 %v1653, %v1653
    %v1814 = vmul.f32 %v1654, %v1654
    %v1815 = vmul.f32 %v1655, %v1655
    %v1816 = vmul.f32 %v1656, %v1656
    %v1817 = vmul.f32 %v1657, %v1657
    %v1818 = vmul.f32 %v1658, %v1658
    %v1819 = vmul.f32 %v1659, %v1659
    %v1820 = vmul.f32 %v1660, %v1660
    %v1821 = vmul.f32 %v1661, %v1661
    %v1822 = vmul.f32 %v1662, %v1662
    %v1823 = vmul.f32 %v1663, %v1663
    %v1824 = vmul.f32 %v1664, %v1664
    %v1825 = vmul.f32 %v1665, %v1665
    %v1826 = vmul.f32 %v1666, %v1666
    %v1827 = vmul.f32 %v1667, %v1667
    %v1828 = vmul.f32 %v1668, %v1668
    %v1829 = vmul.f32 %v1669, %v1669
    %v1830 = vmul.f32 %v1670, %v1670
    %v1831 = vmul.f32 %v1671, %v1671
    %v1832 = vmul.f32 %v1672, %v1672
    %v1833 = vmul.f32 %v1673, %v1673
    %v1834 = vmul.f32 %v1674, %v1674
    %v1835 = vmul.f32 %v1675, %v1675
    %v1836 = vmul.f32 %v1676, %v1676
    %v1837 = vmul.f32 %v1677, %v1677
    %v1838 = vsub.f32 %v1774, %v1806
    %v1839 = vsub.f32 %v1775, %v1807
    %v1840 = vsub.f32 %v1776, %v1808
    %v1841 = vsub.f32 %v1777, %v1809
    %v1842 = vsub.f32 %v1778, %v1810
    %v1843 = vsub.f32 %v1779, %v1811
    %v1844 = vsub.f32 %v1780, %v1812
    %v1845 = vsub.f32 %v1781, %v1813
    %v1846 = vsub.f32 %v1782, %v1814
    %v1847 = vsub.f32 %v1783, %v1815
    %v1848 = vsub.f32 %v1784, %v1816
    %v1849 = vsub.f32 %v1785, %v1817
    %v1850 = vsub.f32 %v1786, %v1818
    %v1851 = vsub.f32 %v1787, %v1819
    %v1852 = vsub.f32 %v1788, %v1820
    %v1853 = vsub.f32 %v1789, %v1821
    %v1854 = vsub.f32 %v1790, %v1822
    %v1855 = vsub.f32 %v1791, %v1823
    %v1856 = vsub.f32 %v1792, %v1824
    %v1857 = vsub.f32 %v1793, %v1825
    %v1858 = vsub.f32 %v1794, %v1826
    %v1859 = vsub.f32 %v1795, %v1827
    %v1860 = vsub.f32 %v1796, %v1828
    %v1861 = vsub.f32 %v1797, %v1829
    %v1862 = vsub.f32 %v1798, %v1830
    %v1863 = vsub.f32 %v1799, %v1831
    %v1864 = vsub.f32 %v1800, %v1832
    %v1865 = vsub.f32 %v1801, %v1833
    %v1866 = vsub.f32 %v1802, %v1834
    %v1867 = vsub.f32 %v1803, %v1835
    %v1868 = vsub.f32 %v1804, %v1836
    %v1869 = vsub.f32 %v1805, %v1837
    %v1870 = vmax.f32 %v1838, 0.0
    %v1871 = vmax.f32 %v1839, 0.0
    %v1872 = vmax.f32 %v1840, 0.0
    %v1873 = vmax.f32 %v1841, 0.0
    %v1874 = vmax.f32 %v1842, 0.0
    %v1875 = vmax.f32 %v1843, 0.0
    %v1876 = vmax.f32 %v1844, 0.0
    %v1877 = vmax.f32 %v1845, 0.0
    %v1878 = vmax.f32 %v1846, 0.0
    %v1879 = vmax.f32 %v1847, 0.0
    %v1880 = vmax.f32 %v1848, 0.0
    %v1881 = vmax.f32 %v1849, 0.0
    %v1882 = vmax.f32 %v1850, 0.0
    %v1883 = vmax.f32 %v1851, 0.0
    %v1884 = vmax.f32 %v1852, 0.0
    %v1885 = vmax.f32 %v1853, 0.0
    %v1886 = vmax.f32 %v1854, 0.0
    %v1887 = vmax.f32 %v1855, 0.0
    %v1888 = vmax.f32 %v1856, 0.0
    %v1889 = vmax.f32 %v1857, 0.0
    %v1890 = vmax.f32 %v1858, 0.0
    %v1891 = vmax.f32 %v1859, 0.0
    %v1892 = vmax.f32 %v1860, 0.0
    %v1893 = vmax.f32 %v1861, 0.0
    %v1894 = vmax.f32 %v1862, 0.0
    %v1895 = vmax.f32 %v1863, 0.0
    %v1896 = vmax.f32 %v1864, 0.0
    %v1897 = vmax.f32 %v1865, 0.0
    %v1898 = vmax.f32 %v1866, 0.0
    %v1899 = vmax.f32 %v1867, 0.0
    %v1900 = vmax.f32 %v1868, 0.0
    %v1901 = vmax.f32 %v1869, 0.0
    %v1902 = vsub.f32 %v520, %v1646
    %v1903 = vsub.f32 %v521, %v1647
    %v1904 = vsub.f32 %v522, %v1648
    %v1905 = vsub.f32 %v523, %v1649
    %v1906 = vsub.f32 %v524, %v1650
    %v1907 = vsub.f32 %v525, %v1651
    %v1908 = vsub.f32 %v526, %v1652
    %v1909 = vsub.f32 %v527, %v1653
    %v1910 = vsub.f32 %v528, %v1654
    %v1911 = vsub.f32 %v529, %v1655
    %v1912 = vsub.f32 %v530, %v1656
    %v1913 = vsub.f32 %v531, %v1657
    %v1914 = vsub.f32 %v532, %v1658
    %v1915 = vsub.f32 %v533, %v1659
    %v1916 = vsub.f32 %v534, %v1660
    %v1917 = vsub.f32 %v535, %v1661
    %v1918 = vsub.f32 %v536, %v1662
    %v1919 = vsub.f32 %v537, %v1663
    %v1920 = vsub.f32 %v538, %v1664
    %v1921 = vsub.f32 %v539, %v1665
    %v1922 = vsub.f32 %v540, %v1666
    %v1923 = vsub.f32 %v541, %v1667
    %v1924 = vsub.f32 %v542, %v1668
    %v1925 = vsub.f32 %v543, %v1669
    %v1926 = vsub.f32 %v544, %v1670
    %v1927 = vsub.f32 %v545, %v1671
    %v1928 = vsub.f32 %v546, %v1672
    %v1929 = vsub.f32 %v547, %v1673
    %v1930 = vsub.f32 %v548, %v1674
    %v1931 = vsub.f32 %v549, %v1675
    %v1932 = vsub.f32 %v550, %v1676
    %v1933 = vsub.f32 %v551, %v1677
    %v1934 = vadd.f32 %v1870, 1e-05
    %v1935 = vadd.f32 %v1871, 1e-05
    %v1936 = vadd.f32 %v1872, 1e-05
    %v1937 = vadd.f32 %v1873, 1e-05
    %v1938 = vadd.f32 %v1874, 1e-05
    %v1939 = vadd.f32 %v1875, 1e-05
    %v1940 = vadd.f32 %v1876, 1e-05
    %v1941 = vadd.f32 %v1877, 1e-05
    %v1942 = vadd.f32 %v1878, 1e-05
    %v1943 = vadd.f32 %v1879, 1e-05
    %v1944 = vadd.f32 %v1880, 1e-05
    %v1945 = vadd.f32 %v1881, 1e-05
    %v1946 = vadd.f32 %v1882, 1e-05
    %v1947 = vadd.f32 %v1883, 1e-05
    %v1948 = vadd.f32 %v1884, 1e-05
    %v1949 = vadd.f32 %v1885, 1e-05
    %v1950 = vadd.f32 %v1886, 1e-05
    %v1951 = vadd.f32 %v1887, 1e-05
    %v1952 = vadd.f32 %v1888, 1e-05
    %v1953 = vadd.f32 %v1889, 1e-05
    %v1954 = vadd.f32 %v1890, 1e-05
    %v1955 = vadd.f32 %v1891, 1e-05
    %v1956 = vadd.f32 %v1892, 1e-05
    %v1957 = vadd.f32 %v1893, 1e-05
    %v1958 = vadd.f32 %v1894, 1e-05
    %v1959 = vadd.f32 %v1895, 1e-05
    %v1960 = vadd.f32 %v1896, 1e-05
    %v1961 = vadd.f32 %v1897, 1e-05
    %v1962 = vadd.f32 %v1898, 1e-05
    %v1963 = vadd.f32 %v1899, 1e-05
    %v1964 = vadd.f32 %v1900, 1e-05
    %v1965 = vadd.f32 %v1901, 1e-05
    %v1966 = vrsqrt.pop %v1934
    %v1967 = vrsqrt.pop %v1935
    %v1968 = vrsqrt.pop %v1936
    %v1969 = vrsqrt.pop %v1937
    %v1970 = vrsqrt.pop %v1938
    %v1971 = vrsqrt.pop %v1939
    %v1972 = vrsqrt.pop %v1940
    %v1973 = vrsqrt.pop %v1941
    %v1974 = vrsqrt.pop %v1942
    %v1975 = vrsqrt.pop %v1943
    %v1976 = vrsqrt.pop %v1944
    %v1977 = vrsqrt.pop %v1945
    %v1978 = vrsqrt.pop %v1946
    %v1979 = vrsqrt.pop %v1947
    %v1980 = vrsqrt.pop %v1948
    %v1981 = vrsqrt.pop %v1949
    %v1982 = vrsqrt.pop %v1950
    %v1983 = vrsqrt.pop %v1951
    %v1984 = vrsqrt.pop %v1952
    %v1985 = vrsqrt.pop %v1953
    %v1986 = vrsqrt.pop %v1954
    %v1987 = vrsqrt.pop %v1955
    %v1988 = vrsqrt.pop %v1956
    %v1989 = vrsqrt.pop %v1957
    %v1990 = vrsqrt.pop %v1958
    %v1991 = vrsqrt.pop %v1959
    %v1992 = vrsqrt.pop %v1960
    %v1993 = vrsqrt.pop %v1961
    %v1994 = vrsqrt.pop %v1962
    %v1995 = vrsqrt.pop %v1963
    %v1996 = vrsqrt.pop %v1964
    %v1997 = vrsqrt.pop %v1965
    %v1998 = vmul.f32 %v1902, %v1966
    %v1999 = vmul.f32 %v1903, %v1967
    %v2000 = vmul.f32 %v1904, %v1968
    %v2001 = vmul.f32 %v1905, %v1969
    %v2002 = vmul.f32 %v1906, %v1970
    %v2003 = vmul.f32 %v1907, %v1971
    %v2004 = vmul.f32 %v1908, %v1972
    %v2005 = vmul.f32 %v1909, %v1973
    %v2006 = vmul.f32 %v1910, %v1974
    %v2007 = vmul.f32 %v1911, %v1975
    %v2008 = vmul.f32 %v1912, %v1976
    %v2009 = vmul.f32 %v1913, %v1977
    %v2010 = vmul.f32 %v1914, %v1978
    %v2011 = vmul.f32 %v1915, %v1979
    %v2012 = vmul.f32 %v1916, %v1980
    %v2013 = vmul.f32 %v1917, %v1981
    %v2014 = vmul.f32 %v1918, %v1982
    %v2015 = vmul.f32 %v1919, %v1983
    %v2016 = vmul.f32 %v1920, %v1984
    %v2017 = vmul.f32 %v1921, %v1985
    %v2018 = vmul.f32 %v1922, %v1986
    %v2019 = vmul.f32 %v1923, %v1987
    %v2020 = vmul.f32 %v1924, %v1988
    %v2021 = vmul.f32 %v1925, %v1989
    %v2022 = vmul.f32 %v1926, %v1990
    %v2023 = vmul.f32 %v1927, %v1991
    %v2024 = vmul.f32 %v1928, %v1992
    %v2025 = vmul.f32 %v1929, %v1993
    %v2026 = vmul.f32 %v1930, %v1994
    %v2027 = vmul.f32 %v1931, %v1995
    %v2028 = vmul.f32 %v1932, %v1996
    %v2029 = vmul.f32 %v1933, %v1997
    %v2030 = vld [vmem:[%s11] sm:$0x1]
    %v2031 = vlaneseq
    %v2032 = vshrl.u32 %v2031, 7
    %v2033 = vsub.s32 0, %v2032
    %v2034 = vrot.slane %v2030, %v2033
    %v2035 = vmul.f32 %v1998, %v2034
    %v2036 = vmul.f32 %v1999, %v2034
    %v2037 = vmul.f32 %v2000, %v2034
    %v2038 = vmul.f32 %v2001, %v2034
    %v2039 = vmul.f32 %v2002, %v2034
    %v2040 = vmul.f32 %v2003, %v2034
    %v2041 = vmul.f32 %v2004, %v2034
    %v2042 = vmul.f32 %v2005, %v2034
    %v2043 = vmul.f32 %v2006, %v2034
    %v2044 = vmul.f32 %v2007, %v2034
    %v2045 = vmul.f32 %v2008, %v2034
    %v2046 = vmul.f32 %v2009, %v2034
    %v2047 = vmul.f32 %v2010, %v2034
    %v2048 = vmul.f32 %v2011, %v2034
    %v2049 = vmul.f32 %v2012, %v2034
    %v2050 = vmul.f32 %v2013, %v2034
    %v2051 = vmul.f32 %v2014, %v2034
    %v2052 = vmul.f32 %v2015, %v2034
    %v2053 = vmul.f32 %v2016, %v2034
    %v2054 = vmul.f32 %v2017, %v2034
    %v2055 = vmul.f32 %v2018, %v2034
    %v2056 = vmul.f32 %v2019, %v2034
    %v2057 = vmul.f32 %v2020, %v2034
    %v2058 = vmul.f32 %v2021, %v2034
    %v2059 = vmul.f32 %v2022, %v2034
    %v2060 = vmul.f32 %v2023, %v2034
    %v2061 = vmul.f32 %v2024, %v2034
    %v2062 = vmul.f32 %v2025, %v2034
    %v2063 = vmul.f32 %v2026, %v2034
    %v2064 = vmul.f32 %v2027, %v2034
    %v2065 = vmul.f32 %v2028, %v2034
    %v2066 = vmul.f32 %v2029, %v2034
    %v2067 = vld [vmem:[%s12] sm:$0x1]
    %v2068 = vlaneseq
    %v2069 = vshrl.u32 %v2068, 7
    %v2070 = vsub.s32 0, %v2069
    %v2071 = vrot.slane %v2067, %v2070
    %v2072 = vadd.f32 %v2035, %v2071
    %v2073 = vadd.f32 %v2036, %v2071
    %v2074 = vadd.f32 %v2037, %v2071
    %v2075 = vadd.f32 %v2038, %v2071
    %v2076 = vadd.f32 %v2039, %v2071
    %v2077 = vadd.f32 %v2040, %v2071
    %v2078 = vadd.f32 %v2041, %v2071
    %v2079 = vadd.f32 %v2042, %v2071
    %v2080 = vadd.f32 %v2043, %v2071
    %v2081 = vadd.f32 %v2044, %v2071
    %v2082 = vadd.f32 %v2045, %v2071
    %v2083 = vadd.f32 %v2046, %v2071
    %v2084 = vadd.f32 %v2047, %v2071
    %v2085 = vadd.f32 %v2048, %v2071
    %v2086 = vadd.f32 %v2049, %v2071
    %v2087 = vadd.f32 %v2050, %v2071
    %v2088 = vadd.f32 %v2051, %v2071
    %v2089 = vadd.f32 %v2052, %v2071
    %v2090 = vadd.f32 %v2053, %v2071
    %v2091 = vadd.f32 %v2054, %v2071
    %v2092 = vadd.f32 %v2055, %v2071
    %v2093 = vadd.f32 %v2056, %v2071
    %v2094 = vadd.f32 %v2057, %v2071
    %v2095 = vadd.f32 %v2058, %v2071
    %v2096 = vadd.f32 %v2059, %v2071
    %v2097 = vadd.f32 %v2060, %v2071
    %v2098 = vadd.f32 %v2061, %v2071
    %v2099 = vadd.f32 %v2062, %v2071
    %v2100 = vadd.f32 %v2063, %v2071
    %v2101 = vadd.f32 %v2064, %v2071
    %v2102 = vadd.f32 %v2065, %v2071
    %v2103 = vadd.f32 %v2066, %v2071
    %v2104 = vmul.f32 %v2072, 0.5
    %v2105 = vmul.f32 %v2073, 0.5
    %v2106 = vmul.f32 %v2074, 0.5
    %v2107 = vmul.f32 %v2075, 0.5
    %v2108 = vmul.f32 %v2076, 0.5
    %v2109 = vmul.f32 %v2077, 0.5
    %v2110 = vmul.f32 %v2078, 0.5
    %v2111 = vmul.f32 %v2079, 0.5
    %v2112 = vmul.f32 %v2080, 0.5
    %v2113 = vmul.f32 %v2081, 0.5
    %v2114 = vmul.f32 %v2082, 0.5
    %v2115 = vmul.f32 %v2083, 0.5
    %v2116 = vmul.f32 %v2084, 0.5
    %v2117 = vmul.f32 %v2085, 0.5
    %v2118 = vmul.f32 %v2086, 0.5
    %v2119 = vmul.f32 %v2087, 0.5
    %v2120 = vmul.f32 %v2088, 0.5
    %v2121 = vmul.f32 %v2089, 0.5
    %v2122 = vmul.f32 %v2090, 0.5
    %v2123 = vmul.f32 %v2091, 0.5
    %v2124 = vmul.f32 %v2092, 0.5
    %v2125 = vmul.f32 %v2093, 0.5
    %v2126 = vmul.f32 %v2094, 0.5
    %v2127 = vmul.f32 %v2095, 0.5
    %v2128 = vmul.f32 %v2096, 0.5
    %v2129 = vmul.f32 %v2097, 0.5
    %v2130 = vmul.f32 %v2098, 0.5
    %v2131 = vmul.f32 %v2099, 0.5
    %v2132 = vmul.f32 %v2100, 0.5
    %v2133 = vmul.f32 %v2101, 0.5
    %v2134 = vmul.f32 %v2102, 0.5
    %v2135 = vmul.f32 %v2103, 0.5
    %v2136 = vtanh.pop %v2104
    %v2137 = vtanh.pop %v2105
    %v2138 = vtanh.pop %v2106
    %v2139 = vtanh.pop %v2107
    %v2140 = vtanh.pop %v2108
    %v2141 = vtanh.pop %v2109
    %v2142 = vtanh.pop %v2110
    %v2143 = vtanh.pop %v2111
    %v2144 = vtanh.pop %v2112
    %v2145 = vtanh.pop %v2113
    %v2146 = vtanh.pop %v2114
    %v2147 = vtanh.pop %v2115
    %v2148 = vtanh.pop %v2116
    %v2149 = vtanh.pop %v2117
    %v2150 = vtanh.pop %v2118
    %v2151 = vtanh.pop %v2119
    %v2152 = vtanh.pop %v2120
    %v2153 = vtanh.pop %v2121
    %v2154 = vtanh.pop %v2122
    %v2155 = vtanh.pop %v2123
    %v2156 = vtanh.pop %v2124
    %v2157 = vtanh.pop %v2125
    %v2158 = vtanh.pop %v2126
    %v2159 = vtanh.pop %v2127
    %v2160 = vtanh.pop %v2128
    %v2161 = vtanh.pop %v2129
    %v2162 = vtanh.pop %v2130
    %v2163 = vtanh.pop %v2131
    %v2164 = vtanh.pop %v2132
    %v2165 = vtanh.pop %v2133
    %v2166 = vtanh.pop %v2134
    %v2167 = vtanh.pop %v2135
    %v2168 = vmul.f32 %v2136, 0.5
    %v2169 = vmul.f32 %v2137, 0.5
    %v2170 = vmul.f32 %v2138, 0.5
    %v2171 = vmul.f32 %v2139, 0.5
    %v2172 = vmul.f32 %v2140, 0.5
    %v2173 = vmul.f32 %v2141, 0.5
    %v2174 = vmul.f32 %v2142, 0.5
    %v2175 = vmul.f32 %v2143, 0.5
    %v2176 = vmul.f32 %v2144, 0.5
    %v2177 = vmul.f32 %v2145, 0.5
    %v2178 = vmul.f32 %v2146, 0.5
    %v2179 = vmul.f32 %v2147, 0.5
    %v2180 = vmul.f32 %v2148, 0.5
    %v2181 = vmul.f32 %v2149, 0.5
    %v2182 = vmul.f32 %v2150, 0.5
    %v2183 = vmul.f32 %v2151, 0.5
    %v2184 = vmul.f32 %v2152, 0.5
    %v2185 = vmul.f32 %v2153, 0.5
    %v2186 = vmul.f32 %v2154, 0.5
    %v2187 = vmul.f32 %v2155, 0.5
    %v2188 = vmul.f32 %v2156, 0.5
    %v2189 = vmul.f32 %v2157, 0.5
    %v2190 = vmul.f32 %v2158, 0.5
    %v2191 = vmul.f32 %v2159, 0.5
    %v2192 = vmul.f32 %v2160, 0.5
    %v2193 = vmul.f32 %v2161, 0.5
    %v2194 = vmul.f32 %v2162, 0.5
    %v2195 = vmul.f32 %v2163, 0.5
    %v2196 = vmul.f32 %v2164, 0.5
    %v2197 = vmul.f32 %v2165, 0.5
    %v2198 = vmul.f32 %v2166, 0.5
    %v2199 = vmul.f32 %v2167, 0.5
    %v2200 = vadd.f32 %v2168, 0.5
    %v2201 = vadd.f32 %v2169, 0.5
    %v2202 = vadd.f32 %v2170, 0.5
    %v2203 = vadd.f32 %v2171, 0.5
    %v2204 = vadd.f32 %v2172, 0.5
    %v2205 = vadd.f32 %v2173, 0.5
    %v2206 = vadd.f32 %v2174, 0.5
    %v2207 = vadd.f32 %v2175, 0.5
    %v2208 = vadd.f32 %v2176, 0.5
    %v2209 = vadd.f32 %v2177, 0.5
    %v2210 = vadd.f32 %v2178, 0.5
    %v2211 = vadd.f32 %v2179, 0.5
    %v2212 = vadd.f32 %v2180, 0.5
    %v2213 = vadd.f32 %v2181, 0.5
    %v2214 = vadd.f32 %v2182, 0.5
    %v2215 = vadd.f32 %v2183, 0.5
    %v2216 = vadd.f32 %v2184, 0.5
    %v2217 = vadd.f32 %v2185, 0.5
    %v2218 = vadd.f32 %v2186, 0.5
    %v2219 = vadd.f32 %v2187, 0.5
    %v2220 = vadd.f32 %v2188, 0.5
    %v2221 = vadd.f32 %v2189, 0.5
    %v2222 = vadd.f32 %v2190, 0.5
    %v2223 = vadd.f32 %v2191, 0.5
    %v2224 = vadd.f32 %v2192, 0.5
    %v2225 = vadd.f32 %v2193, 0.5
    %v2226 = vadd.f32 %v2194, 0.5
    %v2227 = vadd.f32 %v2195, 0.5
    %v2228 = vadd.f32 %v2196, 0.5
    %v2229 = vadd.f32 %v2197, 0.5
    %v2230 = vadd.f32 %v2198, 0.5
    %v2231 = vadd.f32 %v2199, 0.5
    %v2232 = vmul.f32 %v2072, %v2200
    %v2233 = vmul.f32 %v2073, %v2201
    %v2234 = vmul.f32 %v2074, %v2202
    %v2235 = vmul.f32 %v2075, %v2203
    %v2236 = vmul.f32 %v2076, %v2204
    %v2237 = vmul.f32 %v2077, %v2205
    %v2238 = vmul.f32 %v2078, %v2206
    %v2239 = vmul.f32 %v2079, %v2207
    %v2240 = vmul.f32 %v2080, %v2208
    %v2241 = vmul.f32 %v2081, %v2209
    %v2242 = vmul.f32 %v2082, %v2210
    %v2243 = vmul.f32 %v2083, %v2211
    %v2244 = vmul.f32 %v2084, %v2212
    %v2245 = vmul.f32 %v2085, %v2213
    %v2246 = vmul.f32 %v2086, %v2214
    %v2247 = vmul.f32 %v2087, %v2215
    %v2248 = vmul.f32 %v2088, %v2216
    %v2249 = vmul.f32 %v2089, %v2217
    %v2250 = vmul.f32 %v2090, %v2218
    %v2251 = vmul.f32 %v2091, %v2219
    %v2252 = vmul.f32 %v2092, %v2220
    %v2253 = vmul.f32 %v2093, %v2221
    %v2254 = vmul.f32 %v2094, %v2222
    %v2255 = vmul.f32 %v2095, %v2223
    %v2256 = vmul.f32 %v2096, %v2224
    %v2257 = vmul.f32 %v2097, %v2225
    %v2258 = vmul.f32 %v2098, %v2226
    %v2259 = vmul.f32 %v2099, %v2227
    %v2260 = vmul.f32 %v2100, %v2228
    %v2261 = vmul.f32 %v2101, %v2229
    %v2262 = vmul.f32 %v2102, %v2230
    %v2263 = vmul.f32 %v2103, %v2231
    %v2264 = vpack.c.bf16 %v2233, %v2232
    %v2265 = vpack.c.bf16 %v2235, %v2234
    %v2266 = vpack.c.bf16 %v2237, %v2236
    %v2267 = vpack.c.bf16 %v2239, %v2238
    %v2268 = vpack.c.bf16 %v2241, %v2240
    %v2269 = vpack.c.bf16 %v2243, %v2242
    %v2270 = vpack.c.bf16 %v2245, %v2244
    %v2271 = vpack.c.bf16 %v2247, %v2246
    %v2272 = vpack.c.bf16 %v2249, %v2248
    %v2273 = vpack.c.bf16 %v2251, %v2250
    %v2274 = vpack.c.bf16 %v2253, %v2252
    %v2275 = vpack.c.bf16 %v2255, %v2254
    %v2276 = vpack.c.bf16 %v2257, %v2256
    %v2277 = vpack.c.bf16 %v2259, %v2258
    %v2278 = vpack.c.bf16 %v2261, %v2260
    %v2279 = vpack.c.bf16 %v2263, %v2262
    %v2280 = vld [vmem:[#allocation2] sm:$0xff]
    %v2281 = vld [vmem:[#allocation2 + $0x8] sm:$0xff]
    %v2282 = vld [vmem:[#allocation2 + $0x10] sm:$0xff]
    %v2283 = vld [vmem:[#allocation2 + $0x18] sm:$0xff]
    %v2284 = vld [vmem:[#allocation2 + $0x20] sm:$0xff]
    %v2285 = vld [vmem:[#allocation2 + $0x28] sm:$0xff]
    %v2286 = vld [vmem:[#allocation2 + $0x30] sm:$0xff]
    %v2287 = vld [vmem:[#allocation2 + $0x38] sm:$0xff]
    %v2288 = vld [vmem:[#allocation2 + $0x40] sm:$0xff]
    %v2289 = vld [vmem:[#allocation2 + $0x48] sm:$0xff]
    %v2290 = vld [vmem:[#allocation2 + $0x50] sm:$0xff]
    %v2291 = vld [vmem:[#allocation2 + $0x58] sm:$0xff]
    %v2292 = vld [vmem:[#allocation2 + $0x60] sm:$0xff]
    %v2293 = vld [vmem:[#allocation2 + $0x68] sm:$0xff]
    %v2294 = vld [vmem:[#allocation2 + $0x70] sm:$0xff]
    %v2295 = vld [vmem:[#allocation2 + $0x78] sm:$0xff]
    %v2312 = vunpack.c.l.b16 %v2280
    %v2313 = vunpack.c.h.b16 %v2280
    %v2314 = vunpack.c.l.b16 %v2281
    %v2315 = vunpack.c.h.b16 %v2281
    %v2316 = vunpack.c.l.b16 %v2282
    %v2317 = vunpack.c.h.b16 %v2282
    %v2318 = vunpack.c.l.b16 %v2283
    %v2319 = vunpack.c.h.b16 %v2283
    %v2320 = vunpack.c.l.b16 %v2284
    %v2321 = vunpack.c.h.b16 %v2284
    %v2322 = vunpack.c.l.b16 %v2285
    %v2323 = vunpack.c.h.b16 %v2285
    %v2324 = vunpack.c.l.b16 %v2286
    %v2325 = vunpack.c.h.b16 %v2286
    %v2326 = vunpack.c.l.b16 %v2287
    %v2327 = vunpack.c.h.b16 %v2287
    %v2328 = vunpack.c.l.b16 %v2288
    %v2329 = vunpack.c.h.b16 %v2288
    %v2330 = vunpack.c.l.b16 %v2289
    %v2331 = vunpack.c.h.b16 %v2289
    %v2332 = vunpack.c.l.b16 %v2290
    %v2333 = vunpack.c.h.b16 %v2290
    %v2334 = vunpack.c.l.b16 %v2291
    %v2335 = vunpack.c.h.b16 %v2291
    %v2336 = vunpack.c.l.b16 %v2292
    %v2337 = vunpack.c.h.b16 %v2292
    %v2338 = vunpack.c.l.b16 %v2293
    %v2339 = vunpack.c.h.b16 %v2293
    %v2340 = vunpack.c.l.b16 %v2294
    %v2341 = vunpack.c.h.b16 %v2294
    %v2342 = vunpack.c.l.b16 %v2295
    %v2343 = vunpack.c.h.b16 %v2295
    %v2344 = vpack.c.b16 %v2314, %v2312
    %v2345 = vpack.c.b16 %v2315, %v2313
    %v2346 = vpack.c.b16 %v2318, %v2316
    %v2347 = vpack.c.b16 %v2319, %v2317
    %v2348 = vpack.c.b16 %v2322, %v2320
    %v2349 = vpack.c.b16 %v2323, %v2321
    %v2350 = vpack.c.b16 %v2326, %v2324
    %v2351 = vpack.c.b16 %v2327, %v2325
    %v2352 = vpack.c.b16 %v2330, %v2328
    %v2353 = vpack.c.b16 %v2331, %v2329
    %v2354 = vpack.c.b16 %v2334, %v2332
    %v2355 = vpack.c.b16 %v2335, %v2333
    %v2356 = vpack.c.b16 %v2338, %v2336
    %v2357 = vpack.c.b16 %v2339, %v2337
    %v2358 = vpack.c.b16 %v2342, %v2340
    %v2359 = vpack.c.b16 %v2343, %v2341
    %2376 = vmatprep.subr.bf16.mxu0 %v2359
    %2377 = vmatpush1.bf16.msra.mxu0 %v2358
    %2378 = vmatprep.subr.bf16.mxu0 %v2357
    %2379 = vmatpush1.bf16.msra.mxu0 %v2356
    %2380 = vmatprep.subr.bf16.mxu0 %v2355
    %2381 = vmatpush1.bf16.msra.mxu0 %v2354
    %2382 = vmatprep.subr.bf16.mxu0 %v2353
    %2383 = vmatpush1.bf16.msra.mxu0 %v2352
    %2384 = vmatprep.subr.bf16.mxu0 %v2351
    %2385 = vmatpush1.bf16.msra.mxu0 %v2350
    %2386 = vmatprep.subr.bf16.mxu0 %v2349
    %2387 = vmatpush1.bf16.msra.mxu0 %v2348
    %2388 = vmatprep.subr.bf16.mxu0 %v2347
    %2389 = vmatpush1.bf16.msra.mxu0 %v2346
    %2390 = vmatprep.subr.bf16.mxu0 %v2345
    %2391 = vmatpush1.bf16.msra.mxu0 %v2344
    %2392 = vmatprep.subr.bf16.mxu0 0
    %2393 = vmatpush2.bf16.msra.mxu0 0
    %2394 = vmatprep.subr.bf16.mxu0 0
    %2395 = vmatpush2.bf16.msra.mxu0 0
    %2396 = vmatprep.subr.bf16.mxu0 0
    %2397 = vmatpush2.bf16.msra.mxu0 0
    %2398 = vmatprep.subr.bf16.mxu0 0
    %2399 = vmatpush2.bf16.msra.mxu0 0
    %2400 = vmatprep.subr.bf16.mxu0 0
    %2401 = vmatpush2.bf16.msra.mxu0 0
    %2402 = vmatprep.subr.bf16.mxu0 0
    %2403 = vmatpush2.bf16.msra.mxu0 0
    %2404 = vmatprep.subr.bf16.mxu0 0
    %2405 = vmatpush2.bf16.msra.mxu0 0
    %2406 = vmatprep.subr.bf16.mxu0 0
    %2407 = vmatpush2.bf16.msra.mxu0 0
    %2408 = vmatprep.mubr.bf16.mxu0 0
    %2409 = vmatmul.mubr.bf16.gmra.mxu0 %v2264
    %v2410 = vpop.f32.mrf.mxu0
    %v2411 = vadd.f32 %v844, %v2410
    %v2412 = vpop.f32.mrf.mxu0
    %v2413 = vadd.f32 %v846, %v2412
    %v2414 = vpop.f32.mrf.mxu0
    %v2415 = vadd.f32 %v848, %v2414
    %v2416 = vpop.f32.mrf.mxu0
    %v2417 = vadd.f32 %v850, %v2416
    %2418 = vmatprep.mubr.bf16.mxu0 0
    %2419 = vmatmul.mubr.bf16.gmra.mxu0 %v2265
    %v2420 = vpop.f32.mrf.mxu0
    %v2421 = vadd.f32 %v854, %v2420
    %v2422 = vpop.f32.mrf.mxu0
    %v2423 = vadd.f32 %v856, %v2422
    %v2424 = vpop.f32.mrf.mxu0
    %v2425 = vadd.f32 %v858, %v2424
    %v2426 = vpop.f32.mrf.mxu0
    %v2427 = vadd.f32 %v860, %v2426
    %2428 = vmatprep.mubr.bf16.mxu0 0
    %2429 = vmatmul.mubr.bf16.gmra.mxu0 %v2266
    %v2430 = vpop.f32.mrf.mxu0
    %v2431 = vadd.f32 %v864, %v2430
    %v2432 = vpop.f32.mrf.mxu0
    %v2433 = vadd.f32 %v866, %v2432
    %v2434 = vpop.f32.mrf.mxu0
    %v2435 = vadd.f32 %v868, %v2434
    %v2436 = vpop.f32.mrf.mxu0
    %v2437 = vadd.f32 %v870, %v2436
    %2438 = vmatprep.mubr.bf16.mxu0 0
    %2439 = vmatmul.mubr.bf16.gmra.mxu0 %v2267
    %v2440 = vpop.f32.mrf.mxu0
    %v2441 = vadd.f32 %v874, %v2440
    %v2442 = vpop.f32.mrf.mxu0
    %v2443 = vadd.f32 %v876, %v2442
    %v2444 = vpop.f32.mrf.mxu0
    %v2445 = vadd.f32 %v878, %v2444
    %v2446 = vpop.f32.mrf.mxu0
    %v2447 = vadd.f32 %v880, %v2446
    %2448 = vmatprep.mubr.bf16.mxu0 0
    %2449 = vmatmul.mubr.bf16.gmra.mxu0 %v2268
    %v2450 = vpop.f32.mrf.mxu0
    %v2451 = vadd.f32 %v884, %v2450
    %v2452 = vpop.f32.mrf.mxu0
    %v2453 = vadd.f32 %v886, %v2452
    %v2454 = vpop.f32.mrf.mxu0
    %v2455 = vadd.f32 %v888, %v2454
    %v2456 = vpop.f32.mrf.mxu0
    %v2457 = vadd.f32 %v890, %v2456
    %2458 = vmatprep.mubr.bf16.mxu0 0
    %2459 = vmatmul.mubr.bf16.gmra.mxu0 %v2269
    %v2460 = vpop.f32.mrf.mxu0
    %v2461 = vadd.f32 %v894, %v2460
    %v2462 = vpop.f32.mrf.mxu0
    %v2463 = vadd.f32 %v896, %v2462
    %v2464 = vpop.f32.mrf.mxu0
    %v2465 = vadd.f32 %v898, %v2464
    %v2466 = vpop.f32.mrf.mxu0
    %v2467 = vadd.f32 %v900, %v2466
    %2468 = vmatprep.mubr.bf16.mxu0 0
    %2469 = vmatmul.mubr.bf16.gmra.mxu0 %v2270
    %v2470 = vpop.f32.mrf.mxu0
    %v2471 = vadd.f32 %v904, %v2470
    %v2472 = vpop.f32.mrf.mxu0
    %v2473 = vadd.f32 %v906, %v2472
    %v2474 = vpop.f32.mrf.mxu0
    %v2475 = vadd.f32 %v908, %v2474
    %v2476 = vpop.f32.mrf.mxu0
    %v2477 = vadd.f32 %v910, %v2476
    %2478 = vmatprep.mubr.bf16.mxu0 0
    %2479 = vmatmul.mubr.bf16.gmra.mxu0 %v2271
    %v2480 = vpop.f32.mrf.mxu0
    %v2481 = vadd.f32 %v914, %v2480
    %v2482 = vpop.f32.mrf.mxu0
    %v2483 = vadd.f32 %v916, %v2482
    %v2484 = vpop.f32.mrf.mxu0
    %v2485 = vadd.f32 %v918, %v2484
    %v2486 = vpop.f32.mrf.mxu0
    %v2487 = vadd.f32 %v920, %v2486
    %2488 = vmatprep.mubr.bf16.mxu0 0
    %2489 = vmatmul.mubr.bf16.gmra.mxu0 %v2272
    %v2490 = vpop.f32.mrf.mxu0
    %v2491 = vadd.f32 %v924, %v2490
    %v2492 = vpop.f32.mrf.mxu0
    %v2493 = vadd.f32 %v926, %v2492
    %v2494 = vpop.f32.mrf.mxu0
    %v2495 = vadd.f32 %v928, %v2494
    %v2496 = vpop.f32.mrf.mxu0
    %v2497 = vadd.f32 %v930, %v2496
    %2498 = vmatprep.mubr.bf16.mxu0 0
    %2499 = vmatmul.mubr.bf16.gmra.mxu0 %v2273
    %v2500 = vpop.f32.mrf.mxu0
    %v2501 = vadd.f32 %v934, %v2500
    %v2502 = vpop.f32.mrf.mxu0
    %v2503 = vadd.f32 %v936, %v2502
    %v2504 = vpop.f32.mrf.mxu0
    %v2505 = vadd.f32 %v938, %v2504
    %v2506 = vpop.f32.mrf.mxu0
    %v2507 = vadd.f32 %v940, %v2506
    %2508 = vmatprep.mubr.bf16.mxu0 0
    %2509 = vmatmul.mubr.bf16.gmra.mxu0 %v2274
    %v2510 = vpop.f32.mrf.mxu0
    %v2511 = vadd.f32 %v944, %v2510
    %v2512 = vpop.f32.mrf.mxu0
    %v2513 = vadd.f32 %v946, %v2512
    %v2514 = vpop.f32.mrf.mxu0
    %v2515 = vadd.f32 %v948, %v2514
    %v2516 = vpop.f32.mrf.mxu0
    %v2517 = vadd.f32 %v950, %v2516
    %2518 = vmatprep.mubr.bf16.mxu0 0
    %2519 = vmatmul.mubr.bf16.gmra.mxu0 %v2275
    %v2520 = vpop.f32.mrf.mxu0
    %v2521 = vadd.f32 %v954, %v2520
    %v2522 = vpop.f32.mrf.mxu0
    %v2523 = vadd.f32 %v956, %v2522
    %v2524 = vpop.f32.mrf.mxu0
    %v2525 = vadd.f32 %v958, %v2524
    %v2526 = vpop.f32.mrf.mxu0
    %v2527 = vadd.f32 %v960, %v2526
    %2528 = vmatprep.mubr.bf16.mxu0 0
    %2529 = vmatmul.mubr.bf16.gmra.mxu0 %v2276
    %v2530 = vpop.f32.mrf.mxu0
    %v2531 = vadd.f32 %v964, %v2530
    %v2532 = vpop.f32.mrf.mxu0
    %v2533 = vadd.f32 %v966, %v2532
    %v2534 = vpop.f32.mrf.mxu0
    %v2535 = vadd.f32 %v968, %v2534
    %v2536 = vpop.f32.mrf.mxu0
    %v2537 = vadd.f32 %v970, %v2536
    %2538 = vmatprep.mubr.bf16.mxu0 0
    %2539 = vmatmul.mubr.bf16.gmra.mxu0 %v2277
    %v2540 = vpop.f32.mrf.mxu0
    %v2541 = vadd.f32 %v974, %v2540
    %v2542 = vpop.f32.mrf.mxu0
    %v2543 = vadd.f32 %v976, %v2542
    %v2544 = vpop.f32.mrf.mxu0
    %v2545 = vadd.f32 %v978, %v2544
    %v2546 = vpop.f32.mrf.mxu0
    %v2547 = vadd.f32 %v980, %v2546
    %2548 = vmatprep.mubr.bf16.mxu0 0
    %2549 = vmatmul.mubr.bf16.gmra.mxu0 %v2278
    %v2550 = vpop.f32.mrf.mxu0
    %v2551 = vadd.f32 %v984, %v2550
    %v2552 = vpop.f32.mrf.mxu0
    %v2553 = vadd.f32 %v986, %v2552
    %v2554 = vpop.f32.mrf.mxu0
    %v2555 = vadd.f32 %v988, %v2554
    %v2556 = vpop.f32.mrf.mxu0
    %v2557 = vadd.f32 %v990, %v2556
    %2558 = vmatprep.mubr.bf16.mxu0 0
    %2559 = vmatmul.mubr.bf16.gmra.mxu0 %v2279
    %v2560 = vpop.f32.mrf.mxu0
    %v2561 = vadd.f32 %v994, %v2560
    %v2562 = vpop.f32.mrf.mxu0
    %v2563 = vadd.f32 %v996, %v2562
    %v2564 = vpop.f32.mrf.mxu0
    %v2565 = vadd.f32 %v998, %v2564
    %v2566 = vpop.f32.mrf.mxu0
    %v2567 = vadd.f32 %v1000, %v2566
    %2568 = vdwg.mxu0
    %v2569 = vld [vmem:[%s6] ss:$4 sm:$0x3]
    %v2571 = vlaneseq
    %v2572 = vshrl.u32 %v2571, 7
    %v2573 = vsub.s32 0, %v2572
    %v2574 = vrot.slane %v2569, %v2573
    %v2575 = vlaneseq
    %v2576 = vshrl.u32 %v2575, 7
    %v2577 = vsub.s32 1, %v2576
    %v2578 = vrot.slane %v2569, %v2577
    %v2581 = vadd.f32 %v2411, %v2574
    %v2582 = vadd.f32 %v2413, %v2578
    %v2583 = vadd.f32 %v2415, %v2574
    %v2584 = vadd.f32 %v2417, %v2578
    %v2585 = vadd.f32 %v2421, %v2574
    %v2586 = vadd.f32 %v2423, %v2578
    %v2587 = vadd.f32 %v2425, %v2574
    %v2588 = vadd.f32 %v2427, %v2578
    %v2589 = vadd.f32 %v2431, %v2574
    %v2590 = vadd.f32 %v2433, %v2578
    %v2591 = vadd.f32 %v2435, %v2574
    %v2592 = vadd.f32 %v2437, %v2578
    %v2593 = vadd.f32 %v2441, %v2574
    %v2594 = vadd.f32 %v2443, %v2578
    %v2595 = vadd.f32 %v2445, %v2574
    %v2596 = vadd.f32 %v2447, %v2578
    %v2597 = vadd.f32 %v2451, %v2574
    %v2598 = vadd.f32 %v2453, %v2578
    %v2599 = vadd.f32 %v2455, %v2574
    %v2600 = vadd.f32 %v2457, %v2578
    %v2601 = vadd.f32 %v2461, %v2574
    %v2602 = vadd.f32 %v2463, %v2578
    %v2603 = vadd.f32 %v2465, %v2574
    %v2604 = vadd.f32 %v2467, %v2578
    %v2605 = vadd.f32 %v2471, %v2574
    %v2606 = vadd.f32 %v2473, %v2578
    %v2607 = vadd.f32 %v2475, %v2574
    %v2608 = vadd.f32 %v2477, %v2578
    %v2609 = vadd.f32 %v2481, %v2574
    %v2610 = vadd.f32 %v2483, %v2578
    %v2611 = vadd.f32 %v2485, %v2574
    %v2612 = vadd.f32 %v2487, %v2578
    %v2613 = vadd.f32 %v2491, %v2574
    %v2614 = vadd.f32 %v2493, %v2578
    %v2615 = vadd.f32 %v2495, %v2574
    %v2616 = vadd.f32 %v2497, %v2578
    %v2617 = vadd.f32 %v2501, %v2574
    %v2618 = vadd.f32 %v2503, %v2578
    %v2619 = vadd.f32 %v2505, %v2574
    %v2620 = vadd.f32 %v2507, %v2578
    %v2621 = vadd.f32 %v2511, %v2574
    %v2622 = vadd.f32 %v2513, %v2578
    %v2623 = vadd.f32 %v2515, %v2574
    %v2624 = vadd.f32 %v2517, %v2578
    %v2625 = vadd.f32 %v2521, %v2574
    %v2626 = vadd.f32 %v2523, %v2578
    %v2627 = vadd.f32 %v2525, %v2574
    %v2628 = vadd.f32 %v2527, %v2578
    %v2629 = vadd.f32 %v2531, %v2574
    %v2630 = vadd.f32 %v2533, %v2578
    %v2631 = vadd.f32 %v2535, %v2574
    %v2632 = vadd.f32 %v2537, %v2578
    %v2633 = vadd.f32 %v2541, %v2574
    %v2634 = vadd.f32 %v2543, %v2578
    %v2635 = vadd.f32 %v2545, %v2574
    %v2636 = vadd.f32 %v2547, %v2578
    %v2637 = vadd.f32 %v2551, %v2574
    %v2638 = vadd.f32 %v2553, %v2578
    %v2639 = vadd.f32 %v2555, %v2574
    %v2640 = vadd.f32 %v2557, %v2578
    %v2641 = vadd.f32 %v2561, %v2574
    %v2642 = vadd.f32 %v2563, %v2578
    %v2643 = vadd.f32 %v2565, %v2574
    %v2644 = vadd.f32 %v2567, %v2578
    %v2645 = vmul.f32 %v2581, 0.5
    %v2646 = vmul.f32 %v2582, 0.5
    %v2647 = vmul.f32 %v2583, 0.5
    %v2648 = vmul.f32 %v2584, 0.5
    %v2649 = vmul.f32 %v2585, 0.5
    %v2650 = vmul.f32 %v2586, 0.5
    %v2651 = vmul.f32 %v2587, 0.5
    %v2652 = vmul.f32 %v2588, 0.5
    %v2653 = vmul.f32 %v2589, 0.5
    %v2654 = vmul.f32 %v2590, 0.5
    %v2655 = vmul.f32 %v2591, 0.5
    %v2656 = vmul.f32 %v2592, 0.5
    %v2657 = vmul.f32 %v2593, 0.5
    %v2658 = vmul.f32 %v2594, 0.5
    %v2659 = vmul.f32 %v2595, 0.5
    %v2660 = vmul.f32 %v2596, 0.5
    %v2661 = vmul.f32 %v2597, 0.5
    %v2662 = vmul.f32 %v2598, 0.5
    %v2663 = vmul.f32 %v2599, 0.5
    %v2664 = vmul.f32 %v2600, 0.5
    %v2665 = vmul.f32 %v2601, 0.5
    %v2666 = vmul.f32 %v2602, 0.5
    %v2667 = vmul.f32 %v2603, 0.5
    %v2668 = vmul.f32 %v2604, 0.5
    %v2669 = vmul.f32 %v2605, 0.5
    %v2670 = vmul.f32 %v2606, 0.5
    %v2671 = vmul.f32 %v2607, 0.5
    %v2672 = vmul.f32 %v2608, 0.5
    %v2673 = vmul.f32 %v2609, 0.5
    %v2674 = vmul.f32 %v2610, 0.5
    %v2675 = vmul.f32 %v2611, 0.5
    %v2676 = vmul.f32 %v2612, 0.5
    %v2677 = vmul.f32 %v2613, 0.5
    %v2678 = vmul.f32 %v2614, 0.5
    %v2679 = vmul.f32 %v2615, 0.5
    %v2680 = vmul.f32 %v2616, 0.5
    %v2681 = vmul.f32 %v2617, 0.5
    %v2682 = vmul.f32 %v2618, 0.5
    %v2683 = vmul.f32 %v2619, 0.5
    %v2684 = vmul.f32 %v2620, 0.5
    %v2685 = vmul.f32 %v2621, 0.5
    %v2686 = vmul.f32 %v2622, 0.5
    %v2687 = vmul.f32 %v2623, 0.5
    %v2688 = vmul.f32 %v2624, 0.5
    %v2689 = vmul.f32 %v2625, 0.5
    %v2690 = vmul.f32 %v2626, 0.5
    %v2691 = vmul.f32 %v2627, 0.5
    %v2692 = vmul.f32 %v2628, 0.5
    %v2693 = vmul.f32 %v2629, 0.5
    %v2694 = vmul.f32 %v2630, 0.5
    %v2695 = vmul.f32 %v2631, 0.5
    %v2696 = vmul.f32 %v2632, 0.5
    %v2697 = vmul.f32 %v2633, 0.5
    %v2698 = vmul.f32 %v2634, 0.5
    %v2699 = vmul.f32 %v2635, 0.5
    %v2700 = vmul.f32 %v2636, 0.5
    %v2701 = vmul.f32 %v2637, 0.5
    %v2702 = vmul.f32 %v2638, 0.5
    %v2703 = vmul.f32 %v2639, 0.5
    %v2704 = vmul.f32 %v2640, 0.5
    %v2705 = vmul.f32 %v2641, 0.5
    %v2706 = vmul.f32 %v2642, 0.5
    %v2707 = vmul.f32 %v2643, 0.5
    %v2708 = vmul.f32 %v2644, 0.5
    %v2709 = vtanh.pop %v2645
    %v2710 = vtanh.pop %v2646
    %v2711 = vtanh.pop %v2647
    %v2712 = vtanh.pop %v2648
    %v2713 = vtanh.pop %v2649
    %v2714 = vtanh.pop %v2650
    %v2715 = vtanh.pop %v2651
    %v2716 = vtanh.pop %v2652
    %v2717 = vtanh.pop %v2653
    %v2718 = vtanh.pop %v2654
    %v2719 = vtanh.pop %v2655
    %v2720 = vtanh.pop %v2656
    %v2721 = vtanh.pop %v2657
    %v2722 = vtanh.pop %v2658
    %v2723 = vtanh.pop %v2659
    %v2724 = vtanh.pop %v2660
    %v2725 = vtanh.pop %v2661
    %v2726 = vtanh.pop %v2662
    %v2727 = vtanh.pop %v2663
    %v2728 = vtanh.pop %v2664
    %v2729 = vtanh.pop %v2665
    %v2730 = vtanh.pop %v2666
    %v2731 = vtanh.pop %v2667
    %v2732 = vtanh.pop %v2668
    %v2733 = vtanh.pop %v2669
    %v2734 = vtanh.pop %v2670
    %v2735 = vtanh.pop %v2671
    %v2736 = vtanh.pop %v2672
    %v2737 = vtanh.pop %v2673
    %v2738 = vtanh.pop %v2674
    %v2739 = vtanh.pop %v2675
    %v2740 = vtanh.pop %v2676
    %v2741 = vtanh.pop %v2677
    %v2742 = vtanh.pop %v2678
    %v2743 = vtanh.pop %v2679
    %v2744 = vtanh.pop %v2680
    %v2745 = vtanh.pop %v2681
    %v2746 = vtanh.pop %v2682
    %v2747 = vtanh.pop %v2683
    %v2748 = vtanh.pop %v2684
    %v2749 = vtanh.pop %v2685
    %v2750 = vtanh.pop %v2686
    %v2751 = vtanh.pop %v2687
    %v2752 = vtanh.pop %v2688
    %v2753 = vtanh.pop %v2689
    %v2754 = vtanh.pop %v2690
    %v2755 = vtanh.pop %v2691
    %v2756 = vtanh.pop %v2692
    %v2757 = vtanh.pop %v2693
    %v2758 = vtanh.pop %v2694
    %v2759 = vtanh.pop %v2695
    %v2760 = vtanh.pop %v2696
    %v2761 = vtanh.pop %v2697
    %v2762 = vtanh.pop %v2698
    %v2763 = vtanh.pop %v2699
    %v2764 = vtanh.pop %v2700
    %v2765 = vtanh.pop %v2701
    %v2766 = vtanh.pop %v2702
    %v2767 = vtanh.pop %v2703
    %v2768 = vtanh.pop %v2704
    %v2769 = vtanh.pop %v2705
    %v2770 = vtanh.pop %v2706
    %v2771 = vtanh.pop %v2707
    %v2772 = vtanh.pop %v2708
    %v2773 = vmul.f32 %v2709, 0.5
    %v2774 = vmul.f32 %v2710, 0.5
    %v2775 = vmul.f32 %v2711, 0.5
    %v2776 = vmul.f32 %v2712, 0.5
    %v2777 = vmul.f32 %v2713, 0.5
    %v2778 = vmul.f32 %v2714, 0.5
    %v2779 = vmul.f32 %v2715, 0.5
    %v2780 = vmul.f32 %v2716, 0.5
    %v2781 = vmul.f32 %v2717, 0.5
    %v2782 = vmul.f32 %v2718, 0.5
    %v2783 = vmul.f32 %v2719, 0.5
    %v2784 = vmul.f32 %v2720, 0.5
    %v2785 = vmul.f32 %v2721, 0.5
    %v2786 = vmul.f32 %v2722, 0.5
    %v2787 = vmul.f32 %v2723, 0.5
    %v2788 = vmul.f32 %v2724, 0.5
    %v2789 = vmul.f32 %v2725, 0.5
    %v2790 = vmul.f32 %v2726, 0.5
    %v2791 = vmul.f32 %v2727, 0.5
    %v2792 = vmul.f32 %v2728, 0.5
    %v2793 = vmul.f32 %v2729, 0.5
    %v2794 = vmul.f32 %v2730, 0.5
    %v2795 = vmul.f32 %v2731, 0.5
    %v2796 = vmul.f32 %v2732, 0.5
    %v2797 = vmul.f32 %v2733, 0.5
    %v2798 = vmul.f32 %v2734, 0.5
    %v2799 = vmul.f32 %v2735, 0.5
    %v2800 = vmul.f32 %v2736, 0.5
    %v2801 = vmul.f32 %v2737, 0.5
    %v2802 = vmul.f32 %v2738, 0.5
    %v2803 = vmul.f32 %v2739, 0.5
    %v2804 = vmul.f32 %v2740, 0.5
    %v2805 = vmul.f32 %v2741, 0.5
    %v2806 = vmul.f32 %v2742, 0.5
    %v2807 = vmul.f32 %v2743, 0.5
    %v2808 = vmul.f32 %v2744, 0.5
    %v2809 = vmul.f32 %v2745, 0.5
    %v2810 = vmul.f32 %v2746, 0.5
    %v2811 = vmul.f32 %v2747, 0.5
    %v2812 = vmul.f32 %v2748, 0.5
    %v2813 = vmul.f32 %v2749, 0.5
    %v2814 = vmul.f32 %v2750, 0.5
    %v2815 = vmul.f32 %v2751, 0.5
    %v2816 = vmul.f32 %v2752, 0.5
    %v2817 = vmul.f32 %v2753, 0.5
    %v2818 = vmul.f32 %v2754, 0.5
    %v2819 = vmul.f32 %v2755, 0.5
    %v2820 = vmul.f32 %v2756, 0.5
    %v2821 = vmul.f32 %v2757, 0.5
    %v2822 = vmul.f32 %v2758, 0.5
    %v2823 = vmul.f32 %v2759, 0.5
    %v2824 = vmul.f32 %v2760, 0.5
    %v2825 = vmul.f32 %v2761, 0.5
    %v2826 = vmul.f32 %v2762, 0.5
    %v2827 = vmul.f32 %v2763, 0.5
    %v2828 = vmul.f32 %v2764, 0.5
    %v2829 = vmul.f32 %v2765, 0.5
    %v2830 = vmul.f32 %v2766, 0.5
    %v2831 = vmul.f32 %v2767, 0.5
    %v2832 = vmul.f32 %v2768, 0.5
    %v2833 = vmul.f32 %v2769, 0.5
    %v2834 = vmul.f32 %v2770, 0.5
    %v2835 = vmul.f32 %v2771, 0.5
    %v2836 = vmul.f32 %v2772, 0.5
    %v2837 = vadd.f32 %v2773, 0.5
    %v2838 = vadd.f32 %v2774, 0.5
    %v2839 = vadd.f32 %v2775, 0.5
    %v2840 = vadd.f32 %v2776, 0.5
    %v2841 = vadd.f32 %v2777, 0.5
    %v2842 = vadd.f32 %v2778, 0.5
    %v2843 = vadd.f32 %v2779, 0.5
    %v2844 = vadd.f32 %v2780, 0.5
    %v2845 = vadd.f32 %v2781, 0.5
    %v2846 = vadd.f32 %v2782, 0.5
    %v2847 = vadd.f32 %v2783, 0.5
    %v2848 = vadd.f32 %v2784, 0.5
    %v2849 = vadd.f32 %v2785, 0.5
    %v2850 = vadd.f32 %v2786, 0.5
    %v2851 = vadd.f32 %v2787, 0.5
    %v2852 = vadd.f32 %v2788, 0.5
    %v2853 = vadd.f32 %v2789, 0.5
    %v2854 = vadd.f32 %v2790, 0.5
    %v2855 = vadd.f32 %v2791, 0.5
    %v2856 = vadd.f32 %v2792, 0.5
    %v2857 = vadd.f32 %v2793, 0.5
    %v2858 = vadd.f32 %v2794, 0.5
    %v2859 = vadd.f32 %v2795, 0.5
    %v2860 = vadd.f32 %v2796, 0.5
    %v2861 = vadd.f32 %v2797, 0.5
    %v2862 = vadd.f32 %v2798, 0.5
    %v2863 = vadd.f32 %v2799, 0.5
    %v2864 = vadd.f32 %v2800, 0.5
    %v2865 = vadd.f32 %v2801, 0.5
    %v2866 = vadd.f32 %v2802, 0.5
    %v2867 = vadd.f32 %v2803, 0.5
    %v2868 = vadd.f32 %v2804, 0.5
    %v2869 = vadd.f32 %v2805, 0.5
    %v2870 = vadd.f32 %v2806, 0.5
    %v2871 = vadd.f32 %v2807, 0.5
    %v2872 = vadd.f32 %v2808, 0.5
    %v2873 = vadd.f32 %v2809, 0.5
    %v2874 = vadd.f32 %v2810, 0.5
    %v2875 = vadd.f32 %v2811, 0.5
    %v2876 = vadd.f32 %v2812, 0.5
    %v2877 = vadd.f32 %v2813, 0.5
    %v2878 = vadd.f32 %v2814, 0.5
    %v2879 = vadd.f32 %v2815, 0.5
    %v2880 = vadd.f32 %v2816, 0.5
    %v2881 = vadd.f32 %v2817, 0.5
    %v2882 = vadd.f32 %v2818, 0.5
    %v2883 = vadd.f32 %v2819, 0.5
    %v2884 = vadd.f32 %v2820, 0.5
    %v2885 = vadd.f32 %v2821, 0.5
    %v2886 = vadd.f32 %v2822, 0.5
    %v2887 = vadd.f32 %v2823, 0.5
    %v2888 = vadd.f32 %v2824, 0.5
    %v2889 = vadd.f32 %v2825, 0.5
    %v2890 = vadd.f32 %v2826, 0.5
    %v2891 = vadd.f32 %v2827, 0.5
    %v2892 = vadd.f32 %v2828, 0.5
    %v2893 = vadd.f32 %v2829, 0.5
    %v2894 = vadd.f32 %v2830, 0.5
    %v2895 = vadd.f32 %v2831, 0.5
    %v2896 = vadd.f32 %v2832, 0.5
    %v2897 = vadd.f32 %v2833, 0.5
    %v2898 = vadd.f32 %v2834, 0.5
    %v2899 = vadd.f32 %v2835, 0.5
    %v2900 = vadd.f32 %v2836, 0.5
    %v2901 = vmul.f32 %v2581, %v2837
    %v2902 = vmul.f32 %v2582, %v2838
    %v2903 = vmul.f32 %v2583, %v2839
    %v2904 = vmul.f32 %v2584, %v2840
    %v2905 = vmul.f32 %v2585, %v2841
    %v2906 = vmul.f32 %v2586, %v2842
    %v2907 = vmul.f32 %v2587, %v2843
    %v2908 = vmul.f32 %v2588, %v2844
    %v2909 = vmul.f32 %v2589, %v2845
    %v2910 = vmul.f32 %v2590, %v2846
    %v2911 = vmul.f32 %v2591, %v2847
    %v2912 = vmul.f32 %v2592, %v2848
    %v2913 = vmul.f32 %v2593, %v2849
    %v2914 = vmul.f32 %v2594, %v2850
    %v2915 = vmul.f32 %v2595, %v2851
    %v2916 = vmul.f32 %v2596, %v2852
    %v2917 = vmul.f32 %v2597, %v2853
    %v2918 = vmul.f32 %v2598, %v2854
    %v2919 = vmul.f32 %v2599, %v2855
    %v2920 = vmul.f32 %v2600, %v2856
    %v2921 = vmul.f32 %v2601, %v2857
    %v2922 = vmul.f32 %v2602, %v2858
    %v2923 = vmul.f32 %v2603, %v2859
    %v2924 = vmul.f32 %v2604, %v2860
    %v2925 = vmul.f32 %v2605, %v2861
    %v2926 = vmul.f32 %v2606, %v2862
    %v2927 = vmul.f32 %v2607, %v2863
    %v2928 = vmul.f32 %v2608, %v2864
    %v2929 = vmul.f32 %v2609, %v2865
    %v2930 = vmul.f32 %v2610, %v2866
    %v2931 = vmul.f32 %v2611, %v2867
    %v2932 = vmul.f32 %v2612, %v2868
    %v2933 = vmul.f32 %v2613, %v2869
    %v2934 = vmul.f32 %v2614, %v2870
    %v2935 = vmul.f32 %v2615, %v2871
    %v2936 = vmul.f32 %v2616, %v2872
    %v2937 = vmul.f32 %v2617, %v2873
    %v2938 = vmul.f32 %v2618, %v2874
    %v2939 = vmul.f32 %v2619, %v2875
    %v2940 = vmul.f32 %v2620, %v2876
    %v2941 = vmul.f32 %v2621, %v2877
    %v2942 = vmul.f32 %v2622, %v2878
    %v2943 = vmul.f32 %v2623, %v2879
    %v2944 = vmul.f32 %v2624, %v2880
    %v2945 = vmul.f32 %v2625, %v2881
    %v2946 = vmul.f32 %v2626, %v2882
    %v2947 = vmul.f32 %v2627, %v2883
    %v2948 = vmul.f32 %v2628, %v2884
    %v2949 = vmul.f32 %v2629, %v2885
    %v2950 = vmul.f32 %v2630, %v2886
    %v2951 = vmul.f32 %v2631, %v2887
    %v2952 = vmul.f32 %v2632, %v2888
    %v2953 = vmul.f32 %v2633, %v2889
    %v2954 = vmul.f32 %v2634, %v2890
    %v2955 = vmul.f32 %v2635, %v2891
    %v2956 = vmul.f32 %v2636, %v2892
    %v2957 = vmul.f32 %v2637, %v2893
    %v2958 = vmul.f32 %v2638, %v2894
    %v2959 = vmul.f32 %v2639, %v2895
    %v2960 = vmul.f32 %v2640, %v2896
    %v2961 = vmul.f32 %v2641, %v2897
    %v2962 = vmul.f32 %v2642, %v2898
    %v2963 = vmul.f32 %v2643, %v2899
    %v2964 = vmul.f32 %v2644, %v2900
    %v2965 = vpack.c.bf16 %v2903, %v2901
    %v2966 = vpack.c.bf16 %v2904, %v2902
    %v2967 = vpack.c.bf16 %v2907, %v2905
    %v2968 = vpack.c.bf16 %v2908, %v2906
    %v2969 = vpack.c.bf16 %v2911, %v2909
    %v2970 = vpack.c.bf16 %v2912, %v2910
    %v2971 = vpack.c.bf16 %v2915, %v2913
    %v2972 = vpack.c.bf16 %v2916, %v2914
    %v2973 = vpack.c.bf16 %v2919, %v2917
    %v2974 = vpack.c.bf16 %v2920, %v2918
    %v2975 = vpack.c.bf16 %v2923, %v2921
    %v2976 = vpack.c.bf16 %v2924, %v2922
    %v2977 = vpack.c.bf16 %v2927, %v2925
    %v2978 = vpack.c.bf16 %v2928, %v2926
    %v2979 = vpack.c.bf16 %v2931, %v2929
    %v2980 = vpack.c.bf16 %v2932, %v2930
    %v2981 = vpack.c.bf16 %v2935, %v2933
    %v2982 = vpack.c.bf16 %v2936, %v2934
    %v2983 = vpack.c.bf16 %v2939, %v2937
    %v2984 = vpack.c.bf16 %v2940, %v2938
    %v2985 = vpack.c.bf16 %v2943, %v2941
    %v2986 = vpack.c.bf16 %v2944, %v2942
    %v2987 = vpack.c.bf16 %v2947, %v2945
    %v2988 = vpack.c.bf16 %v2948, %v2946
    %v2989 = vpack.c.bf16 %v2951, %v2949
    %v2990 = vpack.c.bf16 %v2952, %v2950
    %v2991 = vpack.c.bf16 %v2955, %v2953
    %v2992 = vpack.c.bf16 %v2956, %v2954
    %v2993 = vpack.c.bf16 %v2959, %v2957
    %v2994 = vpack.c.bf16 %v2960, %v2958
    %v2995 = vpack.c.bf16 %v2963, %v2961
    %v2996 = vpack.c.bf16 %v2964, %v2962
    %v2997 = vld [vmem:[#allocation5] sm:$0xff]
    %v2998 = vld [vmem:[#allocation5 + $0x8] sm:$0xff]
    %v2999 = vld [vmem:[#allocation5 + $0x10] sm:$0xff]
    %v3000 = vld [vmem:[#allocation5 + $0x18] sm:$0xff]
    %v3001 = vld [vmem:[#allocation5 + $0x20] sm:$0xff]
    %v3002 = vld [vmem:[#allocation5 + $0x28] sm:$0xff]
    %v3003 = vld [vmem:[#allocation5 + $0x30] sm:$0xff]
    %v3004 = vld [vmem:[#allocation5 + $0x38] sm:$0xff]
    %v3005 = vld [vmem:[#allocation5 + $0x40] sm:$0xff]
    %v3006 = vld [vmem:[#allocation5 + $0x48] sm:$0xff]
    %v3007 = vld [vmem:[#allocation5 + $0x50] sm:$0xff]
    %v3008 = vld [vmem:[#allocation5 + $0x58] sm:$0xff]
    %v3009 = vld [vmem:[#allocation5 + $0x60] sm:$0xff]
    %v3010 = vld [vmem:[#allocation5 + $0x68] sm:$0xff]
    %v3011 = vld [vmem:[#allocation5 + $0x70] sm:$0xff]
    %v3012 = vld [vmem:[#allocation5 + $0x78] sm:$0xff]
    %v3013 = vld [vmem:[#allocation5 + $0x80] sm:$0xff]
    %v3014 = vld [vmem:[#allocation5 + $0x88] sm:$0xff]
    %v3015 = vld [vmem:[#allocation5 + $0x90] sm:$0xff]
    %v3016 = vld [vmem:[#allocation5 + $0x98] sm:$0xff]
    %v3017 = vld [vmem:[#allocation5 + $0xa0] sm:$0xff]
    %v3018 = vld [vmem:[#allocation5 + $0xa8] sm:$0xff]
    %v3019 = vld [vmem:[#allocation5 + $0xb0] sm:$0xff]
    %v3020 = vld [vmem:[#allocation5 + $0xb8] sm:$0xff]
    %v3021 = vld [vmem:[#allocation5 + $0xc0] sm:$0xff]
    %v3022 = vld [vmem:[#allocation5 + $0xc8] sm:$0xff]
    %v3023 = vld [vmem:[#allocation5 + $0xd0] sm:$0xff]
    %v3024 = vld [vmem:[#allocation5 + $0xd8] sm:$0xff]
    %v3025 = vld [vmem:[#allocation5 + $0xe0] sm:$0xff]
    %v3026 = vld [vmem:[#allocation5 + $0xe8] sm:$0xff]
    %v3027 = vld [vmem:[#allocation5 + $0xf0] sm:$0xff]
    %v3028 = vld [vmem:[#allocation5 + $0xf8] sm:$0xff]
    %v3029 = vld [vmem:[%s8] ss:$4 sm:$0x3]
    %v3031 = vlaneseq
    %v3032 = vshrl.u32 %v3031, 7
    %v3033 = vsub.s32 0, %v3032
    %v3034 = vrot.slane %v3029, %v3033
    %v3035 = vlaneseq
    %v3036 = vshrl.u32 %v3035, 7
    %v3037 = vsub.s32 1, %v3036
    %v3038 = vrot.slane %v3029, %v3037
    %v3073 = vunpack.c.l.b16 %v2997
    %v3074 = vunpack.c.h.b16 %v2997
    %v3075 = vunpack.c.l.b16 %v2998
    %v3076 = vunpack.c.h.b16 %v2998
    %v3077 = vunpack.c.l.b16 %v2999
    %v3078 = vunpack.c.h.b16 %v2999
    %v3079 = vunpack.c.l.b16 %v3000
    %v3080 = vunpack.c.h.b16 %v3000
    %v3081 = vunpack.c.l.b16 %v3001
    %v3082 = vunpack.c.h.b16 %v3001
    %v3083 = vunpack.c.l.b16 %v3002
    %v3084 = vunpack.c.h.b16 %v3002
    %v3085 = vunpack.c.l.b16 %v3003
    %v3086 = vunpack.c.h.b16 %v3003
    %v3087 = vunpack.c.l.b16 %v3004
    %v3088 = vunpack.c.h.b16 %v3004
    %v3089 = vunpack.c.l.b16 %v3005
    %v3090 = vunpack.c.h.b16 %v3005
    %v3091 = vunpack.c.l.b16 %v3006
    %v3092 = vunpack.c.h.b16 %v3006
    %v3093 = vunpack.c.l.b16 %v3007
    %v3094 = vunpack.c.h.b16 %v3007
    %v3095 = vunpack.c.l.b16 %v3008
    %v3096 = vunpack.c.h.b16 %v3008
    %v3097 = vunpack.c.l.b16 %v3009
    %v3098 = vunpack.c.h.b16 %v3009
    %v3099 = vunpack.c.l.b16 %v3010
    %v3100 = vunpack.c.h.b16 %v3010
    %v3101 = vunpack.c.l.b16 %v3011
    %v3102 = vunpack.c.h.b16 %v3011
    %v3103 = vunpack.c.l.b16 %v3012
    %v3104 = vunpack.c.h.b16 %v3012
    %v3105 = vunpack.c.l.b16 %v3013
    %v3106 = vunpack.c.h.b16 %v3013
    %v3107 = vunpack.c.l.b16 %v3014
    %v3108 = vunpack.c.h.b16 %v3014
    %v3109 = vunpack.c.l.b16 %v3015
    %v3110 = vunpack.c.h.b16 %v3015
    %v3111 = vunpack.c.l.b16 %v3016
    %v3112 = vunpack.c.h.b16 %v3016
    %v3113 = vunpack.c.l.b16 %v3017
    %v3114 = vunpack.c.h.b16 %v3017
    %v3115 = vunpack.c.l.b16 %v3018
    %v3116 = vunpack.c.h.b16 %v3018
    %v3117 = vunpack.c.l.b16 %v3019
    %v3118 = vunpack.c.h.b16 %v3019
    %v3119 = vunpack.c.l.b16 %v3020
    %v3120 = vunpack.c.h.b16 %v3020
    %v3121 = vunpack.c.l.b16 %v3021
    %v3122 = vunpack.c.h.b16 %v3021
    %v3123 = vunpack.c.l.b16 %v3022
    %v3124 = vunpack.c.h.b16 %v3022
    %v3125 = vunpack.c.l.b16 %v3023
    %v3126 = vunpack.c.h.b16 %v3023
    %v3127 = vunpack.c.l.b16 %v3024
    %v3128 = vunpack.c.h.b16 %v3024
    %v3129 = vunpack.c.l.b16 %v3025
    %v3130 = vunpack.c.h.b16 %v3025
    %v3131 = vunpack.c.l.b16 %v3026
    %v3132 = vunpack.c.h.b16 %v3026
    %v3133 = vunpack.c.l.b16 %v3027
    %v3134 = vunpack.c.h.b16 %v3027
    %v3135 = vunpack.c.l.b16 %v3028
    %v3136 = vunpack.c.h.b16 %v3028
    %v3137 = vpack.c.b16 %v3075, %v3073
    %v3138 = vpack.c.b16 %v3076, %v3074
    %v3139 = vpack.c.b16 %v3079, %v3077
    %v3140 = vpack.c.b16 %v3080, %v3078
    %v3141 = vpack.c.b16 %v3083, %v3081
    %v3142 = vpack.c.b16 %v3084, %v3082
    %v3143 = vpack.c.b16 %v3087, %v3085
    %v3144 = vpack.c.b16 %v3088, %v3086
    %v3145 = vpack.c.b16 %v3091, %v3089
    %v3146 = vpack.c.b16 %v3092, %v3090
    %v3147 = vpack.c.b16 %v3095, %v3093
    %v3148 = vpack.c.b16 %v3096, %v3094
    %v3149 = vpack.c.b16 %v3099, %v3097
    %v3150 = vpack.c.b16 %v3100, %v3098
    %v3151 = vpack.c.b16 %v3103, %v3101
    %v3152 = vpack.c.b16 %v3104, %v3102
    %v3153 = vpack.c.b16 %v3107, %v3105
    %v3154 = vpack.c.b16 %v3108, %v3106
    %v3155 = vpack.c.b16 %v3111, %v3109
    %v3156 = vpack.c.b16 %v3112, %v3110
    %v3157 = vpack.c.b16 %v3115, %v3113
    %v3158 = vpack.c.b16 %v3116, %v3114
    %v3159 = vpack.c.b16 %v3119, %v3117
    %v3160 = vpack.c.b16 %v3120, %v3118
    %v3161 = vpack.c.b16 %v3123, %v3121
    %v3162 = vpack.c.b16 %v3124, %v3122
    %v3163 = vpack.c.b16 %v3127, %v3125
    %v3164 = vpack.c.b16 %v3128, %v3126
    %v3165 = vpack.c.b16 %v3131, %v3129
    %v3166 = vpack.c.b16 %v3132, %v3130
    %v3167 = vpack.c.b16 %v3135, %v3133
    %v3168 = vpack.c.b16 %v3136, %v3134
    %3201 = vmatprep.subr.bf16.mxu0 %v3152
    %3202 = vmatpush1.bf16.msra.mxu0 %v3151
    %3203 = vmatprep.subr.bf16.mxu0 %v3150
    %3204 = vmatpush1.bf16.msra.mxu0 %v3149
    %3205 = vmatprep.subr.bf16.mxu0 %v3148
    %3206 = vmatpush1.bf16.msra.mxu0 %v3147
    %3207 = vmatprep.subr.bf16.mxu0 %v3146
    %3208 = vmatpush1.bf16.msra.mxu0 %v3145
    %3209 = vmatprep.subr.bf16.mxu0 %v3144
    %3210 = vmatpush1.bf16.msra.mxu0 %v3143
    %3211 = vmatprep.subr.bf16.mxu0 %v3142
    %3212 = vmatpush1.bf16.msra.mxu0 %v3141
    %3213 = vmatprep.subr.bf16.mxu0 %v3140
    %3214 = vmatpush1.bf16.msra.mxu0 %v3139
    %3215 = vmatprep.subr.bf16.mxu0 %v3138
    %3216 = vmatpush1.bf16.msra.mxu0 %v3137
    %3217 = vmatprep.subr.bf16.mxu0 %v3168
    %3218 = vmatpush2.bf16.msra.mxu0 %v3167
    %3219 = vmatprep.subr.bf16.mxu0 %v3166
    %3220 = vmatpush2.bf16.msra.mxu0 %v3165
    %3221 = vmatprep.subr.bf16.mxu0 %v3164
    %3222 = vmatpush2.bf16.msra.mxu0 %v3163
    %3223 = vmatprep.subr.bf16.mxu0 %v3162
    %3224 = vmatpush2.bf16.msra.mxu0 %v3161
    %3225 = vmatprep.subr.bf16.mxu0 %v3160
    %3226 = vmatpush2.bf16.msra.mxu0 %v3159
    %3227 = vmatprep.subr.bf16.mxu0 %v3158
    %3228 = vmatpush2.bf16.msra.mxu0 %v3157
    %3229 = vmatprep.subr.bf16.mxu0 %v3156
    %3230 = vmatpush2.bf16.msra.mxu0 %v3155
    %3231 = vmatprep.subr.bf16.mxu0 %v3154
    %3232 = vmatpush2.bf16.msra.mxu0 %v3153
    %3233 = vmatprep.mubr.bf16.mxu0 %v2966
    %3234 = vmatmul.mubr.bf16.gmra.mxu0 %v2965
    %v3235 = vpop.f32.mrf.mxu0
    %v3236 = vadd.f32 %v3034, %v3235
    %v3237 = vpop.f32.mrf.mxu0
    %v3238 = vadd.f32 %v3038, %v3237
    %v3239 = vpop.f32.mrf.mxu0
    %v3240 = vadd.f32 %v3034, %v3239
    %v3241 = vpop.f32.mrf.mxu0
    %v3242 = vadd.f32 %v3038, %v3241
    %3243 = vmatprep.mubr.bf16.mxu0 %v2968
    %3244 = vmatmul.mubr.bf16.gmra.mxu0 %v2967
    %v3245 = vpop.f32.mrf.mxu0
    %v3246 = vadd.f32 %v3034, %v3245
    %v3247 = vpop.f32.mrf.mxu0
    %v3248 = vadd.f32 %v3038, %v3247
    %v3249 = vpop.f32.mrf.mxu0
    %v3250 = vadd.f32 %v3034, %v3249
    %v3251 = vpop.f32.mrf.mxu0
    %v3252 = vadd.f32 %v3038, %v3251
    %3253 = vmatprep.mubr.bf16.mxu0 %v2970
    %3254 = vmatmul.mubr.bf16.gmra.mxu0 %v2969
    %v3255 = vpop.f32.mrf.mxu0
    %v3256 = vadd.f32 %v3034, %v3255
    %v3257 = vpop.f32.mrf.mxu0
    %v3258 = vadd.f32 %v3038, %v3257
    %v3259 = vpop.f32.mrf.mxu0
    %v3260 = vadd.f32 %v3034, %v3259
    %v3261 = vpop.f32.mrf.mxu0
    %v3262 = vadd.f32 %v3038, %v3261
    %3263 = vmatprep.mubr.bf16.mxu0 %v2972
    %3264 = vmatmul.mubr.bf16.gmra.mxu0 %v2971
    %v3265 = vpop.f32.mrf.mxu0
    %v3266 = vadd.f32 %v3034, %v3265
    %v3267 = vpop.f32.mrf.mxu0
    %v3268 = vadd.f32 %v3038, %v3267
    %v3269 = vpop.f32.mrf.mxu0
    %v3270 = vadd.f32 %v3034, %v3269
    %v3271 = vpop.f32.mrf.mxu0
    %v3272 = vadd.f32 %v3038, %v3271
    %3273 = vmatprep.mubr.bf16.mxu0 %v2974
    %3274 = vmatmul.mubr.bf16.gmra.mxu0 %v2973
    %v3275 = vpop.f32.mrf.mxu0
    %v3276 = vadd.f32 %v3034, %v3275
    %v3277 = vpop.f32.mrf.mxu0
    %v3278 = vadd.f32 %v3038, %v3277
    %v3279 = vpop.f32.mrf.mxu0
    %v3280 = vadd.f32 %v3034, %v3279
    %v3281 = vpop.f32.mrf.mxu0
    %v3282 = vadd.f32 %v3038, %v3281
    %3283 = vmatprep.mubr.bf16.mxu0 %v2976
    %3284 = vmatmul.mubr.bf16.gmra.mxu0 %v2975
    %v3285 = vpop.f32.mrf.mxu0
    %v3286 = vadd.f32 %v3034, %v3285
    %v3287 = vpop.f32.mrf.mxu0
    %v3288 = vadd.f32 %v3038, %v3287
    %v3289 = vpop.f32.mrf.mxu0
    %v3290 = vadd.f32 %v3034, %v3289
    %v3291 = vpop.f32.mrf.mxu0
    %v3292 = vadd.f32 %v3038, %v3291
    %3293 = vmatprep.mubr.bf16.mxu0 %v2978
    %3294 = vmatmul.mubr.bf16.gmra.mxu0 %v2977
    %v3295 = vpop.f32.mrf.mxu0
    %v3296 = vadd.f32 %v3034, %v3295
    %v3297 = vpop.f32.mrf.mxu0
    %v3298 = vadd.f32 %v3038, %v3297
    %v3299 = vpop.f32.mrf.mxu0
    %v3300 = vadd.f32 %v3034, %v3299
    %v3301 = vpop.f32.mrf.mxu0
    %v3302 = vadd.f32 %v3038, %v3301
    %3303 = vmatprep.mubr.bf16.mxu0 %v2980
    %3304 = vmatmul.mubr.bf16.gmra.mxu0 %v2979
    %v3305 = vpop.f32.mrf.mxu0
    %v3306 = vadd.f32 %v3034, %v3305
    %v3307 = vpop.f32.mrf.mxu0
    %v3308 = vadd.f32 %v3038, %v3307
    %v3309 = vpop.f32.mrf.mxu0
    %v3310 = vadd.f32 %v3034, %v3309
    %v3311 = vpop.f32.mrf.mxu0
    %v3312 = vadd.f32 %v3038, %v3311
    %3313 = vmatprep.mubr.bf16.mxu0 %v2982
    %3314 = vmatmul.mubr.bf16.gmra.mxu0 %v2981
    %v3315 = vpop.f32.mrf.mxu0
    %v3316 = vadd.f32 %v3034, %v3315
    %v3317 = vpop.f32.mrf.mxu0
    %v3318 = vadd.f32 %v3038, %v3317
    %v3319 = vpop.f32.mrf.mxu0
    %v3320 = vadd.f32 %v3034, %v3319
    %v3321 = vpop.f32.mrf.mxu0
    %v3322 = vadd.f32 %v3038, %v3321
    %3323 = vmatprep.mubr.bf16.mxu0 %v2984
    %3324 = vmatmul.mubr.bf16.gmra.mxu0 %v2983
    %v3325 = vpop.f32.mrf.mxu0
    %v3326 = vadd.f32 %v3034, %v3325
    %v3327 = vpop.f32.mrf.mxu0
    %v3328 = vadd.f32 %v3038, %v3327
    %v3329 = vpop.f32.mrf.mxu0
    %v3330 = vadd.f32 %v3034, %v3329
    %v3331 = vpop.f32.mrf.mxu0
    %v3332 = vadd.f32 %v3038, %v3331
    %3333 = vmatprep.mubr.bf16.mxu0 %v2986
    %3334 = vmatmul.mubr.bf16.gmra.mxu0 %v2985
    %v3335 = vpop.f32.mrf.mxu0
    %v3336 = vadd.f32 %v3034, %v3335
    %v3337 = vpop.f32.mrf.mxu0
    %v3338 = vadd.f32 %v3038, %v3337
    %v3339 = vpop.f32.mrf.mxu0
    %v3340 = vadd.f32 %v3034, %v3339
    %v3341 = vpop.f32.mrf.mxu0
    %v3342 = vadd.f32 %v3038, %v3341
    %3343 = vmatprep.mubr.bf16.mxu0 %v2988
    %3344 = vmatmul.mubr.bf16.gmra.mxu0 %v2987
    %v3345 = vpop.f32.mrf.mxu0
    %v3346 = vadd.f32 %v3034, %v3345
    %v3347 = vpop.f32.mrf.mxu0
    %v3348 = vadd.f32 %v3038, %v3347
    %v3349 = vpop.f32.mrf.mxu0
    %v3350 = vadd.f32 %v3034, %v3349
    %v3351 = vpop.f32.mrf.mxu0
    %v3352 = vadd.f32 %v3038, %v3351
    %3353 = vmatprep.mubr.bf16.mxu0 %v2990
    %3354 = vmatmul.mubr.bf16.gmra.mxu0 %v2989
    %v3355 = vpop.f32.mrf.mxu0
    %v3356 = vadd.f32 %v3034, %v3355
    %v3357 = vpop.f32.mrf.mxu0
    %v3358 = vadd.f32 %v3038, %v3357
    %v3359 = vpop.f32.mrf.mxu0
    %v3360 = vadd.f32 %v3034, %v3359
    %v3361 = vpop.f32.mrf.mxu0
    %v3362 = vadd.f32 %v3038, %v3361
    %3363 = vmatprep.mubr.bf16.mxu0 %v2992
    %3364 = vmatmul.mubr.bf16.gmra.mxu0 %v2991
    %v3365 = vpop.f32.mrf.mxu0
    %v3366 = vadd.f32 %v3034, %v3365
    %v3367 = vpop.f32.mrf.mxu0
    %v3368 = vadd.f32 %v3038, %v3367
    %v3369 = vpop.f32.mrf.mxu0
    %v3370 = vadd.f32 %v3034, %v3369
    %v3371 = vpop.f32.mrf.mxu0
    %v3372 = vadd.f32 %v3038, %v3371
    %3373 = vmatprep.mubr.bf16.mxu0 %v2994
    %3374 = vmatmul.mubr.bf16.gmra.mxu0 %v2993
    %v3375 = vpop.f32.mrf.mxu0
    %v3376 = vadd.f32 %v3034, %v3375
    %v3377 = vpop.f32.mrf.mxu0
    %v3378 = vadd.f32 %v3038, %v3377
    %v3379 = vpop.f32.mrf.mxu0
    %v3380 = vadd.f32 %v3034, %v3379
    %v3381 = vpop.f32.mrf.mxu0
    %v3382 = vadd.f32 %v3038, %v3381
    %3383 = vmatprep.mubr.bf16.mxu0 %v2996
    %3384 = vmatmul.mubr.bf16.gmra.mxu0 %v2995
    %v3385 = vpop.f32.mrf.mxu0
    %v3386 = vadd.f32 %v3034, %v3385
    %v3387 = vpop.f32.mrf.mxu0
    %v3388 = vadd.f32 %v3038, %v3387
    %v3389 = vpop.f32.mrf.mxu0
    %v3390 = vadd.f32 %v3034, %v3389
    %v3391 = vpop.f32.mrf.mxu0
    %v3392 = vadd.f32 %v3038, %v3391
    %3393 = vdwg.mxu0
    %v3394 = vmul.f32 %v3236, 0.5
    %v3395 = vmul.f32 %v3238, 0.5
    %v3396 = vmul.f32 %v3240, 0.5
    %v3397 = vmul.f32 %v3242, 0.5
    %v3398 = vmul.f32 %v3246, 0.5
    %v3399 = vmul.f32 %v3248, 0.5
    %v3400 = vmul.f32 %v3250, 0.5
    %v3401 = vmul.f32 %v3252, 0.5
    %v3402 = vmul.f32 %v3256, 0.5
    %v3403 = vmul.f32 %v3258, 0.5
    %v3404 = vmul.f32 %v3260, 0.5
    %v3405 = vmul.f32 %v3262, 0.5
    %v3406 = vmul.f32 %v3266, 0.5
    %v3407 = vmul.f32 %v3268, 0.5
    %v3408 = vmul.f32 %v3270, 0.5
    %v3409 = vmul.f32 %v3272, 0.5
    %v3410 = vmul.f32 %v3276, 0.5
    %v3411 = vmul.f32 %v3278, 0.5
    %v3412 = vmul.f32 %v3280, 0.5
    %v3413 = vmul.f32 %v3282, 0.5
    %v3414 = vmul.f32 %v3286, 0.5
    %v3415 = vmul.f32 %v3288, 0.5
    %v3416 = vmul.f32 %v3290, 0.5
    %v3417 = vmul.f32 %v3292, 0.5
    %v3418 = vmul.f32 %v3296, 0.5
    %v3419 = vmul.f32 %v3298, 0.5
    %v3420 = vmul.f32 %v3300, 0.5
    %v3421 = vmul.f32 %v3302, 0.5
    %v3422 = vmul.f32 %v3306, 0.5
    %v3423 = vmul.f32 %v3308, 0.5
    %v3424 = vmul.f32 %v3310, 0.5
    %v3425 = vmul.f32 %v3312, 0.5
    %v3426 = vmul.f32 %v3316, 0.5
    %v3427 = vmul.f32 %v3318, 0.5
    %v3428 = vmul.f32 %v3320, 0.5
    %v3429 = vmul.f32 %v3322, 0.5
    %v3430 = vmul.f32 %v3326, 0.5
    %v3431 = vmul.f32 %v3328, 0.5
    %v3432 = vmul.f32 %v3330, 0.5
    %v3433 = vmul.f32 %v3332, 0.5
    %v3434 = vmul.f32 %v3336, 0.5
    %v3435 = vmul.f32 %v3338, 0.5
    %v3436 = vmul.f32 %v3340, 0.5
    %v3437 = vmul.f32 %v3342, 0.5
    %v3438 = vmul.f32 %v3346, 0.5
    %v3439 = vmul.f32 %v3348, 0.5
    %v3440 = vmul.f32 %v3350, 0.5
    %v3441 = vmul.f32 %v3352, 0.5
    %v3442 = vmul.f32 %v3356, 0.5
    %v3443 = vmul.f32 %v3358, 0.5
    %v3444 = vmul.f32 %v3360, 0.5
    %v3445 = vmul.f32 %v3362, 0.5
    %v3446 = vmul.f32 %v3366, 0.5
    %v3447 = vmul.f32 %v3368, 0.5
    %v3448 = vmul.f32 %v3370, 0.5
    %v3449 = vmul.f32 %v3372, 0.5
    %v3450 = vmul.f32 %v3376, 0.5
    %v3451 = vmul.f32 %v3378, 0.5
    %v3452 = vmul.f32 %v3380, 0.5
    %v3453 = vmul.f32 %v3382, 0.5
    %v3454 = vmul.f32 %v3386, 0.5
    %v3455 = vmul.f32 %v3388, 0.5
    %v3456 = vmul.f32 %v3390, 0.5
    %v3457 = vmul.f32 %v3392, 0.5
    %v3458 = vtanh.pop %v3394
    %v3459 = vtanh.pop %v3395
    %v3460 = vtanh.pop %v3396
    %v3461 = vtanh.pop %v3397
    %v3462 = vtanh.pop %v3398
    %v3463 = vtanh.pop %v3399
    %v3464 = vtanh.pop %v3400
    %v3465 = vtanh.pop %v3401
    %v3466 = vtanh.pop %v3402
    %v3467 = vtanh.pop %v3403
    %v3468 = vtanh.pop %v3404
    %v3469 = vtanh.pop %v3405
    %v3470 = vtanh.pop %v3406
    %v3471 = vtanh.pop %v3407
    %v3472 = vtanh.pop %v3408
    %v3473 = vtanh.pop %v3409
    %v3474 = vtanh.pop %v3410
    %v3475 = vtanh.pop %v3411
    %v3476 = vtanh.pop %v3412
    %v3477 = vtanh.pop %v3413
    %v3478 = vtanh.pop %v3414
    %v3479 = vtanh.pop %v3415
    %v3480 = vtanh.pop %v3416
    %v3481 = vtanh.pop %v3417
    %v3482 = vtanh.pop %v3418
    %v3483 = vtanh.pop %v3419
    %v3484 = vtanh.pop %v3420
    %v3485 = vtanh.pop %v3421
    %v3486 = vtanh.pop %v3422
    %v3487 = vtanh.pop %v3423
    %v3488 = vtanh.pop %v3424
    %v3489 = vtanh.pop %v3425
    %v3490 = vtanh.pop %v3426
    %v3491 = vtanh.pop %v3427
    %v3492 = vtanh.pop %v3428
    %v3493 = vtanh.pop %v3429
    %v3494 = vtanh.pop %v3430
    %v3495 = vtanh.pop %v3431
    %v3496 = vtanh.pop %v3432
    %v3497 = vtanh.pop %v3433
    %v3498 = vtanh.pop %v3434
    %v3499 = vtanh.pop %v3435
    %v3500 = vtanh.pop %v3436
    %v3501 = vtanh.pop %v3437
    %v3502 = vtanh.pop %v3438
    %v3503 = vtanh.pop %v3439
    %v3504 = vtanh.pop %v3440
    %v3505 = vtanh.pop %v3441
    %v3506 = vtanh.pop %v3442
    %v3507 = vtanh.pop %v3443
    %v3508 = vtanh.pop %v3444
    %v3509 = vtanh.pop %v3445
    %v3510 = vtanh.pop %v3446
    %v3511 = vtanh.pop %v3447
    %v3512 = vtanh.pop %v3448
    %v3513 = vtanh.pop %v3449
    %v3514 = vtanh.pop %v3450
    %v3515 = vtanh.pop %v3451
    %v3516 = vtanh.pop %v3452
    %v3517 = vtanh.pop %v3453
    %v3518 = vtanh.pop %v3454
    %v3519 = vtanh.pop %v3455
    %v3520 = vtanh.pop %v3456
    %v3521 = vtanh.pop %v3457
    %v3522 = vmul.f32 %v3458, 0.5
    %v3523 = vmul.f32 %v3459, 0.5
    %v3524 = vmul.f32 %v3460, 0.5
    %v3525 = vmul.f32 %v3461, 0.5
    %v3526 = vmul.f32 %v3462, 0.5
    %v3527 = vmul.f32 %v3463, 0.5
    %v3528 = vmul.f32 %v3464, 0.5
    %v3529 = vmul.f32 %v3465, 0.5
    %v3530 = vmul.f32 %v3466, 0.5
    %v3531 = vmul.f32 %v3467, 0.5
    %v3532 = vmul.f32 %v3468, 0.5
    %v3533 = vmul.f32 %v3469, 0.5
    %v3534 = vmul.f32 %v3470, 0.5
    %v3535 = vmul.f32 %v3471, 0.5
    %v3536 = vmul.f32 %v3472, 0.5
    %v3537 = vmul.f32 %v3473, 0.5
    %v3538 = vmul.f32 %v3474, 0.5
    %v3539 = vmul.f32 %v3475, 0.5
    %v3540 = vmul.f32 %v3476, 0.5
    %v3541 = vmul.f32 %v3477, 0.5
    %v3542 = vmul.f32 %v3478, 0.5
    %v3543 = vmul.f32 %v3479, 0.5
    %v3544 = vmul.f32 %v3480, 0.5
    %v3545 = vmul.f32 %v3481, 0.5
    %v3546 = vmul.f32 %v3482, 0.5
    %v3547 = vmul.f32 %v3483, 0.5
    %v3548 = vmul.f32 %v3484, 0.5
    %v3549 = vmul.f32 %v3485, 0.5
    %v3550 = vmul.f32 %v3486, 0.5
    %v3551 = vmul.f32 %v3487, 0.5
    %v3552 = vmul.f32 %v3488, 0.5
    %v3553 = vmul.f32 %v3489, 0.5
    %v3554 = vmul.f32 %v3490, 0.5
    %v3555 = vmul.f32 %v3491, 0.5
    %v3556 = vmul.f32 %v3492, 0.5
    %v3557 = vmul.f32 %v3493, 0.5
    %v3558 = vmul.f32 %v3494, 0.5
    %v3559 = vmul.f32 %v3495, 0.5
    %v3560 = vmul.f32 %v3496, 0.5
    %v3561 = vmul.f32 %v3497, 0.5
    %v3562 = vmul.f32 %v3498, 0.5
    %v3563 = vmul.f32 %v3499, 0.5
    %v3564 = vmul.f32 %v3500, 0.5
    %v3565 = vmul.f32 %v3501, 0.5
    %v3566 = vmul.f32 %v3502, 0.5
    %v3567 = vmul.f32 %v3503, 0.5
    %v3568 = vmul.f32 %v3504, 0.5
    %v3569 = vmul.f32 %v3505, 0.5
    %v3570 = vmul.f32 %v3506, 0.5
    %v3571 = vmul.f32 %v3507, 0.5
    %v3572 = vmul.f32 %v3508, 0.5
    %v3573 = vmul.f32 %v3509, 0.5
    %v3574 = vmul.f32 %v3510, 0.5
    %v3575 = vmul.f32 %v3511, 0.5
    %v3576 = vmul.f32 %v3512, 0.5
    %v3577 = vmul.f32 %v3513, 0.5
    %v3578 = vmul.f32 %v3514, 0.5
    %v3579 = vmul.f32 %v3515, 0.5
    %v3580 = vmul.f32 %v3516, 0.5
    %v3581 = vmul.f32 %v3517, 0.5
    %v3582 = vmul.f32 %v3518, 0.5
    %v3583 = vmul.f32 %v3519, 0.5
    %v3584 = vmul.f32 %v3520, 0.5
    %v3585 = vmul.f32 %v3521, 0.5
    %v3586 = vadd.f32 %v3522, 0.5
    %v3587 = vadd.f32 %v3523, 0.5
    %v3588 = vadd.f32 %v3524, 0.5
    %v3589 = vadd.f32 %v3525, 0.5
    %v3590 = vadd.f32 %v3526, 0.5
    %v3591 = vadd.f32 %v3527, 0.5
    %v3592 = vadd.f32 %v3528, 0.5
    %v3593 = vadd.f32 %v3529, 0.5
    %v3594 = vadd.f32 %v3530, 0.5
    %v3595 = vadd.f32 %v3531, 0.5
    %v3596 = vadd.f32 %v3532, 0.5
    %v3597 = vadd.f32 %v3533, 0.5
    %v3598 = vadd.f32 %v3534, 0.5
    %v3599 = vadd.f32 %v3535, 0.5
    %v3600 = vadd.f32 %v3536, 0.5
    %v3601 = vadd.f32 %v3537, 0.5
    %v3602 = vadd.f32 %v3538, 0.5
    %v3603 = vadd.f32 %v3539, 0.5
    %v3604 = vadd.f32 %v3540, 0.5
    %v3605 = vadd.f32 %v3541, 0.5
    %v3606 = vadd.f32 %v3542, 0.5
    %v3607 = vadd.f32 %v3543, 0.5
    %v3608 = vadd.f32 %v3544, 0.5
    %v3609 = vadd.f32 %v3545, 0.5
    %v3610 = vadd.f32 %v3546, 0.5
    %v3611 = vadd.f32 %v3547, 0.5
    %v3612 = vadd.f32 %v3548, 0.5
    %v3613 = vadd.f32 %v3549, 0.5
    %v3614 = vadd.f32 %v3550, 0.5
    %v3615 = vadd.f32 %v3551, 0.5
    %v3616 = vadd.f32 %v3552, 0.5
    %v3617 = vadd.f32 %v3553, 0.5
    %v3618 = vadd.f32 %v3554, 0.5
    %v3619 = vadd.f32 %v3555, 0.5
    %v3620 = vadd.f32 %v3556, 0.5
    %v3621 = vadd.f32 %v3557, 0.5
    %v3622 = vadd.f32 %v3558, 0.5
    %v3623 = vadd.f32 %v3559, 0.5
    %v3624 = vadd.f32 %v3560, 0.5
    %v3625 = vadd.f32 %v3561, 0.5
    %v3626 = vadd.f32 %v3562, 0.5
    %v3627 = vadd.f32 %v3563, 0.5
    %v3628 = vadd.f32 %v3564, 0.5
    %v3629 = vadd.f32 %v3565, 0.5
    %v3630 = vadd.f32 %v3566, 0.5
    %v3631 = vadd.f32 %v3567, 0.5
    %v3632 = vadd.f32 %v3568, 0.5
    %v3633 = vadd.f32 %v3569, 0.5
    %v3634 = vadd.f32 %v3570, 0.5
    %v3635 = vadd.f32 %v3571, 0.5
    %v3636 = vadd.f32 %v3572, 0.5
    %v3637 = vadd.f32 %v3573, 0.5
    %v3638 = vadd.f32 %v3574, 0.5
    %v3639 = vadd.f32 %v3575, 0.5
    %v3640 = vadd.f32 %v3576, 0.5
    %v3641 = vadd.f32 %v3577, 0.5
    %v3642 = vadd.f32 %v3578, 0.5
    %v3643 = vadd.f32 %v3579, 0.5
    %v3644 = vadd.f32 %v3580, 0.5
    %v3645 = vadd.f32 %v3581, 0.5
    %v3646 = vadd.f32 %v3582, 0.5
    %v3647 = vadd.f32 %v3583, 0.5
    %v3648 = vadd.f32 %v3584, 0.5
    %v3649 = vadd.f32 %v3585, 0.5
    %v3650 = vmul.f32 %v3236, %v3586
    %v3651 = vmul.f32 %v3238, %v3587
    %v3652 = vmul.f32 %v3240, %v3588
    %v3653 = vmul.f32 %v3242, %v3589
    %v3654 = vmul.f32 %v3246, %v3590
    %v3655 = vmul.f32 %v3248, %v3591
    %v3656 = vmul.f32 %v3250, %v3592
    %v3657 = vmul.f32 %v3252, %v3593
    %v3658 = vmul.f32 %v3256, %v3594
    %v3659 = vmul.f32 %v3258, %v3595
    %v3660 = vmul.f32 %v3260, %v3596
    %v3661 = vmul.f32 %v3262, %v3597
    %v3662 = vmul.f32 %v3266, %v3598
    %v3663 = vmul.f32 %v3268, %v3599
    %v3664 = vmul.f32 %v3270, %v3600
    %v3665 = vmul.f32 %v3272, %v3601
    %v3666 = vmul.f32 %v3276, %v3602
    %v3667 = vmul.f32 %v3278, %v3603
    %v3668 = vmul.f32 %v3280, %v3604
    %v3669 = vmul.f32 %v3282, %v3605
    %v3670 = vmul.f32 %v3286, %v3606
    %v3671 = vmul.f32 %v3288, %v3607
    %v3672 = vmul.f32 %v3290, %v3608
    %v3673 = vmul.f32 %v3292, %v3609
    %v3674 = vmul.f32 %v3296, %v3610
    %v3675 = vmul.f32 %v3298, %v3611
    %v3676 = vmul.f32 %v3300, %v3612
    %v3677 = vmul.f32 %v3302, %v3613
    %v3678 = vmul.f32 %v3306, %v3614
    %v3679 = vmul.f32 %v3308, %v3615
    %v3680 = vmul.f32 %v3310, %v3616
    %v3681 = vmul.f32 %v3312, %v3617
    %v3682 = vmul.f32 %v3316, %v3618
    %v3683 = vmul.f32 %v3318, %v3619
    %v3684 = vmul.f32 %v3320, %v3620
    %v3685 = vmul.f32 %v3322, %v3621
    %v3686 = vmul.f32 %v3326, %v3622
    %v3687 = vmul.f32 %v3328, %v3623
    %v3688 = vmul.f32 %v3330, %v3624
    %v3689 = vmul.f32 %v3332, %v3625
    %v3690 = vmul.f32 %v3336, %v3626
    %v3691 = vmul.f32 %v3338, %v3627
    %v3692 = vmul.f32 %v3340, %v3628
    %v3693 = vmul.f32 %v3342, %v3629
    %v3694 = vmul.f32 %v3346, %v3630
    %v3695 = vmul.f32 %v3348, %v3631
    %v3696 = vmul.f32 %v3350, %v3632
    %v3697 = vmul.f32 %v3352, %v3633
    %v3698 = vmul.f32 %v3356, %v3634
    %v3699 = vmul.f32 %v3358, %v3635
    %v3700 = vmul.f32 %v3360, %v3636
    %v3701 = vmul.f32 %v3362, %v3637
    %v3702 = vmul.f32 %v3366, %v3638
    %v3703 = vmul.f32 %v3368, %v3639
    %v3704 = vmul.f32 %v3370, %v3640
    %v3705 = vmul.f32 %v3372, %v3641
    %v3706 = vmul.f32 %v3376, %v3642
    %v3707 = vmul.f32 %v3378, %v3643
    %v3708 = vmul.f32 %v3380, %v3644
    %v3709 = vmul.f32 %v3382, %v3645
    %v3710 = vmul.f32 %v3386, %v3646
    %v3711 = vmul.f32 %v3388, %v3647
    %v3712 = vmul.f32 %v3390, %v3648
    %v3713 = vmul.f32 %v3392, %v3649
    %v3714 = vpack.c.bf16 %v3652, %v3650
    %v3715 = vpack.c.bf16 %v3653, %v3651
    %v3716 = vpack.c.bf16 %v3656, %v3654
    %v3717 = vpack.c.bf16 %v3657, %v3655
    %v3718 = vpack.c.bf16 %v3660, %v3658
    %v3719 = vpack.c.bf16 %v3661, %v3659
    %v3720 = vpack.c.bf16 %v3664, %v3662
    %v3721 = vpack.c.bf16 %v3665, %v3663
    %v3722 = vpack.c.bf16 %v3668, %v3666
    %v3723 = vpack.c.bf16 %v3669, %v3667
    %v3724 = vpack.c.bf16 %v3672, %v3670
    %v3725 = vpack.c.bf16 %v3673, %v3671
    %v3726 = vpack.c.bf16 %v3676, %v3674
    %v3727 = vpack.c.bf16 %v3677, %v3675
    %v3728 = vpack.c.bf16 %v3680, %v3678
    %v3729 = vpack.c.bf16 %v3681, %v3679
    %v3730 = vpack.c.bf16 %v3684, %v3682
    %v3731 = vpack.c.bf16 %v3685, %v3683
    %v3732 = vpack.c.bf16 %v3688, %v3686
    %v3733 = vpack.c.bf16 %v3689, %v3687
    %v3734 = vpack.c.bf16 %v3692, %v3690
    %v3735 = vpack.c.bf16 %v3693, %v3691
    %v3736 = vpack.c.bf16 %v3696, %v3694
    %v3737 = vpack.c.bf16 %v3697, %v3695
    %v3738 = vpack.c.bf16 %v3700, %v3698
    %v3739 = vpack.c.bf16 %v3701, %v3699
    %v3740 = vpack.c.bf16 %v3704, %v3702
    %v3741 = vpack.c.bf16 %v3705, %v3703
    %v3742 = vpack.c.bf16 %v3708, %v3706
    %v3743 = vpack.c.bf16 %v3709, %v3707
    %v3744 = vpack.c.bf16 %v3712, %v3710
    %v3745 = vpack.c.bf16 %v3713, %v3711
    %v3746 = vld [vmem:[#allocation7] sm:$0xf]
    %v3747 = vld [vmem:[#allocation7 + $0x4] sm:$0xf]
    %v3748 = vld [vmem:[#allocation7 + $0x8] sm:$0xf]
    %v3749 = vld [vmem:[#allocation7 + $0xc] sm:$0xf]
    %v3750 = vld [vmem:[#allocation7 + $0x10] sm:$0xf]
    %v3751 = vld [vmem:[#allocation7 + $0x14] sm:$0xf]
    %v3752 = vld [vmem:[#allocation7 + $0x18] sm:$0xf]
    %v3753 = vld [vmem:[#allocation7 + $0x1c] sm:$0xf]
    %v3754 = vld [vmem:[#allocation7 + $0x20] sm:$0xf]
    %v3755 = vld [vmem:[#allocation7 + $0x24] sm:$0xf]
    %v3756 = vld [vmem:[#allocation7 + $0x28] sm:$0xf]
    %v3757 = vld [vmem:[#allocation7 + $0x2c] sm:$0xf]
    %v3758 = vld [vmem:[#allocation7 + $0x30] sm:$0xf]
    %v3759 = vld [vmem:[#allocation7 + $0x34] sm:$0xf]
    %v3760 = vld [vmem:[#allocation7 + $0x38] sm:$0xf]
    %v3761 = vld [vmem:[#allocation7 + $0x3c] sm:$0xf]
    %v3762 = vld [vmem:[#allocation7 + $0x40] sm:$0xf]
    %v3763 = vld [vmem:[#allocation7 + $0x44] sm:$0xf]
    %v3764 = vld [vmem:[#allocation7 + $0x48] sm:$0xf]
    %v3765 = vld [vmem:[#allocation7 + $0x4c] sm:$0xf]
    %v3766 = vld [vmem:[#allocation7 + $0x50] sm:$0xf]
    %v3767 = vld [vmem:[#allocation7 + $0x54] sm:$0xf]
    %v3768 = vld [vmem:[#allocation7 + $0x58] sm:$0xf]
    %v3769 = vld [vmem:[#allocation7 + $0x5c] sm:$0xf]
    %v3770 = vld [vmem:[#allocation7 + $0x60] sm:$0xf]
    %v3771 = vld [vmem:[#allocation7 + $0x64] sm:$0xf]
    %v3772 = vld [vmem:[#allocation7 + $0x68] sm:$0xf]
    %v3773 = vld [vmem:[#allocation7 + $0x6c] sm:$0xf]
    %v3774 = vld [vmem:[#allocation7 + $0x70] sm:$0xf]
    %v3775 = vld [vmem:[#allocation7 + $0x74] sm:$0xf]
    %v3776 = vld [vmem:[#allocation7 + $0x78] sm:$0xf]
    %v3777 = vld [vmem:[#allocation7 + $0x7c] sm:$0xf]
    %v3778 = vld [vmem:[%s10] sm:$0x1]
    %v3779 = vlaneseq
    %v3780 = vshrl.u32 %v3779, 7
    %v3781 = vsub.s32 0, %v3780
    %v3782 = vrot.slane %v3778, %v3781
    %v3815 = vunpack.c.l.b16 %v3746
    %v3816 = vunpack.c.l.b16 %v3747
    %v3817 = vunpack.c.l.b16 %v3748
    %v3818 = vunpack.c.l.b16 %v3749
    %v3819 = vunpack.c.l.b16 %v3750
    %v3820 = vunpack.c.l.b16 %v3751
    %v3821 = vunpack.c.l.b16 %v3752
    %v3822 = vunpack.c.l.b16 %v3753
    %v3823 = vunpack.c.l.b16 %v3754
    %v3824 = vunpack.c.l.b16 %v3755
    %v3825 = vunpack.c.l.b16 %v3756
    %v3826 = vunpack.c.l.b16 %v3757
    %v3827 = vunpack.c.l.b16 %v3758
    %v3828 = vunpack.c.l.b16 %v3759
    %v3829 = vunpack.c.l.b16 %v3760
    %v3830 = vunpack.c.l.b16 %v3761
    %v3831 = vunpack.c.l.b16 %v3762
    %v3832 = vunpack.c.l.b16 %v3763
    %v3833 = vunpack.c.l.b16 %v3764
    %v3834 = vunpack.c.l.b16 %v3765
    %v3835 = vunpack.c.l.b16 %v3766
    %v3836 = vunpack.c.l.b16 %v3767
    %v3837 = vunpack.c.l.b16 %v3768
    %v3838 = vunpack.c.l.b16 %v3769
    %v3839 = vunpack.c.l.b16 %v3770
    %v3840 = vunpack.c.l.b16 %v3771
    %v3841 = vunpack.c.l.b16 %v3772
    %v3842 = vunpack.c.l.b16 %v3773
    %v3843 = vunpack.c.l.b16 %v3774
    %v3844 = vunpack.c.l.b16 %v3775
    %v3845 = vunpack.c.l.b16 %v3776
    %v3846 = vunpack.c.l.b16 %v3777
    %v3847 = vpack.c.b16 %v3816, %v3815
    %v3848 = vpack.c.b16 %v3818, %v3817
    %v3849 = vpack.c.b16 %v3820, %v3819
    %v3850 = vpack.c.b16 %v3822, %v3821
    %v3851 = vpack.c.b16 %v3824, %v3823
    %v3852 = vpack.c.b16 %v3826, %v3825
    %v3853 = vpack.c.b16 %v3828, %v3827
    %v3854 = vpack.c.b16 %v3830, %v3829
    %v3855 = vpack.c.b16 %v3832, %v3831
    %v3856 = vpack.c.b16 %v3834, %v3833
    %v3857 = vpack.c.b16 %v3836, %v3835
    %v3858 = vpack.c.b16 %v3838, %v3837
    %v3859 = vpack.c.b16 %v3840, %v3839
    %v3860 = vpack.c.b16 %v3842, %v3841
    %v3861 = vpack.c.b16 %v3844, %v3843
    %v3862 = vpack.c.b16 %v3846, %v3845
    %3879 = vmatprep.subr.bf16.mxu0 0
    %3880 = vmatpush1.bf16.msra.mxu0 %v3854
    %3881 = vmatprep.subr.bf16.mxu0 0
    %3882 = vmatpush1.bf16.msra.mxu0 %v3853
    %3883 = vmatprep.subr.bf16.mxu0 0
    %3884 = vmatpush1.bf16.msra.mxu0 %v3852
    %3885 = vmatprep.subr.bf16.mxu0 0
    %3886 = vmatpush1.bf16.msra.mxu0 %v3851
    %3887 = vmatprep.subr.bf16.mxu0 0
    %3888 = vmatpush1.bf16.msra.mxu0 %v3850
    %3889 = vmatprep.subr.bf16.mxu0 0
    %3890 = vmatpush1.bf16.msra.mxu0 %v3849
    %3891 = vmatprep.subr.bf16.mxu0 0
    %3892 = vmatpush1.bf16.msra.mxu0 %v3848
    %3893 = vmatprep.subr.bf16.mxu0 0
    %3894 = vmatpush1.bf16.msra.mxu0 %v3847
    %3895 = vmatprep.subr.bf16.mxu0 0
    %3896 = vmatpush2.bf16.msra.mxu0 %v3862
    %3897 = vmatprep.subr.bf16.mxu0 0
    %3898 = vmatpush2.bf16.msra.mxu0 %v3861
    %3899 = vmatprep.subr.bf16.mxu0 0
    %3900 = vmatpush2.bf16.msra.mxu0 %v3860
    %3901 = vmatprep.subr.bf16.mxu0 0
    %3902 = vmatpush2.bf16.msra.mxu0 %v3859
    %3903 = vmatprep.subr.bf16.mxu0 0
    %3904 = vmatpush2.bf16.msra.mxu0 %v3858
    %3905 = vmatprep.subr.bf16.mxu0 0
    %3906 = vmatpush2.bf16.msra.mxu0 %v3857
    %3907 = vmatprep.subr.bf16.mxu0 0
    %3908 = vmatpush2.bf16.msra.mxu0 %v3856
    %3909 = vmatprep.subr.bf16.mxu0 0
    %3910 = vmatpush2.bf16.msra.mxu0 %v3855
    %3911 = vmatprep.mubr.bf16.mxu0 %v3715
    %3912 = vmatmul.mubr.bf16.gmra.mxu0 %v3714
    %v3913 = vpop.f32.mrf.mxu0
    %v3914 = vadd.f32 %v3782, %v3913
    %v3915 = vpop.f32.mrf.mxu0
    %v3916 = vpop.f32.mrf.mxu0
    %v3917 = vadd.f32 %v3782, %v3916
    %v3918 = vpop.f32.mrf.mxu0
    %3919 = vmatprep.mubr.bf16.mxu0 %v3717
    %3920 = vmatmul.mubr.bf16.gmra.mxu0 %v3716
    %v3921 = vpop.f32.mrf.mxu0
    %v3922 = vadd.f32 %v3782, %v3921
    %v3923 = vpop.f32.mrf.mxu0
    %v3924 = vpop.f32.mrf.mxu0
    %v3925 = vadd.f32 %v3782, %v3924
    %v3926 = vpop.f32.mrf.mxu0
    %3927 = vmatprep.mubr.bf16.mxu0 %v3719
    %3928 = vmatmul.mubr.bf16.gmra.mxu0 %v3718
    %v3929 = vpop.f32.mrf.mxu0
    %v3930 = vadd.f32 %v3782, %v3929
    %v3931 = vpop.f32.mrf.mxu0
    %v3932 = vpop.f32.mrf.mxu0
    %v3933 = vadd.f32 %v3782, %v3932
    %v3934 = vpop.f32.mrf.mxu0
    %3935 = vmatprep.mubr.bf16.mxu0 %v3721
    %3936 = vmatmul.mubr.bf16.gmra.mxu0 %v3720
    %v3937 = vpop.f32.mrf.mxu0
    %v3938 = vadd.f32 %v3782, %v3937
    %v3939 = vpop.f32.mrf.mxu0
    %v3940 = vpop.f32.mrf.mxu0
    %v3941 = vadd.f32 %v3782, %v3940
    %v3942 = vpop.f32.mrf.mxu0
    %3943 = vmatprep.mubr.bf16.mxu0 %v3723
    %3944 = vmatmul.mubr.bf16.gmra.mxu0 %v3722
    %v3945 = vpop.f32.mrf.mxu0
    %v3946 = vadd.f32 %v3782, %v3945
    %v3947 = vpop.f32.mrf.mxu0
    %v3948 = vpop.f32.mrf.mxu0
    %v3949 = vadd.f32 %v3782, %v3948
    %v3950 = vpop.f32.mrf.mxu0
    %3951 = vmatprep.mubr.bf16.mxu0 %v3725
    %3952 = vmatmul.mubr.bf16.gmra.mxu0 %v3724
    %v3953 = vpop.f32.mrf.mxu0
    %v3954 = vadd.f32 %v3782, %v3953
    %v3955 = vpop.f32.mrf.mxu0
    %v3956 = vpop.f32.mrf.mxu0
    %v3957 = vadd.f32 %v3782, %v3956
    %v3958 = vpop.f32.mrf.mxu0
    %3959 = vmatprep.mubr.bf16.mxu0 %v3727
    %3960 = vmatmul.mubr.bf16.gmra.mxu0 %v3726
    %v3961 = vpop.f32.mrf.mxu0
    %v3962 = vadd.f32 %v3782, %v3961
    %v3963 = vpop.f32.mrf.mxu0
    %v3964 = vpop.f32.mrf.mxu0
    %v3965 = vadd.f32 %v3782, %v3964
    %v3966 = vpop.f32.mrf.mxu0
    %3967 = vmatprep.mubr.bf16.mxu0 %v3729
    %3968 = vmatmul.mubr.bf16.gmra.mxu0 %v3728
    %v3969 = vpop.f32.mrf.mxu0
    %v3970 = vadd.f32 %v3782, %v3969
    %v3971 = vpop.f32.mrf.mxu0
    %v3972 = vpop.f32.mrf.mxu0
    %v3973 = vadd.f32 %v3782, %v3972
    %v3974 = vpop.f32.mrf.mxu0
    %3975 = vmatprep.mubr.bf16.mxu0 %v3731
    %3976 = vmatmul.mubr.bf16.gmra.mxu0 %v3730
    %v3977 = vpop.f32.mrf.mxu0
    %v3978 = vadd.f32 %v3782, %v3977
    %v3979 = vpop.f32.mrf.mxu0
    %v3980 = vpop.f32.mrf.mxu0
    %v3981 = vadd.f32 %v3782, %v3980
    %v3982 = vpop.f32.mrf.mxu0
    %3983 = vmatprep.mubr.bf16.mxu0 %v3733
    %3984 = vmatmul.mubr.bf16.gmra.mxu0 %v3732
    %v3985 = vpop.f32.mrf.mxu0
    %v3986 = vadd.f32 %v3782, %v3985
    %v3987 = vpop.f32.mrf.mxu0
    %v3988 = vpop.f32.mrf.mxu0
    %v3989 = vadd.f32 %v3782, %v3988
    %v3990 = vpop.f32.mrf.mxu0
    %3991 = vmatprep.mubr.bf16.mxu0 %v3735
    %3992 = vmatmul.mubr.bf16.gmra.mxu0 %v3734
    %v3993 = vpop.f32.mrf.mxu0
    %v3994 = vadd.f32 %v3782, %v3993
    %v3995 = vpop.f32.mrf.mxu0
    %v3996 = vpop.f32.mrf.mxu0
    %v3997 = vadd.f32 %v3782, %v3996
    %v3998 = vpop.f32.mrf.mxu0
    %3999 = vmatprep.mubr.bf16.mxu0 %v3737
    %4000 = vmatmul.mubr.bf16.gmra.mxu0 %v3736
    %v4001 = vpop.f32.mrf.mxu0
    %v4002 = vadd.f32 %v3782, %v4001
    %v4003 = vpop.f32.mrf.mxu0
    %v4004 = vpop.f32.mrf.mxu0
    %v4005 = vadd.f32 %v3782, %v4004
    %v4006 = vpop.f32.mrf.mxu0
    %4007 = vmatprep.mubr.bf16.mxu0 %v3739
    %4008 = vmatmul.mubr.bf16.gmra.mxu0 %v3738
    %v4009 = vpop.f32.mrf.mxu0
    %v4010 = vadd.f32 %v3782, %v4009
    %v4011 = vpop.f32.mrf.mxu0
    %v4012 = vpop.f32.mrf.mxu0
    %v4013 = vadd.f32 %v3782, %v4012
    %v4014 = vpop.f32.mrf.mxu0
    %4015 = vmatprep.mubr.bf16.mxu0 %v3741
    %4016 = vmatmul.mubr.bf16.gmra.mxu0 %v3740
    %v4017 = vpop.f32.mrf.mxu0
    %v4018 = vadd.f32 %v3782, %v4017
    %v4019 = vpop.f32.mrf.mxu0
    %v4020 = vpop.f32.mrf.mxu0
    %v4021 = vadd.f32 %v3782, %v4020
    %v4022 = vpop.f32.mrf.mxu0
    %4023 = vmatprep.mubr.bf16.mxu0 %v3743
    %4024 = vmatmul.mubr.bf16.gmra.mxu0 %v3742
    %v4025 = vpop.f32.mrf.mxu0
    %v4026 = vadd.f32 %v3782, %v4025
    %v4027 = vpop.f32.mrf.mxu0
    %v4028 = vpop.f32.mrf.mxu0
    %v4029 = vadd.f32 %v3782, %v4028
    %v4030 = vpop.f32.mrf.mxu0
    %4031 = vmatprep.mubr.bf16.mxu0 %v3745
    %4032 = vmatmul.mubr.bf16.gmra.mxu0 %v3744
    %v4033 = vpop.f32.mrf.mxu0
    %v4034 = vadd.f32 %v3782, %v4033
    %v4035 = vpop.f32.mrf.mxu0
    %v4036 = vpop.f32.mrf.mxu0
    %v4037 = vadd.f32 %v3782, %v4036
    %v4038 = vpop.f32.mrf.mxu0
    %4039 = vdwg.mxu0
    %v4040 = vadd.f32 %v520, %v3914
    %v4041 = vadd.f32 %v521, %v3917
    %v4042 = vadd.f32 %v522, %v3922
    %v4043 = vadd.f32 %v523, %v3925
    %v4044 = vadd.f32 %v524, %v3930
    %v4045 = vadd.f32 %v525, %v3933
    %v4046 = vadd.f32 %v526, %v3938
    %v4047 = vadd.f32 %v527, %v3941
    %v4048 = vadd.f32 %v528, %v3946
    %v4049 = vadd.f32 %v529, %v3949
    %v4050 = vadd.f32 %v530, %v3954
    %v4051 = vadd.f32 %v531, %v3957
    %v4052 = vadd.f32 %v532, %v3962
    %v4053 = vadd.f32 %v533, %v3965
    %v4054 = vadd.f32 %v534, %v3970
    %v4055 = vadd.f32 %v535, %v3973
    %v4056 = vadd.f32 %v536, %v3978
    %v4057 = vadd.f32 %v537, %v3981
    %v4058 = vadd.f32 %v538, %v3986
    %v4059 = vadd.f32 %v539, %v3989
    %v4060 = vadd.f32 %v540, %v3994
    %v4061 = vadd.f32 %v541, %v3997
    %v4062 = vadd.f32 %v542, %v4002
    %v4063 = vadd.f32 %v543, %v4005
    %v4064 = vadd.f32 %v544, %v4010
    %v4065 = vadd.f32 %v545, %v4013
    %v4066 = vadd.f32 %v546, %v4018
    %v4067 = vadd.f32 %v547, %v4021
    %v4068 = vadd.f32 %v548, %v4026
    %v4069 = vadd.f32 %v549, %v4029
    %v4070 = vadd.f32 %v550, %v4034
    %v4071 = vadd.f32 %v551, %v4037
    %4072 = vadd.xlane.f32.xlu0 %v4040
    %v4073 = vpop.xlane.xlu0 %4072
    %4074 = vadd.xlane.f32.xlu0 %v4041
    %v4075 = vpop.xlane.xlu0 %4074
    %4076 = vadd.xlane.f32.xlu0 %v4042
    %v4077 = vpop.xlane.xlu0 %4076
    %4078 = vadd.xlane.f32.xlu0 %v4043
    %v4079 = vpop.xlane.xlu0 %4078
    %4080 = vadd.xlane.f32.xlu0 %v4044
    %v4081 = vpop.xlane.xlu0 %4080
    %4082 = vadd.xlane.f32.xlu0 %v4045
    %v4083 = vpop.xlane.xlu0 %4082
    %4084 = vadd.xlane.f32.xlu0 %v4046
    %v4085 = vpop.xlane.xlu0 %4084
    %4086 = vadd.xlane.f32.xlu0 %v4047
    %v4087 = vpop.xlane.xlu0 %4086
    %4088 = vadd.xlane.f32.xlu0 %v4048
    %v4089 = vpop.xlane.xlu0 %4088
    %4090 = vadd.xlane.f32.xlu0 %v4049
    %v4091 = vpop.xlane.xlu0 %4090
    %4092 = vadd.xlane.f32.xlu0 %v4050
    %v4093 = vpop.xlane.xlu0 %4092
    %4094 = vadd.xlane.f32.xlu0 %v4051
    %v4095 = vpop.xlane.xlu0 %4094
    %4096 = vadd.xlane.f32.xlu0 %v4052
    %v4097 = vpop.xlane.xlu0 %4096
    %4098 = vadd.xlane.f32.xlu0 %v4053
    %v4099 = vpop.xlane.xlu0 %4098
    %4100 = vadd.xlane.f32.xlu0 %v4054
    %v4101 = vpop.xlane.xlu0 %4100
    %4102 = vadd.xlane.f32.xlu0 %v4055
    %v4103 = vpop.xlane.xlu0 %4102
    %4104 = vadd.xlane.f32.xlu0 %v4056
    %v4105 = vpop.xlane.xlu0 %4104
    %4106 = vadd.xlane.f32.xlu0 %v4057
    %v4107 = vpop.xlane.xlu0 %4106
    %4108 = vadd.xlane.f32.xlu0 %v4058
    %v4109 = vpop.xlane.xlu0 %4108
    %4110 = vadd.xlane.f32.xlu0 %v4059
    %v4111 = vpop.xlane.xlu0 %4110
    %4112 = vadd.xlane.f32.xlu0 %v4060
    %v4113 = vpop.xlane.xlu0 %4112
    %4114 = vadd.xlane.f32.xlu0 %v4061
    %v4115 = vpop.xlane.xlu0 %4114
    %4116 = vadd.xlane.f32.xlu0 %v4062
    %v4117 = vpop.xlane.xlu0 %4116
    %4118 = vadd.xlane.f32.xlu0 %v4063
    %v4119 = vpop.xlane.xlu0 %4118
    %4120 = vadd.xlane.f32.xlu0 %v4064
    %v4121 = vpop.xlane.xlu0 %4120
    %4122 = vadd.xlane.f32.xlu0 %v4065
    %v4123 = vpop.xlane.xlu0 %4122
    %4124 = vadd.xlane.f32.xlu0 %v4066
    %v4125 = vpop.xlane.xlu0 %4124
    %4126 = vadd.xlane.f32.xlu0 %v4067
    %v4127 = vpop.xlane.xlu0 %4126
    %4128 = vadd.xlane.f32.xlu0 %v4068
    %v4129 = vpop.xlane.xlu0 %4128
    %4130 = vadd.xlane.f32.xlu0 %v4069
    %v4131 = vpop.xlane.xlu0 %4130
    %4132 = vadd.xlane.f32.xlu0 %v4070
    %v4133 = vpop.xlane.xlu0 %4132
    %4134 = vadd.xlane.f32.xlu0 %v4071
    %v4135 = vpop.xlane.xlu0 %4134
    %v4136 = vmul.f32 %v4073, %v1645
    %v4137 = vmul.f32 %v4075, %v1645
    %v4138 = vmul.f32 %v4077, %v1645
    %v4139 = vmul.f32 %v4079, %v1645
    %v4140 = vmul.f32 %v4081, %v1645
    %v4141 = vmul.f32 %v4083, %v1645
    %v4142 = vmul.f32 %v4085, %v1645
    %v4143 = vmul.f32 %v4087, %v1645
    %v4144 = vmul.f32 %v4089, %v1645
    %v4145 = vmul.f32 %v4091, %v1645
    %v4146 = vmul.f32 %v4093, %v1645
    %v4147 = vmul.f32 %v4095, %v1645
    %v4148 = vmul.f32 %v4097, %v1645
    %v4149 = vmul.f32 %v4099, %v1645
    %v4150 = vmul.f32 %v4101, %v1645
    %v4151 = vmul.f32 %v4103, %v1645
    %v4152 = vmul.f32 %v4105, %v1645
    %v4153 = vmul.f32 %v4107, %v1645
    %v4154 = vmul.f32 %v4109, %v1645
    %v4155 = vmul.f32 %v4111, %v1645
    %v4156 = vmul.f32 %v4113, %v1645
    %v4157 = vmul.f32 %v4115, %v1645
    %v4158 = vmul.f32 %v4117, %v1645
    %v4159 = vmul.f32 %v4119, %v1645
    %v4160 = vmul.f32 %v4121, %v1645
    %v4161 = vmul.f32 %v4123, %v1645
    %v4162 = vmul.f32 %v4125, %v1645
    %v4163 = vmul.f32 %v4127, %v1645
    %v4164 = vmul.f32 %v4129, %v1645
    %v4165 = vmul.f32 %v4131, %v1645
    %v4166 = vmul.f32 %v4133, %v1645
    %v4167 = vmul.f32 %v4135, %v1645
    %v4168 = vmul.f32 %v4040, %v4040
    %v4169 = vmul.f32 %v4041, %v4041
    %v4170 = vmul.f32 %v4042, %v4042
    %v4171 = vmul.f32 %v4043, %v4043
    %v4172 = vmul.f32 %v4044, %v4044
    %v4173 = vmul.f32 %v4045, %v4045
    %v4174 = vmul.f32 %v4046, %v4046
    %v4175 = vmul.f32 %v4047, %v4047
    %v4176 = vmul.f32 %v4048, %v4048
    %v4177 = vmul.f32 %v4049, %v4049
    %v4178 = vmul.f32 %v4050, %v4050
    %v4179 = vmul.f32 %v4051, %v4051
    %v4180 = vmul.f32 %v4052, %v4052
    %v4181 = vmul.f32 %v4053, %v4053
    %v4182 = vmul.f32 %v4054, %v4054
    %v4183 = vmul.f32 %v4055, %v4055
    %v4184 = vmul.f32 %v4056, %v4056
    %v4185 = vmul.f32 %v4057, %v4057
    %v4186 = vmul.f32 %v4058, %v4058
    %v4187 = vmul.f32 %v4059, %v4059
    %v4188 = vmul.f32 %v4060, %v4060
    %v4189 = vmul.f32 %v4061, %v4061
    %v4190 = vmul.f32 %v4062, %v4062
    %v4191 = vmul.f32 %v4063, %v4063
    %v4192 = vmul.f32 %v4064, %v4064
    %v4193 = vmul.f32 %v4065, %v4065
    %v4194 = vmul.f32 %v4066, %v4066
    %v4195 = vmul.f32 %v4067, %v4067
    %v4196 = vmul.f32 %v4068, %v4068
    %v4197 = vmul.f32 %v4069, %v4069
    %v4198 = vmul.f32 %v4070, %v4070
    %v4199 = vmul.f32 %v4071, %v4071
    %4200 = vadd.xlane.f32.xlu0 %v4168
    %v4201 = vpop.xlane.xlu0 %4200
    %4202 = vadd.xlane.f32.xlu0 %v4169
    %v4203 = vpop.xlane.xlu0 %4202
    %4204 = vadd.xlane.f32.xlu0 %v4170
    %v4205 = vpop.xlane.xlu0 %4204
    %4206 = vadd.xlane.f32.xlu0 %v4171
    %v4207 = vpop.xlane.xlu0 %4206
    %4208 = vadd.xlane.f32.xlu0 %v4172
    %v4209 = vpop.xlane.xlu0 %4208
    %4210 = vadd.xlane.f32.xlu0 %v4173
    %v4211 = vpop.xlane.xlu0 %4210
    %4212 = vadd.xlane.f32.xlu0 %v4174
    %v4213 = vpop.xlane.xlu0 %4212
    %4214 = vadd.xlane.f32.xlu0 %v4175
    %v4215 = vpop.xlane.xlu0 %4214
    %4216 = vadd.xlane.f32.xlu0 %v4176
    %v4217 = vpop.xlane.xlu0 %4216
    %4218 = vadd.xlane.f32.xlu0 %v4177
    %v4219 = vpop.xlane.xlu0 %4218
    %4220 = vadd.xlane.f32.xlu0 %v4178
    %v4221 = vpop.xlane.xlu0 %4220
    %4222 = vadd.xlane.f32.xlu0 %v4179
    %v4223 = vpop.xlane.xlu0 %4222
    %4224 = vadd.xlane.f32.xlu0 %v4180
    %v4225 = vpop.xlane.xlu0 %4224
    %4226 = vadd.xlane.f32.xlu0 %v4181
    %v4227 = vpop.xlane.xlu0 %4226
    %4228 = vadd.xlane.f32.xlu0 %v4182
    %v4229 = vpop.xlane.xlu0 %4228
    %4230 = vadd.xlane.f32.xlu0 %v4183
    %v4231 = vpop.xlane.xlu0 %4230
    %4232 = vadd.xlane.f32.xlu0 %v4184
    %v4233 = vpop.xlane.xlu0 %4232
    %4234 = vadd.xlane.f32.xlu0 %v4185
    %v4235 = vpop.xlane.xlu0 %4234
    %4236 = vadd.xlane.f32.xlu0 %v4186
    %v4237 = vpop.xlane.xlu0 %4236
    %4238 = vadd.xlane.f32.xlu0 %v4187
    %v4239 = vpop.xlane.xlu0 %4238
    %4240 = vadd.xlane.f32.xlu0 %v4188
    %v4241 = vpop.xlane.xlu0 %4240
    %4242 = vadd.xlane.f32.xlu0 %v4189
    %v4243 = vpop.xlane.xlu0 %4242
    %4244 = vadd.xlane.f32.xlu0 %v4190
    %v4245 = vpop.xlane.xlu0 %4244
    %4246 = vadd.xlane.f32.xlu0 %v4191
    %v4247 = vpop.xlane.xlu0 %4246
    %4248 = vadd.xlane.f32.xlu0 %v4192
    %v4249 = vpop.xlane.xlu0 %4248
    %4250 = vadd.xlane.f32.xlu0 %v4193
    %v4251 = vpop.xlane.xlu0 %4250
    %4252 = vadd.xlane.f32.xlu0 %v4194
    %v4253 = vpop.xlane.xlu0 %4252
    %4254 = vadd.xlane.f32.xlu0 %v4195
    %v4255 = vpop.xlane.xlu0 %4254
    %4256 = vadd.xlane.f32.xlu0 %v4196
    %v4257 = vpop.xlane.xlu0 %4256
    %4258 = vadd.xlane.f32.xlu0 %v4197
    %v4259 = vpop.xlane.xlu0 %4258
    %4260 = vadd.xlane.f32.xlu0 %v4198
    %v4261 = vpop.xlane.xlu0 %4260
    %4262 = vadd.xlane.f32.xlu0 %v4199
    %v4263 = vpop.xlane.xlu0 %4262
    %v4264 = vmul.f32 %v4201, %v1645
    %v4265 = vmul.f32 %v4203, %v1645
    %v4266 = vmul.f32 %v4205, %v1645
    %v4267 = vmul.f32 %v4207, %v1645
    %v4268 = vmul.f32 %v4209, %v1645
    %v4269 = vmul.f32 %v4211, %v1645
    %v4270 = vmul.f32 %v4213, %v1645
    %v4271 = vmul.f32 %v4215, %v1645
    %v4272 = vmul.f32 %v4217, %v1645
    %v4273 = vmul.f32 %v4219, %v1645
    %v4274 = vmul.f32 %v4221, %v1645
    %v4275 = vmul.f32 %v4223, %v1645
    %v4276 = vmul.f32 %v4225, %v1645
    %v4277 = vmul.f32 %v4227, %v1645
    %v4278 = vmul.f32 %v4229, %v1645
    %v4279 = vmul.f32 %v4231, %v1645
    %v4280 = vmul.f32 %v4233, %v1645
    %v4281 = vmul.f32 %v4235, %v1645
    %v4282 = vmul.f32 %v4237, %v1645
    %v4283 = vmul.f32 %v4239, %v1645
    %v4284 = vmul.f32 %v4241, %v1645
    %v4285 = vmul.f32 %v4243, %v1645
    %v4286 = vmul.f32 %v4245, %v1645
    %v4287 = vmul.f32 %v4247, %v1645
    %v4288 = vmul.f32 %v4249, %v1645
    %v4289 = vmul.f32 %v4251, %v1645
    %v4290 = vmul.f32 %v4253, %v1645
    %v4291 = vmul.f32 %v4255, %v1645
    %v4292 = vmul.f32 %v4257, %v1645
    %v4293 = vmul.f32 %v4259, %v1645
    %v4294 = vmul.f32 %v4261, %v1645
    %v4295 = vmul.f32 %v4263, %v1645
    %v4296 = vmul.f32 %v4136, %v4136
    %v4297 = vmul.f32 %v4137, %v4137
    %v4298 = vmul.f32 %v4138, %v4138
    %v4299 = vmul.f32 %v4139, %v4139
    %v4300 = vmul.f32 %v4140, %v4140
    %v4301 = vmul.f32 %v4141, %v4141
    %v4302 = vmul.f32 %v4142, %v4142
    %v4303 = vmul.f32 %v4143, %v4143
    %v4304 = vmul.f32 %v4144, %v4144
    %v4305 = vmul.f32 %v4145, %v4145
    %v4306 = vmul.f32 %v4146, %v4146
    %v4307 = vmul.f32 %v4147, %v4147
    %v4308 = vmul.f32 %v4148, %v4148
    %v4309 = vmul.f32 %v4149, %v4149
    %v4310 = vmul.f32 %v4150, %v4150
    %v4311 = vmul.f32 %v4151, %v4151
    %v4312 = vmul.f32 %v4152, %v4152
    %v4313 = vmul.f32 %v4153, %v4153
    %v4314 = vmul.f32 %v4154, %v4154
    %v4315 = vmul.f32 %v4155, %v4155
    %v4316 = vmul.f32 %v4156, %v4156
    %v4317 = vmul.f32 %v4157, %v4157
    %v4318 = vmul.f32 %v4158, %v4158
    %v4319 = vmul.f32 %v4159, %v4159
    %v4320 = vmul.f32 %v4160, %v4160
    %v4321 = vmul.f32 %v4161, %v4161
    %v4322 = vmul.f32 %v4162, %v4162
    %v4323 = vmul.f32 %v4163, %v4163
    %v4324 = vmul.f32 %v4164, %v4164
    %v4325 = vmul.f32 %v4165, %v4165
    %v4326 = vmul.f32 %v4166, %v4166
    %v4327 = vmul.f32 %v4167, %v4167
    %v4328 = vsub.f32 %v4264, %v4296
    %v4329 = vsub.f32 %v4265, %v4297
    %v4330 = vsub.f32 %v4266, %v4298
    %v4331 = vsub.f32 %v4267, %v4299
    %v4332 = vsub.f32 %v4268, %v4300
    %v4333 = vsub.f32 %v4269, %v4301
    %v4334 = vsub.f32 %v4270, %v4302
    %v4335 = vsub.f32 %v4271, %v4303
    %v4336 = vsub.f32 %v4272, %v4304
    %v4337 = vsub.f32 %v4273, %v4305
    %v4338 = vsub.f32 %v4274, %v4306
    %v4339 = vsub.f32 %v4275, %v4307
    %v4340 = vsub.f32 %v4276, %v4308
    %v4341 = vsub.f32 %v4277, %v4309
    %v4342 = vsub.f32 %v4278, %v4310
    %v4343 = vsub.f32 %v4279, %v4311
    %v4344 = vsub.f32 %v4280, %v4312
    %v4345 = vsub.f32 %v4281, %v4313
    %v4346 = vsub.f32 %v4282, %v4314
    %v4347 = vsub.f32 %v4283, %v4315
    %v4348 = vsub.f32 %v4284, %v4316
    %v4349 = vsub.f32 %v4285, %v4317
    %v4350 = vsub.f32 %v4286, %v4318
    %v4351 = vsub.f32 %v4287, %v4319
    %v4352 = vsub.f32 %v4288, %v4320
    %v4353 = vsub.f32 %v4289, %v4321
    %v4354 = vsub.f32 %v4290, %v4322
    %v4355 = vsub.f32 %v4291, %v4323
    %v4356 = vsub.f32 %v4292, %v4324
    %v4357 = vsub.f32 %v4293, %v4325
    %v4358 = vsub.f32 %v4294, %v4326
    %v4359 = vsub.f32 %v4295, %v4327
    %v4360 = vmax.f32 %v4328, 0.0
    %v4361 = vmax.f32 %v4329, 0.0
    %v4362 = vmax.f32 %v4330, 0.0
    %v4363 = vmax.f32 %v4331, 0.0
    %v4364 = vmax.f32 %v4332, 0.0
    %v4365 = vmax.f32 %v4333, 0.0
    %v4366 = vmax.f32 %v4334, 0.0
    %v4367 = vmax.f32 %v4335, 0.0
    %v4368 = vmax.f32 %v4336, 0.0
    %v4369 = vmax.f32 %v4337, 0.0
    %v4370 = vmax.f32 %v4338, 0.0
    %v4371 = vmax.f32 %v4339, 0.0
    %v4372 = vmax.f32 %v4340, 0.0
    %v4373 = vmax.f32 %v4341, 0.0
    %v4374 = vmax.f32 %v4342, 0.0
    %v4375 = vmax.f32 %v4343, 0.0
    %v4376 = vmax.f32 %v4344, 0.0
    %v4377 = vmax.f32 %v4345, 0.0
    %v4378 = vmax.f32 %v4346, 0.0
    %v4379 = vmax.f32 %v4347, 0.0
    %v4380 = vmax.f32 %v4348, 0.0
    %v4381 = vmax.f32 %v4349, 0.0
    %v4382 = vmax.f32 %v4350, 0.0
    %v4383 = vmax.f32 %v4351, 0.0
    %v4384 = vmax.f32 %v4352, 0.0
    %v4385 = vmax.f32 %v4353, 0.0
    %v4386 = vmax.f32 %v4354, 0.0
    %v4387 = vmax.f32 %v4355, 0.0
    %v4388 = vmax.f32 %v4356, 0.0
    %v4389 = vmax.f32 %v4357, 0.0
    %v4390 = vmax.f32 %v4358, 0.0
    %v4391 = vmax.f32 %v4359, 0.0
    %v4392 = vsub.f32 %v4040, %v4136
    %v4393 = vsub.f32 %v4041, %v4137
    %v4394 = vsub.f32 %v4042, %v4138
    %v4395 = vsub.f32 %v4043, %v4139
    %v4396 = vsub.f32 %v4044, %v4140
    %v4397 = vsub.f32 %v4045, %v4141
    %v4398 = vsub.f32 %v4046, %v4142
    %v4399 = vsub.f32 %v4047, %v4143
    %v4400 = vsub.f32 %v4048, %v4144
    %v4401 = vsub.f32 %v4049, %v4145
    %v4402 = vsub.f32 %v4050, %v4146
    %v4403 = vsub.f32 %v4051, %v4147
    %v4404 = vsub.f32 %v4052, %v4148
    %v4405 = vsub.f32 %v4053, %v4149
    %v4406 = vsub.f32 %v4054, %v4150
    %v4407 = vsub.f32 %v4055, %v4151
    %v4408 = vsub.f32 %v4056, %v4152
    %v4409 = vsub.f32 %v4057, %v4153
    %v4410 = vsub.f32 %v4058, %v4154
    %v4411 = vsub.f32 %v4059, %v4155
    %v4412 = vsub.f32 %v4060, %v4156
    %v4413 = vsub.f32 %v4061, %v4157
    %v4414 = vsub.f32 %v4062, %v4158
    %v4415 = vsub.f32 %v4063, %v4159
    %v4416 = vsub.f32 %v4064, %v4160
    %v4417 = vsub.f32 %v4065, %v4161
    %v4418 = vsub.f32 %v4066, %v4162
    %v4419 = vsub.f32 %v4067, %v4163
    %v4420 = vsub.f32 %v4068, %v4164
    %v4421 = vsub.f32 %v4069, %v4165
    %v4422 = vsub.f32 %v4070, %v4166
    %v4423 = vsub.f32 %v4071, %v4167
    %v4424 = vadd.f32 %v4360, 1e-05
    %v4425 = vadd.f32 %v4361, 1e-05
    %v4426 = vadd.f32 %v4362, 1e-05
    %v4427 = vadd.f32 %v4363, 1e-05
    %v4428 = vadd.f32 %v4364, 1e-05
    %v4429 = vadd.f32 %v4365, 1e-05
    %v4430 = vadd.f32 %v4366, 1e-05
    %v4431 = vadd.f32 %v4367, 1e-05
    %v4432 = vadd.f32 %v4368, 1e-05
    %v4433 = vadd.f32 %v4369, 1e-05
    %v4434 = vadd.f32 %v4370, 1e-05
    %v4435 = vadd.f32 %v4371, 1e-05
    %v4436 = vadd.f32 %v4372, 1e-05
    %v4437 = vadd.f32 %v4373, 1e-05
    %v4438 = vadd.f32 %v4374, 1e-05
    %v4439 = vadd.f32 %v4375, 1e-05
    %v4440 = vadd.f32 %v4376, 1e-05
    %v4441 = vadd.f32 %v4377, 1e-05
    %v4442 = vadd.f32 %v4378, 1e-05
    %v4443 = vadd.f32 %v4379, 1e-05
    %v4444 = vadd.f32 %v4380, 1e-05
    %v4445 = vadd.f32 %v4381, 1e-05
    %v4446 = vadd.f32 %v4382, 1e-05
    %v4447 = vadd.f32 %v4383, 1e-05
    %v4448 = vadd.f32 %v4384, 1e-05
    %v4449 = vadd.f32 %v4385, 1e-05
    %v4450 = vadd.f32 %v4386, 1e-05
    %v4451 = vadd.f32 %v4387, 1e-05
    %v4452 = vadd.f32 %v4388, 1e-05
    %v4453 = vadd.f32 %v4389, 1e-05
    %v4454 = vadd.f32 %v4390, 1e-05
    %v4455 = vadd.f32 %v4391, 1e-05
    %v4456 = vrsqrt.pop %v4424
    %v4457 = vrsqrt.pop %v4425
    %v4458 = vrsqrt.pop %v4426
    %v4459 = vrsqrt.pop %v4427
    %v4460 = vrsqrt.pop %v4428
    %v4461 = vrsqrt.pop %v4429
    %v4462 = vrsqrt.pop %v4430
    %v4463 = vrsqrt.pop %v4431
    %v4464 = vrsqrt.pop %v4432
    %v4465 = vrsqrt.pop %v4433
    %v4466 = vrsqrt.pop %v4434
    %v4467 = vrsqrt.pop %v4435
    %v4468 = vrsqrt.pop %v4436
    %v4469 = vrsqrt.pop %v4437
    %v4470 = vrsqrt.pop %v4438
    %v4471 = vrsqrt.pop %v4439
    %v4472 = vrsqrt.pop %v4440
    %v4473 = vrsqrt.pop %v4441
    %v4474 = vrsqrt.pop %v4442
    %v4475 = vrsqrt.pop %v4443
    %v4476 = vrsqrt.pop %v4444
    %v4477 = vrsqrt.pop %v4445
    %v4478 = vrsqrt.pop %v4446
    %v4479 = vrsqrt.pop %v4447
    %v4480 = vrsqrt.pop %v4448
    %v4481 = vrsqrt.pop %v4449
    %v4482 = vrsqrt.pop %v4450
    %v4483 = vrsqrt.pop %v4451
    %v4484 = vrsqrt.pop %v4452
    %v4485 = vrsqrt.pop %v4453
    %v4486 = vrsqrt.pop %v4454
    %v4487 = vrsqrt.pop %v4455
    %v4488 = vmul.f32 %v4392, %v4456
    %v4489 = vmul.f32 %v4393, %v4457
    %v4490 = vmul.f32 %v4394, %v4458
    %v4491 = vmul.f32 %v4395, %v4459
    %v4492 = vmul.f32 %v4396, %v4460
    %v4493 = vmul.f32 %v4397, %v4461
    %v4494 = vmul.f32 %v4398, %v4462
    %v4495 = vmul.f32 %v4399, %v4463
    %v4496 = vmul.f32 %v4400, %v4464
    %v4497 = vmul.f32 %v4401, %v4465
    %v4498 = vmul.f32 %v4402, %v4466
    %v4499 = vmul.f32 %v4403, %v4467
    %v4500 = vmul.f32 %v4404, %v4468
    %v4501 = vmul.f32 %v4405, %v4469
    %v4502 = vmul.f32 %v4406, %v4470
    %v4503 = vmul.f32 %v4407, %v4471
    %v4504 = vmul.f32 %v4408, %v4472
    %v4505 = vmul.f32 %v4409, %v4473
    %v4506 = vmul.f32 %v4410, %v4474
    %v4507 = vmul.f32 %v4411, %v4475
    %v4508 = vmul.f32 %v4412, %v4476
    %v4509 = vmul.f32 %v4413, %v4477
    %v4510 = vmul.f32 %v4414, %v4478
    %v4511 = vmul.f32 %v4415, %v4479
    %v4512 = vmul.f32 %v4416, %v4480
    %v4513 = vmul.f32 %v4417, %v4481
    %v4514 = vmul.f32 %v4418, %v4482
    %v4515 = vmul.f32 %v4419, %v4483
    %v4516 = vmul.f32 %v4420, %v4484
    %v4517 = vmul.f32 %v4421, %v4485
    %v4518 = vmul.f32 %v4422, %v4486
    %v4519 = vmul.f32 %v4423, %v4487
    %v4520 = vld [vmem:[%s11 + $0x1] sm:$0x1]
    %v4521 = vlaneseq
    %v4522 = vshrl.u32 %v4521, 7
    %v4523 = vsub.s32 0, %v4522
    %v4524 = vrot.slane %v4520, %v4523
    %v4525 = vmul.f32 %v4488, %v4524
    %v4526 = vmul.f32 %v4489, %v4524
    %v4527 = vmul.f32 %v4490, %v4524
    %v4528 = vmul.f32 %v4491, %v4524
    %v4529 = vmul.f32 %v4492, %v4524
    %v4530 = vmul.f32 %v4493, %v4524
    %v4531 = vmul.f32 %v4494, %v4524
    %v4532 = vmul.f32 %v4495, %v4524
    %v4533 = vmul.f32 %v4496, %v4524
    %v4534 = vmul.f32 %v4497, %v4524
    %v4535 = vmul.f32 %v4498, %v4524
    %v4536 = vmul.f32 %v4499, %v4524
    %v4537 = vmul.f32 %v4500, %v4524
    %v4538 = vmul.f32 %v4501, %v4524
    %v4539 = vmul.f32 %v4502, %v4524
    %v4540 = vmul.f32 %v4503, %v4524
    %v4541 = vmul.f32 %v4504, %v4524
    %v4542 = vmul.f32 %v4505, %v4524
    %v4543 = vmul.f32 %v4506, %v4524
    %v4544 = vmul.f32 %v4507, %v4524
    %v4545 = vmul.f32 %v4508, %v4524
    %v4546 = vmul.f32 %v4509, %v4524
    %v4547 = vmul.f32 %v4510, %v4524
    %v4548 = vmul.f32 %v4511, %v4524
    %v4549 = vmul.f32 %v4512, %v4524
    %v4550 = vmul.f32 %v4513, %v4524
    %v4551 = vmul.f32 %v4514, %v4524
    %v4552 = vmul.f32 %v4515, %v4524
    %v4553 = vmul.f32 %v4516, %v4524
    %v4554 = vmul.f32 %v4517, %v4524
    %v4555 = vmul.f32 %v4518, %v4524
    %v4556 = vmul.f32 %v4519, %v4524
    %v4557 = vld [vmem:[%s12 + $0x1] sm:$0x1]
    %v4558 = vlaneseq
    %v4559 = vshrl.u32 %v4558, 7
    %v4560 = vsub.s32 0, %v4559
    %v4561 = vrot.slane %v4557, %v4560
    %v4562 = vadd.f32 %v4525, %v4561
    %v4563 = vadd.f32 %v4526, %v4561
    %v4564 = vadd.f32 %v4527, %v4561
    %v4565 = vadd.f32 %v4528, %v4561
    %v4566 = vadd.f32 %v4529, %v4561
    %v4567 = vadd.f32 %v4530, %v4561
    %v4568 = vadd.f32 %v4531, %v4561
    %v4569 = vadd.f32 %v4532, %v4561
    %v4570 = vadd.f32 %v4533, %v4561
    %v4571 = vadd.f32 %v4534, %v4561
    %v4572 = vadd.f32 %v4535, %v4561
    %v4573 = vadd.f32 %v4536, %v4561
    %v4574 = vadd.f32 %v4537, %v4561
    %v4575 = vadd.f32 %v4538, %v4561
    %v4576 = vadd.f32 %v4539, %v4561
    %v4577 = vadd.f32 %v4540, %v4561
    %v4578 = vadd.f32 %v4541, %v4561
    %v4579 = vadd.f32 %v4542, %v4561
    %v4580 = vadd.f32 %v4543, %v4561
    %v4581 = vadd.f32 %v4544, %v4561
    %v4582 = vadd.f32 %v4545, %v4561
    %v4583 = vadd.f32 %v4546, %v4561
    %v4584 = vadd.f32 %v4547, %v4561
    %v4585 = vadd.f32 %v4548, %v4561
    %v4586 = vadd.f32 %v4549, %v4561
    %v4587 = vadd.f32 %v4550, %v4561
    %v4588 = vadd.f32 %v4551, %v4561
    %v4589 = vadd.f32 %v4552, %v4561
    %v4590 = vadd.f32 %v4553, %v4561
    %v4591 = vadd.f32 %v4554, %v4561
    %v4592 = vadd.f32 %v4555, %v4561
    %v4593 = vadd.f32 %v4556, %v4561
    %v4594 = vmul.f32 %v4562, 0.5
    %v4595 = vmul.f32 %v4563, 0.5
    %v4596 = vmul.f32 %v4564, 0.5
    %v4597 = vmul.f32 %v4565, 0.5
    %v4598 = vmul.f32 %v4566, 0.5
    %v4599 = vmul.f32 %v4567, 0.5
    %v4600 = vmul.f32 %v4568, 0.5
    %v4601 = vmul.f32 %v4569, 0.5
    %v4602 = vmul.f32 %v4570, 0.5
    %v4603 = vmul.f32 %v4571, 0.5
    %v4604 = vmul.f32 %v4572, 0.5
    %v4605 = vmul.f32 %v4573, 0.5
    %v4606 = vmul.f32 %v4574, 0.5
    %v4607 = vmul.f32 %v4575, 0.5
    %v4608 = vmul.f32 %v4576, 0.5
    %v4609 = vmul.f32 %v4577, 0.5
    %v4610 = vmul.f32 %v4578, 0.5
    %v4611 = vmul.f32 %v4579, 0.5
    %v4612 = vmul.f32 %v4580, 0.5
    %v4613 = vmul.f32 %v4581, 0.5
    %v4614 = vmul.f32 %v4582, 0.5
    %v4615 = vmul.f32 %v4583, 0.5
    %v4616 = vmul.f32 %v4584, 0.5
    %v4617 = vmul.f32 %v4585, 0.5
    %v4618 = vmul.f32 %v4586, 0.5
    %v4619 = vmul.f32 %v4587, 0.5
    %v4620 = vmul.f32 %v4588, 0.5
    %v4621 = vmul.f32 %v4589, 0.5
    %v4622 = vmul.f32 %v4590, 0.5
    %v4623 = vmul.f32 %v4591, 0.5
    %v4624 = vmul.f32 %v4592, 0.5
    %v4625 = vmul.f32 %v4593, 0.5
    %v4626 = vtanh.pop %v4594
    %v4627 = vtanh.pop %v4595
    %v4628 = vtanh.pop %v4596
    %v4629 = vtanh.pop %v4597
    %v4630 = vtanh.pop %v4598
    %v4631 = vtanh.pop %v4599
    %v4632 = vtanh.pop %v4600
    %v4633 = vtanh.pop %v4601
    %v4634 = vtanh.pop %v4602
    %v4635 = vtanh.pop %v4603
    %v4636 = vtanh.pop %v4604
    %v4637 = vtanh.pop %v4605
    %v4638 = vtanh.pop %v4606
    %v4639 = vtanh.pop %v4607
    %v4640 = vtanh.pop %v4608
    %v4641 = vtanh.pop %v4609
    %v4642 = vtanh.pop %v4610
    %v4643 = vtanh.pop %v4611
    %v4644 = vtanh.pop %v4612
    %v4645 = vtanh.pop %v4613
    %v4646 = vtanh.pop %v4614
    %v4647 = vtanh.pop %v4615
    %v4648 = vtanh.pop %v4616
    %v4649 = vtanh.pop %v4617
    %v4650 = vtanh.pop %v4618
    %v4651 = vtanh.pop %v4619
    %v4652 = vtanh.pop %v4620
    %v4653 = vtanh.pop %v4621
    %v4654 = vtanh.pop %v4622
    %v4655 = vtanh.pop %v4623
    %v4656 = vtanh.pop %v4624
    %v4657 = vtanh.pop %v4625
    %v4658 = vmul.f32 %v4626, 0.5
    %v4659 = vmul.f32 %v4627, 0.5
    %v4660 = vmul.f32 %v4628, 0.5
    %v4661 = vmul.f32 %v4629, 0.5
    %v4662 = vmul.f32 %v4630, 0.5
    %v4663 = vmul.f32 %v4631, 0.5
    %v4664 = vmul.f32 %v4632, 0.5
    %v4665 = vmul.f32 %v4633, 0.5
    %v4666 = vmul.f32 %v4634, 0.5
    %v4667 = vmul.f32 %v4635, 0.5
    %v4668 = vmul.f32 %v4636, 0.5
    %v4669 = vmul.f32 %v4637, 0.5
    %v4670 = vmul.f32 %v4638, 0.5
    %v4671 = vmul.f32 %v4639, 0.5
    %v4672 = vmul.f32 %v4640, 0.5
    %v4673 = vmul.f32 %v4641, 0.5
    %v4674 = vmul.f32 %v4642, 0.5
    %v4675 = vmul.f32 %v4643, 0.5
    %v4676 = vmul.f32 %v4644, 0.5
    %v4677 = vmul.f32 %v4645, 0.5
    %v4678 = vmul.f32 %v4646, 0.5
    %v4679 = vmul.f32 %v4647, 0.5
    %v4680 = vmul.f32 %v4648, 0.5
    %v4681 = vmul.f32 %v4649, 0.5
    %v4682 = vmul.f32 %v4650, 0.5
    %v4683 = vmul.f32 %v4651, 0.5
    %v4684 = vmul.f32 %v4652, 0.5
    %v4685 = vmul.f32 %v4653, 0.5
    %v4686 = vmul.f32 %v4654, 0.5
    %v4687 = vmul.f32 %v4655, 0.5
    %v4688 = vmul.f32 %v4656, 0.5
    %v4689 = vmul.f32 %v4657, 0.5
    %v4690 = vadd.f32 %v4658, 0.5
    %v4691 = vadd.f32 %v4659, 0.5
    %v4692 = vadd.f32 %v4660, 0.5
    %v4693 = vadd.f32 %v4661, 0.5
    %v4694 = vadd.f32 %v4662, 0.5
    %v4695 = vadd.f32 %v4663, 0.5
    %v4696 = vadd.f32 %v4664, 0.5
    %v4697 = vadd.f32 %v4665, 0.5
    %v4698 = vadd.f32 %v4666, 0.5
    %v4699 = vadd.f32 %v4667, 0.5
    %v4700 = vadd.f32 %v4668, 0.5
    %v4701 = vadd.f32 %v4669, 0.5
    %v4702 = vadd.f32 %v4670, 0.5
    %v4703 = vadd.f32 %v4671, 0.5
    %v4704 = vadd.f32 %v4672, 0.5
    %v4705 = vadd.f32 %v4673, 0.5
    %v4706 = vadd.f32 %v4674, 0.5
    %v4707 = vadd.f32 %v4675, 0.5
    %v4708 = vadd.f32 %v4676, 0.5
    %v4709 = vadd.f32 %v4677, 0.5
    %v4710 = vadd.f32 %v4678, 0.5
    %v4711 = vadd.f32 %v4679, 0.5
    %v4712 = vadd.f32 %v4680, 0.5
    %v4713 = vadd.f32 %v4681, 0.5
    %v4714 = vadd.f32 %v4682, 0.5
    %v4715 = vadd.f32 %v4683, 0.5
    %v4716 = vadd.f32 %v4684, 0.5
    %v4717 = vadd.f32 %v4685, 0.5
    %v4718 = vadd.f32 %v4686, 0.5
    %v4719 = vadd.f32 %v4687, 0.5
    %v4720 = vadd.f32 %v4688, 0.5
    %v4721 = vadd.f32 %v4689, 0.5
    %v4722 = vmul.f32 %v4562, %v4690
    %v4723 = vmul.f32 %v4563, %v4691
    %v4724 = vmul.f32 %v4564, %v4692
    %v4725 = vmul.f32 %v4565, %v4693
    %v4726 = vmul.f32 %v4566, %v4694
    %v4727 = vmul.f32 %v4567, %v4695
    %v4728 = vmul.f32 %v4568, %v4696
    %v4729 = vmul.f32 %v4569, %v4697
    %v4730 = vmul.f32 %v4570, %v4698
    %v4731 = vmul.f32 %v4571, %v4699
    %v4732 = vmul.f32 %v4572, %v4700
    %v4733 = vmul.f32 %v4573, %v4701
    %v4734 = vmul.f32 %v4574, %v4702
    %v4735 = vmul.f32 %v4575, %v4703
    %v4736 = vmul.f32 %v4576, %v4704
    %v4737 = vmul.f32 %v4577, %v4705
    %v4738 = vmul.f32 %v4578, %v4706
    %v4739 = vmul.f32 %v4579, %v4707
    %v4740 = vmul.f32 %v4580, %v4708
    %v4741 = vmul.f32 %v4581, %v4709
    %v4742 = vmul.f32 %v4582, %v4710
    %v4743 = vmul.f32 %v4583, %v4711
    %v4744 = vmul.f32 %v4584, %v4712
    %v4745 = vmul.f32 %v4585, %v4713
    %v4746 = vmul.f32 %v4586, %v4714
    %v4747 = vmul.f32 %v4587, %v4715
    %v4748 = vmul.f32 %v4588, %v4716
    %v4749 = vmul.f32 %v4589, %v4717
    %v4750 = vmul.f32 %v4590, %v4718
    %v4751 = vmul.f32 %v4591, %v4719
    %v4752 = vmul.f32 %v4592, %v4720
    %v4753 = vmul.f32 %v4593, %v4721
    %v4754 = vpack.c.bf16 %v4723, %v4722
    %v4755 = vpack.c.bf16 %v4725, %v4724
    %v4756 = vpack.c.bf16 %v4727, %v4726
    %v4757 = vpack.c.bf16 %v4729, %v4728
    %v4758 = vpack.c.bf16 %v4731, %v4730
    %v4759 = vpack.c.bf16 %v4733, %v4732
    %v4760 = vpack.c.bf16 %v4735, %v4734
    %v4761 = vpack.c.bf16 %v4737, %v4736
    %v4762 = vpack.c.bf16 %v4739, %v4738
    %v4763 = vpack.c.bf16 %v4741, %v4740
    %v4764 = vpack.c.bf16 %v4743, %v4742
    %v4765 = vpack.c.bf16 %v4745, %v4744
    %v4766 = vpack.c.bf16 %v4747, %v4746
    %v4767 = vpack.c.bf16 %v4749, %v4748
    %v4768 = vpack.c.bf16 %v4751, %v4750
    %v4769 = vpack.c.bf16 %v4753, %v4752
    %s4770 = scalar_lea.vmem [#allocation2], 128
    %v4771 = vld [vmem:[%s4770] sm:$0xff]
    %v4772 = vld [vmem:[%s4770 + $0x8] sm:$0xff]
    %v4773 = vld [vmem:[%s4770 + $0x10] sm:$0xff]
    %v4774 = vld [vmem:[%s4770 + $0x18] sm:$0xff]
    %v4775 = vld [vmem:[%s4770 + $0x20] sm:$0xff]
    %v4776 = vld [vmem:[%s4770 + $0x28] sm:$0xff]
    %v4777 = vld [vmem:[%s4770 + $0x30] sm:$0xff]
    %v4778 = vld [vmem:[%s4770 + $0x38] sm:$0xff]
    %v4779 = vld [vmem:[%s4770 + $0x40] sm:$0xff]
    %v4780 = vld [vmem:[%s4770 + $0x48] sm:$0xff]
    %v4781 = vld [vmem:[%s4770 + $0x50] sm:$0xff]
    %v4782 = vld [vmem:[%s4770 + $0x58] sm:$0xff]
    %v4783 = vld [vmem:[%s4770 + $0x60] sm:$0xff]
    %v4784 = vld [vmem:[%s4770 + $0x68] sm:$0xff]
    %v4785 = vld [vmem:[%s4770 + $0x70] sm:$0xff]
    %v4786 = vld [vmem:[%s4770 + $0x78] sm:$0xff]
    %v4803 = vunpack.c.l.b16 %v4771
    %v4804 = vunpack.c.h.b16 %v4771
    %v4805 = vunpack.c.l.b16 %v4772
    %v4806 = vunpack.c.h.b16 %v4772
    %v4807 = vunpack.c.l.b16 %v4773
    %v4808 = vunpack.c.h.b16 %v4773
    %v4809 = vunpack.c.l.b16 %v4774
    %v4810 = vunpack.c.h.b16 %v4774
    %v4811 = vunpack.c.l.b16 %v4775
    %v4812 = vunpack.c.h.b16 %v4775
    %v4813 = vunpack.c.l.b16 %v4776
    %v4814 = vunpack.c.h.b16 %v4776
    %v4815 = vunpack.c.l.b16 %v4777
    %v4816 = vunpack.c.h.b16 %v4777
    %v4817 = vunpack.c.l.b16 %v4778
    %v4818 = vunpack.c.h.b16 %v4778
    %v4819 = vunpack.c.l.b16 %v4779
    %v4820 = vunpack.c.h.b16 %v4779
    %v4821 = vunpack.c.l.b16 %v4780
    %v4822 = vunpack.c.h.b16 %v4780
    %v4823 = vunpack.c.l.b16 %v4781
    %v4824 = vunpack.c.h.b16 %v4781
    %v4825 = vunpack.c.l.b16 %v4782
    %v4826 = vunpack.c.h.b16 %v4782
    %v4827 = vunpack.c.l.b16 %v4783
    %v4828 = vunpack.c.h.b16 %v4783
    %v4829 = vunpack.c.l.b16 %v4784
    %v4830 = vunpack.c.h.b16 %v4784
    %v4831 = vunpack.c.l.b16 %v4785
    %v4832 = vunpack.c.h.b16 %v4785
    %v4833 = vunpack.c.l.b16 %v4786
    %v4834 = vunpack.c.h.b16 %v4786
    %v4835 = vpack.c.b16 %v4805, %v4803
    %v4836 = vpack.c.b16 %v4806, %v4804
    %v4837 = vpack.c.b16 %v4809, %v4807
    %v4838 = vpack.c.b16 %v4810, %v4808
    %v4839 = vpack.c.b16 %v4813, %v4811
    %v4840 = vpack.c.b16 %v4814, %v4812
    %v4841 = vpack.c.b16 %v4817, %v4815
    %v4842 = vpack.c.b16 %v4818, %v4816
    %v4843 = vpack.c.b16 %v4821, %v4819
    %v4844 = vpack.c.b16 %v4822, %v4820
    %v4845 = vpack.c.b16 %v4825, %v4823
    %v4846 = vpack.c.b16 %v4826, %v4824
    %v4847 = vpack.c.b16 %v4829, %v4827
    %v4848 = vpack.c.b16 %v4830, %v4828
    %v4849 = vpack.c.b16 %v4833, %v4831
    %v4850 = vpack.c.b16 %v4834, %v4832
    %4867 = vmatprep.subr.bf16.mxu0 %v4850
    %4868 = vmatpush1.bf16.msra.mxu0 %v4849
    %4869 = vmatprep.subr.bf16.mxu0 %v4848
    %4870 = vmatpush1.bf16.msra.mxu0 %v4847
    %4871 = vmatprep.subr.bf16.mxu0 %v4846
    %4872 = vmatpush1.bf16.msra.mxu0 %v4845
    %4873 = vmatprep.subr.bf16.mxu0 %v4844
    %4874 = vmatpush1.bf16.msra.mxu0 %v4843
    %4875 = vmatprep.subr.bf16.mxu0 %v4842
    %4876 = vmatpush1.bf16.msra.mxu0 %v4841
    %4877 = vmatprep.subr.bf16.mxu0 %v4840
    %4878 = vmatpush1.bf16.msra.mxu0 %v4839
    %4879 = vmatprep.subr.bf16.mxu0 %v4838
    %4880 = vmatpush1.bf16.msra.mxu0 %v4837
    %4881 = vmatprep.subr.bf16.mxu0 %v4836
    %4882 = vmatpush1.bf16.msra.mxu0 %v4835
    %4883 = vmatprep.subr.bf16.mxu0 0
    %4884 = vmatpush2.bf16.msra.mxu0 0
    %4885 = vmatprep.subr.bf16.mxu0 0
    %4886 = vmatpush2.bf16.msra.mxu0 0
    %4887 = vmatprep.subr.bf16.mxu0 0
    %4888 = vmatpush2.bf16.msra.mxu0 0
    %4889 = vmatprep.subr.bf16.mxu0 0
    %4890 = vmatpush2.bf16.msra.mxu0 0
    %4891 = vmatprep.subr.bf16.mxu0 0
    %4892 = vmatpush2.bf16.msra.mxu0 0
    %4893 = vmatprep.subr.bf16.mxu0 0
    %4894 = vmatpush2.bf16.msra.mxu0 0
    %4895 = vmatprep.subr.bf16.mxu0 0
    %4896 = vmatpush2.bf16.msra.mxu0 0
    %4897 = vmatprep.subr.bf16.mxu0 0
    %4898 = vmatpush2.bf16.msra.mxu0 0
    %4899 = vmatprep.mubr.bf16.mxu0 0
    %4900 = vmatmul.mubr.bf16.gmra.mxu0 %v4754
    %v4901 = vpop.f32.mrf.mxu0
    %v4902 = vadd.f32 %v1037, %v4901
    %v4903 = vpop.f32.mrf.mxu0
    %v4904 = vadd.f32 %v1039, %v4903
    %v4905 = vpop.f32.mrf.mxu0
    %v4906 = vadd.f32 %v1041, %v4905
    %v4907 = vpop.f32.mrf.mxu0
    %v4908 = vadd.f32 %v1043, %v4907
    %4909 = vmatprep.mubr.bf16.mxu0 0
    %4910 = vmatmul.mubr.bf16.gmra.mxu0 %v4755
    %v4911 = vpop.f32.mrf.mxu0
    %v4912 = vadd.f32 %v1047, %v4911
    %v4913 = vpop.f32.mrf.mxu0
    %v4914 = vadd.f32 %v1049, %v4913
    %v4915 = vpop.f32.mrf.mxu0
    %v4916 = vadd.f32 %v1051, %v4915
    %v4917 = vpop.f32.mrf.mxu0
    %v4918 = vadd.f32 %v1053, %v4917
    %4919 = vmatprep.mubr.bf16.mxu0 0
    %4920 = vmatmul.mubr.bf16.gmra.mxu0 %v4756
    %v4921 = vpop.f32.mrf.mxu0
    %v4922 = vadd.f32 %v1057, %v4921
    %v4923 = vpop.f32.mrf.mxu0
    %v4924 = vadd.f32 %v1059, %v4923
    %v4925 = vpop.f32.mrf.mxu0
    %v4926 = vadd.f32 %v1061, %v4925
    %v4927 = vpop.f32.mrf.mxu0
    %v4928 = vadd.f32 %v1063, %v4927
    %4929 = vmatprep.mubr.bf16.mxu0 0
    %4930 = vmatmul.mubr.bf16.gmra.mxu0 %v4757
    %v4931 = vpop.f32.mrf.mxu0
    %v4932 = vadd.f32 %v1067, %v4931
    %v4933 = vpop.f32.mrf.mxu0
    %v4934 = vadd.f32 %v1069, %v4933
    %v4935 = vpop.f32.mrf.mxu0
    %v4936 = vadd.f32 %v1071, %v4935
    %v4937 = vpop.f32.mrf.mxu0
    %v4938 = vadd.f32 %v1073, %v4937
    %4939 = vmatprep.mubr.bf16.mxu0 0
    %4940 = vmatmul.mubr.bf16.gmra.mxu0 %v4758
    %v4941 = vpop.f32.mrf.mxu0
    %v4942 = vadd.f32 %v1077, %v4941
    %v4943 = vpop.f32.mrf.mxu0
    %v4944 = vadd.f32 %v1079, %v4943
    %v4945 = vpop.f32.mrf.mxu0
    %v4946 = vadd.f32 %v1081, %v4945
    %v4947 = vpop.f32.mrf.mxu0
    %v4948 = vadd.f32 %v1083, %v4947
    %4949 = vmatprep.mubr.bf16.mxu0 0
    %4950 = vmatmul.mubr.bf16.gmra.mxu0 %v4759
    %v4951 = vpop.f32.mrf.mxu0
    %v4952 = vadd.f32 %v1087, %v4951
    %v4953 = vpop.f32.mrf.mxu0
    %v4954 = vadd.f32 %v1089, %v4953
    %v4955 = vpop.f32.mrf.mxu0
    %v4956 = vadd.f32 %v1091, %v4955
    %v4957 = vpop.f32.mrf.mxu0
    %v4958 = vadd.f32 %v1093, %v4957
    %4959 = vmatprep.mubr.bf16.mxu0 0
    %4960 = vmatmul.mubr.bf16.gmra.mxu0 %v4760
    %v4961 = vpop.f32.mrf.mxu0
    %v4962 = vadd.f32 %v1097, %v4961
    %v4963 = vpop.f32.mrf.mxu0
    %v4964 = vadd.f32 %v1099, %v4963
    %v4965 = vpop.f32.mrf.mxu0
    %v4966 = vadd.f32 %v1101, %v4965
    %v4967 = vpop.f32.mrf.mxu0
    %v4968 = vadd.f32 %v1103, %v4967
    %4969 = vmatprep.mubr.bf16.mxu0 0
    %4970 = vmatmul.mubr.bf16.gmra.mxu0 %v4761
    %v4971 = vpop.f32.mrf.mxu0
    %v4972 = vadd.f32 %v1107, %v4971
    %v4973 = vpop.f32.mrf.mxu0
    %v4974 = vadd.f32 %v1109, %v4973
    %v4975 = vpop.f32.mrf.mxu0
    %v4976 = vadd.f32 %v1111, %v4975
    %v4977 = vpop.f32.mrf.mxu0
    %v4978 = vadd.f32 %v1113, %v4977
    %4979 = vmatprep.mubr.bf16.mxu0 0
    %4980 = vmatmul.mubr.bf16.gmra.mxu0 %v4762
    %v4981 = vpop.f32.mrf.mxu0
    %v4982 = vadd.f32 %v1117, %v4981
    %v4983 = vpop.f32.mrf.mxu0
    %v4984 = vadd.f32 %v1119, %v4983
    %v4985 = vpop.f32.mrf.mxu0
    %v4986 = vadd.f32 %v1121, %v4985
    %v4987 = vpop.f32.mrf.mxu0
    %v4988 = vadd.f32 %v1123, %v4987
    %4989 = vmatprep.mubr.bf16.mxu0 0
    %4990 = vmatmul.mubr.bf16.gmra.mxu0 %v4763
    %v4991 = vpop.f32.mrf.mxu0
    %v4992 = vadd.f32 %v1127, %v4991
    %v4993 = vpop.f32.mrf.mxu0
    %v4994 = vadd.f32 %v1129, %v4993
    %v4995 = vpop.f32.mrf.mxu0
    %v4996 = vadd.f32 %v1131, %v4995
    %v4997 = vpop.f32.mrf.mxu0
    %v4998 = vadd.f32 %v1133, %v4997
    %4999 = vmatprep.mubr.bf16.mxu0 0
    %5000 = vmatmul.mubr.bf16.gmra.mxu0 %v4764
    %v5001 = vpop.f32.mrf.mxu0
    %v5002 = vadd.f32 %v1137, %v5001
    %v5003 = vpop.f32.mrf.mxu0
    %v5004 = vadd.f32 %v1139, %v5003
    %v5005 = vpop.f32.mrf.mxu0
    %v5006 = vadd.f32 %v1141, %v5005
    %v5007 = vpop.f32.mrf.mxu0
    %v5008 = vadd.f32 %v1143, %v5007
    %5009 = vmatprep.mubr.bf16.mxu0 0
    %5010 = vmatmul.mubr.bf16.gmra.mxu0 %v4765
    %v5011 = vpop.f32.mrf.mxu0
    %v5012 = vadd.f32 %v1147, %v5011
    %v5013 = vpop.f32.mrf.mxu0
    %v5014 = vadd.f32 %v1149, %v5013
    %v5015 = vpop.f32.mrf.mxu0
    %v5016 = vadd.f32 %v1151, %v5015
    %v5017 = vpop.f32.mrf.mxu0
    %v5018 = vadd.f32 %v1153, %v5017
    %5019 = vmatprep.mubr.bf16.mxu0 0
    %5020 = vmatmul.mubr.bf16.gmra.mxu0 %v4766
    %v5021 = vpop.f32.mrf.mxu0
    %v5022 = vadd.f32 %v1157, %v5021
    %v5023 = vpop.f32.mrf.mxu0
    %v5024 = vadd.f32 %v1159, %v5023
    %v5025 = vpop.f32.mrf.mxu0
    %v5026 = vadd.f32 %v1161, %v5025
    %v5027 = vpop.f32.mrf.mxu0
    %v5028 = vadd.f32 %v1163, %v5027
    %5029 = vmatprep.mubr.bf16.mxu0 0
    %5030 = vmatmul.mubr.bf16.gmra.mxu0 %v4767
    %v5031 = vpop.f32.mrf.mxu0
    %v5032 = vadd.f32 %v1167, %v5031
    %v5033 = vpop.f32.mrf.mxu0
    %v5034 = vadd.f32 %v1169, %v5033
    %v5035 = vpop.f32.mrf.mxu0
    %v5036 = vadd.f32 %v1171, %v5035
    %v5037 = vpop.f32.mrf.mxu0
    %v5038 = vadd.f32 %v1173, %v5037
    %5039 = vmatprep.mubr.bf16.mxu0 0
    %5040 = vmatmul.mubr.bf16.gmra.mxu0 %v4768
    %v5041 = vpop.f32.mrf.mxu0
    %v5042 = vadd.f32 %v1177, %v5041
    %v5043 = vpop.f32.mrf.mxu0
    %v5044 = vadd.f32 %v1179, %v5043
    %v5045 = vpop.f32.mrf.mxu0
    %v5046 = vadd.f32 %v1181, %v5045
    %v5047 = vpop.f32.mrf.mxu0
    %v5048 = vadd.f32 %v1183, %v5047
    %5049 = vmatprep.mubr.bf16.mxu0 0
    %5050 = vmatmul.mubr.bf16.gmra.mxu0 %v4769
    %v5051 = vpop.f32.mrf.mxu0
    %v5052 = vadd.f32 %v1187, %v5051
    %v5053 = vpop.f32.mrf.mxu0
    %v5054 = vadd.f32 %v1189, %v5053
    %v5055 = vpop.f32.mrf.mxu0
    %v5056 = vadd.f32 %v1191, %v5055
    %v5057 = vpop.f32.mrf.mxu0
    %v5058 = vadd.f32 %v1193, %v5057
    %5059 = vdwg.mxu0
    %s5060 = scalar_lea.vmem %s6, 1
    %v5061 = vld [vmem:[%s5060] ss:$4 sm:$0x3]
    %v5063 = vlaneseq
    %v5064 = vshrl.u32 %v5063, 7
    %v5065 = vsub.s32 0, %v5064
    %v5066 = vrot.slane %v5061, %v5065
    %v5067 = vlaneseq
    %v5068 = vshrl.u32 %v5067, 7
    %v5069 = vsub.s32 1, %v5068
    %v5070 = vrot.slane %v5061, %v5069
    %v5073 = vadd.f32 %v4902, %v5066
    %v5074 = vadd.f32 %v4904, %v5070
    %v5075 = vadd.f32 %v4906, %v5066
    %v5076 = vadd.f32 %v4908, %v5070
    %v5077 = vadd.f32 %v4912, %v5066
    %v5078 = vadd.f32 %v4914, %v5070
    %v5079 = vadd.f32 %v4916, %v5066
    %v5080 = vadd.f32 %v4918, %v5070
    %v5081 = vadd.f32 %v4922, %v5066
    %v5082 = vadd.f32 %v4924, %v5070
    %v5083 = vadd.f32 %v4926, %v5066
    %v5084 = vadd.f32 %v4928, %v5070
    %v5085 = vadd.f32 %v4932, %v5066
    %v5086 = vadd.f32 %v4934, %v5070
    %v5087 = vadd.f32 %v4936, %v5066
    %v5088 = vadd.f32 %v4938, %v5070
    %v5089 = vadd.f32 %v4942, %v5066
    %v5090 = vadd.f32 %v4944, %v5070
    %v5091 = vadd.f32 %v4946, %v5066
    %v5092 = vadd.f32 %v4948, %v5070
    %v5093 = vadd.f32 %v4952, %v5066
    %v5094 = vadd.f32 %v4954, %v5070
    %v5095 = vadd.f32 %v4956, %v5066
    %v5096 = vadd.f32 %v4958, %v5070
    %v5097 = vadd.f32 %v4962, %v5066
    %v5098 = vadd.f32 %v4964, %v5070
    %v5099 = vadd.f32 %v4966, %v5066
    %v5100 = vadd.f32 %v4968, %v5070
    %v5101 = vadd.f32 %v4972, %v5066
    %v5102 = vadd.f32 %v4974, %v5070
    %v5103 = vadd.f32 %v4976, %v5066
    %v5104 = vadd.f32 %v4978, %v5070
    %v5105 = vadd.f32 %v4982, %v5066
    %v5106 = vadd.f32 %v4984, %v5070
    %v5107 = vadd.f32 %v4986, %v5066
    %v5108 = vadd.f32 %v4988, %v5070
    %v5109 = vadd.f32 %v4992, %v5066
    %v5110 = vadd.f32 %v4994, %v5070
    %v5111 = vadd.f32 %v4996, %v5066
    %v5112 = vadd.f32 %v4998, %v5070
    %v5113 = vadd.f32 %v5002, %v5066
    %v5114 = vadd.f32 %v5004, %v5070
    %v5115 = vadd.f32 %v5006, %v5066
    %v5116 = vadd.f32 %v5008, %v5070
    %v5117 = vadd.f32 %v5012, %v5066
    %v5118 = vadd.f32 %v5014, %v5070
    %v5119 = vadd.f32 %v5016, %v5066
    %v5120 = vadd.f32 %v5018, %v5070
    %v5121 = vadd.f32 %v5022, %v5066
    %v5122 = vadd.f32 %v5024, %v5070
    %v5123 = vadd.f32 %v5026, %v5066
    %v5124 = vadd.f32 %v5028, %v5070
    %v5125 = vadd.f32 %v5032, %v5066
    %v5126 = vadd.f32 %v5034, %v5070
    %v5127 = vadd.f32 %v5036, %v5066
    %v5128 = vadd.f32 %v5038, %v5070
    %v5129 = vadd.f32 %v5042, %v5066
    %v5130 = vadd.f32 %v5044, %v5070
    %v5131 = vadd.f32 %v5046, %v5066
    %v5132 = vadd.f32 %v5048, %v5070
    %v5133 = vadd.f32 %v5052, %v5066
    %v5134 = vadd.f32 %v5054, %v5070
    %v5135 = vadd.f32 %v5056, %v5066
    %v5136 = vadd.f32 %v5058, %v5070
    %v5137 = vmul.f32 %v5073, 0.5
    %v5138 = vmul.f32 %v5074, 0.5
    %v5139 = vmul.f32 %v5075, 0.5
    %v5140 = vmul.f32 %v5076, 0.5
    %v5141 = vmul.f32 %v5077, 0.5
    %v5142 = vmul.f32 %v5078, 0.5
    %v5143 = vmul.f32 %v5079, 0.5
    %v5144 = vmul.f32 %v5080, 0.5
    %v5145 = vmul.f32 %v5081, 0.5
    %v5146 = vmul.f32 %v5082, 0.5
    %v5147 = vmul.f32 %v5083, 0.5
    %v5148 = vmul.f32 %v5084, 0.5
    %v5149 = vmul.f32 %v5085, 0.5
    %v5150 = vmul.f32 %v5086, 0.5
    %v5151 = vmul.f32 %v5087, 0.5
    %v5152 = vmul.f32 %v5088, 0.5
    %v5153 = vmul.f32 %v5089, 0.5
    %v5154 = vmul.f32 %v5090, 0.5
    %v5155 = vmul.f32 %v5091, 0.5
    %v5156 = vmul.f32 %v5092, 0.5
    %v5157 = vmul.f32 %v5093, 0.5
    %v5158 = vmul.f32 %v5094, 0.5
    %v5159 = vmul.f32 %v5095, 0.5
    %v5160 = vmul.f32 %v5096, 0.5
    %v5161 = vmul.f32 %v5097, 0.5
    %v5162 = vmul.f32 %v5098, 0.5
    %v5163 = vmul.f32 %v5099, 0.5
    %v5164 = vmul.f32 %v5100, 0.5
    %v5165 = vmul.f32 %v5101, 0.5
    %v5166 = vmul.f32 %v5102, 0.5
    %v5167 = vmul.f32 %v5103, 0.5
    %v5168 = vmul.f32 %v5104, 0.5
    %v5169 = vmul.f32 %v5105, 0.5
    %v5170 = vmul.f32 %v5106, 0.5
    %v5171 = vmul.f32 %v5107, 0.5
    %v5172 = vmul.f32 %v5108, 0.5
    %v5173 = vmul.f32 %v5109, 0.5
    %v5174 = vmul.f32 %v5110, 0.5
    %v5175 = vmul.f32 %v5111, 0.5
    %v5176 = vmul.f32 %v5112, 0.5
    %v5177 = vmul.f32 %v5113, 0.5
    %v5178 = vmul.f32 %v5114, 0.5
    %v5179 = vmul.f32 %v5115, 0.5
    %v5180 = vmul.f32 %v5116, 0.5
    %v5181 = vmul.f32 %v5117, 0.5
    %v5182 = vmul.f32 %v5118, 0.5
    %v5183 = vmul.f32 %v5119, 0.5
    %v5184 = vmul.f32 %v5120, 0.5
    %v5185 = vmul.f32 %v5121, 0.5
    %v5186 = vmul.f32 %v5122, 0.5
    %v5187 = vmul.f32 %v5123, 0.5
    %v5188 = vmul.f32 %v5124, 0.5
    %v5189 = vmul.f32 %v5125, 0.5
    %v5190 = vmul.f32 %v5126, 0.5
    %v5191 = vmul.f32 %v5127, 0.5
    %v5192 = vmul.f32 %v5128, 0.5
    %v5193 = vmul.f32 %v5129, 0.5
    %v5194 = vmul.f32 %v5130, 0.5
    %v5195 = vmul.f32 %v5131, 0.5
    %v5196 = vmul.f32 %v5132, 0.5
    %v5197 = vmul.f32 %v5133, 0.5
    %v5198 = vmul.f32 %v5134, 0.5
    %v5199 = vmul.f32 %v5135, 0.5
    %v5200 = vmul.f32 %v5136, 0.5
    %v5201 = vtanh.pop %v5137
    %v5202 = vtanh.pop %v5138
    %v5203 = vtanh.pop %v5139
    %v5204 = vtanh.pop %v5140
    %v5205 = vtanh.pop %v5141
    %v5206 = vtanh.pop %v5142
    %v5207 = vtanh.pop %v5143
    %v5208 = vtanh.pop %v5144
    %v5209 = vtanh.pop %v5145
    %v5210 = vtanh.pop %v5146
    %v5211 = vtanh.pop %v5147
    %v5212 = vtanh.pop %v5148
    %v5213 = vtanh.pop %v5149
    %v5214 = vtanh.pop %v5150
    %v5215 = vtanh.pop %v5151
    %v5216 = vtanh.pop %v5152
    %v5217 = vtanh.pop %v5153
    %v5218 = vtanh.pop %v5154
    %v5219 = vtanh.pop %v5155
    %v5220 = vtanh.pop %v5156
    %v5221 = vtanh.pop %v5157
    %v5222 = vtanh.pop %v5158
    %v5223 = vtanh.pop %v5159
    %v5224 = vtanh.pop %v5160
    %v5225 = vtanh.pop %v5161
    %v5226 = vtanh.pop %v5162
    %v5227 = vtanh.pop %v5163
    %v5228 = vtanh.pop %v5164
    %v5229 = vtanh.pop %v5165
    %v5230 = vtanh.pop %v5166
    %v5231 = vtanh.pop %v5167
    %v5232 = vtanh.pop %v5168
    %v5233 = vtanh.pop %v5169
    %v5234 = vtanh.pop %v5170
    %v5235 = vtanh.pop %v5171
    %v5236 = vtanh.pop %v5172
    %v5237 = vtanh.pop %v5173
    %v5238 = vtanh.pop %v5174
    %v5239 = vtanh.pop %v5175
    %v5240 = vtanh.pop %v5176
    %v5241 = vtanh.pop %v5177
    %v5242 = vtanh.pop %v5178
    %v5243 = vtanh.pop %v5179
    %v5244 = vtanh.pop %v5180
    %v5245 = vtanh.pop %v5181
    %v5246 = vtanh.pop %v5182
    %v5247 = vtanh.pop %v5183
    %v5248 = vtanh.pop %v5184
    %v5249 = vtanh.pop %v5185
    %v5250 = vtanh.pop %v5186
    %v5251 = vtanh.pop %v5187
    %v5252 = vtanh.pop %v5188
    %v5253 = vtanh.pop %v5189
    %v5254 = vtanh.pop %v5190
    %v5255 = vtanh.pop %v5191
    %v5256 = vtanh.pop %v5192
    %v5257 = vtanh.pop %v5193
    %v5258 = vtanh.pop %v5194
    %v5259 = vtanh.pop %v5195
    %v5260 = vtanh.pop %v5196
    %v5261 = vtanh.pop %v5197
    %v5262 = vtanh.pop %v5198
    %v5263 = vtanh.pop %v5199
    %v5264 = vtanh.pop %v5200
    %v5265 = vmul.f32 %v5201, 0.5
    %v5266 = vmul.f32 %v5202, 0.5
    %v5267 = vmul.f32 %v5203, 0.5
    %v5268 = vmul.f32 %v5204, 0.5
    %v5269 = vmul.f32 %v5205, 0.5
    %v5270 = vmul.f32 %v5206, 0.5
    %v5271 = vmul.f32 %v5207, 0.5
    %v5272 = vmul.f32 %v5208, 0.5
    %v5273 = vmul.f32 %v5209, 0.5
    %v5274 = vmul.f32 %v5210, 0.5
    %v5275 = vmul.f32 %v5211, 0.5
    %v5276 = vmul.f32 %v5212, 0.5
    %v5277 = vmul.f32 %v5213, 0.5
    %v5278 = vmul.f32 %v5214, 0.5
    %v5279 = vmul.f32 %v5215, 0.5
    %v5280 = vmul.f32 %v5216, 0.5
    %v5281 = vmul.f32 %v5217, 0.5
    %v5282 = vmul.f32 %v5218, 0.5
    %v5283 = vmul.f32 %v5219, 0.5
    %v5284 = vmul.f32 %v5220, 0.5
    %v5285 = vmul.f32 %v5221, 0.5
    %v5286 = vmul.f32 %v5222, 0.5
    %v5287 = vmul.f32 %v5223, 0.5
    %v5288 = vmul.f32 %v5224, 0.5
    %v5289 = vmul.f32 %v5225, 0.5
    %v5290 = vmul.f32 %v5226, 0.5
    %v5291 = vmul.f32 %v5227, 0.5
    %v5292 = vmul.f32 %v5228, 0.5
    %v5293 = vmul.f32 %v5229, 0.5
    %v5294 = vmul.f32 %v5230, 0.5
    %v5295 = vmul.f32 %v5231, 0.5
    %v5296 = vmul.f32 %v5232, 0.5
    %v5297 = vmul.f32 %v5233, 0.5
    %v5298 = vmul.f32 %v5234, 0.5
    %v5299 = vmul.f32 %v5235, 0.5
    %v5300 = vmul.f32 %v5236, 0.5
    %v5301 = vmul.f32 %v5237, 0.5
    %v5302 = vmul.f32 %v5238, 0.5
    %v5303 = vmul.f32 %v5239, 0.5
    %v5304 = vmul.f32 %v5240, 0.5
    %v5305 = vmul.f32 %v5241, 0.5
    %v5306 = vmul.f32 %v5242, 0.5
    %v5307 = vmul.f32 %v5243, 0.5
    %v5308 = vmul.f32 %v5244, 0.5
    %v5309 = vmul.f32 %v5245, 0.5
    %v5310 = vmul.f32 %v5246, 0.5
    %v5311 = vmul.f32 %v5247, 0.5
    %v5312 = vmul.f32 %v5248, 0.5
    %v5313 = vmul.f32 %v5249, 0.5
    %v5314 = vmul.f32 %v5250, 0.5
    %v5315 = vmul.f32 %v5251, 0.5
    %v5316 = vmul.f32 %v5252, 0.5
    %v5317 = vmul.f32 %v5253, 0.5
    %v5318 = vmul.f32 %v5254, 0.5
    %v5319 = vmul.f32 %v5255, 0.5
    %v5320 = vmul.f32 %v5256, 0.5
    %v5321 = vmul.f32 %v5257, 0.5
    %v5322 = vmul.f32 %v5258, 0.5
    %v5323 = vmul.f32 %v5259, 0.5
    %v5324 = vmul.f32 %v5260, 0.5
    %v5325 = vmul.f32 %v5261, 0.5
    %v5326 = vmul.f32 %v5262, 0.5
    %v5327 = vmul.f32 %v5263, 0.5
    %v5328 = vmul.f32 %v5264, 0.5
    %v5329 = vadd.f32 %v5265, 0.5
    %v5330 = vadd.f32 %v5266, 0.5
    %v5331 = vadd.f32 %v5267, 0.5
    %v5332 = vadd.f32 %v5268, 0.5
    %v5333 = vadd.f32 %v5269, 0.5
    %v5334 = vadd.f32 %v5270, 0.5
    %v5335 = vadd.f32 %v5271, 0.5
    %v5336 = vadd.f32 %v5272, 0.5
    %v5337 = vadd.f32 %v5273, 0.5
    %v5338 = vadd.f32 %v5274, 0.5
    %v5339 = vadd.f32 %v5275, 0.5
    %v5340 = vadd.f32 %v5276, 0.5
    %v5341 = vadd.f32 %v5277, 0.5
    %v5342 = vadd.f32 %v5278, 0.5
    %v5343 = vadd.f32 %v5279, 0.5
    %v5344 = vadd.f32 %v5280, 0.5
    %v5345 = vadd.f32 %v5281, 0.5
    %v5346 = vadd.f32 %v5282, 0.5
    %v5347 = vadd.f32 %v5283, 0.5
    %v5348 = vadd.f32 %v5284, 0.5
    %v5349 = vadd.f32 %v5285, 0.5
    %v5350 = vadd.f32 %v5286, 0.5
    %v5351 = vadd.f32 %v5287, 0.5
    %v5352 = vadd.f32 %v5288, 0.5
    %v5353 = vadd.f32 %v5289, 0.5
    %v5354 = vadd.f32 %v5290, 0.5
    %v5355 = vadd.f32 %v5291, 0.5
    %v5356 = vadd.f32 %v5292, 0.5
    %v5357 = vadd.f32 %v5293, 0.5
    %v5358 = vadd.f32 %v5294, 0.5
    %v5359 = vadd.f32 %v5295, 0.5
    %v5360 = vadd.f32 %v5296, 0.5
    %v5361 = vadd.f32 %v5297, 0.5
    %v5362 = vadd.f32 %v5298, 0.5
    %v5363 = vadd.f32 %v5299, 0.5
    %v5364 = vadd.f32 %v5300, 0.5
    %v5365 = vadd.f32 %v5301, 0.5
    %v5366 = vadd.f32 %v5302, 0.5
    %v5367 = vadd.f32 %v5303, 0.5
    %v5368 = vadd.f32 %v5304, 0.5
    %v5369 = vadd.f32 %v5305, 0.5
    %v5370 = vadd.f32 %v5306, 0.5
    %v5371 = vadd.f32 %v5307, 0.5
    %v5372 = vadd.f32 %v5308, 0.5
    %v5373 = vadd.f32 %v5309, 0.5
    %v5374 = vadd.f32 %v5310, 0.5
    %v5375 = vadd.f32 %v5311, 0.5
    %v5376 = vadd.f32 %v5312, 0.5
    %v5377 = vadd.f32 %v5313, 0.5
    %v5378 = vadd.f32 %v5314, 0.5
    %v5379 = vadd.f32 %v5315, 0.5
    %v5380 = vadd.f32 %v5316, 0.5
    %v5381 = vadd.f32 %v5317, 0.5
    %v5382 = vadd.f32 %v5318, 0.5
    %v5383 = vadd.f32 %v5319, 0.5
    %v5384 = vadd.f32 %v5320, 0.5
    %v5385 = vadd.f32 %v5321, 0.5
    %v5386 = vadd.f32 %v5322, 0.5
    %v5387 = vadd.f32 %v5323, 0.5
    %v5388 = vadd.f32 %v5324, 0.5
    %v5389 = vadd.f32 %v5325, 0.5
    %v5390 = vadd.f32 %v5326, 0.5
    %v5391 = vadd.f32 %v5327, 0.5
    %v5392 = vadd.f32 %v5328, 0.5
    %v5393 = vmul.f32 %v5073, %v5329
    %v5394 = vmul.f32 %v5074, %v5330
    %v5395 = vmul.f32 %v5075, %v5331
    %v5396 = vmul.f32 %v5076, %v5332
    %v5397 = vmul.f32 %v5077, %v5333
    %v5398 = vmul.f32 %v5078, %v5334
    %v5399 = vmul.f32 %v5079, %v5335
    %v5400 = vmul.f32 %v5080, %v5336
    %v5401 = vmul.f32 %v5081, %v5337
    %v5402 = vmul.f32 %v5082, %v5338
    %v5403 = vmul.f32 %v5083, %v5339
    %v5404 = vmul.f32 %v5084, %v5340
    %v5405 = vmul.f32 %v5085, %v5341
    %v5406 = vmul.f32 %v5086, %v5342
    %v5407 = vmul.f32 %v5087, %v5343
    %v5408 = vmul.f32 %v5088, %v5344
    %v5409 = vmul.f32 %v5089, %v5345
    %v5410 = vmul.f32 %v5090, %v5346
    %v5411 = vmul.f32 %v5091, %v5347
    %v5412 = vmul.f32 %v5092, %v5348
    %v5413 = vmul.f32 %v5093, %v5349
    %v5414 = vmul.f32 %v5094, %v5350
    %v5415 = vmul.f32 %v5095, %v5351
    %v5416 = vmul.f32 %v5096, %v5352
    %v5417 = vmul.f32 %v5097, %v5353
    %v5418 = vmul.f32 %v5098, %v5354
    %v5419 = vmul.f32 %v5099, %v5355
    %v5420 = vmul.f32 %v5100, %v5356
    %v5421 = vmul.f32 %v5101, %v5357
    %v5422 = vmul.f32 %v5102, %v5358
    %v5423 = vmul.f32 %v5103, %v5359
    %v5424 = vmul.f32 %v5104, %v5360
    %v5425 = vmul.f32 %v5105, %v5361
    %v5426 = vmul.f32 %v5106, %v5362
    %v5427 = vmul.f32 %v5107, %v5363
    %v5428 = vmul.f32 %v5108, %v5364
    %v5429 = vmul.f32 %v5109, %v5365
    %v5430 = vmul.f32 %v5110, %v5366
    %v5431 = vmul.f32 %v5111, %v5367
    %v5432 = vmul.f32 %v5112, %v5368
    %v5433 = vmul.f32 %v5113, %v5369
    %v5434 = vmul.f32 %v5114, %v5370
    %v5435 = vmul.f32 %v5115, %v5371
    %v5436 = vmul.f32 %v5116, %v5372
    %v5437 = vmul.f32 %v5117, %v5373
    %v5438 = vmul.f32 %v5118, %v5374
    %v5439 = vmul.f32 %v5119, %v5375
    %v5440 = vmul.f32 %v5120, %v5376
    %v5441 = vmul.f32 %v5121, %v5377
    %v5442 = vmul.f32 %v5122, %v5378
    %v5443 = vmul.f32 %v5123, %v5379
    %v5444 = vmul.f32 %v5124, %v5380
    %v5445 = vmul.f32 %v5125, %v5381
    %v5446 = vmul.f32 %v5126, %v5382
    %v5447 = vmul.f32 %v5127, %v5383
    %v5448 = vmul.f32 %v5128, %v5384
    %v5449 = vmul.f32 %v5129, %v5385
    %v5450 = vmul.f32 %v5130, %v5386
    %v5451 = vmul.f32 %v5131, %v5387
    %v5452 = vmul.f32 %v5132, %v5388
    %v5453 = vmul.f32 %v5133, %v5389
    %v5454 = vmul.f32 %v5134, %v5390
    %v5455 = vmul.f32 %v5135, %v5391
    %v5456 = vmul.f32 %v5136, %v5392
    %v5457 = vpack.c.bf16 %v5395, %v5393
    %v5458 = vpack.c.bf16 %v5396, %v5394
    %v5459 = vpack.c.bf16 %v5399, %v5397
    %v5460 = vpack.c.bf16 %v5400, %v5398
    %v5461 = vpack.c.bf16 %v5403, %v5401
    %v5462 = vpack.c.bf16 %v5404, %v5402
    %v5463 = vpack.c.bf16 %v5407, %v5405
    %v5464 = vpack.c.bf16 %v5408, %v5406
    %v5465 = vpack.c.bf16 %v5411, %v5409
    %v5466 = vpack.c.bf16 %v5412, %v5410
    %v5467 = vpack.c.bf16 %v5415, %v5413
    %v5468 = vpack.c.bf16 %v5416, %v5414
    %v5469 = vpack.c.bf16 %v5419, %v5417
    %v5470 = vpack.c.bf16 %v5420, %v5418
    %v5471 = vpack.c.bf16 %v5423, %v5421
    %v5472 = vpack.c.bf16 %v5424, %v5422
    %v5473 = vpack.c.bf16 %v5427, %v5425
    %v5474 = vpack.c.bf16 %v5428, %v5426
    %v5475 = vpack.c.bf16 %v5431, %v5429
    %v5476 = vpack.c.bf16 %v5432, %v5430
    %v5477 = vpack.c.bf16 %v5435, %v5433
    %v5478 = vpack.c.bf16 %v5436, %v5434
    %v5479 = vpack.c.bf16 %v5439, %v5437
    %v5480 = vpack.c.bf16 %v5440, %v5438
    %v5481 = vpack.c.bf16 %v5443, %v5441
    %v5482 = vpack.c.bf16 %v5444, %v5442
    %v5483 = vpack.c.bf16 %v5447, %v5445
    %v5484 = vpack.c.bf16 %v5448, %v5446
    %v5485 = vpack.c.bf16 %v5451, %v5449
    %v5486 = vpack.c.bf16 %v5452, %v5450
    %v5487 = vpack.c.bf16 %v5455, %v5453
    %v5488 = vpack.c.bf16 %v5456, %v5454
    %s5489 = scalar_lea.vmem [#allocation5], 256
    %v5490 = vld [vmem:[%s5489] sm:$0xff]
    %v5491 = vld [vmem:[%s5489 + $0x8] sm:$0xff]
    %v5492 = vld [vmem:[%s5489 + $0x10] sm:$0xff]
    %v5493 = vld [vmem:[%s5489 + $0x18] sm:$0xff]
    %v5494 = vld [vmem:[%s5489 + $0x20] sm:$0xff]
    %v5495 = vld [vmem:[%s5489 + $0x28] sm:$0xff]
    %v5496 = vld [vmem:[%s5489 + $0x30] sm:$0xff]
    %v5497 = vld [vmem:[%s5489 + $0x38] sm:$0xff]
    %v5498 = vld [vmem:[%s5489 + $0x40] sm:$0xff]
    %v5499 = vld [vmem:[%s5489 + $0x48] sm:$0xff]
    %v5500 = vld [vmem:[%s5489 + $0x50] sm:$0xff]
    %v5501 = vld [vmem:[%s5489 + $0x58] sm:$0xff]
    %v5502 = vld [vmem:[%s5489 + $0x60] sm:$0xff]
    %v5503 = vld [vmem:[%s5489 + $0x68] sm:$0xff]
    %v5504 = vld [vmem:[%s5489 + $0x70] sm:$0xff]
    %v5505 = vld [vmem:[%s5489 + $0x78] sm:$0xff]
    %v5506 = vld [vmem:[%s5489 + $0x80] sm:$0xff]
    %v5507 = vld [vmem:[%s5489 + $0x88] sm:$0xff]
    %v5508 = vld [vmem:[%s5489 + $0x90] sm:$0xff]
    %v5509 = vld [vmem:[%s5489 + $0x98] sm:$0xff]
    %v5510 = vld [vmem:[%s5489 + $0xa0] sm:$0xff]
    %v5511 = vld [vmem:[%s5489 + $0xa8] sm:$0xff]
    %v5512 = vld [vmem:[%s5489 + $0xb0] sm:$0xff]
    %v5513 = vld [vmem:[%s5489 + $0xb8] sm:$0xff]
    %v5514 = vld [vmem:[%s5489 + $0xc0] sm:$0xff]
    %v5515 = vld [vmem:[%s5489 + $0xc8] sm:$0xff]
    %v5516 = vld [vmem:[%s5489 + $0xd0] sm:$0xff]
    %v5517 = vld [vmem:[%s5489 + $0xd8] sm:$0xff]
    %v5518 = vld [vmem:[%s5489 + $0xe0] sm:$0xff]
    %v5519 = vld [vmem:[%s5489 + $0xe8] sm:$0xff]
    %v5520 = vld [vmem:[%s5489 + $0xf0] sm:$0xff]
    %v5521 = vld [vmem:[%s5489 + $0xf8] sm:$0xff]
    %s5522 = scalar_lea.vmem %s8, 1
    %v5523 = vld [vmem:[%s5522] ss:$4 sm:$0x3]
    %v5525 = vlaneseq
    %v5526 = vshrl.u32 %v5525, 7
    %v5527 = vsub.s32 0, %v5526
    %v5528 = vrot.slane %v5523, %v5527
    %v5529 = vlaneseq
    %v5530 = vshrl.u32 %v5529, 7
    %v5531 = vsub.s32 1, %v5530
    %v5532 = vrot.slane %v5523, %v5531
    %v5567 = vunpack.c.l.b16 %v5490
    %v5568 = vunpack.c.h.b16 %v5490
    %v5569 = vunpack.c.l.b16 %v5491
    %v5570 = vunpack.c.h.b16 %v5491
    %v5571 = vunpack.c.l.b16 %v5492
    %v5572 = vunpack.c.h.b16 %v5492
    %v5573 = vunpack.c.l.b16 %v5493
    %v5574 = vunpack.c.h.b16 %v5493
    %v5575 = vunpack.c.l.b16 %v5494
    %v5576 = vunpack.c.h.b16 %v5494
    %v5577 = vunpack.c.l.b16 %v5495
    %v5578 = vunpack.c.h.b16 %v5495
    %v5579 = vunpack.c.l.b16 %v5496
    %v5580 = vunpack.c.h.b16 %v5496
    %v5581 = vunpack.c.l.b16 %v5497
    %v5582 = vunpack.c.h.b16 %v5497
    %v5583 = vunpack.c.l.b16 %v5498
    %v5584 = vunpack.c.h.b16 %v5498
    %v5585 = vunpack.c.l.b16 %v5499
    %v5586 = vunpack.c.h.b16 %v5499
    %v5587 = vunpack.c.l.b16 %v5500
    %v5588 = vunpack.c.h.b16 %v5500
    %v5589 = vunpack.c.l.b16 %v5501
    %v5590 = vunpack.c.h.b16 %v5501
    %v5591 = vunpack.c.l.b16 %v5502
    %v5592 = vunpack.c.h.b16 %v5502
    %v5593 = vunpack.c.l.b16 %v5503
    %v5594 = vunpack.c.h.b16 %v5503
    %v5595 = vunpack.c.l.b16 %v5504
    %v5596 = vunpack.c.h.b16 %v5504
    %v5597 = vunpack.c.l.b16 %v5505
    %v5598 = vunpack.c.h.b16 %v5505
    %v5599 = vunpack.c.l.b16 %v5506
    %v5600 = vunpack.c.h.b16 %v5506
    %v5601 = vunpack.c.l.b16 %v5507
    %v5602 = vunpack.c.h.b16 %v5507
    %v5603 = vunpack.c.l.b16 %v5508
    %v5604 = vunpack.c.h.b16 %v5508
    %v5605 = vunpack.c.l.b16 %v5509
    %v5606 = vunpack.c.h.b16 %v5509
    %v5607 = vunpack.c.l.b16 %v5510
    %v5608 = vunpack.c.h.b16 %v5510
    %v5609 = vunpack.c.l.b16 %v5511
    %v5610 = vunpack.c.h.b16 %v5511
    %v5611 = vunpack.c.l.b16 %v5512
    %v5612 = vunpack.c.h.b16 %v5512
    %v5613 = vunpack.c.l.b16 %v5513
    %v5614 = vunpack.c.h.b16 %v5513
    %v5615 = vunpack.c.l.b16 %v5514
    %v5616 = vunpack.c.h.b16 %v5514
    %v5617 = vunpack.c.l.b16 %v5515
    %v5618 = vunpack.c.h.b16 %v5515
    %v5619 = vunpack.c.l.b16 %v5516
    %v5620 = vunpack.c.h.b16 %v5516
    %v5621 = vunpack.c.l.b16 %v5517
    %v5622 = vunpack.c.h.b16 %v5517
    %v5623 = vunpack.c.l.b16 %v5518
    %v5624 = vunpack.c.h.b16 %v5518
    %v5625 = vunpack.c.l.b16 %v5519
    %v5626 = vunpack.c.h.b16 %v5519
    %v5627 = vunpack.c.l.b16 %v5520
    %v5628 = vunpack.c.h.b16 %v5520
    %v5629 = vunpack.c.l.b16 %v5521
    %v5630 = vunpack.c.h.b16 %v5521
    %v5631 = vpack.c.b16 %v5569, %v5567
    %v5632 = vpack.c.b16 %v5570, %v5568
    %v5633 = vpack.c.b16 %v5573, %v5571
    %v5634 = vpack.c.b16 %v5574, %v5572
    %v5635 = vpack.c.b16 %v5577, %v5575
    %v5636 = vpack.c.b16 %v5578, %v5576
    %v5637 = vpack.c.b16 %v5581, %v5579
    %v5638 = vpack.c.b16 %v5582, %v5580
    %v5639 = vpack.c.b16 %v5585, %v5583
    %v5640 = vpack.c.b16 %v5586, %v5584
    %v5641 = vpack.c.b16 %v5589, %v5587
    %v5642 = vpack.c.b16 %v5590, %v5588
    %v5643 = vpack.c.b16 %v5593, %v5591
    %v5644 = vpack.c.b16 %v5594, %v5592
    %v5645 = vpack.c.b16 %v5597, %v5595
    %v5646 = vpack.c.b16 %v5598, %v5596
    %v5647 = vpack.c.b16 %v5601, %v5599
    %v5648 = vpack.c.b16 %v5602, %v5600
    %v5649 = vpack.c.b16 %v5605, %v5603
    %v5650 = vpack.c.b16 %v5606, %v5604
    %v5651 = vpack.c.b16 %v5609, %v5607
    %v5652 = vpack.c.b16 %v5610, %v5608
    %v5653 = vpack.c.b16 %v5613, %v5611
    %v5654 = vpack.c.b16 %v5614, %v5612
    %v5655 = vpack.c.b16 %v5617, %v5615
    %v5656 = vpack.c.b16 %v5618, %v5616
    %v5657 = vpack.c.b16 %v5621, %v5619
    %v5658 = vpack.c.b16 %v5622, %v5620
    %v5659 = vpack.c.b16 %v5625, %v5623
    %v5660 = vpack.c.b16 %v5626, %v5624
    %v5661 = vpack.c.b16 %v5629, %v5627
    %v5662 = vpack.c.b16 %v5630, %v5628
    %5695 = vmatprep.subr.bf16.mxu0 %v5646
    %5696 = vmatpush1.bf16.msra.mxu0 %v5645
    %5697 = vmatprep.subr.bf16.mxu0 %v5644
    %5698 = vmatpush1.bf16.msra.mxu0 %v5643
    %5699 = vmatprep.subr.bf16.mxu0 %v5642
    %5700 = vmatpush1.bf16.msra.mxu0 %v5641
    %5701 = vmatprep.subr.bf16.mxu0 %v5640
    %5702 = vmatpush1.bf16.msra.mxu0 %v5639
    %5703 = vmatprep.subr.bf16.mxu0 %v5638
    %5704 = vmatpush1.bf16.msra.mxu0 %v5637
    %5705 = vmatprep.subr.bf16.mxu0 %v5636
    %5706 = vmatpush1.bf16.msra.mxu0 %v5635
    %5707 = vmatprep.subr.bf16.mxu0 %v5634
    %5708 = vmatpush1.bf16.msra.mxu0 %v5633
    %5709 = vmatprep.subr.bf16.mxu0 %v5632
    %5710 = vmatpush1.bf16.msra.mxu0 %v5631
    %5711 = vmatprep.subr.bf16.mxu0 %v5662
    %5712 = vmatpush2.bf16.msra.mxu0 %v5661
    %5713 = vmatprep.subr.bf16.mxu0 %v5660
    %5714 = vmatpush2.bf16.msra.mxu0 %v5659
    %5715 = vmatprep.subr.bf16.mxu0 %v5658
    %5716 = vmatpush2.bf16.msra.mxu0 %v5657
    %5717 = vmatprep.subr.bf16.mxu0 %v5656
    %5718 = vmatpush2.bf16.msra.mxu0 %v5655
    %5719 = vmatprep.subr.bf16.mxu0 %v5654
    %5720 = vmatpush2.bf16.msra.mxu0 %v5653
    %5721 = vmatprep.subr.bf16.mxu0 %v5652
    %5722 = vmatpush2.bf16.msra.mxu0 %v5651
    %5723 = vmatprep.subr.bf16.mxu0 %v5650
    %5724 = vmatpush2.bf16.msra.mxu0 %v5649
    %5725 = vmatprep.subr.bf16.mxu0 %v5648
    %5726 = vmatpush2.bf16.msra.mxu0 %v5647
    %5727 = vmatprep.mubr.bf16.mxu0 %v5458
    %5728 = vmatmul.mubr.bf16.gmra.mxu0 %v5457
    %v5729 = vpop.f32.mrf.mxu0
    %v5730 = vadd.f32 %v5528, %v5729
    %v5731 = vpop.f32.mrf.mxu0
    %v5732 = vadd.f32 %v5532, %v5731
    %v5733 = vpop.f32.mrf.mxu0
    %v5734 = vadd.f32 %v5528, %v5733
    %v5735 = vpop.f32.mrf.mxu0
    %v5736 = vadd.f32 %v5532, %v5735
    %5737 = vmatprep.mubr.bf16.mxu0 %v5460
    %5738 = vmatmul.mubr.bf16.gmra.mxu0 %v5459
    %v5739 = vpop.f32.mrf.mxu0
    %v5740 = vadd.f32 %v5528, %v5739
    %v5741 = vpop.f32.mrf.mxu0
    %v5742 = vadd.f32 %v5532, %v5741
    %v5743 = vpop.f32.mrf.mxu0
    %v5744 = vadd.f32 %v5528, %v5743
    %v5745 = vpop.f32.mrf.mxu0
    %v5746 = vadd.f32 %v5532, %v5745
    %5747 = vmatprep.mubr.bf16.mxu0 %v5462
    %5748 = vmatmul.mubr.bf16.gmra.mxu0 %v5461
    %v5749 = vpop.f32.mrf.mxu0
    %v5750 = vadd.f32 %v5528, %v5749
    %v5751 = vpop.f32.mrf.mxu0
    %v5752 = vadd.f32 %v5532, %v5751
    %v5753 = vpop.f32.mrf.mxu0
    %v5754 = vadd.f32 %v5528, %v5753
    %v5755 = vpop.f32.mrf.mxu0
    %v5756 = vadd.f32 %v5532, %v5755
    %5757 = vmatprep.mubr.bf16.mxu0 %v5464
    %5758 = vmatmul.mubr.bf16.gmra.mxu0 %v5463
    %v5759 = vpop.f32.mrf.mxu0
    %v5760 = vadd.f32 %v5528, %v5759
    %v5761 = vpop.f32.mrf.mxu0
    %v5762 = vadd.f32 %v5532, %v5761
    %v5763 = vpop.f32.mrf.mxu0
    %v5764 = vadd.f32 %v5528, %v5763
    %v5765 = vpop.f32.mrf.mxu0
    %v5766 = vadd.f32 %v5532, %v5765
    %5767 = vmatprep.mubr.bf16.mxu0 %v5466
    %5768 = vmatmul.mubr.bf16.gmra.mxu0 %v5465
    %v5769 = vpop.f32.mrf.mxu0
    %v5770 = vadd.f32 %v5528, %v5769
    %v5771 = vpop.f32.mrf.mxu0
    %v5772 = vadd.f32 %v5532, %v5771
    %v5773 = vpop.f32.mrf.mxu0
    %v5774 = vadd.f32 %v5528, %v5773
    %v5775 = vpop.f32.mrf.mxu0
    %v5776 = vadd.f32 %v5532, %v5775
    %5777 = vmatprep.mubr.bf16.mxu0 %v5468
    %5778 = vmatmul.mubr.bf16.gmra.mxu0 %v5467
    %v5779 = vpop.f32.mrf.mxu0
    %v5780 = vadd.f32 %v5528, %v5779
    %v5781 = vpop.f32.mrf.mxu0
    %v5782 = vadd.f32 %v5532, %v5781
    %v5783 = vpop.f32.mrf.mxu0
    %v5784 = vadd.f32 %v5528, %v5783
    %v5785 = vpop.f32.mrf.mxu0
    %v5786 = vadd.f32 %v5532, %v5785
    %5787 = vmatprep.mubr.bf16.mxu0 %v5470
    %5788 = vmatmul.mubr.bf16.gmra.mxu0 %v5469
    %v5789 = vpop.f32.mrf.mxu0
    %v5790 = vadd.f32 %v5528, %v5789
    %v5791 = vpop.f32.mrf.mxu0
    %v5792 = vadd.f32 %v5532, %v5791
    %v5793 = vpop.f32.mrf.mxu0
    %v5794 = vadd.f32 %v5528, %v5793
    %v5795 = vpop.f32.mrf.mxu0
    %v5796 = vadd.f32 %v5532, %v5795
    %5797 = vmatprep.mubr.bf16.mxu0 %v5472
    %5798 = vmatmul.mubr.bf16.gmra.mxu0 %v5471
    %v5799 = vpop.f32.mrf.mxu0
    %v5800 = vadd.f32 %v5528, %v5799
    %v5801 = vpop.f32.mrf.mxu0
    %v5802 = vadd.f32 %v5532, %v5801
    %v5803 = vpop.f32.mrf.mxu0
    %v5804 = vadd.f32 %v5528, %v5803
    %v5805 = vpop.f32.mrf.mxu0
    %v5806 = vadd.f32 %v5532, %v5805
    %5807 = vmatprep.mubr.bf16.mxu0 %v5474
    %5808 = vmatmul.mubr.bf16.gmra.mxu0 %v5473
    %v5809 = vpop.f32.mrf.mxu0
    %v5810 = vadd.f32 %v5528, %v5809
    %v5811 = vpop.f32.mrf.mxu0
    %v5812 = vadd.f32 %v5532, %v5811
    %v5813 = vpop.f32.mrf.mxu0
    %v5814 = vadd.f32 %v5528, %v5813
    %v5815 = vpop.f32.mrf.mxu0
    %v5816 = vadd.f32 %v5532, %v5815
    %5817 = vmatprep.mubr.bf16.mxu0 %v5476
    %5818 = vmatmul.mubr.bf16.gmra.mxu0 %v5475
    %v5819 = vpop.f32.mrf.mxu0
    %v5820 = vadd.f32 %v5528, %v5819
    %v5821 = vpop.f32.mrf.mxu0
    %v5822 = vadd.f32 %v5532, %v5821
    %v5823 = vpop.f32.mrf.mxu0
    %v5824 = vadd.f32 %v5528, %v5823
    %v5825 = vpop.f32.mrf.mxu0
    %v5826 = vadd.f32 %v5532, %v5825
    %5827 = vmatprep.mubr.bf16.mxu0 %v5478
    %5828 = vmatmul.mubr.bf16.gmra.mxu0 %v5477
    %v5829 = vpop.f32.mrf.mxu0
    %v5830 = vadd.f32 %v5528, %v5829
    %v5831 = vpop.f32.mrf.mxu0
    %v5832 = vadd.f32 %v5532, %v5831
    %v5833 = vpop.f32.mrf.mxu0
    %v5834 = vadd.f32 %v5528, %v5833
    %v5835 = vpop.f32.mrf.mxu0
    %v5836 = vadd.f32 %v5532, %v5835
    %5837 = vmatprep.mubr.bf16.mxu0 %v5480
    %5838 = vmatmul.mubr.bf16.gmra.mxu0 %v5479
    %v5839 = vpop.f32.mrf.mxu0
    %v5840 = vadd.f32 %v5528, %v5839
    %v5841 = vpop.f32.mrf.mxu0
    %v5842 = vadd.f32 %v5532, %v5841
    %v5843 = vpop.f32.mrf.mxu0
    %v5844 = vadd.f32 %v5528, %v5843
    %v5845 = vpop.f32.mrf.mxu0
    %v5846 = vadd.f32 %v5532, %v5845
    %5847 = vmatprep.mubr.bf16.mxu0 %v5482
    %5848 = vmatmul.mubr.bf16.gmra.mxu0 %v5481
    %v5849 = vpop.f32.mrf.mxu0
    %v5850 = vadd.f32 %v5528, %v5849
    %v5851 = vpop.f32.mrf.mxu0
    %v5852 = vadd.f32 %v5532, %v5851
    %v5853 = vpop.f32.mrf.mxu0
    %v5854 = vadd.f32 %v5528, %v5853
    %v5855 = vpop.f32.mrf.mxu0
    %v5856 = vadd.f32 %v5532, %v5855
    %5857 = vmatprep.mubr.bf16.mxu0 %v5484
    %5858 = vmatmul.mubr.bf16.gmra.mxu0 %v5483
    %v5859 = vpop.f32.mrf.mxu0
    %v5860 = vadd.f32 %v5528, %v5859
    %v5861 = vpop.f32.mrf.mxu0
    %v5862 = vadd.f32 %v5532, %v5861
    %v5863 = vpop.f32.mrf.mxu0
    %v5864 = vadd.f32 %v5528, %v5863
    %v5865 = vpop.f32.mrf.mxu0
    %v5866 = vadd.f32 %v5532, %v5865
    %5867 = vmatprep.mubr.bf16.mxu0 %v5486
    %5868 = vmatmul.mubr.bf16.gmra.mxu0 %v5485
    %v5869 = vpop.f32.mrf.mxu0
    %v5870 = vadd.f32 %v5528, %v5869
    %v5871 = vpop.f32.mrf.mxu0
    %v5872 = vadd.f32 %v5532, %v5871
    %v5873 = vpop.f32.mrf.mxu0
    %v5874 = vadd.f32 %v5528, %v5873
    %v5875 = vpop.f32.mrf.mxu0
    %v5876 = vadd.f32 %v5532, %v5875
    %5877 = vmatprep.mubr.bf16.mxu0 %v5488
    %5878 = vmatmul.mubr.bf16.gmra.mxu0 %v5487
    %v5879 = vpop.f32.mrf.mxu0
    %v5880 = vadd.f32 %v5528, %v5879
    %v5881 = vpop.f32.mrf.mxu0
    %v5882 = vadd.f32 %v5532, %v5881
    %v5883 = vpop.f32.mrf.mxu0
    %v5884 = vadd.f32 %v5528, %v5883
    %v5885 = vpop.f32.mrf.mxu0
    %v5886 = vadd.f32 %v5532, %v5885
    %5887 = vdwg.mxu0
    %v5888 = vmul.f32 %v5730, 0.5
    %v5889 = vmul.f32 %v5732, 0.5
    %v5890 = vmul.f32 %v5734, 0.5
    %v5891 = vmul.f32 %v5736, 0.5
    %v5892 = vmul.f32 %v5740, 0.5
    %v5893 = vmul.f32 %v5742, 0.5
    %v5894 = vmul.f32 %v5744, 0.5
    %v5895 = vmul.f32 %v5746, 0.5
    %v5896 = vmul.f32 %v5750, 0.5
    %v5897 = vmul.f32 %v5752, 0.5
    %v5898 = vmul.f32 %v5754, 0.5
    %v5899 = vmul.f32 %v5756, 0.5
    %v5900 = vmul.f32 %v5760, 0.5
    %v5901 = vmul.f32 %v5762, 0.5
    %v5902 = vmul.f32 %v5764, 0.5
    %v5903 = vmul.f32 %v5766, 0.5
    %v5904 = vmul.f32 %v5770, 0.5
    %v5905 = vmul.f32 %v5772, 0.5
    %v5906 = vmul.f32 %v5774, 0.5
    %v5907 = vmul.f32 %v5776, 0.5
    %v5908 = vmul.f32 %v5780, 0.5
    %v5909 = vmul.f32 %v5782, 0.5
    %v5910 = vmul.f32 %v5784, 0.5
    %v5911 = vmul.f32 %v5786, 0.5
    %v5912 = vmul.f32 %v5790, 0.5
    %v5913 = vmul.f32 %v5792, 0.5
    %v5914 = vmul.f32 %v5794, 0.5
    %v5915 = vmul.f32 %v5796, 0.5
    %v5916 = vmul.f32 %v5800, 0.5
    %v5917 = vmul.f32 %v5802, 0.5
    %v5918 = vmul.f32 %v5804, 0.5
    %v5919 = vmul.f32 %v5806, 0.5
    %v5920 = vmul.f32 %v5810, 0.5
    %v5921 = vmul.f32 %v5812, 0.5
    %v5922 = vmul.f32 %v5814, 0.5
    %v5923 = vmul.f32 %v5816, 0.5
    %v5924 = vmul.f32 %v5820, 0.5
    %v5925 = vmul.f32 %v5822, 0.5
    %v5926 = vmul.f32 %v5824, 0.5
    %v5927 = vmul.f32 %v5826, 0.5
    %v5928 = vmul.f32 %v5830, 0.5
    %v5929 = vmul.f32 %v5832, 0.5
    %v5930 = vmul.f32 %v5834, 0.5
    %v5931 = vmul.f32 %v5836, 0.5
    %v5932 = vmul.f32 %v5840, 0.5
    %v5933 = vmul.f32 %v5842, 0.5
    %v5934 = vmul.f32 %v5844, 0.5
    %v5935 = vmul.f32 %v5846, 0.5
    %v5936 = vmul.f32 %v5850, 0.5
    %v5937 = vmul.f32 %v5852, 0.5
    %v5938 = vmul.f32 %v5854, 0.5
    %v5939 = vmul.f32 %v5856, 0.5
    %v5940 = vmul.f32 %v5860, 0.5
    %v5941 = vmul.f32 %v5862, 0.5
    %v5942 = vmul.f32 %v5864, 0.5
    %v5943 = vmul.f32 %v5866, 0.5
    %v5944 = vmul.f32 %v5870, 0.5
    %v5945 = vmul.f32 %v5872, 0.5
    %v5946 = vmul.f32 %v5874, 0.5
    %v5947 = vmul.f32 %v5876, 0.5
    %v5948 = vmul.f32 %v5880, 0.5
    %v5949 = vmul.f32 %v5882, 0.5
    %v5950 = vmul.f32 %v5884, 0.5
    %v5951 = vmul.f32 %v5886, 0.5
    %v5952 = vtanh.pop %v5888
    %v5953 = vtanh.pop %v5889
    %v5954 = vtanh.pop %v5890
    %v5955 = vtanh.pop %v5891
    %v5956 = vtanh.pop %v5892
    %v5957 = vtanh.pop %v5893
    %v5958 = vtanh.pop %v5894
    %v5959 = vtanh.pop %v5895
    %v5960 = vtanh.pop %v5896
    %v5961 = vtanh.pop %v5897
    %v5962 = vtanh.pop %v5898
    %v5963 = vtanh.pop %v5899
    %v5964 = vtanh.pop %v5900
    %v5965 = vtanh.pop %v5901
    %v5966 = vtanh.pop %v5902
    %v5967 = vtanh.pop %v5903
    %v5968 = vtanh.pop %v5904
    %v5969 = vtanh.pop %v5905
    %v5970 = vtanh.pop %v5906
    %v5971 = vtanh.pop %v5907
    %v5972 = vtanh.pop %v5908
    %v5973 = vtanh.pop %v5909
    %v5974 = vtanh.pop %v5910
    %v5975 = vtanh.pop %v5911
    %v5976 = vtanh.pop %v5912
    %v5977 = vtanh.pop %v5913
    %v5978 = vtanh.pop %v5914
    %v5979 = vtanh.pop %v5915
    %v5980 = vtanh.pop %v5916
    %v5981 = vtanh.pop %v5917
    %v5982 = vtanh.pop %v5918
    %v5983 = vtanh.pop %v5919
    %v5984 = vtanh.pop %v5920
    %v5985 = vtanh.pop %v5921
    %v5986 = vtanh.pop %v5922
    %v5987 = vtanh.pop %v5923
    %v5988 = vtanh.pop %v5924
    %v5989 = vtanh.pop %v5925
    %v5990 = vtanh.pop %v5926
    %v5991 = vtanh.pop %v5927
    %v5992 = vtanh.pop %v5928
    %v5993 = vtanh.pop %v5929
    %v5994 = vtanh.pop %v5930
    %v5995 = vtanh.pop %v5931
    %v5996 = vtanh.pop %v5932
    %v5997 = vtanh.pop %v5933
    %v5998 = vtanh.pop %v5934
    %v5999 = vtanh.pop %v5935
    %v6000 = vtanh.pop %v5936
    %v6001 = vtanh.pop %v5937
    %v6002 = vtanh.pop %v5938
    %v6003 = vtanh.pop %v5939
    %v6004 = vtanh.pop %v5940
    %v6005 = vtanh.pop %v5941
    %v6006 = vtanh.pop %v5942
    %v6007 = vtanh.pop %v5943
    %v6008 = vtanh.pop %v5944
    %v6009 = vtanh.pop %v5945
    %v6010 = vtanh.pop %v5946
    %v6011 = vtanh.pop %v5947
    %v6012 = vtanh.pop %v5948
    %v6013 = vtanh.pop %v5949
    %v6014 = vtanh.pop %v5950
    %v6015 = vtanh.pop %v5951
    %v6016 = vmul.f32 %v5952, 0.5
    %v6017 = vmul.f32 %v5953, 0.5
    %v6018 = vmul.f32 %v5954, 0.5
    %v6019 = vmul.f32 %v5955, 0.5
    %v6020 = vmul.f32 %v5956, 0.5
    %v6021 = vmul.f32 %v5957, 0.5
    %v6022 = vmul.f32 %v5958, 0.5
    %v6023 = vmul.f32 %v5959, 0.5
    %v6024 = vmul.f32 %v5960, 0.5
    %v6025 = vmul.f32 %v5961, 0.5
    %v6026 = vmul.f32 %v5962, 0.5
    %v6027 = vmul.f32 %v5963, 0.5
    %v6028 = vmul.f32 %v5964, 0.5
    %v6029 = vmul.f32 %v5965, 0.5
    %v6030 = vmul.f32 %v5966, 0.5
    %v6031 = vmul.f32 %v5967, 0.5
    %v6032 = vmul.f32 %v5968, 0.5
    %v6033 = vmul.f32 %v5969, 0.5
    %v6034 = vmul.f32 %v5970, 0.5
    %v6035 = vmul.f32 %v5971, 0.5
    %v6036 = vmul.f32 %v5972, 0.5
    %v6037 = vmul.f32 %v5973, 0.5
    %v6038 = vmul.f32 %v5974, 0.5
    %v6039 = vmul.f32 %v5975, 0.5
    %v6040 = vmul.f32 %v5976, 0.5
    %v6041 = vmul.f32 %v5977, 0.5
    %v6042 = vmul.f32 %v5978, 0.5
    %v6043 = vmul.f32 %v5979, 0.5
    %v6044 = vmul.f32 %v5980, 0.5
    %v6045 = vmul.f32 %v5981, 0.5
    %v6046 = vmul.f32 %v5982, 0.5
    %v6047 = vmul.f32 %v5983, 0.5
    %v6048 = vmul.f32 %v5984, 0.5
    %v6049 = vmul.f32 %v5985, 0.5
    %v6050 = vmul.f32 %v5986, 0.5
    %v6051 = vmul.f32 %v5987, 0.5
    %v6052 = vmul.f32 %v5988, 0.5
    %v6053 = vmul.f32 %v5989, 0.5
    %v6054 = vmul.f32 %v5990, 0.5
    %v6055 = vmul.f32 %v5991, 0.5
    %v6056 = vmul.f32 %v5992, 0.5
    %v6057 = vmul.f32 %v5993, 0.5
    %v6058 = vmul.f32 %v5994, 0.5
    %v6059 = vmul.f32 %v5995, 0.5
    %v6060 = vmul.f32 %v5996, 0.5
    %v6061 = vmul.f32 %v5997, 0.5
    %v6062 = vmul.f32 %v5998, 0.5
    %v6063 = vmul.f32 %v5999, 0.5
    %v6064 = vmul.f32 %v6000, 0.5
    %v6065 = vmul.f32 %v6001, 0.5
    %v6066 = vmul.f32 %v6002, 0.5
    %v6067 = vmul.f32 %v6003, 0.5
    %v6068 = vmul.f32 %v6004, 0.5
    %v6069 = vmul.f32 %v6005, 0.5
    %v6070 = vmul.f32 %v6006, 0.5
    %v6071 = vmul.f32 %v6007, 0.5
    %v6072 = vmul.f32 %v6008, 0.5
    %v6073 = vmul.f32 %v6009, 0.5
    %v6074 = vmul.f32 %v6010, 0.5
    %v6075 = vmul.f32 %v6011, 0.5
    %v6076 = vmul.f32 %v6012, 0.5
    %v6077 = vmul.f32 %v6013, 0.5
    %v6078 = vmul.f32 %v6014, 0.5
    %v6079 = vmul.f32 %v6015, 0.5
    %v6080 = vadd.f32 %v6016, 0.5
    %v6081 = vadd.f32 %v6017, 0.5
    %v6082 = vadd.f32 %v6018, 0.5
    %v6083 = vadd.f32 %v6019, 0.5
    %v6084 = vadd.f32 %v6020, 0.5
    %v6085 = vadd.f32 %v6021, 0.5
    %v6086 = vadd.f32 %v6022, 0.5
    %v6087 = vadd.f32 %v6023, 0.5
    %v6088 = vadd.f32 %v6024, 0.5
    %v6089 = vadd.f32 %v6025, 0.5
    %v6090 = vadd.f32 %v6026, 0.5
    %v6091 = vadd.f32 %v6027, 0.5
    %v6092 = vadd.f32 %v6028, 0.5
    %v6093 = vadd.f32 %v6029, 0.5
    %v6094 = vadd.f32 %v6030, 0.5
    %v6095 = vadd.f32 %v6031, 0.5
    %v6096 = vadd.f32 %v6032, 0.5
    %v6097 = vadd.f32 %v6033, 0.5
    %v6098 = vadd.f32 %v6034, 0.5
    %v6099 = vadd.f32 %v6035, 0.5
    %v6100 = vadd.f32 %v6036, 0.5
    %v6101 = vadd.f32 %v6037, 0.5
    %v6102 = vadd.f32 %v6038, 0.5
    %v6103 = vadd.f32 %v6039, 0.5
    %v6104 = vadd.f32 %v6040, 0.5
    %v6105 = vadd.f32 %v6041, 0.5
    %v6106 = vadd.f32 %v6042, 0.5
    %v6107 = vadd.f32 %v6043, 0.5
    %v6108 = vadd.f32 %v6044, 0.5
    %v6109 = vadd.f32 %v6045, 0.5
    %v6110 = vadd.f32 %v6046, 0.5
    %v6111 = vadd.f32 %v6047, 0.5
    %v6112 = vadd.f32 %v6048, 0.5
    %v6113 = vadd.f32 %v6049, 0.5
    %v6114 = vadd.f32 %v6050, 0.5
    %v6115 = vadd.f32 %v6051, 0.5
    %v6116 = vadd.f32 %v6052, 0.5
    %v6117 = vadd.f32 %v6053, 0.5
    %v6118 = vadd.f32 %v6054, 0.5
    %v6119 = vadd.f32 %v6055, 0.5
    %v6120 = vadd.f32 %v6056, 0.5
    %v6121 = vadd.f32 %v6057, 0.5
    %v6122 = vadd.f32 %v6058, 0.5
    %v6123 = vadd.f32 %v6059, 0.5
    %v6124 = vadd.f32 %v6060, 0.5
    %v6125 = vadd.f32 %v6061, 0.5
    %v6126 = vadd.f32 %v6062, 0.5
    %v6127 = vadd.f32 %v6063, 0.5
    %v6128 = vadd.f32 %v6064, 0.5
    %v6129 = vadd.f32 %v6065, 0.5
    %v6130 = vadd.f32 %v6066, 0.5
    %v6131 = vadd.f32 %v6067, 0.5
    %v6132 = vadd.f32 %v6068, 0.5
    %v6133 = vadd.f32 %v6069, 0.5
    %v6134 = vadd.f32 %v6070, 0.5
    %v6135 = vadd.f32 %v6071, 0.5
    %v6136 = vadd.f32 %v6072, 0.5
    %v6137 = vadd.f32 %v6073, 0.5
    %v6138 = vadd.f32 %v6074, 0.5
    %v6139 = vadd.f32 %v6075, 0.5
    %v6140 = vadd.f32 %v6076, 0.5
    %v6141 = vadd.f32 %v6077, 0.5
    %v6142 = vadd.f32 %v6078, 0.5
    %v6143 = vadd.f32 %v6079, 0.5
    %v6144 = vmul.f32 %v5730, %v6080
    %v6145 = vmul.f32 %v5732, %v6081
    %v6146 = vmul.f32 %v5734, %v6082
    %v6147 = vmul.f32 %v5736, %v6083
    %v6148 = vmul.f32 %v5740, %v6084
    %v6149 = vmul.f32 %v5742, %v6085
    %v6150 = vmul.f32 %v5744, %v6086
    %v6151 = vmul.f32 %v5746, %v6087
    %v6152 = vmul.f32 %v5750, %v6088
    %v6153 = vmul.f32 %v5752, %v6089
    %v6154 = vmul.f32 %v5754, %v6090
    %v6155 = vmul.f32 %v5756, %v6091
    %v6156 = vmul.f32 %v5760, %v6092
    %v6157 = vmul.f32 %v5762, %v6093
    %v6158 = vmul.f32 %v5764, %v6094
    %v6159 = vmul.f32 %v5766, %v6095
    %v6160 = vmul.f32 %v5770, %v6096
    %v6161 = vmul.f32 %v5772, %v6097
    %v6162 = vmul.f32 %v5774, %v6098
    %v6163 = vmul.f32 %v5776, %v6099
    %v6164 = vmul.f32 %v5780, %v6100
    %v6165 = vmul.f32 %v5782, %v6101
    %v6166 = vmul.f32 %v5784, %v6102
    %v6167 = vmul.f32 %v5786, %v6103
    %v6168 = vmul.f32 %v5790, %v6104
    %v6169 = vmul.f32 %v5792, %v6105
    %v6170 = vmul.f32 %v5794, %v6106
    %v6171 = vmul.f32 %v5796, %v6107
    %v6172 = vmul.f32 %v5800, %v6108
    %v6173 = vmul.f32 %v5802, %v6109
    %v6174 = vmul.f32 %v5804, %v6110
    %v6175 = vmul.f32 %v5806, %v6111
    %v6176 = vmul.f32 %v5810, %v6112
    %v6177 = vmul.f32 %v5812, %v6113
    %v6178 = vmul.f32 %v5814, %v6114
    %v6179 = vmul.f32 %v5816, %v6115
    %v6180 = vmul.f32 %v5820, %v6116
    %v6181 = vmul.f32 %v5822, %v6117
    %v6182 = vmul.f32 %v5824, %v6118
    %v6183 = vmul.f32 %v5826, %v6119
    %v6184 = vmul.f32 %v5830, %v6120
    %v6185 = vmul.f32 %v5832, %v6121
    %v6186 = vmul.f32 %v5834, %v6122
    %v6187 = vmul.f32 %v5836, %v6123
    %v6188 = vmul.f32 %v5840, %v6124
    %v6189 = vmul.f32 %v5842, %v6125
    %v6190 = vmul.f32 %v5844, %v6126
    %v6191 = vmul.f32 %v5846, %v6127
    %v6192 = vmul.f32 %v5850, %v6128
    %v6193 = vmul.f32 %v5852, %v6129
    %v6194 = vmul.f32 %v5854, %v6130
    %v6195 = vmul.f32 %v5856, %v6131
    %v6196 = vmul.f32 %v5860, %v6132
    %v6197 = vmul.f32 %v5862, %v6133
    %v6198 = vmul.f32 %v5864, %v6134
    %v6199 = vmul.f32 %v5866, %v6135
    %v6200 = vmul.f32 %v5870, %v6136
    %v6201 = vmul.f32 %v5872, %v6137
    %v6202 = vmul.f32 %v5874, %v6138
    %v6203 = vmul.f32 %v5876, %v6139
    %v6204 = vmul.f32 %v5880, %v6140
    %v6205 = vmul.f32 %v5882, %v6141
    %v6206 = vmul.f32 %v5884, %v6142
    %v6207 = vmul.f32 %v5886, %v6143
    %v6208 = vpack.c.bf16 %v6146, %v6144
    %v6209 = vpack.c.bf16 %v6147, %v6145
    %v6210 = vpack.c.bf16 %v6150, %v6148
    %v6211 = vpack.c.bf16 %v6151, %v6149
    %v6212 = vpack.c.bf16 %v6154, %v6152
    %v6213 = vpack.c.bf16 %v6155, %v6153
    %v6214 = vpack.c.bf16 %v6158, %v6156
    %v6215 = vpack.c.bf16 %v6159, %v6157
    %v6216 = vpack.c.bf16 %v6162, %v6160
    %v6217 = vpack.c.bf16 %v6163, %v6161
    %v6218 = vpack.c.bf16 %v6166, %v6164
    %v6219 = vpack.c.bf16 %v6167, %v6165
    %v6220 = vpack.c.bf16 %v6170, %v6168
    %v6221 = vpack.c.bf16 %v6171, %v6169
    %v6222 = vpack.c.bf16 %v6174, %v6172
    %v6223 = vpack.c.bf16 %v6175, %v6173
    %v6224 = vpack.c.bf16 %v6178, %v6176
    %v6225 = vpack.c.bf16 %v6179, %v6177
    %v6226 = vpack.c.bf16 %v6182, %v6180
    %v6227 = vpack.c.bf16 %v6183, %v6181
    %v6228 = vpack.c.bf16 %v6186, %v6184
    %v6229 = vpack.c.bf16 %v6187, %v6185
    %v6230 = vpack.c.bf16 %v6190, %v6188
    %v6231 = vpack.c.bf16 %v6191, %v6189
    %v6232 = vpack.c.bf16 %v6194, %v6192
    %v6233 = vpack.c.bf16 %v6195, %v6193
    %v6234 = vpack.c.bf16 %v6198, %v6196
    %v6235 = vpack.c.bf16 %v6199, %v6197
    %v6236 = vpack.c.bf16 %v6202, %v6200
    %v6237 = vpack.c.bf16 %v6203, %v6201
    %v6238 = vpack.c.bf16 %v6206, %v6204
    %v6239 = vpack.c.bf16 %v6207, %v6205
    %s6240 = scalar_lea.vmem [#allocation7], 128
    %v6241 = vld [vmem:[%s6240] sm:$0xf]
    %v6242 = vld [vmem:[%s6240 + $0x4] sm:$0xf]
    %v6243 = vld [vmem:[%s6240 + $0x8] sm:$0xf]
    %v6244 = vld [vmem:[%s6240 + $0xc] sm:$0xf]
    %v6245 = vld [vmem:[%s6240 + $0x10] sm:$0xf]
    %v6246 = vld [vmem:[%s6240 + $0x14] sm:$0xf]
    %v6247 = vld [vmem:[%s6240 + $0x18] sm:$0xf]
    %v6248 = vld [vmem:[%s6240 + $0x1c] sm:$0xf]
    %v6249 = vld [vmem:[%s6240 + $0x20] sm:$0xf]
    %v6250 = vld [vmem:[%s6240 + $0x24] sm:$0xf]
    %v6251 = vld [vmem:[%s6240 + $0x28] sm:$0xf]
    %v6252 = vld [vmem:[%s6240 + $0x2c] sm:$0xf]
    %v6253 = vld [vmem:[%s6240 + $0x30] sm:$0xf]
    %v6254 = vld [vmem:[%s6240 + $0x34] sm:$0xf]
    %v6255 = vld [vmem:[%s6240 + $0x38] sm:$0xf]
    %v6256 = vld [vmem:[%s6240 + $0x3c] sm:$0xf]
    %v6257 = vld [vmem:[%s6240 + $0x40] sm:$0xf]
    %v6258 = vld [vmem:[%s6240 + $0x44] sm:$0xf]
    %v6259 = vld [vmem:[%s6240 + $0x48] sm:$0xf]
    %v6260 = vld [vmem:[%s6240 + $0x4c] sm:$0xf]
    %v6261 = vld [vmem:[%s6240 + $0x50] sm:$0xf]
    %v6262 = vld [vmem:[%s6240 + $0x54] sm:$0xf]
    %v6263 = vld [vmem:[%s6240 + $0x58] sm:$0xf]
    %v6264 = vld [vmem:[%s6240 + $0x5c] sm:$0xf]
    %v6265 = vld [vmem:[%s6240 + $0x60] sm:$0xf]
    %v6266 = vld [vmem:[%s6240 + $0x64] sm:$0xf]
    %v6267 = vld [vmem:[%s6240 + $0x68] sm:$0xf]
    %v6268 = vld [vmem:[%s6240 + $0x6c] sm:$0xf]
    %v6269 = vld [vmem:[%s6240 + $0x70] sm:$0xf]
    %v6270 = vld [vmem:[%s6240 + $0x74] sm:$0xf]
    %v6271 = vld [vmem:[%s6240 + $0x78] sm:$0xf]
    %v6272 = vld [vmem:[%s6240 + $0x7c] sm:$0xf]
    %v6273 = vld [vmem:[%s10 + $0x1] sm:$0x1]
    %v6274 = vlaneseq
    %v6275 = vshrl.u32 %v6274, 7
    %v6276 = vsub.s32 0, %v6275
    %v6277 = vrot.slane %v6273, %v6276
    %v6310 = vunpack.c.l.b16 %v6241
    %v6311 = vunpack.c.l.b16 %v6242
    %v6312 = vunpack.c.l.b16 %v6243
    %v6313 = vunpack.c.l.b16 %v6244
    %v6314 = vunpack.c.l.b16 %v6245
    %v6315 = vunpack.c.l.b16 %v6246
    %v6316 = vunpack.c.l.b16 %v6247
    %v6317 = vunpack.c.l.b16 %v6248
    %v6318 = vunpack.c.l.b16 %v6249
    %v6319 = vunpack.c.l.b16 %v6250
    %v6320 = vunpack.c.l.b16 %v6251
    %v6321 = vunpack.c.l.b16 %v6252
    %v6322 = vunpack.c.l.b16 %v6253
    %v6323 = vunpack.c.l.b16 %v6254
    %v6324 = vunpack.c.l.b16 %v6255
    %v6325 = vunpack.c.l.b16 %v6256
    %v6326 = vunpack.c.l.b16 %v6257
    %v6327 = vunpack.c.l.b16 %v6258
    %v6328 = vunpack.c.l.b16 %v6259
    %v6329 = vunpack.c.l.b16 %v6260
    %v6330 = vunpack.c.l.b16 %v6261
    %v6331 = vunpack.c.l.b16 %v6262
    %v6332 = vunpack.c.l.b16 %v6263
    %v6333 = vunpack.c.l.b16 %v6264
    %v6334 = vunpack.c.l.b16 %v6265
    %v6335 = vunpack.c.l.b16 %v6266
    %v6336 = vunpack.c.l.b16 %v6267
    %v6337 = vunpack.c.l.b16 %v6268
    %v6338 = vunpack.c.l.b16 %v6269
    %v6339 = vunpack.c.l.b16 %v6270
    %v6340 = vunpack.c.l.b16 %v6271
    %v6341 = vunpack.c.l.b16 %v6272
    %v6342 = vpack.c.b16 %v6311, %v6310
    %v6343 = vpack.c.b16 %v6313, %v6312
    %v6344 = vpack.c.b16 %v6315, %v6314
    %v6345 = vpack.c.b16 %v6317, %v6316
    %v6346 = vpack.c.b16 %v6319, %v6318
    %v6347 = vpack.c.b16 %v6321, %v6320
    %v6348 = vpack.c.b16 %v6323, %v6322
    %v6349 = vpack.c.b16 %v6325, %v6324
    %v6350 = vpack.c.b16 %v6327, %v6326
    %v6351 = vpack.c.b16 %v6329, %v6328
    %v6352 = vpack.c.b16 %v6331, %v6330
    %v6353 = vpack.c.b16 %v6333, %v6332
    %v6354 = vpack.c.b16 %v6335, %v6334
    %v6355 = vpack.c.b16 %v6337, %v6336
    %v6356 = vpack.c.b16 %v6339, %v6338
    %v6357 = vpack.c.b16 %v6341, %v6340
    %6374 = vmatprep.subr.bf16.mxu0 0
    %6375 = vmatpush1.bf16.msra.mxu0 %v6349
    %6376 = vmatprep.subr.bf16.mxu0 0
    %6377 = vmatpush1.bf16.msra.mxu0 %v6348
    %6378 = vmatprep.subr.bf16.mxu0 0
    %6379 = vmatpush1.bf16.msra.mxu0 %v6347
    %6380 = vmatprep.subr.bf16.mxu0 0
    %6381 = vmatpush1.bf16.msra.mxu0 %v6346
    %6382 = vmatprep.subr.bf16.mxu0 0
    %6383 = vmatpush1.bf16.msra.mxu0 %v6345
    %6384 = vmatprep.subr.bf16.mxu0 0
    %6385 = vmatpush1.bf16.msra.mxu0 %v6344
    %6386 = vmatprep.subr.bf16.mxu0 0
    %6387 = vmatpush1.bf16.msra.mxu0 %v6343
    %6388 = vmatprep.subr.bf16.mxu0 0
    %6389 = vmatpush1.bf16.msra.mxu0 %v6342
    %6390 = vmatprep.subr.bf16.mxu0 0
    %6391 = vmatpush2.bf16.msra.mxu0 %v6357
    %6392 = vmatprep.subr.bf16.mxu0 0
    %6393 = vmatpush2.bf16.msra.mxu0 %v6356
    %6394 = vmatprep.subr.bf16.mxu0 0
    %6395 = vmatpush2.bf16.msra.mxu0 %v6355
    %6396 = vmatprep.subr.bf16.mxu0 0
    %6397 = vmatpush2.bf16.msra.mxu0 %v6354
    %6398 = vmatprep.subr.bf16.mxu0 0
    %6399 = vmatpush2.bf16.msra.mxu0 %v6353
    %6400 = vmatprep.subr.bf16.mxu0 0
    %6401 = vmatpush2.bf16.msra.mxu0 %v6352
    %6402 = vmatprep.subr.bf16.mxu0 0
    %6403 = vmatpush2.bf16.msra.mxu0 %v6351
    %6404 = vmatprep.subr.bf16.mxu0 0
    %6405 = vmatpush2.bf16.msra.mxu0 %v6350
    %6406 = vmatprep.mubr.bf16.mxu0 %v6209
    %6407 = vmatmul.mubr.bf16.gmra.mxu0 %v6208
    %v6408 = vpop.f32.mrf.mxu0
    %v6409 = vadd.f32 %v6277, %v6408
    %v6410 = vpop.f32.mrf.mxu0
    %v6411 = vpop.f32.mrf.mxu0
    %v6412 = vadd.f32 %v6277, %v6411
    %v6413 = vpop.f32.mrf.mxu0
    %6414 = vmatprep.mubr.bf16.mxu0 %v6211
    %6415 = vmatmul.mubr.bf16.gmra.mxu0 %v6210
    %v6416 = vpop.f32.mrf.mxu0
    %v6417 = vadd.f32 %v6277, %v6416
    %v6418 = vpop.f32.mrf.mxu0
    %v6419 = vpop.f32.mrf.mxu0
    %v6420 = vadd.f32 %v6277, %v6419
    %v6421 = vpop.f32.mrf.mxu0
    %6422 = vmatprep.mubr.bf16.mxu0 %v6213
    %6423 = vmatmul.mubr.bf16.gmra.mxu0 %v6212
    %v6424 = vpop.f32.mrf.mxu0
    %v6425 = vadd.f32 %v6277, %v6424
    %v6426 = vpop.f32.mrf.mxu0
    %v6427 = vpop.f32.mrf.mxu0
    %v6428 = vadd.f32 %v6277, %v6427
    %v6429 = vpop.f32.mrf.mxu0
    %6430 = vmatprep.mubr.bf16.mxu0 %v6215
    %6431 = vmatmul.mubr.bf16.gmra.mxu0 %v6214
    %v6432 = vpop.f32.mrf.mxu0
    %v6433 = vadd.f32 %v6277, %v6432
    %v6434 = vpop.f32.mrf.mxu0
    %v6435 = vpop.f32.mrf.mxu0
    %v6436 = vadd.f32 %v6277, %v6435
    %v6437 = vpop.f32.mrf.mxu0
    %6438 = vmatprep.mubr.bf16.mxu0 %v6217
    %6439 = vmatmul.mubr.bf16.gmra.mxu0 %v6216
    %v6440 = vpop.f32.mrf.mxu0
    %v6441 = vadd.f32 %v6277, %v6440
    %v6442 = vpop.f32.mrf.mxu0
    %v6443 = vpop.f32.mrf.mxu0
    %v6444 = vadd.f32 %v6277, %v6443
    %v6445 = vpop.f32.mrf.mxu0
    %6446 = vmatprep.mubr.bf16.mxu0 %v6219
    %6447 = vmatmul.mubr.bf16.gmra.mxu0 %v6218
    %v6448 = vpop.f32.mrf.mxu0
    %v6449 = vadd.f32 %v6277, %v6448
    %v6450 = vpop.f32.mrf.mxu0
    %v6451 = vpop.f32.mrf.mxu0
    %v6452 = vadd.f32 %v6277, %v6451
    %v6453 = vpop.f32.mrf.mxu0
    %6454 = vmatprep.mubr.bf16.mxu0 %v6221
    %6455 = vmatmul.mubr.bf16.gmra.mxu0 %v6220
    %v6456 = vpop.f32.mrf.mxu0
    %v6457 = vadd.f32 %v6277, %v6456
    %v6458 = vpop.f32.mrf.mxu0
    %v6459 = vpop.f32.mrf.mxu0
    %v6460 = vadd.f32 %v6277, %v6459
    %v6461 = vpop.f32.mrf.mxu0
    %6462 = vmatprep.mubr.bf16.mxu0 %v6223
    %6463 = vmatmul.mubr.bf16.gmra.mxu0 %v6222
    %v6464 = vpop.f32.mrf.mxu0
    %v6465 = vadd.f32 %v6277, %v6464
    %v6466 = vpop.f32.mrf.mxu0
    %v6467 = vpop.f32.mrf.mxu0
    %v6468 = vadd.f32 %v6277, %v6467
    %v6469 = vpop.f32.mrf.mxu0
    %6470 = vmatprep.mubr.bf16.mxu0 %v6225
    %6471 = vmatmul.mubr.bf16.gmra.mxu0 %v6224
    %v6472 = vpop.f32.mrf.mxu0
    %v6473 = vadd.f32 %v6277, %v6472
    %v6474 = vpop.f32.mrf.mxu0
    %v6475 = vpop.f32.mrf.mxu0
    %v6476 = vadd.f32 %v6277, %v6475
    %v6477 = vpop.f32.mrf.mxu0
    %6478 = vmatprep.mubr.bf16.mxu0 %v6227
    %6479 = vmatmul.mubr.bf16.gmra.mxu0 %v6226
    %v6480 = vpop.f32.mrf.mxu0
    %v6481 = vadd.f32 %v6277, %v6480
    %v6482 = vpop.f32.mrf.mxu0
    %v6483 = vpop.f32.mrf.mxu0
    %v6484 = vadd.f32 %v6277, %v6483
    %v6485 = vpop.f32.mrf.mxu0
    %6486 = vmatprep.mubr.bf16.mxu0 %v6229
    %6487 = vmatmul.mubr.bf16.gmra.mxu0 %v6228
    %v6488 = vpop.f32.mrf.mxu0
    %v6489 = vadd.f32 %v6277, %v6488
    %v6490 = vpop.f32.mrf.mxu0
    %v6491 = vpop.f32.mrf.mxu0
    %v6492 = vadd.f32 %v6277, %v6491
    %v6493 = vpop.f32.mrf.mxu0
    %6494 = vmatprep.mubr.bf16.mxu0 %v6231
    %6495 = vmatmul.mubr.bf16.gmra.mxu0 %v6230
    %v6496 = vpop.f32.mrf.mxu0
    %v6497 = vadd.f32 %v6277, %v6496
    %v6498 = vpop.f32.mrf.mxu0
    %v6499 = vpop.f32.mrf.mxu0
    %v6500 = vadd.f32 %v6277, %v6499
    %v6501 = vpop.f32.mrf.mxu0
    %6502 = vmatprep.mubr.bf16.mxu0 %v6233
    %6503 = vmatmul.mubr.bf16.gmra.mxu0 %v6232
    %v6504 = vpop.f32.mrf.mxu0
    %v6505 = vadd.f32 %v6277, %v6504
    %v6506 = vpop.f32.mrf.mxu0
    %v6507 = vpop.f32.mrf.mxu0
    %v6508 = vadd.f32 %v6277, %v6507
    %v6509 = vpop.f32.mrf.mxu0
    %6510 = vmatprep.mubr.bf16.mxu0 %v6235
    %6511 = vmatmul.mubr.bf16.gmra.mxu0 %v6234
    %v6512 = vpop.f32.mrf.mxu0
    %v6513 = vadd.f32 %v6277, %v6512
    %v6514 = vpop.f32.mrf.mxu0
    %v6515 = vpop.f32.mrf.mxu0
    %v6516 = vadd.f32 %v6277, %v6515
    %v6517 = vpop.f32.mrf.mxu0
    %6518 = vmatprep.mubr.bf16.mxu0 %v6237
    %6519 = vmatmul.mubr.bf16.gmra.mxu0 %v6236
    %v6520 = vpop.f32.mrf.mxu0
    %v6521 = vadd.f32 %v6277, %v6520
    %v6522 = vpop.f32.mrf.mxu0
    %v6523 = vpop.f32.mrf.mxu0
    %v6524 = vadd.f32 %v6277, %v6523
    %v6525 = vpop.f32.mrf.mxu0
    %6526 = vmatprep.mubr.bf16.mxu0 %v6239
    %6527 = vmatmul.mubr.bf16.gmra.mxu0 %v6238
    %v6528 = vpop.f32.mrf.mxu0
    %v6529 = vadd.f32 %v6277, %v6528
    %v6530 = vpop.f32.mrf.mxu0
    %v6531 = vpop.f32.mrf.mxu0
    %v6532 = vadd.f32 %v6277, %v6531
    %v6533 = vpop.f32.mrf.mxu0
    %6534 = vdwg.mxu0
    %v6535 = vadd.f32 %v4040, %v6409
    %v6536 = vadd.f32 %v4041, %v6412
    %v6537 = vadd.f32 %v4042, %v6417
    %v6538 = vadd.f32 %v4043, %v6420
    %v6539 = vadd.f32 %v4044, %v6425
    %v6540 = vadd.f32 %v4045, %v6428
    %v6541 = vadd.f32 %v4046, %v6433
    %v6542 = vadd.f32 %v4047, %v6436
    %v6543 = vadd.f32 %v4048, %v6441
    %v6544 = vadd.f32 %v4049, %v6444
    %v6545 = vadd.f32 %v4050, %v6449
    %v6546 = vadd.f32 %v4051, %v6452
    %v6547 = vadd.f32 %v4052, %v6457
    %v6548 = vadd.f32 %v4053, %v6460
    %v6549 = vadd.f32 %v4054, %v6465
    %v6550 = vadd.f32 %v4055, %v6468
    %v6551 = vadd.f32 %v4056, %v6473
    %v6552 = vadd.f32 %v4057, %v6476
    %v6553 = vadd.f32 %v4058, %v6481
    %v6554 = vadd.f32 %v4059, %v6484
    %v6555 = vadd.f32 %v4060, %v6489
    %v6556 = vadd.f32 %v4061, %v6492
    %v6557 = vadd.f32 %v4062, %v6497
    %v6558 = vadd.f32 %v4063, %v6500
    %v6559 = vadd.f32 %v4064, %v6505
    %v6560 = vadd.f32 %v4065, %v6508
    %v6561 = vadd.f32 %v4066, %v6513
    %v6562 = vadd.f32 %v4067, %v6516
    %v6563 = vadd.f32 %v4068, %v6521
    %v6564 = vadd.f32 %v4069, %v6524
    %v6565 = vadd.f32 %v4070, %v6529
    %v6566 = vadd.f32 %v4071, %v6532
    %6567 = vadd.xlane.f32.xlu0 %v6535
    %v6568 = vpop.xlane.xlu0 %6567
    %6569 = vadd.xlane.f32.xlu0 %v6536
    %v6570 = vpop.xlane.xlu0 %6569
    %6571 = vadd.xlane.f32.xlu0 %v6537
    %v6572 = vpop.xlane.xlu0 %6571
    %6573 = vadd.xlane.f32.xlu0 %v6538
    %v6574 = vpop.xlane.xlu0 %6573
    %6575 = vadd.xlane.f32.xlu0 %v6539
    %v6576 = vpop.xlane.xlu0 %6575
    %6577 = vadd.xlane.f32.xlu0 %v6540
    %v6578 = vpop.xlane.xlu0 %6577
    %6579 = vadd.xlane.f32.xlu0 %v6541
    %v6580 = vpop.xlane.xlu0 %6579
    %6581 = vadd.xlane.f32.xlu0 %v6542
    %v6582 = vpop.xlane.xlu0 %6581
    %6583 = vadd.xlane.f32.xlu0 %v6543
    %v6584 = vpop.xlane.xlu0 %6583
    %6585 = vadd.xlane.f32.xlu0 %v6544
    %v6586 = vpop.xlane.xlu0 %6585
    %6587 = vadd.xlane.f32.xlu0 %v6545
    %v6588 = vpop.xlane.xlu0 %6587
    %6589 = vadd.xlane.f32.xlu0 %v6546
    %v6590 = vpop.xlane.xlu0 %6589
    %6591 = vadd.xlane.f32.xlu0 %v6547
    %v6592 = vpop.xlane.xlu0 %6591
    %6593 = vadd.xlane.f32.xlu0 %v6548
    %v6594 = vpop.xlane.xlu0 %6593
    %6595 = vadd.xlane.f32.xlu0 %v6549
    %v6596 = vpop.xlane.xlu0 %6595
    %6597 = vadd.xlane.f32.xlu0 %v6550
    %v6598 = vpop.xlane.xlu0 %6597
    %6599 = vadd.xlane.f32.xlu0 %v6551
    %v6600 = vpop.xlane.xlu0 %6599
    %6601 = vadd.xlane.f32.xlu0 %v6552
    %v6602 = vpop.xlane.xlu0 %6601
    %6603 = vadd.xlane.f32.xlu0 %v6553
    %v6604 = vpop.xlane.xlu0 %6603
    %6605 = vadd.xlane.f32.xlu0 %v6554
    %v6606 = vpop.xlane.xlu0 %6605
    %6607 = vadd.xlane.f32.xlu0 %v6555
    %v6608 = vpop.xlane.xlu0 %6607
    %6609 = vadd.xlane.f32.xlu0 %v6556
    %v6610 = vpop.xlane.xlu0 %6609
    %6611 = vadd.xlane.f32.xlu0 %v6557
    %v6612 = vpop.xlane.xlu0 %6611
    %6613 = vadd.xlane.f32.xlu0 %v6558
    %v6614 = vpop.xlane.xlu0 %6613
    %6615 = vadd.xlane.f32.xlu0 %v6559
    %v6616 = vpop.xlane.xlu0 %6615
    %6617 = vadd.xlane.f32.xlu0 %v6560
    %v6618 = vpop.xlane.xlu0 %6617
    %6619 = vadd.xlane.f32.xlu0 %v6561
    %v6620 = vpop.xlane.xlu0 %6619
    %6621 = vadd.xlane.f32.xlu0 %v6562
    %v6622 = vpop.xlane.xlu0 %6621
    %6623 = vadd.xlane.f32.xlu0 %v6563
    %v6624 = vpop.xlane.xlu0 %6623
    %6625 = vadd.xlane.f32.xlu0 %v6564
    %v6626 = vpop.xlane.xlu0 %6625
    %6627 = vadd.xlane.f32.xlu0 %v6565
    %v6628 = vpop.xlane.xlu0 %6627
    %6629 = vadd.xlane.f32.xlu0 %v6566
    %v6630 = vpop.xlane.xlu0 %6629
    %v6631 = vmul.f32 %v6568, %v1645
    %v6632 = vmul.f32 %v6570, %v1645
    %v6633 = vmul.f32 %v6572, %v1645
    %v6634 = vmul.f32 %v6574, %v1645
    %v6635 = vmul.f32 %v6576, %v1645
    %v6636 = vmul.f32 %v6578, %v1645
    %v6637 = vmul.f32 %v6580, %v1645
    %v6638 = vmul.f32 %v6582, %v1645
    %v6639 = vmul.f32 %v6584, %v1645
    %v6640 = vmul.f32 %v6586, %v1645
    %v6641 = vmul.f32 %v6588, %v1645
    %v6642 = vmul.f32 %v6590, %v1645
    %v6643 = vmul.f32 %v6592, %v1645
    %v6644 = vmul.f32 %v6594, %v1645
    %v6645 = vmul.f32 %v6596, %v1645
    %v6646 = vmul.f32 %v6598, %v1645
    %v6647 = vmul.f32 %v6600, %v1645
    %v6648 = vmul.f32 %v6602, %v1645
    %v6649 = vmul.f32 %v6604, %v1645
    %v6650 = vmul.f32 %v6606, %v1645
    %v6651 = vmul.f32 %v6608, %v1645
    %v6652 = vmul.f32 %v6610, %v1645
    %v6653 = vmul.f32 %v6612, %v1645
    %v6654 = vmul.f32 %v6614, %v1645
    %v6655 = vmul.f32 %v6616, %v1645
    %v6656 = vmul.f32 %v6618, %v1645
    %v6657 = vmul.f32 %v6620, %v1645
    %v6658 = vmul.f32 %v6622, %v1645
    %v6659 = vmul.f32 %v6624, %v1645
    %v6660 = vmul.f32 %v6626, %v1645
    %v6661 = vmul.f32 %v6628, %v1645
    %v6662 = vmul.f32 %v6630, %v1645
    %v6663 = vmul.f32 %v6535, %v6535
    %v6664 = vmul.f32 %v6536, %v6536
    %v6665 = vmul.f32 %v6537, %v6537
    %v6666 = vmul.f32 %v6538, %v6538
    %v6667 = vmul.f32 %v6539, %v6539
    %v6668 = vmul.f32 %v6540, %v6540
    %v6669 = vmul.f32 %v6541, %v6541
    %v6670 = vmul.f32 %v6542, %v6542
    %v6671 = vmul.f32 %v6543, %v6543
    %v6672 = vmul.f32 %v6544, %v6544
    %v6673 = vmul.f32 %v6545, %v6545
    %v6674 = vmul.f32 %v6546, %v6546
    %v6675 = vmul.f32 %v6547, %v6547
    %v6676 = vmul.f32 %v6548, %v6548
    %v6677 = vmul.f32 %v6549, %v6549
    %v6678 = vmul.f32 %v6550, %v6550
    %v6679 = vmul.f32 %v6551, %v6551
    %v6680 = vmul.f32 %v6552, %v6552
    %v6681 = vmul.f32 %v6553, %v6553
    %v6682 = vmul.f32 %v6554, %v6554
    %v6683 = vmul.f32 %v6555, %v6555
    %v6684 = vmul.f32 %v6556, %v6556
    %v6685 = vmul.f32 %v6557, %v6557
    %v6686 = vmul.f32 %v6558, %v6558
    %v6687 = vmul.f32 %v6559, %v6559
    %v6688 = vmul.f32 %v6560, %v6560
    %v6689 = vmul.f32 %v6561, %v6561
    %v6690 = vmul.f32 %v6562, %v6562
    %v6691 = vmul.f32 %v6563, %v6563
    %v6692 = vmul.f32 %v6564, %v6564
    %v6693 = vmul.f32 %v6565, %v6565
    %v6694 = vmul.f32 %v6566, %v6566
    %6695 = vadd.xlane.f32.xlu0 %v6663
    %v6696 = vpop.xlane.xlu0 %6695
    %6697 = vadd.xlane.f32.xlu0 %v6664
    %v6698 = vpop.xlane.xlu0 %6697
    %6699 = vadd.xlane.f32.xlu0 %v6665
    %v6700 = vpop.xlane.xlu0 %6699
    %6701 = vadd.xlane.f32.xlu0 %v6666
    %v6702 = vpop.xlane.xlu0 %6701
    %6703 = vadd.xlane.f32.xlu0 %v6667
    %v6704 = vpop.xlane.xlu0 %6703
    %6705 = vadd.xlane.f32.xlu0 %v6668
    %v6706 = vpop.xlane.xlu0 %6705
    %6707 = vadd.xlane.f32.xlu0 %v6669
    %v6708 = vpop.xlane.xlu0 %6707
    %6709 = vadd.xlane.f32.xlu0 %v6670
    %v6710 = vpop.xlane.xlu0 %6709
    %6711 = vadd.xlane.f32.xlu0 %v6671
    %v6712 = vpop.xlane.xlu0 %6711
    %6713 = vadd.xlane.f32.xlu0 %v6672
    %v6714 = vpop.xlane.xlu0 %6713
    %6715 = vadd.xlane.f32.xlu0 %v6673
    %v6716 = vpop.xlane.xlu0 %6715
    %6717 = vadd.xlane.f32.xlu0 %v6674
    %v6718 = vpop.xlane.xlu0 %6717
    %6719 = vadd.xlane.f32.xlu0 %v6675
    %v6720 = vpop.xlane.xlu0 %6719
    %6721 = vadd.xlane.f32.xlu0 %v6676
    %v6722 = vpop.xlane.xlu0 %6721
    %6723 = vadd.xlane.f32.xlu0 %v6677
    %v6724 = vpop.xlane.xlu0 %6723
    %6725 = vadd.xlane.f32.xlu0 %v6678
    %v6726 = vpop.xlane.xlu0 %6725
    %6727 = vadd.xlane.f32.xlu0 %v6679
    %v6728 = vpop.xlane.xlu0 %6727
    %6729 = vadd.xlane.f32.xlu0 %v6680
    %v6730 = vpop.xlane.xlu0 %6729
    %6731 = vadd.xlane.f32.xlu0 %v6681
    %v6732 = vpop.xlane.xlu0 %6731
    %6733 = vadd.xlane.f32.xlu0 %v6682
    %v6734 = vpop.xlane.xlu0 %6733
    %6735 = vadd.xlane.f32.xlu0 %v6683
    %v6736 = vpop.xlane.xlu0 %6735
    %6737 = vadd.xlane.f32.xlu0 %v6684
    %v6738 = vpop.xlane.xlu0 %6737
    %6739 = vadd.xlane.f32.xlu0 %v6685
    %v6740 = vpop.xlane.xlu0 %6739
    %6741 = vadd.xlane.f32.xlu0 %v6686
    %v6742 = vpop.xlane.xlu0 %6741
    %6743 = vadd.xlane.f32.xlu0 %v6687
    %v6744 = vpop.xlane.xlu0 %6743
    %6745 = vadd.xlane.f32.xlu0 %v6688
    %v6746 = vpop.xlane.xlu0 %6745
    %6747 = vadd.xlane.f32.xlu0 %v6689
    %v6748 = vpop.xlane.xlu0 %6747
    %6749 = vadd.xlane.f32.xlu0 %v6690
    %v6750 = vpop.xlane.xlu0 %6749
    %6751 = vadd.xlane.f32.xlu0 %v6691
    %v6752 = vpop.xlane.xlu0 %6751
    %6753 = vadd.xlane.f32.xlu0 %v6692
    %v6754 = vpop.xlane.xlu0 %6753
    %6755 = vadd.xlane.f32.xlu0 %v6693
    %v6756 = vpop.xlane.xlu0 %6755
    %6757 = vadd.xlane.f32.xlu0 %v6694
    %v6758 = vpop.xlane.xlu0 %6757
    %v6759 = vmul.f32 %v6696, %v1645
    %v6760 = vmul.f32 %v6698, %v1645
    %v6761 = vmul.f32 %v6700, %v1645
    %v6762 = vmul.f32 %v6702, %v1645
    %v6763 = vmul.f32 %v6704, %v1645
    %v6764 = vmul.f32 %v6706, %v1645
    %v6765 = vmul.f32 %v6708, %v1645
    %v6766 = vmul.f32 %v6710, %v1645
    %v6767 = vmul.f32 %v6712, %v1645
    %v6768 = vmul.f32 %v6714, %v1645
    %v6769 = vmul.f32 %v6716, %v1645
    %v6770 = vmul.f32 %v6718, %v1645
    %v6771 = vmul.f32 %v6720, %v1645
    %v6772 = vmul.f32 %v6722, %v1645
    %v6773 = vmul.f32 %v6724, %v1645
    %v6774 = vmul.f32 %v6726, %v1645
    %v6775 = vmul.f32 %v6728, %v1645
    %v6776 = vmul.f32 %v6730, %v1645
    %v6777 = vmul.f32 %v6732, %v1645
    %v6778 = vmul.f32 %v6734, %v1645
    %v6779 = vmul.f32 %v6736, %v1645
    %v6780 = vmul.f32 %v6738, %v1645
    %v6781 = vmul.f32 %v6740, %v1645
    %v6782 = vmul.f32 %v6742, %v1645
    %v6783 = vmul.f32 %v6744, %v1645
    %v6784 = vmul.f32 %v6746, %v1645
    %v6785 = vmul.f32 %v6748, %v1645
    %v6786 = vmul.f32 %v6750, %v1645
    %v6787 = vmul.f32 %v6752, %v1645
    %v6788 = vmul.f32 %v6754, %v1645
    %v6789 = vmul.f32 %v6756, %v1645
    %v6790 = vmul.f32 %v6758, %v1645
    %v6791 = vmul.f32 %v6631, %v6631
    %v6792 = vmul.f32 %v6632, %v6632
    %v6793 = vmul.f32 %v6633, %v6633
    %v6794 = vmul.f32 %v6634, %v6634
    %v6795 = vmul.f32 %v6635, %v6635
    %v6796 = vmul.f32 %v6636, %v6636
    %v6797 = vmul.f32 %v6637, %v6637
    %v6798 = vmul.f32 %v6638, %v6638
    %v6799 = vmul.f32 %v6639, %v6639
    %v6800 = vmul.f32 %v6640, %v6640
    %v6801 = vmul.f32 %v6641, %v6641
    %v6802 = vmul.f32 %v6642, %v6642
    %v6803 = vmul.f32 %v6643, %v6643
    %v6804 = vmul.f32 %v6644, %v6644
    %v6805 = vmul.f32 %v6645, %v6645
    %v6806 = vmul.f32 %v6646, %v6646
    %v6807 = vmul.f32 %v6647, %v6647
    %v6808 = vmul.f32 %v6648, %v6648
    %v6809 = vmul.f32 %v6649, %v6649
    %v6810 = vmul.f32 %v6650, %v6650
    %v6811 = vmul.f32 %v6651, %v6651
    %v6812 = vmul.f32 %v6652, %v6652
    %v6813 = vmul.f32 %v6653, %v6653
    %v6814 = vmul.f32 %v6654, %v6654
    %v6815 = vmul.f32 %v6655, %v6655
    %v6816 = vmul.f32 %v6656, %v6656
    %v6817 = vmul.f32 %v6657, %v6657
    %v6818 = vmul.f32 %v6658, %v6658
    %v6819 = vmul.f32 %v6659, %v6659
    %v6820 = vmul.f32 %v6660, %v6660
    %v6821 = vmul.f32 %v6661, %v6661
    %v6822 = vmul.f32 %v6662, %v6662
    %v6823 = vsub.f32 %v6759, %v6791
    %v6824 = vsub.f32 %v6760, %v6792
    %v6825 = vsub.f32 %v6761, %v6793
    %v6826 = vsub.f32 %v6762, %v6794
    %v6827 = vsub.f32 %v6763, %v6795
    %v6828 = vsub.f32 %v6764, %v6796
    %v6829 = vsub.f32 %v6765, %v6797
    %v6830 = vsub.f32 %v6766, %v6798
    %v6831 = vsub.f32 %v6767, %v6799
    %v6832 = vsub.f32 %v6768, %v6800
    %v6833 = vsub.f32 %v6769, %v6801
    %v6834 = vsub.f32 %v6770, %v6802
    %v6835 = vsub.f32 %v6771, %v6803
    %v6836 = vsub.f32 %v6772, %v6804
    %v6837 = vsub.f32 %v6773, %v6805
    %v6838 = vsub.f32 %v6774, %v6806
    %v6839 = vsub.f32 %v6775, %v6807
    %v6840 = vsub.f32 %v6776, %v6808
    %v6841 = vsub.f32 %v6777, %v6809
    %v6842 = vsub.f32 %v6778, %v6810
    %v6843 = vsub.f32 %v6779, %v6811
    %v6844 = vsub.f32 %v6780, %v6812
    %v6845 = vsub.f32 %v6781, %v6813
    %v6846 = vsub.f32 %v6782, %v6814
    %v6847 = vsub.f32 %v6783, %v6815
    %v6848 = vsub.f32 %v6784, %v6816
    %v6849 = vsub.f32 %v6785, %v6817
    %v6850 = vsub.f32 %v6786, %v6818
    %v6851 = vsub.f32 %v6787, %v6819
    %v6852 = vsub.f32 %v6788, %v6820
    %v6853 = vsub.f32 %v6789, %v6821
    %v6854 = vsub.f32 %v6790, %v6822
    %v6855 = vmax.f32 %v6823, 0.0
    %v6856 = vmax.f32 %v6824, 0.0
    %v6857 = vmax.f32 %v6825, 0.0
    %v6858 = vmax.f32 %v6826, 0.0
    %v6859 = vmax.f32 %v6827, 0.0
    %v6860 = vmax.f32 %v6828, 0.0
    %v6861 = vmax.f32 %v6829, 0.0
    %v6862 = vmax.f32 %v6830, 0.0
    %v6863 = vmax.f32 %v6831, 0.0
    %v6864 = vmax.f32 %v6832, 0.0
    %v6865 = vmax.f32 %v6833, 0.0
    %v6866 = vmax.f32 %v6834, 0.0
    %v6867 = vmax.f32 %v6835, 0.0
    %v6868 = vmax.f32 %v6836, 0.0
    %v6869 = vmax.f32 %v6837, 0.0
    %v6870 = vmax.f32 %v6838, 0.0
    %v6871 = vmax.f32 %v6839, 0.0
    %v6872 = vmax.f32 %v6840, 0.0
    %v6873 = vmax.f32 %v6841, 0.0
    %v6874 = vmax.f32 %v6842, 0.0
    %v6875 = vmax.f32 %v6843, 0.0
    %v6876 = vmax.f32 %v6844, 0.0
    %v6877 = vmax.f32 %v6845, 0.0
    %v6878 = vmax.f32 %v6846, 0.0
    %v6879 = vmax.f32 %v6847, 0.0
    %v6880 = vmax.f32 %v6848, 0.0
    %v6881 = vmax.f32 %v6849, 0.0
    %v6882 = vmax.f32 %v6850, 0.0
    %v6883 = vmax.f32 %v6851, 0.0
    %v6884 = vmax.f32 %v6852, 0.0
    %v6885 = vmax.f32 %v6853, 0.0
    %v6886 = vmax.f32 %v6854, 0.0
    %v6887 = vsub.f32 %v6535, %v6631
    %v6888 = vsub.f32 %v6536, %v6632
    %v6889 = vsub.f32 %v6537, %v6633
    %v6890 = vsub.f32 %v6538, %v6634
    %v6891 = vsub.f32 %v6539, %v6635
    %v6892 = vsub.f32 %v6540, %v6636
    %v6893 = vsub.f32 %v6541, %v6637
    %v6894 = vsub.f32 %v6542, %v6638
    %v6895 = vsub.f32 %v6543, %v6639
    %v6896 = vsub.f32 %v6544, %v6640
    %v6897 = vsub.f32 %v6545, %v6641
    %v6898 = vsub.f32 %v6546, %v6642
    %v6899 = vsub.f32 %v6547, %v6643
    %v6900 = vsub.f32 %v6548, %v6644
    %v6901 = vsub.f32 %v6549, %v6645
    %v6902 = vsub.f32 %v6550, %v6646
    %v6903 = vsub.f32 %v6551, %v6647
    %v6904 = vsub.f32 %v6552, %v6648
    %v6905 = vsub.f32 %v6553, %v6649
    %v6906 = vsub.f32 %v6554, %v6650
    %v6907 = vsub.f32 %v6555, %v6651
    %v6908 = vsub.f32 %v6556, %v6652
    %v6909 = vsub.f32 %v6557, %v6653
    %v6910 = vsub.f32 %v6558, %v6654
    %v6911 = vsub.f32 %v6559, %v6655
    %v6912 = vsub.f32 %v6560, %v6656
    %v6913 = vsub.f32 %v6561, %v6657
    %v6914 = vsub.f32 %v6562, %v6658
    %v6915 = vsub.f32 %v6563, %v6659
    %v6916 = vsub.f32 %v6564, %v6660
    %v6917 = vsub.f32 %v6565, %v6661
    %v6918 = vsub.f32 %v6566, %v6662
    %v6919 = vadd.f32 %v6855, 1e-05
    %v6920 = vadd.f32 %v6856, 1e-05
    %v6921 = vadd.f32 %v6857, 1e-05
    %v6922 = vadd.f32 %v6858, 1e-05
    %v6923 = vadd.f32 %v6859, 1e-05
    %v6924 = vadd.f32 %v6860, 1e-05
    %v6925 = vadd.f32 %v6861, 1e-05
    %v6926 = vadd.f32 %v6862, 1e-05
    %v6927 = vadd.f32 %v6863, 1e-05
    %v6928 = vadd.f32 %v6864, 1e-05
    %v6929 = vadd.f32 %v6865, 1e-05
    %v6930 = vadd.f32 %v6866, 1e-05
    %v6931 = vadd.f32 %v6867, 1e-05
    %v6932 = vadd.f32 %v6868, 1e-05
    %v6933 = vadd.f32 %v6869, 1e-05
    %v6934 = vadd.f32 %v6870, 1e-05
    %v6935 = vadd.f32 %v6871, 1e-05
    %v6936 = vadd.f32 %v6872, 1e-05
    %v6937 = vadd.f32 %v6873, 1e-05
    %v6938 = vadd.f32 %v6874, 1e-05
    %v6939 = vadd.f32 %v6875, 1e-05
    %v6940 = vadd.f32 %v6876, 1e-05
    %v6941 = vadd.f32 %v6877, 1e-05
    %v6942 = vadd.f32 %v6878, 1e-05
    %v6943 = vadd.f32 %v6879, 1e-05
    %v6944 = vadd.f32 %v6880, 1e-05
    %v6945 = vadd.f32 %v6881, 1e-05
    %v6946 = vadd.f32 %v6882, 1e-05
    %v6947 = vadd.f32 %v6883, 1e-05
    %v6948 = vadd.f32 %v6884, 1e-05
    %v6949 = vadd.f32 %v6885, 1e-05
    %v6950 = vadd.f32 %v6886, 1e-05
    %v6951 = vrsqrt.pop %v6919
    %v6952 = vrsqrt.pop %v6920
    %v6953 = vrsqrt.pop %v6921
    %v6954 = vrsqrt.pop %v6922
    %v6955 = vrsqrt.pop %v6923
    %v6956 = vrsqrt.pop %v6924
    %v6957 = vrsqrt.pop %v6925
    %v6958 = vrsqrt.pop %v6926
    %v6959 = vrsqrt.pop %v6927
    %v6960 = vrsqrt.pop %v6928
    %v6961 = vrsqrt.pop %v6929
    %v6962 = vrsqrt.pop %v6930
    %v6963 = vrsqrt.pop %v6931
    %v6964 = vrsqrt.pop %v6932
    %v6965 = vrsqrt.pop %v6933
    %v6966 = vrsqrt.pop %v6934
    %v6967 = vrsqrt.pop %v6935
    %v6968 = vrsqrt.pop %v6936
    %v6969 = vrsqrt.pop %v6937
    %v6970 = vrsqrt.pop %v6938
    %v6971 = vrsqrt.pop %v6939
    %v6972 = vrsqrt.pop %v6940
    %v6973 = vrsqrt.pop %v6941
    %v6974 = vrsqrt.pop %v6942
    %v6975 = vrsqrt.pop %v6943
    %v6976 = vrsqrt.pop %v6944
    %v6977 = vrsqrt.pop %v6945
    %v6978 = vrsqrt.pop %v6946
    %v6979 = vrsqrt.pop %v6947
    %v6980 = vrsqrt.pop %v6948
    %v6981 = vrsqrt.pop %v6949
    %v6982 = vrsqrt.pop %v6950
    %v6983 = vmul.f32 %v6887, %v6951
    %v6984 = vmul.f32 %v6888, %v6952
    %v6985 = vmul.f32 %v6889, %v6953
    %v6986 = vmul.f32 %v6890, %v6954
    %v6987 = vmul.f32 %v6891, %v6955
    %v6988 = vmul.f32 %v6892, %v6956
    %v6989 = vmul.f32 %v6893, %v6957
    %v6990 = vmul.f32 %v6894, %v6958
    %v6991 = vmul.f32 %v6895, %v6959
    %v6992 = vmul.f32 %v6896, %v6960
    %v6993 = vmul.f32 %v6897, %v6961
    %v6994 = vmul.f32 %v6898, %v6962
    %v6995 = vmul.f32 %v6899, %v6963
    %v6996 = vmul.f32 %v6900, %v6964
    %v6997 = vmul.f32 %v6901, %v6965
    %v6998 = vmul.f32 %v6902, %v6966
    %v6999 = vmul.f32 %v6903, %v6967
    %v7000 = vmul.f32 %v6904, %v6968
    %v7001 = vmul.f32 %v6905, %v6969
    %v7002 = vmul.f32 %v6906, %v6970
    %v7003 = vmul.f32 %v6907, %v6971
    %v7004 = vmul.f32 %v6908, %v6972
    %v7005 = vmul.f32 %v6909, %v6973
    %v7006 = vmul.f32 %v6910, %v6974
    %v7007 = vmul.f32 %v6911, %v6975
    %v7008 = vmul.f32 %v6912, %v6976
    %v7009 = vmul.f32 %v6913, %v6977
    %v7010 = vmul.f32 %v6914, %v6978
    %v7011 = vmul.f32 %v6915, %v6979
    %v7012 = vmul.f32 %v6916, %v6980
    %v7013 = vmul.f32 %v6917, %v6981
    %v7014 = vmul.f32 %v6918, %v6982
    %v7015 = vld [vmem:[%s11 + $0x2] sm:$0x1]
    %v7016 = vlaneseq
    %v7017 = vshrl.u32 %v7016, 7
    %v7018 = vsub.s32 0, %v7017
    %v7019 = vrot.slane %v7015, %v7018
    %v7020 = vmul.f32 %v6983, %v7019
    %v7021 = vmul.f32 %v6984, %v7019
    %v7022 = vmul.f32 %v6985, %v7019
    %v7023 = vmul.f32 %v6986, %v7019
    %v7024 = vmul.f32 %v6987, %v7019
    %v7025 = vmul.f32 %v6988, %v7019
    %v7026 = vmul.f32 %v6989, %v7019
    %v7027 = vmul.f32 %v6990, %v7019
    %v7028 = vmul.f32 %v6991, %v7019
    %v7029 = vmul.f32 %v6992, %v7019
    %v7030 = vmul.f32 %v6993, %v7019
    %v7031 = vmul.f32 %v6994, %v7019
    %v7032 = vmul.f32 %v6995, %v7019
    %v7033 = vmul.f32 %v6996, %v7019
    %v7034 = vmul.f32 %v6997, %v7019
    %v7035 = vmul.f32 %v6998, %v7019
    %v7036 = vmul.f32 %v6999, %v7019
    %v7037 = vmul.f32 %v7000, %v7019
    %v7038 = vmul.f32 %v7001, %v7019
    %v7039 = vmul.f32 %v7002, %v7019
    %v7040 = vmul.f32 %v7003, %v7019
    %v7041 = vmul.f32 %v7004, %v7019
    %v7042 = vmul.f32 %v7005, %v7019
    %v7043 = vmul.f32 %v7006, %v7019
    %v7044 = vmul.f32 %v7007, %v7019
    %v7045 = vmul.f32 %v7008, %v7019
    %v7046 = vmul.f32 %v7009, %v7019
    %v7047 = vmul.f32 %v7010, %v7019
    %v7048 = vmul.f32 %v7011, %v7019
    %v7049 = vmul.f32 %v7012, %v7019
    %v7050 = vmul.f32 %v7013, %v7019
    %v7051 = vmul.f32 %v7014, %v7019
    %v7052 = vld [vmem:[%s12 + $0x2] sm:$0x1]
    %v7053 = vlaneseq
    %v7054 = vshrl.u32 %v7053, 7
    %v7055 = vsub.s32 0, %v7054
    %v7056 = vrot.slane %v7052, %v7055
    %v7057 = vadd.f32 %v7020, %v7056
    %v7058 = vadd.f32 %v7021, %v7056
    %v7059 = vadd.f32 %v7022, %v7056
    %v7060 = vadd.f32 %v7023, %v7056
    %v7061 = vadd.f32 %v7024, %v7056
    %v7062 = vadd.f32 %v7025, %v7056
    %v7063 = vadd.f32 %v7026, %v7056
    %v7064 = vadd.f32 %v7027, %v7056
    %v7065 = vadd.f32 %v7028, %v7056
    %v7066 = vadd.f32 %v7029, %v7056
    %v7067 = vadd.f32 %v7030, %v7056
    %v7068 = vadd.f32 %v7031, %v7056
    %v7069 = vadd.f32 %v7032, %v7056
    %v7070 = vadd.f32 %v7033, %v7056
    %v7071 = vadd.f32 %v7034, %v7056
    %v7072 = vadd.f32 %v7035, %v7056
    %v7073 = vadd.f32 %v7036, %v7056
    %v7074 = vadd.f32 %v7037, %v7056
    %v7075 = vadd.f32 %v7038, %v7056
    %v7076 = vadd.f32 %v7039, %v7056
    %v7077 = vadd.f32 %v7040, %v7056
    %v7078 = vadd.f32 %v7041, %v7056
    %v7079 = vadd.f32 %v7042, %v7056
    %v7080 = vadd.f32 %v7043, %v7056
    %v7081 = vadd.f32 %v7044, %v7056
    %v7082 = vadd.f32 %v7045, %v7056
    %v7083 = vadd.f32 %v7046, %v7056
    %v7084 = vadd.f32 %v7047, %v7056
    %v7085 = vadd.f32 %v7048, %v7056
    %v7086 = vadd.f32 %v7049, %v7056
    %v7087 = vadd.f32 %v7050, %v7056
    %v7088 = vadd.f32 %v7051, %v7056
    %v7089 = vmul.f32 %v7057, 0.5
    %v7090 = vmul.f32 %v7058, 0.5
    %v7091 = vmul.f32 %v7059, 0.5
    %v7092 = vmul.f32 %v7060, 0.5
    %v7093 = vmul.f32 %v7061, 0.5
    %v7094 = vmul.f32 %v7062, 0.5
    %v7095 = vmul.f32 %v7063, 0.5
    %v7096 = vmul.f32 %v7064, 0.5
    %v7097 = vmul.f32 %v7065, 0.5
    %v7098 = vmul.f32 %v7066, 0.5
    %v7099 = vmul.f32 %v7067, 0.5
    %v7100 = vmul.f32 %v7068, 0.5
    %v7101 = vmul.f32 %v7069, 0.5
    %v7102 = vmul.f32 %v7070, 0.5
    %v7103 = vmul.f32 %v7071, 0.5
    %v7104 = vmul.f32 %v7072, 0.5
    %v7105 = vmul.f32 %v7073, 0.5
    %v7106 = vmul.f32 %v7074, 0.5
    %v7107 = vmul.f32 %v7075, 0.5
    %v7108 = vmul.f32 %v7076, 0.5
    %v7109 = vmul.f32 %v7077, 0.5
    %v7110 = vmul.f32 %v7078, 0.5
    %v7111 = vmul.f32 %v7079, 0.5
    %v7112 = vmul.f32 %v7080, 0.5
    %v7113 = vmul.f32 %v7081, 0.5
    %v7114 = vmul.f32 %v7082, 0.5
    %v7115 = vmul.f32 %v7083, 0.5
    %v7116 = vmul.f32 %v7084, 0.5
    %v7117 = vmul.f32 %v7085, 0.5
    %v7118 = vmul.f32 %v7086, 0.5
    %v7119 = vmul.f32 %v7087, 0.5
    %v7120 = vmul.f32 %v7088, 0.5
    %v7121 = vtanh.pop %v7089
    %v7122 = vtanh.pop %v7090
    %v7123 = vtanh.pop %v7091
    %v7124 = vtanh.pop %v7092
    %v7125 = vtanh.pop %v7093
    %v7126 = vtanh.pop %v7094
    %v7127 = vtanh.pop %v7095
    %v7128 = vtanh.pop %v7096
    %v7129 = vtanh.pop %v7097
    %v7130 = vtanh.pop %v7098
    %v7131 = vtanh.pop %v7099
    %v7132 = vtanh.pop %v7100
    %v7133 = vtanh.pop %v7101
    %v7134 = vtanh.pop %v7102
    %v7135 = vtanh.pop %v7103
    %v7136 = vtanh.pop %v7104
    %v7137 = vtanh.pop %v7105
    %v7138 = vtanh.pop %v7106
    %v7139 = vtanh.pop %v7107
    %v7140 = vtanh.pop %v7108
    %v7141 = vtanh.pop %v7109
    %v7142 = vtanh.pop %v7110
    %v7143 = vtanh.pop %v7111
    %v7144 = vtanh.pop %v7112
    %v7145 = vtanh.pop %v7113
    %v7146 = vtanh.pop %v7114
    %v7147 = vtanh.pop %v7115
    %v7148 = vtanh.pop %v7116
    %v7149 = vtanh.pop %v7117
    %v7150 = vtanh.pop %v7118
    %v7151 = vtanh.pop %v7119
    %v7152 = vtanh.pop %v7120
    %v7153 = vmul.f32 %v7121, 0.5
    %v7154 = vmul.f32 %v7122, 0.5
    %v7155 = vmul.f32 %v7123, 0.5
    %v7156 = vmul.f32 %v7124, 0.5
    %v7157 = vmul.f32 %v7125, 0.5
    %v7158 = vmul.f32 %v7126, 0.5
    %v7159 = vmul.f32 %v7127, 0.5
    %v7160 = vmul.f32 %v7128, 0.5
    %v7161 = vmul.f32 %v7129, 0.5
    %v7162 = vmul.f32 %v7130, 0.5
    %v7163 = vmul.f32 %v7131, 0.5
    %v7164 = vmul.f32 %v7132, 0.5
    %v7165 = vmul.f32 %v7133, 0.5
    %v7166 = vmul.f32 %v7134, 0.5
    %v7167 = vmul.f32 %v7135, 0.5
    %v7168 = vmul.f32 %v7136, 0.5
    %v7169 = vmul.f32 %v7137, 0.5
    %v7170 = vmul.f32 %v7138, 0.5
    %v7171 = vmul.f32 %v7139, 0.5
    %v7172 = vmul.f32 %v7140, 0.5
    %v7173 = vmul.f32 %v7141, 0.5
    %v7174 = vmul.f32 %v7142, 0.5
    %v7175 = vmul.f32 %v7143, 0.5
    %v7176 = vmul.f32 %v7144, 0.5
    %v7177 = vmul.f32 %v7145, 0.5
    %v7178 = vmul.f32 %v7146, 0.5
    %v7179 = vmul.f32 %v7147, 0.5
    %v7180 = vmul.f32 %v7148, 0.5
    %v7181 = vmul.f32 %v7149, 0.5
    %v7182 = vmul.f32 %v7150, 0.5
    %v7183 = vmul.f32 %v7151, 0.5
    %v7184 = vmul.f32 %v7152, 0.5
    %v7185 = vadd.f32 %v7153, 0.5
    %v7186 = vadd.f32 %v7154, 0.5
    %v7187 = vadd.f32 %v7155, 0.5
    %v7188 = vadd.f32 %v7156, 0.5
    %v7189 = vadd.f32 %v7157, 0.5
    %v7190 = vadd.f32 %v7158, 0.5
    %v7191 = vadd.f32 %v7159, 0.5
    %v7192 = vadd.f32 %v7160, 0.5
    %v7193 = vadd.f32 %v7161, 0.5
    %v7194 = vadd.f32 %v7162, 0.5
    %v7195 = vadd.f32 %v7163, 0.5
    %v7196 = vadd.f32 %v7164, 0.5
    %v7197 = vadd.f32 %v7165, 0.5
    %v7198 = vadd.f32 %v7166, 0.5
    %v7199 = vadd.f32 %v7167, 0.5
    %v7200 = vadd.f32 %v7168, 0.5
    %v7201 = vadd.f32 %v7169, 0.5
    %v7202 = vadd.f32 %v7170, 0.5
    %v7203 = vadd.f32 %v7171, 0.5
    %v7204 = vadd.f32 %v7172, 0.5
    %v7205 = vadd.f32 %v7173, 0.5
    %v7206 = vadd.f32 %v7174, 0.5
    %v7207 = vadd.f32 %v7175, 0.5
    %v7208 = vadd.f32 %v7176, 0.5
    %v7209 = vadd.f32 %v7177, 0.5
    %v7210 = vadd.f32 %v7178, 0.5
    %v7211 = vadd.f32 %v7179, 0.5
    %v7212 = vadd.f32 %v7180, 0.5
    %v7213 = vadd.f32 %v7181, 0.5
    %v7214 = vadd.f32 %v7182, 0.5
    %v7215 = vadd.f32 %v7183, 0.5
    %v7216 = vadd.f32 %v7184, 0.5
    %v7217 = vmul.f32 %v7057, %v7185
    %v7218 = vmul.f32 %v7058, %v7186
    %v7219 = vmul.f32 %v7059, %v7187
    %v7220 = vmul.f32 %v7060, %v7188
    %v7221 = vmul.f32 %v7061, %v7189
    %v7222 = vmul.f32 %v7062, %v7190
    %v7223 = vmul.f32 %v7063, %v7191
    %v7224 = vmul.f32 %v7064, %v7192
    %v7225 = vmul.f32 %v7065, %v7193
    %v7226 = vmul.f32 %v7066, %v7194
    %v7227 = vmul.f32 %v7067, %v7195
    %v7228 = vmul.f32 %v7068, %v7196
    %v7229 = vmul.f32 %v7069, %v7197
    %v7230 = vmul.f32 %v7070, %v7198
    %v7231 = vmul.f32 %v7071, %v7199
    %v7232 = vmul.f32 %v7072, %v7200
    %v7233 = vmul.f32 %v7073, %v7201
    %v7234 = vmul.f32 %v7074, %v7202
    %v7235 = vmul.f32 %v7075, %v7203
    %v7236 = vmul.f32 %v7076, %v7204
    %v7237 = vmul.f32 %v7077, %v7205
    %v7238 = vmul.f32 %v7078, %v7206
    %v7239 = vmul.f32 %v7079, %v7207
    %v7240 = vmul.f32 %v7080, %v7208
    %v7241 = vmul.f32 %v7081, %v7209
    %v7242 = vmul.f32 %v7082, %v7210
    %v7243 = vmul.f32 %v7083, %v7211
    %v7244 = vmul.f32 %v7084, %v7212
    %v7245 = vmul.f32 %v7085, %v7213
    %v7246 = vmul.f32 %v7086, %v7214
    %v7247 = vmul.f32 %v7087, %v7215
    %v7248 = vmul.f32 %v7088, %v7216
    %v7249 = vpack.c.bf16 %v7218, %v7217
    %v7250 = vpack.c.bf16 %v7220, %v7219
    %v7251 = vpack.c.bf16 %v7222, %v7221
    %v7252 = vpack.c.bf16 %v7224, %v7223
    %v7253 = vpack.c.bf16 %v7226, %v7225
    %v7254 = vpack.c.bf16 %v7228, %v7227
    %v7255 = vpack.c.bf16 %v7230, %v7229
    %v7256 = vpack.c.bf16 %v7232, %v7231
    %v7257 = vpack.c.bf16 %v7234, %v7233
    %v7258 = vpack.c.bf16 %v7236, %v7235
    %v7259 = vpack.c.bf16 %v7238, %v7237
    %v7260 = vpack.c.bf16 %v7240, %v7239
    %v7261 = vpack.c.bf16 %v7242, %v7241
    %v7262 = vpack.c.bf16 %v7244, %v7243
    %v7263 = vpack.c.bf16 %v7246, %v7245
    %v7264 = vpack.c.bf16 %v7248, %v7247
    %s7265 = scalar_lea.vmem [#allocation2], 256
    %v7266 = vld [vmem:[%s7265] sm:$0xff]
    %v7267 = vld [vmem:[%s7265 + $0x8] sm:$0xff]
    %v7268 = vld [vmem:[%s7265 + $0x10] sm:$0xff]
    %v7269 = vld [vmem:[%s7265 + $0x18] sm:$0xff]
    %v7270 = vld [vmem:[%s7265 + $0x20] sm:$0xff]
    %v7271 = vld [vmem:[%s7265 + $0x28] sm:$0xff]
    %v7272 = vld [vmem:[%s7265 + $0x30] sm:$0xff]
    %v7273 = vld [vmem:[%s7265 + $0x38] sm:$0xff]
    %v7274 = vld [vmem:[%s7265 + $0x40] sm:$0xff]
    %v7275 = vld [vmem:[%s7265 + $0x48] sm:$0xff]
    %v7276 = vld [vmem:[%s7265 + $0x50] sm:$0xff]
    %v7277 = vld [vmem:[%s7265 + $0x58] sm:$0xff]
    %v7278 = vld [vmem:[%s7265 + $0x60] sm:$0xff]
    %v7279 = vld [vmem:[%s7265 + $0x68] sm:$0xff]
    %v7280 = vld [vmem:[%s7265 + $0x70] sm:$0xff]
    %v7281 = vld [vmem:[%s7265 + $0x78] sm:$0xff]
    %v7298 = vunpack.c.l.b16 %v7266
    %v7299 = vunpack.c.h.b16 %v7266
    %v7300 = vunpack.c.l.b16 %v7267
    %v7301 = vunpack.c.h.b16 %v7267
    %v7302 = vunpack.c.l.b16 %v7268
    %v7303 = vunpack.c.h.b16 %v7268
    %v7304 = vunpack.c.l.b16 %v7269
    %v7305 = vunpack.c.h.b16 %v7269
    %v7306 = vunpack.c.l.b16 %v7270
    %v7307 = vunpack.c.h.b16 %v7270
    %v7308 = vunpack.c.l.b16 %v7271
    %v7309 = vunpack.c.h.b16 %v7271
    %v7310 = vunpack.c.l.b16 %v7272
    %v7311 = vunpack.c.h.b16 %v7272
    %v7312 = vunpack.c.l.b16 %v7273
    %v7313 = vunpack.c.h.b16 %v7273
    %v7314 = vunpack.c.l.b16 %v7274
    %v7315 = vunpack.c.h.b16 %v7274
    %v7316 = vunpack.c.l.b16 %v7275
    %v7317 = vunpack.c.h.b16 %v7275
    %v7318 = vunpack.c.l.b16 %v7276
    %v7319 = vunpack.c.h.b16 %v7276
    %v7320 = vunpack.c.l.b16 %v7277
    %v7321 = vunpack.c.h.b16 %v7277
    %v7322 = vunpack.c.l.b16 %v7278
    %v7323 = vunpack.c.h.b16 %v7278
    %v7324 = vunpack.c.l.b16 %v7279
    %v7325 = vunpack.c.h.b16 %v7279
    %v7326 = vunpack.c.l.b16 %v7280
    %v7327 = vunpack.c.h.b16 %v7280
    %v7328 = vunpack.c.l.b16 %v7281
    %v7329 = vunpack.c.h.b16 %v7281
    %v7330 = vpack.c.b16 %v7300, %v7298
    %v7331 = vpack.c.b16 %v7301, %v7299
    %v7332 = vpack.c.b16 %v7304, %v7302
    %v7333 = vpack.c.b16 %v7305, %v7303
    %v7334 = vpack.c.b16 %v7308, %v7306
    %v7335 = vpack.c.b16 %v7309, %v7307
    %v7336 = vpack.c.b16 %v7312, %v7310
    %v7337 = vpack.c.b16 %v7313, %v7311
    %v7338 = vpack.c.b16 %v7316, %v7314
    %v7339 = vpack.c.b16 %v7317, %v7315
    %v7340 = vpack.c.b16 %v7320, %v7318
    %v7341 = vpack.c.b16 %v7321, %v7319
    %v7342 = vpack.c.b16 %v7324, %v7322
    %v7343 = vpack.c.b16 %v7325, %v7323
    %v7344 = vpack.c.b16 %v7328, %v7326
    %v7345 = vpack.c.b16 %v7329, %v7327
    %7362 = vmatprep.subr.bf16.mxu0 %v7345
    %7363 = vmatpush1.bf16.msra.mxu0 %v7344
    %7364 = vmatprep.subr.bf16.mxu0 %v7343
    %7365 = vmatpush1.bf16.msra.mxu0 %v7342
    %7366 = vmatprep.subr.bf16.mxu0 %v7341
    %7367 = vmatpush1.bf16.msra.mxu0 %v7340
    %7368 = vmatprep.subr.bf16.mxu0 %v7339
    %7369 = vmatpush1.bf16.msra.mxu0 %v7338
    %7370 = vmatprep.subr.bf16.mxu0 %v7337
    %7371 = vmatpush1.bf16.msra.mxu0 %v7336
    %7372 = vmatprep.subr.bf16.mxu0 %v7335
    %7373 = vmatpush1.bf16.msra.mxu0 %v7334
    %7374 = vmatprep.subr.bf16.mxu0 %v7333
    %7375 = vmatpush1.bf16.msra.mxu0 %v7332
    %7376 = vmatprep.subr.bf16.mxu0 %v7331
    %7377 = vmatpush1.bf16.msra.mxu0 %v7330
    %7378 = vmatprep.subr.bf16.mxu0 0
    %7379 = vmatpush2.bf16.msra.mxu0 0
    %7380 = vmatprep.subr.bf16.mxu0 0
    %7381 = vmatpush2.bf16.msra.mxu0 0
    %7382 = vmatprep.subr.bf16.mxu0 0
    %7383 = vmatpush2.bf16.msra.mxu0 0
    %7384 = vmatprep.subr.bf16.mxu0 0
    %7385 = vmatpush2.bf16.msra.mxu0 0
    %7386 = vmatprep.subr.bf16.mxu0 0
    %7387 = vmatpush2.bf16.msra.mxu0 0
    %7388 = vmatprep.subr.bf16.mxu0 0
    %7389 = vmatpush2.bf16.msra.mxu0 0
    %7390 = vmatprep.subr.bf16.mxu0 0
    %7391 = vmatpush2.bf16.msra.mxu0 0
    %7392 = vmatprep.subr.bf16.mxu0 0
    %7393 = vmatpush2.bf16.msra.mxu0 0
    %7394 = vmatprep.mubr.bf16.mxu0 0
    %7395 = vmatmul.mubr.bf16.gmra.mxu0 %v7249
    %v7396 = vpop.f32.mrf.mxu0
    %v7397 = vadd.f32 %v1230, %v7396
    %v7398 = vpop.f32.mrf.mxu0
    %v7399 = vadd.f32 %v1232, %v7398
    %v7400 = vpop.f32.mrf.mxu0
    %v7401 = vadd.f32 %v1234, %v7400
    %v7402 = vpop.f32.mrf.mxu0
    %v7403 = vadd.f32 %v1236, %v7402
    %7404 = vmatprep.mubr.bf16.mxu0 0
    %7405 = vmatmul.mubr.bf16.gmra.mxu0 %v7250
    %v7406 = vpop.f32.mrf.mxu0
    %v7407 = vadd.f32 %v1240, %v7406
    %v7408 = vpop.f32.mrf.mxu0
    %v7409 = vadd.f32 %v1242, %v7408
    %v7410 = vpop.f32.mrf.mxu0
    %v7411 = vadd.f32 %v1244, %v7410
    %v7412 = vpop.f32.mrf.mxu0
    %v7413 = vadd.f32 %v1246, %v7412
    %7414 = vmatprep.mubr.bf16.mxu0 0
    %7415 = vmatmul.mubr.bf16.gmra.mxu0 %v7251
    %v7416 = vpop.f32.mrf.mxu0
    %v7417 = vadd.f32 %v1250, %v7416
    %v7418 = vpop.f32.mrf.mxu0
    %v7419 = vadd.f32 %v1252, %v7418
    %v7420 = vpop.f32.mrf.mxu0
    %v7421 = vadd.f32 %v1254, %v7420
    %v7422 = vpop.f32.mrf.mxu0
    %v7423 = vadd.f32 %v1256, %v7422
    %7424 = vmatprep.mubr.bf16.mxu0 0
    %7425 = vmatmul.mubr.bf16.gmra.mxu0 %v7252
    %v7426 = vpop.f32.mrf.mxu0
    %v7427 = vadd.f32 %v1260, %v7426
    %v7428 = vpop.f32.mrf.mxu0
    %v7429 = vadd.f32 %v1262, %v7428
    %v7430 = vpop.f32.mrf.mxu0
    %v7431 = vadd.f32 %v1264, %v7430
    %v7432 = vpop.f32.mrf.mxu0
    %v7433 = vadd.f32 %v1266, %v7432
    %7434 = vmatprep.mubr.bf16.mxu0 0
    %7435 = vmatmul.mubr.bf16.gmra.mxu0 %v7253
    %v7436 = vpop.f32.mrf.mxu0
    %v7437 = vadd.f32 %v1270, %v7436
    %v7438 = vpop.f32.mrf.mxu0
    %v7439 = vadd.f32 %v1272, %v7438
    %v7440 = vpop.f32.mrf.mxu0
    %v7441 = vadd.f32 %v1274, %v7440
    %v7442 = vpop.f32.mrf.mxu0
    %v7443 = vadd.f32 %v1276, %v7442
    %7444 = vmatprep.mubr.bf16.mxu0 0
    %7445 = vmatmul.mubr.bf16.gmra.mxu0 %v7254
    %v7446 = vpop.f32.mrf.mxu0
    %v7447 = vadd.f32 %v1280, %v7446
    %v7448 = vpop.f32.mrf.mxu0
    %v7449 = vadd.f32 %v1282, %v7448
    %v7450 = vpop.f32.mrf.mxu0
    %v7451 = vadd.f32 %v1284, %v7450
    %v7452 = vpop.f32.mrf.mxu0
    %v7453 = vadd.f32 %v1286, %v7452
    %7454 = vmatprep.mubr.bf16.mxu0 0
    %7455 = vmatmul.mubr.bf16.gmra.mxu0 %v7255
    %v7456 = vpop.f32.mrf.mxu0
    %v7457 = vadd.f32 %v1290, %v7456
    %v7458 = vpop.f32.mrf.mxu0
    %v7459 = vadd.f32 %v1292, %v7458
    %v7460 = vpop.f32.mrf.mxu0
    %v7461 = vadd.f32 %v1294, %v7460
    %v7462 = vpop.f32.mrf.mxu0
    %v7463 = vadd.f32 %v1296, %v7462
    %7464 = vmatprep.mubr.bf16.mxu0 0
    %7465 = vmatmul.mubr.bf16.gmra.mxu0 %v7256
    %v7466 = vpop.f32.mrf.mxu0
    %v7467 = vadd.f32 %v1300, %v7466
    %v7468 = vpop.f32.mrf.mxu0
    %v7469 = vadd.f32 %v1302, %v7468
    %v7470 = vpop.f32.mrf.mxu0
    %v7471 = vadd.f32 %v1304, %v7470
    %v7472 = vpop.f32.mrf.mxu0
    %v7473 = vadd.f32 %v1306, %v7472
    %7474 = vmatprep.mubr.bf16.mxu0 0
    %7475 = vmatmul.mubr.bf16.gmra.mxu0 %v7257
    %v7476 = vpop.f32.mrf.mxu0
    %v7477 = vadd.f32 %v1310, %v7476
    %v7478 = vpop.f32.mrf.mxu0
    %v7479 = vadd.f32 %v1312, %v7478
    %v7480 = vpop.f32.mrf.mxu0
    %v7481 = vadd.f32 %v1314, %v7480
    %v7482 = vpop.f32.mrf.mxu0
    %v7483 = vadd.f32 %v1316, %v7482
    %7484 = vmatprep.mubr.bf16.mxu0 0
    %7485 = vmatmul.mubr.bf16.gmra.mxu0 %v7258
    %v7486 = vpop.f32.mrf.mxu0
    %v7487 = vadd.f32 %v1320, %v7486
    %v7488 = vpop.f32.mrf.mxu0
    %v7489 = vadd.f32 %v1322, %v7488
    %v7490 = vpop.f32.mrf.mxu0
    %v7491 = vadd.f32 %v1324, %v7490
    %v7492 = vpop.f32.mrf.mxu0
    %v7493 = vadd.f32 %v1326, %v7492
    %7494 = vmatprep.mubr.bf16.mxu0 0
    %7495 = vmatmul.mubr.bf16.gmra.mxu0 %v7259
    %v7496 = vpop.f32.mrf.mxu0
    %v7497 = vadd.f32 %v1330, %v7496
    %v7498 = vpop.f32.mrf.mxu0
    %v7499 = vadd.f32 %v1332, %v7498
    %v7500 = vpop.f32.mrf.mxu0
    %v7501 = vadd.f32 %v1334, %v7500
    %v7502 = vpop.f32.mrf.mxu0
    %v7503 = vadd.f32 %v1336, %v7502
    %7504 = vmatprep.mubr.bf16.mxu0 0
    %7505 = vmatmul.mubr.bf16.gmra.mxu0 %v7260
    %v7506 = vpop.f32.mrf.mxu0
    %v7507 = vadd.f32 %v1340, %v7506
    %v7508 = vpop.f32.mrf.mxu0
    %v7509 = vadd.f32 %v1342, %v7508
    %v7510 = vpop.f32.mrf.mxu0
    %v7511 = vadd.f32 %v1344, %v7510
    %v7512 = vpop.f32.mrf.mxu0
    %v7513 = vadd.f32 %v1346, %v7512
    %7514 = vmatprep.mubr.bf16.mxu0 0
    %7515 = vmatmul.mubr.bf16.gmra.mxu0 %v7261
    %v7516 = vpop.f32.mrf.mxu0
    %v7517 = vadd.f32 %v1350, %v7516
    %v7518 = vpop.f32.mrf.mxu0
    %v7519 = vadd.f32 %v1352, %v7518
    %v7520 = vpop.f32.mrf.mxu0
    %v7521 = vadd.f32 %v1354, %v7520
    %v7522 = vpop.f32.mrf.mxu0
    %v7523 = vadd.f32 %v1356, %v7522
    %7524 = vmatprep.mubr.bf16.mxu0 0
    %7525 = vmatmul.mubr.bf16.gmra.mxu0 %v7262
    %v7526 = vpop.f32.mrf.mxu0
    %v7527 = vadd.f32 %v1360, %v7526
    %v7528 = vpop.f32.mrf.mxu0
    %v7529 = vadd.f32 %v1362, %v7528
    %v7530 = vpop.f32.mrf.mxu0
    %v7531 = vadd.f32 %v1364, %v7530
    %v7532 = vpop.f32.mrf.mxu0
    %v7533 = vadd.f32 %v1366, %v7532
    %7534 = vmatprep.mubr.bf16.mxu0 0
    %7535 = vmatmul.mubr.bf16.gmra.mxu0 %v7263
    %v7536 = vpop.f32.mrf.mxu0
    %v7537 = vadd.f32 %v1370, %v7536
    %v7538 = vpop.f32.mrf.mxu0
    %v7539 = vadd.f32 %v1372, %v7538
    %v7540 = vpop.f32.mrf.mxu0
    %v7541 = vadd.f32 %v1374, %v7540
    %v7542 = vpop.f32.mrf.mxu0
    %v7543 = vadd.f32 %v1376, %v7542
    %7544 = vmatprep.mubr.bf16.mxu0 0
    %7545 = vmatmul.mubr.bf16.gmra.mxu0 %v7264
    %v7546 = vpop.f32.mrf.mxu0
    %v7547 = vadd.f32 %v1380, %v7546
    %v7548 = vpop.f32.mrf.mxu0
    %v7549 = vadd.f32 %v1382, %v7548
    %v7550 = vpop.f32.mrf.mxu0
    %v7551 = vadd.f32 %v1384, %v7550
    %v7552 = vpop.f32.mrf.mxu0
    %v7553 = vadd.f32 %v1386, %v7552
    %7554 = vdwg.mxu0
    %s7555 = scalar_lea.vmem %s6, 2
    %v7556 = vld [vmem:[%s7555] ss:$4 sm:$0x3]
    %v7558 = vlaneseq
    %v7559 = vshrl.u32 %v7558, 7
    %v7560 = vsub.s32 0, %v7559
    %v7561 = vrot.slane %v7556, %v7560
    %v7562 = vlaneseq
    %v7563 = vshrl.u32 %v7562, 7
    %v7564 = vsub.s32 1, %v7563
    %v7565 = vrot.slane %v7556, %v7564
    %v7568 = vadd.f32 %v7397, %v7561
    %v7569 = vadd.f32 %v7399, %v7565
    %v7570 = vadd.f32 %v7401, %v7561
    %v7571 = vadd.f32 %v7403, %v7565
    %v7572 = vadd.f32 %v7407, %v7561
    %v7573 = vadd.f32 %v7409, %v7565
    %v7574 = vadd.f32 %v7411, %v7561
    %v7575 = vadd.f32 %v7413, %v7565
    %v7576 = vadd.f32 %v7417, %v7561
    %v7577 = vadd.f32 %v7419, %v7565
    %v7578 = vadd.f32 %v7421, %v7561
    %v7579 = vadd.f32 %v7423, %v7565
    %v7580 = vadd.f32 %v7427, %v7561
    %v7581 = vadd.f32 %v7429, %v7565
    %v7582 = vadd.f32 %v7431, %v7561
    %v7583 = vadd.f32 %v7433, %v7565
    %v7584 = vadd.f32 %v7437, %v7561
    %v7585 = vadd.f32 %v7439, %v7565
    %v7586 = vadd.f32 %v7441, %v7561
    %v7587 = vadd.f32 %v7443, %v7565
    %v7588 = vadd.f32 %v7447, %v7561
    %v7589 = vadd.f32 %v7449, %v7565
    %v7590 = vadd.f32 %v7451, %v7561
    %v7591 = vadd.f32 %v7453, %v7565
    %v7592 = vadd.f32 %v7457, %v7561
    %v7593 = vadd.f32 %v7459, %v7565
    %v7594 = vadd.f32 %v7461, %v7561
    %v7595 = vadd.f32 %v7463, %v7565
    %v7596 = vadd.f32 %v7467, %v7561
    %v7597 = vadd.f32 %v7469, %v7565
    %v7598 = vadd.f32 %v7471, %v7561
    %v7599 = vadd.f32 %v7473, %v7565
    %v7600 = vadd.f32 %v7477, %v7561
    %v7601 = vadd.f32 %v7479, %v7565
    %v7602 = vadd.f32 %v7481, %v7561
    %v7603 = vadd.f32 %v7483, %v7565
    %v7604 = vadd.f32 %v7487, %v7561
    %v7605 = vadd.f32 %v7489, %v7565
    %v7606 = vadd.f32 %v7491, %v7561
    %v7607 = vadd.f32 %v7493, %v7565
    %v7608 = vadd.f32 %v7497, %v7561
    %v7609 = vadd.f32 %v7499, %v7565
    %v7610 = vadd.f32 %v7501, %v7561
    %v7611 = vadd.f32 %v7503, %v7565
    %v7612 = vadd.f32 %v7507, %v7561
    %v7613 = vadd.f32 %v7509, %v7565
    %v7614 = vadd.f32 %v7511, %v7561
    %v7615 = vadd.f32 %v7513, %v7565
    %v7616 = vadd.f32 %v7517, %v7561
    %v7617 = vadd.f32 %v7519, %v7565
    %v7618 = vadd.f32 %v7521, %v7561
    %v7619 = vadd.f32 %v7523, %v7565
    %v7620 = vadd.f32 %v7527, %v7561
    %v7621 = vadd.f32 %v7529, %v7565
    %v7622 = vadd.f32 %v7531, %v7561
    %v7623 = vadd.f32 %v7533, %v7565
    %v7624 = vadd.f32 %v7537, %v7561
    %v7625 = vadd.f32 %v7539, %v7565
    %v7626 = vadd.f32 %v7541, %v7561
    %v7627 = vadd.f32 %v7543, %v7565
    %v7628 = vadd.f32 %v7547, %v7561
    %v7629 = vadd.f32 %v7549, %v7565
    %v7630 = vadd.f32 %v7551, %v7561
    %v7631 = vadd.f32 %v7553, %v7565
    %v7632 = vmul.f32 %v7568, 0.5
    %v7633 = vmul.f32 %v7569, 0.5
    %v7634 = vmul.f32 %v7570, 0.5
    %v7635 = vmul.f32 %v7571, 0.5
    %v7636 = vmul.f32 %v7572, 0.5
    %v7637 = vmul.f32 %v7573, 0.5
    %v7638 = vmul.f32 %v7574, 0.5
    %v7639 = vmul.f32 %v7575, 0.5
    %v7640 = vmul.f32 %v7576, 0.5
    %v7641 = vmul.f32 %v7577, 0.5
    %v7642 = vmul.f32 %v7578, 0.5
    %v7643 = vmul.f32 %v7579, 0.5
    %v7644 = vmul.f32 %v7580, 0.5
    %v7645 = vmul.f32 %v7581, 0.5
    %v7646 = vmul.f32 %v7582, 0.5
    %v7647 = vmul.f32 %v7583, 0.5
    %v7648 = vmul.f32 %v7584, 0.5
    %v7649 = vmul.f32 %v7585, 0.5
    %v7650 = vmul.f32 %v7586, 0.5
    %v7651 = vmul.f32 %v7587, 0.5
    %v7652 = vmul.f32 %v7588, 0.5
    %v7653 = vmul.f32 %v7589, 0.5
    %v7654 = vmul.f32 %v7590, 0.5
    %v7655 = vmul.f32 %v7591, 0.5
    %v7656 = vmul.f32 %v7592, 0.5
    %v7657 = vmul.f32 %v7593, 0.5
    %v7658 = vmul.f32 %v7594, 0.5
    %v7659 = vmul.f32 %v7595, 0.5
    %v7660 = vmul.f32 %v7596, 0.5
    %v7661 = vmul.f32 %v7597, 0.5
    %v7662 = vmul.f32 %v7598, 0.5
    %v7663 = vmul.f32 %v7599, 0.5
    %v7664 = vmul.f32 %v7600, 0.5
    %v7665 = vmul.f32 %v7601, 0.5
    %v7666 = vmul.f32 %v7602, 0.5
    %v7667 = vmul.f32 %v7603, 0.5
    %v7668 = vmul.f32 %v7604, 0.5
    %v7669 = vmul.f32 %v7605, 0.5
    %v7670 = vmul.f32 %v7606, 0.5
    %v7671 = vmul.f32 %v7607, 0.5
    %v7672 = vmul.f32 %v7608, 0.5
    %v7673 = vmul.f32 %v7609, 0.5
    %v7674 = vmul.f32 %v7610, 0.5
    %v7675 = vmul.f32 %v7611, 0.5
    %v7676 = vmul.f32 %v7612, 0.5
    %v7677 = vmul.f32 %v7613, 0.5
    %v7678 = vmul.f32 %v7614, 0.5
    %v7679 = vmul.f32 %v7615, 0.5
    %v7680 = vmul.f32 %v7616, 0.5
    %v7681 = vmul.f32 %v7617, 0.5
    %v7682 = vmul.f32 %v7618, 0.5
    %v7683 = vmul.f32 %v7619, 0.5
    %v7684 = vmul.f32 %v7620, 0.5
    %v7685 = vmul.f32 %v7621, 0.5
    %v7686 = vmul.f32 %v7622, 0.5
    %v7687 = vmul.f32 %v7623, 0.5
    %v7688 = vmul.f32 %v7624, 0.5
    %v7689 = vmul.f32 %v7625, 0.5
    %v7690 = vmul.f32 %v7626, 0.5
    %v7691 = vmul.f32 %v7627, 0.5
    %v7692 = vmul.f32 %v7628, 0.5
    %v7693 = vmul.f32 %v7629, 0.5
    %v7694 = vmul.f32 %v7630, 0.5
    %v7695 = vmul.f32 %v7631, 0.5
    %v7696 = vtanh.pop %v7632
    %v7697 = vtanh.pop %v7633
    %v7698 = vtanh.pop %v7634
    %v7699 = vtanh.pop %v7635
    %v7700 = vtanh.pop %v7636
    %v7701 = vtanh.pop %v7637
    %v7702 = vtanh.pop %v7638
    %v7703 = vtanh.pop %v7639
    %v7704 = vtanh.pop %v7640
    %v7705 = vtanh.pop %v7641
    %v7706 = vtanh.pop %v7642
    %v7707 = vtanh.pop %v7643
    %v7708 = vtanh.pop %v7644
    %v7709 = vtanh.pop %v7645
    %v7710 = vtanh.pop %v7646
    %v7711 = vtanh.pop %v7647
    %v7712 = vtanh.pop %v7648
    %v7713 = vtanh.pop %v7649
    %v7714 = vtanh.pop %v7650
    %v7715 = vtanh.pop %v7651
    %v7716 = vtanh.pop %v7652
    %v7717 = vtanh.pop %v7653
    %v7718 = vtanh.pop %v7654
    %v7719 = vtanh.pop %v7655
    %v7720 = vtanh.pop %v7656
    %v7721 = vtanh.pop %v7657
    %v7722 = vtanh.pop %v7658
    %v7723 = vtanh.pop %v7659
    %v7724 = vtanh.pop %v7660
    %v7725 = vtanh.pop %v7661
    %v7726 = vtanh.pop %v7662
    %v7727 = vtanh.pop %v7663
    %v7728 = vtanh.pop %v7664
    %v7729 = vtanh.pop %v7665
    %v7730 = vtanh.pop %v7666
    %v7731 = vtanh.pop %v7667
    %v7732 = vtanh.pop %v7668
    %v7733 = vtanh.pop %v7669
    %v7734 = vtanh.pop %v7670
    %v7735 = vtanh.pop %v7671
    %v7736 = vtanh.pop %v7672
    %v7737 = vtanh.pop %v7673
    %v7738 = vtanh.pop %v7674
    %v7739 = vtanh.pop %v7675
    %v7740 = vtanh.pop %v7676
    %v7741 = vtanh.pop %v7677
    %v7742 = vtanh.pop %v7678
    %v7743 = vtanh.pop %v7679
    %v7744 = vtanh.pop %v7680
    %v7745 = vtanh.pop %v7681
    %v7746 = vtanh.pop %v7682
    %v7747 = vtanh.pop %v7683
    %v7748 = vtanh.pop %v7684
    %v7749 = vtanh.pop %v7685
    %v7750 = vtanh.pop %v7686
    %v7751 = vtanh.pop %v7687
    %v7752 = vtanh.pop %v7688
    %v7753 = vtanh.pop %v7689
    %v7754 = vtanh.pop %v7690
    %v7755 = vtanh.pop %v7691
    %v7756 = vtanh.pop %v7692
    %v7757 = vtanh.pop %v7693
    %v7758 = vtanh.pop %v7694
    %v7759 = vtanh.pop %v7695
    %v7760 = vmul.f32 %v7696, 0.5
    %v7761 = vmul.f32 %v7697, 0.5
    %v7762 = vmul.f32 %v7698, 0.5
    %v7763 = vmul.f32 %v7699, 0.5
    %v7764 = vmul.f32 %v7700, 0.5
    %v7765 = vmul.f32 %v7701, 0.5
    %v7766 = vmul.f32 %v7702, 0.5
    %v7767 = vmul.f32 %v7703, 0.5
    %v7768 = vmul.f32 %v7704, 0.5
    %v7769 = vmul.f32 %v7705, 0.5
    %v7770 = vmul.f32 %v7706, 0.5
    %v7771 = vmul.f32 %v7707, 0.5
    %v7772 = vmul.f32 %v7708, 0.5
    %v7773 = vmul.f32 %v7709, 0.5
    %v7774 = vmul.f32 %v7710, 0.5
    %v7775 = vmul.f32 %v7711, 0.5
    %v7776 = vmul.f32 %v7712, 0.5
    %v7777 = vmul.f32 %v7713, 0.5
    %v7778 = vmul.f32 %v7714, 0.5
    %v7779 = vmul.f32 %v7715, 0.5
    %v7780 = vmul.f32 %v7716, 0.5
    %v7781 = vmul.f32 %v7717, 0.5
    %v7782 = vmul.f32 %v7718, 0.5
    %v7783 = vmul.f32 %v7719, 0.5
    %v7784 = vmul.f32 %v7720, 0.5
    %v7785 = vmul.f32 %v7721, 0.5
    %v7786 = vmul.f32 %v7722, 0.5
    %v7787 = vmul.f32 %v7723, 0.5
    %v7788 = vmul.f32 %v7724, 0.5
    %v7789 = vmul.f32 %v7725, 0.5
    %v7790 = vmul.f32 %v7726, 0.5
    %v7791 = vmul.f32 %v7727, 0.5
    %v7792 = vmul.f32 %v7728, 0.5
    %v7793 = vmul.f32 %v7729, 0.5
    %v7794 = vmul.f32 %v7730, 0.5
    %v7795 = vmul.f32 %v7731, 0.5
    %v7796 = vmul.f32 %v7732, 0.5
    %v7797 = vmul.f32 %v7733, 0.5
    %v7798 = vmul.f32 %v7734, 0.5
    %v7799 = vmul.f32 %v7735, 0.5
    %v7800 = vmul.f32 %v7736, 0.5
    %v7801 = vmul.f32 %v7737, 0.5
    %v7802 = vmul.f32 %v7738, 0.5
    %v7803 = vmul.f32 %v7739, 0.5
    %v7804 = vmul.f32 %v7740, 0.5
    %v7805 = vmul.f32 %v7741, 0.5
    %v7806 = vmul.f32 %v7742, 0.5
    %v7807 = vmul.f32 %v7743, 0.5
    %v7808 = vmul.f32 %v7744, 0.5
    %v7809 = vmul.f32 %v7745, 0.5
    %v7810 = vmul.f32 %v7746, 0.5
    %v7811 = vmul.f32 %v7747, 0.5
    %v7812 = vmul.f32 %v7748, 0.5
    %v7813 = vmul.f32 %v7749, 0.5
    %v7814 = vmul.f32 %v7750, 0.5
    %v7815 = vmul.f32 %v7751, 0.5
    %v7816 = vmul.f32 %v7752, 0.5
    %v7817 = vmul.f32 %v7753, 0.5
    %v7818 = vmul.f32 %v7754, 0.5
    %v7819 = vmul.f32 %v7755, 0.5
    %v7820 = vmul.f32 %v7756, 0.5
    %v7821 = vmul.f32 %v7757, 0.5
    %v7822 = vmul.f32 %v7758, 0.5
    %v7823 = vmul.f32 %v7759, 0.5
    %v7824 = vadd.f32 %v7760, 0.5
    %v7825 = vadd.f32 %v7761, 0.5
    %v7826 = vadd.f32 %v7762, 0.5
    %v7827 = vadd.f32 %v7763, 0.5
    %v7828 = vadd.f32 %v7764, 0.5
    %v7829 = vadd.f32 %v7765, 0.5
    %v7830 = vadd.f32 %v7766, 0.5
    %v7831 = vadd.f32 %v7767, 0.5
    %v7832 = vadd.f32 %v7768, 0.5
    %v7833 = vadd.f32 %v7769, 0.5
    %v7834 = vadd.f32 %v7770, 0.5
    %v7835 = vadd.f32 %v7771, 0.5
    %v7836 = vadd.f32 %v7772, 0.5
    %v7837 = vadd.f32 %v7773, 0.5
    %v7838 = vadd.f32 %v7774, 0.5
    %v7839 = vadd.f32 %v7775, 0.5
    %v7840 = vadd.f32 %v7776, 0.5
    %v7841 = vadd.f32 %v7777, 0.5
    %v7842 = vadd.f32 %v7778, 0.5
    %v7843 = vadd.f32 %v7779, 0.5
    %v7844 = vadd.f32 %v7780, 0.5
    %v7845 = vadd.f32 %v7781, 0.5
    %v7846 = vadd.f32 %v7782, 0.5
    %v7847 = vadd.f32 %v7783, 0.5
    %v7848 = vadd.f32 %v7784, 0.5
    %v7849 = vadd.f32 %v7785, 0.5
    %v7850 = vadd.f32 %v7786, 0.5
    %v7851 = vadd.f32 %v7787, 0.5
    %v7852 = vadd.f32 %v7788, 0.5
    %v7853 = vadd.f32 %v7789, 0.5
    %v7854 = vadd.f32 %v7790, 0.5
    %v7855 = vadd.f32 %v7791, 0.5
    %v7856 = vadd.f32 %v7792, 0.5
    %v7857 = vadd.f32 %v7793, 0.5
    %v7858 = vadd.f32 %v7794, 0.5
    %v7859 = vadd.f32 %v7795, 0.5
    %v7860 = vadd.f32 %v7796, 0.5
    %v7861 = vadd.f32 %v7797, 0.5
    %v7862 = vadd.f32 %v7798, 0.5
    %v7863 = vadd.f32 %v7799, 0.5
    %v7864 = vadd.f32 %v7800, 0.5
    %v7865 = vadd.f32 %v7801, 0.5
    %v7866 = vadd.f32 %v7802, 0.5
    %v7867 = vadd.f32 %v7803, 0.5
    %v7868 = vadd.f32 %v7804, 0.5
    %v7869 = vadd.f32 %v7805, 0.5
    %v7870 = vadd.f32 %v7806, 0.5
    %v7871 = vadd.f32 %v7807, 0.5
    %v7872 = vadd.f32 %v7808, 0.5
    %v7873 = vadd.f32 %v7809, 0.5
    %v7874 = vadd.f32 %v7810, 0.5
    %v7875 = vadd.f32 %v7811, 0.5
    %v7876 = vadd.f32 %v7812, 0.5
    %v7877 = vadd.f32 %v7813, 0.5
    %v7878 = vadd.f32 %v7814, 0.5
    %v7879 = vadd.f32 %v7815, 0.5
    %v7880 = vadd.f32 %v7816, 0.5
    %v7881 = vadd.f32 %v7817, 0.5
    %v7882 = vadd.f32 %v7818, 0.5
    %v7883 = vadd.f32 %v7819, 0.5
    %v7884 = vadd.f32 %v7820, 0.5
    %v7885 = vadd.f32 %v7821, 0.5
    %v7886 = vadd.f32 %v7822, 0.5
    %v7887 = vadd.f32 %v7823, 0.5
    %v7888 = vmul.f32 %v7568, %v7824
    %v7889 = vmul.f32 %v7569, %v7825
    %v7890 = vmul.f32 %v7570, %v7826
    %v7891 = vmul.f32 %v7571, %v7827
    %v7892 = vmul.f32 %v7572, %v7828
    %v7893 = vmul.f32 %v7573, %v7829
    %v7894 = vmul.f32 %v7574, %v7830
    %v7895 = vmul.f32 %v7575, %v7831
    %v7896 = vmul.f32 %v7576, %v7832
    %v7897 = vmul.f32 %v7577, %v7833
    %v7898 = vmul.f32 %v7578, %v7834
    %v7899 = vmul.f32 %v7579, %v7835
    %v7900 = vmul.f32 %v7580, %v7836
    %v7901 = vmul.f32 %v7581, %v7837
    %v7902 = vmul.f32 %v7582, %v7838
    %v7903 = vmul.f32 %v7583, %v7839
    %v7904 = vmul.f32 %v7584, %v7840
    %v7905 = vmul.f32 %v7585, %v7841
    %v7906 = vmul.f32 %v7586, %v7842
    %v7907 = vmul.f32 %v7587, %v7843
    %v7908 = vmul.f32 %v7588, %v7844
    %v7909 = vmul.f32 %v7589, %v7845
    %v7910 = vmul.f32 %v7590, %v7846
    %v7911 = vmul.f32 %v7591, %v7847
    %v7912 = vmul.f32 %v7592, %v7848
    %v7913 = vmul.f32 %v7593, %v7849
    %v7914 = vmul.f32 %v7594, %v7850
    %v7915 = vmul.f32 %v7595, %v7851
    %v7916 = vmul.f32 %v7596, %v7852
    %v7917 = vmul.f32 %v7597, %v7853
    %v7918 = vmul.f32 %v7598, %v7854
    %v7919 = vmul.f32 %v7599, %v7855
    %v7920 = vmul.f32 %v7600, %v7856
    %v7921 = vmul.f32 %v7601, %v7857
    %v7922 = vmul.f32 %v7602, %v7858
    %v7923 = vmul.f32 %v7603, %v7859
    %v7924 = vmul.f32 %v7604, %v7860
    %v7925 = vmul.f32 %v7605, %v7861
    %v7926 = vmul.f32 %v7606, %v7862
    %v7927 = vmul.f32 %v7607, %v7863
    %v7928 = vmul.f32 %v7608, %v7864
    %v7929 = vmul.f32 %v7609, %v7865
    %v7930 = vmul.f32 %v7610, %v7866
    %v7931 = vmul.f32 %v7611, %v7867
    %v7932 = vmul.f32 %v7612, %v7868
    %v7933 = vmul.f32 %v7613, %v7869
    %v7934 = vmul.f32 %v7614, %v7870
    %v7935 = vmul.f32 %v7615, %v7871
    %v7936 = vmul.f32 %v7616, %v7872
    %v7937 = vmul.f32 %v7617, %v7873
    %v7938 = vmul.f32 %v7618, %v7874
    %v7939 = vmul.f32 %v7619, %v7875
    %v7940 = vmul.f32 %v7620, %v7876
    %v7941 = vmul.f32 %v7621, %v7877
    %v7942 = vmul.f32 %v7622, %v7878
    %v7943 = vmul.f32 %v7623, %v7879
    %v7944 = vmul.f32 %v7624, %v7880
    %v7945 = vmul.f32 %v7625, %v7881
    %v7946 = vmul.f32 %v7626, %v7882
    %v7947 = vmul.f32 %v7627, %v7883
    %v7948 = vmul.f32 %v7628, %v7884
    %v7949 = vmul.f32 %v7629, %v7885
    %v7950 = vmul.f32 %v7630, %v7886
    %v7951 = vmul.f32 %v7631, %v7887
    %v7952 = vpack.c.bf16 %v7890, %v7888
    %v7953 = vpack.c.bf16 %v7891, %v7889
    %v7954 = vpack.c.bf16 %v7894, %v7892
    %v7955 = vpack.c.bf16 %v7895, %v7893
    %v7956 = vpack.c.bf16 %v7898, %v7896
    %v7957 = vpack.c.bf16 %v7899, %v7897
    %v7958 = vpack.c.bf16 %v7902, %v7900
    %v7959 = vpack.c.bf16 %v7903, %v7901
    %v7960 = vpack.c.bf16 %v7906, %v7904
    %v7961 = vpack.c.bf16 %v7907, %v7905
    %v7962 = vpack.c.bf16 %v7910, %v7908
    %v7963 = vpack.c.bf16 %v7911, %v7909
    %v7964 = vpack.c.bf16 %v7914, %v7912
    %v7965 = vpack.c.bf16 %v7915, %v7913
    %v7966 = vpack.c.bf16 %v7918, %v7916
    %v7967 = vpack.c.bf16 %v7919, %v7917
    %v7968 = vpack.c.bf16 %v7922, %v7920
    %v7969 = vpack.c.bf16 %v7923, %v7921
    %v7970 = vpack.c.bf16 %v7926, %v7924
    %v7971 = vpack.c.bf16 %v7927, %v7925
    %v7972 = vpack.c.bf16 %v7930, %v7928
    %v7973 = vpack.c.bf16 %v7931, %v7929
    %v7974 = vpack.c.bf16 %v7934, %v7932
    %v7975 = vpack.c.bf16 %v7935, %v7933
    %v7976 = vpack.c.bf16 %v7938, %v7936
    %v7977 = vpack.c.bf16 %v7939, %v7937
    %v7978 = vpack.c.bf16 %v7942, %v7940
    %v7979 = vpack.c.bf16 %v7943, %v7941
    %v7980 = vpack.c.bf16 %v7946, %v7944
    %v7981 = vpack.c.bf16 %v7947, %v7945
    %v7982 = vpack.c.bf16 %v7950, %v7948
    %v7983 = vpack.c.bf16 %v7951, %v7949
    %s7984 = scalar_lea.vmem [#allocation5], 512
    %v7985 = vld [vmem:[%s7984] sm:$0xff]
    %v7986 = vld [vmem:[%s7984 + $0x8] sm:$0xff]
    %v7987 = vld [vmem:[%s7984 + $0x10] sm:$0xff]
    %v7988 = vld [vmem:[%s7984 + $0x18] sm:$0xff]
    %v7989 = vld [vmem:[%s7984 + $0x20] sm:$0xff]
    %v7990 = vld [vmem:[%s7984 + $0x28] sm:$0xff]
    %v7991 = vld [vmem:[%s7984 + $0x30] sm:$0xff]
    %v7992 = vld [vmem:[%s7984 + $0x38] sm:$0xff]
    %v7993 = vld [vmem:[%s7984 + $0x40] sm:$0xff]
    %v7994 = vld [vmem:[%s7984 + $0x48] sm:$0xff]
    %v7995 = vld [vmem:[%s7984 + $0x50] sm:$0xff]
    %v7996 = vld [vmem:[%s7984 + $0x58] sm:$0xff]
    %v7997 = vld [vmem:[%s7984 + $0x60] sm:$0xff]
    %v7998 = vld [vmem:[%s7984 + $0x68] sm:$0xff]
    %v7999 = vld [vmem:[%s7984 + $0x70] sm:$0xff]
    %v8000 = vld [vmem:[%s7984 + $0x78] sm:$0xff]
    %v8001 = vld [vmem:[%s7984 + $0x80] sm:$0xff]
    %v8002 = vld [vmem:[%s7984 + $0x88] sm:$0xff]
    %v8003 = vld [vmem:[%s7984 + $0x90] sm:$0xff]
    %v8004 = vld [vmem:[%s7984 + $0x98] sm:$0xff]
    %v8005 = vld [vmem:[%s7984 + $0xa0] sm:$0xff]
    %v8006 = vld [vmem:[%s7984 + $0xa8] sm:$0xff]
    %v8007 = vld [vmem:[%s7984 + $0xb0] sm:$0xff]
    %v8008 = vld [vmem:[%s7984 + $0xb8] sm:$0xff]
    %v8009 = vld [vmem:[%s7984 + $0xc0] sm:$0xff]
    %v8010 = vld [vmem:[%s7984 + $0xc8] sm:$0xff]
    %v8011 = vld [vmem:[%s7984 + $0xd0] sm:$0xff]
    %v8012 = vld [vmem:[%s7984 + $0xd8] sm:$0xff]
    %v8013 = vld [vmem:[%s7984 + $0xe0] sm:$0xff]
    %v8014 = vld [vmem:[%s7984 + $0xe8] sm:$0xff]
    %v8015 = vld [vmem:[%s7984 + $0xf0] sm:$0xff]
    %v8016 = vld [vmem:[%s7984 + $0xf8] sm:$0xff]
    %s8017 = scalar_lea.vmem %s8, 2
    %v8018 = vld [vmem:[%s8017] ss:$4 sm:$0x3]
    %v8020 = vlaneseq
    %v8021 = vshrl.u32 %v8020, 7
    %v8022 = vsub.s32 0, %v8021
    %v8023 = vrot.slane %v8018, %v8022
    %v8024 = vlaneseq
    %v8025 = vshrl.u32 %v8024, 7
    %v8026 = vsub.s32 1, %v8025
    %v8027 = vrot.slane %v8018, %v8026
    %v8062 = vunpack.c.l.b16 %v7985
    %v8063 = vunpack.c.h.b16 %v7985
    %v8064 = vunpack.c.l.b16 %v7986
    %v8065 = vunpack.c.h.b16 %v7986
    %v8066 = vunpack.c.l.b16 %v7987
    %v8067 = vunpack.c.h.b16 %v7987
    %v8068 = vunpack.c.l.b16 %v7988
    %v8069 = vunpack.c.h.b16 %v7988
    %v8070 = vunpack.c.l.b16 %v7989
    %v8071 = vunpack.c.h.b16 %v7989
    %v8072 = vunpack.c.l.b16 %v7990
    %v8073 = vunpack.c.h.b16 %v7990
    %v8074 = vunpack.c.l.b16 %v7991
    %v8075 = vunpack.c.h.b16 %v7991
    %v8076 = vunpack.c.l.b16 %v7992
    %v8077 = vunpack.c.h.b16 %v7992
    %v8078 = vunpack.c.l.b16 %v7993
    %v8079 = vunpack.c.h.b16 %v7993
    %v8080 = vunpack.c.l.b16 %v7994
    %v8081 = vunpack.c.h.b16 %v7994
    %v8082 = vunpack.c.l.b16 %v7995
    %v8083 = vunpack.c.h.b16 %v7995
    %v8084 = vunpack.c.l.b16 %v7996
    %v8085 = vunpack.c.h.b16 %v7996
    %v8086 = vunpack.c.l.b16 %v7997
    %v8087 = vunpack.c.h.b16 %v7997
    %v8088 = vunpack.c.l.b16 %v7998
    %v8089 = vunpack.c.h.b16 %v7998
    %v8090 = vunpack.c.l.b16 %v7999
    %v8091 = vunpack.c.h.b16 %v7999
    %v8092 = vunpack.c.l.b16 %v8000
    %v8093 = vunpack.c.h.b16 %v8000
    %v8094 = vunpack.c.l.b16 %v8001
    %v8095 = vunpack.c.h.b16 %v8001
    %v8096 = vunpack.c.l.b16 %v8002
    %v8097 = vunpack.c.h.b16 %v8002
    %v8098 = vunpack.c.l.b16 %v8003
    %v8099 = vunpack.c.h.b16 %v8003
    %v8100 = vunpack.c.l.b16 %v8004
    %v8101 = vunpack.c.h.b16 %v8004
    %v8102 = vunpack.c.l.b16 %v8005
    %v8103 = vunpack.c.h.b16 %v8005
    %v8104 = vunpack.c.l.b16 %v8006
    %v8105 = vunpack.c.h.b16 %v8006
    %v8106 = vunpack.c.l.b16 %v8007
    %v8107 = vunpack.c.h.b16 %v8007
    %v8108 = vunpack.c.l.b16 %v8008
    %v8109 = vunpack.c.h.b16 %v8008
    %v8110 = vunpack.c.l.b16 %v8009
    %v8111 = vunpack.c.h.b16 %v8009
    %v8112 = vunpack.c.l.b16 %v8010
    %v8113 = vunpack.c.h.b16 %v8010
    %v8114 = vunpack.c.l.b16 %v8011
    %v8115 = vunpack.c.h.b16 %v8011
    %v8116 = vunpack.c.l.b16 %v8012
    %v8117 = vunpack.c.h.b16 %v8012
    %v8118 = vunpack.c.l.b16 %v8013
    %v8119 = vunpack.c.h.b16 %v8013
    %v8120 = vunpack.c.l.b16 %v8014
    %v8121 = vunpack.c.h.b16 %v8014
    %v8122 = vunpack.c.l.b16 %v8015
    %v8123 = vunpack.c.h.b16 %v8015
    %v8124 = vunpack.c.l.b16 %v8016
    %v8125 = vunpack.c.h.b16 %v8016
    %v8126 = vpack.c.b16 %v8064, %v8062
    %v8127 = vpack.c.b16 %v8065, %v8063
    %v8128 = vpack.c.b16 %v8068, %v8066
    %v8129 = vpack.c.b16 %v8069, %v8067
    %v8130 = vpack.c.b16 %v8072, %v8070
    %v8131 = vpack.c.b16 %v8073, %v8071
    %v8132 = vpack.c.b16 %v8076, %v8074
    %v8133 = vpack.c.b16 %v8077, %v8075
    %v8134 = vpack.c.b16 %v8080, %v8078
    %v8135 = vpack.c.b16 %v8081, %v8079
    %v8136 = vpack.c.b16 %v8084, %v8082
    %v8137 = vpack.c.b16 %v8085, %v8083
    %v8138 = vpack.c.b16 %v8088, %v8086
    %v8139 = vpack.c.b16 %v8089, %v8087
    %v8140 = vpack.c.b16 %v8092, %v8090
    %v8141 = vpack.c.b16 %v8093, %v8091
    %v8142 = vpack.c.b16 %v8096, %v8094
    %v8143 = vpack.c.b16 %v8097, %v8095
    %v8144 = vpack.c.b16 %v8100, %v8098
    %v8145 = vpack.c.b16 %v8101, %v8099
    %v8146 = vpack.c.b16 %v8104, %v8102
    %v8147 = vpack.c.b16 %v8105, %v8103
    %v8148 = vpack.c.b16 %v8108, %v8106
    %v8149 = vpack.c.b16 %v8109, %v8107
    %v8150 = vpack.c.b16 %v8112, %v8110
    %v8151 = vpack.c.b16 %v8113, %v8111
    %v8152 = vpack.c.b16 %v8116, %v8114
    %v8153 = vpack.c.b16 %v8117, %v8115
    %v8154 = vpack.c.b16 %v8120, %v8118
    %v8155 = vpack.c.b16 %v8121, %v8119
    %v8156 = vpack.c.b16 %v8124, %v8122
    %v8157 = vpack.c.b16 %v8125, %v8123
    %8190 = vmatprep.subr.bf16.mxu0 %v8141
    %8191 = vmatpush1.bf16.msra.mxu0 %v8140
    %8192 = vmatprep.subr.bf16.mxu0 %v8139
    %8193 = vmatpush1.bf16.msra.mxu0 %v8138
    %8194 = vmatprep.subr.bf16.mxu0 %v8137
    %8195 = vmatpush1.bf16.msra.mxu0 %v8136
    %8196 = vmatprep.subr.bf16.mxu0 %v8135
    %8197 = vmatpush1.bf16.msra.mxu0 %v8134
    %8198 = vmatprep.subr.bf16.mxu0 %v8133
    %8199 = vmatpush1.bf16.msra.mxu0 %v8132
    %8200 = vmatprep.subr.bf16.mxu0 %v8131
    %8201 = vmatpush1.bf16.msra.mxu0 %v8130
    %8202 = vmatprep.subr.bf16.mxu0 %v8129
    %8203 = vmatpush1.bf16.msra.mxu0 %v8128
    %8204 = vmatprep.subr.bf16.mxu0 %v8127
    %8205 = vmatpush1.bf16.msra.mxu0 %v8126
    %8206 = vmatprep.subr.bf16.mxu0 %v8157
    %8207 = vmatpush2.bf16.msra.mxu0 %v8156
    %8208 = vmatprep.subr.bf16.mxu0 %v8155
    %8209 = vmatpush2.bf16.msra.mxu0 %v8154
    %8210 = vmatprep.subr.bf16.mxu0 %v8153
    %8211 = vmatpush2.bf16.msra.mxu0 %v8152
    %8212 = vmatprep.subr.bf16.mxu0 %v8151
    %8213 = vmatpush2.bf16.msra.mxu0 %v8150
    %8214 = vmatprep.subr.bf16.mxu0 %v8149
    %8215 = vmatpush2.bf16.msra.mxu0 %v8148
    %8216 = vmatprep.subr.bf16.mxu0 %v8147
    %8217 = vmatpush2.bf16.msra.mxu0 %v8146
    %8218 = vmatprep.subr.bf16.mxu0 %v8145
    %8219 = vmatpush2.bf16.msra.mxu0 %v8144
    %8220 = vmatprep.subr.bf16.mxu0 %v8143
    %8221 = vmatpush2.bf16.msra.mxu0 %v8142
    %8222 = vmatprep.mubr.bf16.mxu0 %v7953
    %8223 = vmatmul.mubr.bf16.gmra.mxu0 %v7952
    %v8224 = vpop.f32.mrf.mxu0
    %v8225 = vadd.f32 %v8023, %v8224
    %v8226 = vpop.f32.mrf.mxu0
    %v8227 = vadd.f32 %v8027, %v8226
    %v8228 = vpop.f32.mrf.mxu0
    %v8229 = vadd.f32 %v8023, %v8228
    %v8230 = vpop.f32.mrf.mxu0
    %v8231 = vadd.f32 %v8027, %v8230
    %8232 = vmatprep.mubr.bf16.mxu0 %v7955
    %8233 = vmatmul.mubr.bf16.gmra.mxu0 %v7954
    %v8234 = vpop.f32.mrf.mxu0
    %v8235 = vadd.f32 %v8023, %v8234
    %v8236 = vpop.f32.mrf.mxu0
    %v8237 = vadd.f32 %v8027, %v8236
    %v8238 = vpop.f32.mrf.mxu0
    %v8239 = vadd.f32 %v8023, %v8238
    %v8240 = vpop.f32.mrf.mxu0
    %v8241 = vadd.f32 %v8027, %v8240
    %8242 = vmatprep.mubr.bf16.mxu0 %v7957
    %8243 = vmatmul.mubr.bf16.gmra.mxu0 %v7956
    %v8244 = vpop.f32.mrf.mxu0
    %v8245 = vadd.f32 %v8023, %v8244
    %v8246 = vpop.f32.mrf.mxu0
    %v8247 = vadd.f32 %v8027, %v8246
    %v8248 = vpop.f32.mrf.mxu0
    %v8249 = vadd.f32 %v8023, %v8248
    %v8250 = vpop.f32.mrf.mxu0
    %v8251 = vadd.f32 %v8027, %v8250
    %8252 = vmatprep.mubr.bf16.mxu0 %v7959
    %8253 = vmatmul.mubr.bf16.gmra.mxu0 %v7958
    %v8254 = vpop.f32.mrf.mxu0
    %v8255 = vadd.f32 %v8023, %v8254
    %v8256 = vpop.f32.mrf.mxu0
    %v8257 = vadd.f32 %v8027, %v8256
    %v8258 = vpop.f32.mrf.mxu0
    %v8259 = vadd.f32 %v8023, %v8258
    %v8260 = vpop.f32.mrf.mxu0
    %v8261 = vadd.f32 %v8027, %v8260
    %8262 = vmatprep.mubr.bf16.mxu0 %v7961
    %8263 = vmatmul.mubr.bf16.gmra.mxu0 %v7960
    %v8264 = vpop.f32.mrf.mxu0
    %v8265 = vadd.f32 %v8023, %v8264
    %v8266 = vpop.f32.mrf.mxu0
    %v8267 = vadd.f32 %v8027, %v8266
    %v8268 = vpop.f32.mrf.mxu0
    %v8269 = vadd.f32 %v8023, %v8268
    %v8270 = vpop.f32.mrf.mxu0
    %v8271 = vadd.f32 %v8027, %v8270
    %8272 = vmatprep.mubr.bf16.mxu0 %v7963
    %8273 = vmatmul.mubr.bf16.gmra.mxu0 %v7962
    %v8274 = vpop.f32.mrf.mxu0
    %v8275 = vadd.f32 %v8023, %v8274
    %v8276 = vpop.f32.mrf.mxu0
    %v8277 = vadd.f32 %v8027, %v8276
    %v8278 = vpop.f32.mrf.mxu0
    %v8279 = vadd.f32 %v8023, %v8278
    %v8280 = vpop.f32.mrf.mxu0
    %v8281 = vadd.f32 %v8027, %v8280
    %8282 = vmatprep.mubr.bf16.mxu0 %v7965
    %8283 = vmatmul.mubr.bf16.gmra.mxu0 %v7964
    %v8284 = vpop.f32.mrf.mxu0
    %v8285 = vadd.f32 %v8023, %v8284
    %v8286 = vpop.f32.mrf.mxu0
    %v8287 = vadd.f32 %v8027, %v8286
    %v8288 = vpop.f32.mrf.mxu0
    %v8289 = vadd.f32 %v8023, %v8288
    %v8290 = vpop.f32.mrf.mxu0
    %v8291 = vadd.f32 %v8027, %v8290
    %8292 = vmatprep.mubr.bf16.mxu0 %v7967
    %8293 = vmatmul.mubr.bf16.gmra.mxu0 %v7966
    %v8294 = vpop.f32.mrf.mxu0
    %v8295 = vadd.f32 %v8023, %v8294
    %v8296 = vpop.f32.mrf.mxu0
    %v8297 = vadd.f32 %v8027, %v8296
    %v8298 = vpop.f32.mrf.mxu0
    %v8299 = vadd.f32 %v8023, %v8298
    %v8300 = vpop.f32.mrf.mxu0
    %v8301 = vadd.f32 %v8027, %v8300
    %8302 = vmatprep.mubr.bf16.mxu0 %v7969
    %8303 = vmatmul.mubr.bf16.gmra.mxu0 %v7968
    %v8304 = vpop.f32.mrf.mxu0
    %v8305 = vadd.f32 %v8023, %v8304
    %v8306 = vpop.f32.mrf.mxu0
    %v8307 = vadd.f32 %v8027, %v8306
    %v8308 = vpop.f32.mrf.mxu0
    %v8309 = vadd.f32 %v8023, %v8308
    %v8310 = vpop.f32.mrf.mxu0
    %v8311 = vadd.f32 %v8027, %v8310
    %8312 = vmatprep.mubr.bf16.mxu0 %v7971
    %8313 = vmatmul.mubr.bf16.gmra.mxu0 %v7970
    %v8314 = vpop.f32.mrf.mxu0
    %v8315 = vadd.f32 %v8023, %v8314
    %v8316 = vpop.f32.mrf.mxu0
    %v8317 = vadd.f32 %v8027, %v8316
    %v8318 = vpop.f32.mrf.mxu0
    %v8319 = vadd.f32 %v8023, %v8318
    %v8320 = vpop.f32.mrf.mxu0
    %v8321 = vadd.f32 %v8027, %v8320
    %8322 = vmatprep.mubr.bf16.mxu0 %v7973
    %8323 = vmatmul.mubr.bf16.gmra.mxu0 %v7972
    %v8324 = vpop.f32.mrf.mxu0
    %v8325 = vadd.f32 %v8023, %v8324
    %v8326 = vpop.f32.mrf.mxu0
    %v8327 = vadd.f32 %v8027, %v8326
    %v8328 = vpop.f32.mrf.mxu0
    %v8329 = vadd.f32 %v8023, %v8328
    %v8330 = vpop.f32.mrf.mxu0
    %v8331 = vadd.f32 %v8027, %v8330
    %8332 = vmatprep.mubr.bf16.mxu0 %v7975
    %8333 = vmatmul.mubr.bf16.gmra.mxu0 %v7974
    %v8334 = vpop.f32.mrf.mxu0
    %v8335 = vadd.f32 %v8023, %v8334
    %v8336 = vpop.f32.mrf.mxu0
    %v8337 = vadd.f32 %v8027, %v8336
    %v8338 = vpop.f32.mrf.mxu0
    %v8339 = vadd.f32 %v8023, %v8338
    %v8340 = vpop.f32.mrf.mxu0
    %v8341 = vadd.f32 %v8027, %v8340
    %8342 = vmatprep.mubr.bf16.mxu0 %v7977
    %8343 = vmatmul.mubr.bf16.gmra.mxu0 %v7976
    %v8344 = vpop.f32.mrf.mxu0
    %v8345 = vadd.f32 %v8023, %v8344
    %v8346 = vpop.f32.mrf.mxu0
    %v8347 = vadd.f32 %v8027, %v8346
    %v8348 = vpop.f32.mrf.mxu0
    %v8349 = vadd.f32 %v8023, %v8348
    %v8350 = vpop.f32.mrf.mxu0
    %v8351 = vadd.f32 %v8027, %v8350
    %8352 = vmatprep.mubr.bf16.mxu0 %v7979
    %8353 = vmatmul.mubr.bf16.gmra.mxu0 %v7978
    %v8354 = vpop.f32.mrf.mxu0
    %v8355 = vadd.f32 %v8023, %v8354
    %v8356 = vpop.f32.mrf.mxu0
    %v8357 = vadd.f32 %v8027, %v8356
    %v8358 = vpop.f32.mrf.mxu0
    %v8359 = vadd.f32 %v8023, %v8358
    %v8360 = vpop.f32.mrf.mxu0
    %v8361 = vadd.f32 %v8027, %v8360
    %8362 = vmatprep.mubr.bf16.mxu0 %v7981
    %8363 = vmatmul.mubr.bf16.gmra.mxu0 %v7980
    %v8364 = vpop.f32.mrf.mxu0
    %v8365 = vadd.f32 %v8023, %v8364
    %v8366 = vpop.f32.mrf.mxu0
    %v8367 = vadd.f32 %v8027, %v8366
    %v8368 = vpop.f32.mrf.mxu0
    %v8369 = vadd.f32 %v8023, %v8368
    %v8370 = vpop.f32.mrf.mxu0
    %v8371 = vadd.f32 %v8027, %v8370
    %8372 = vmatprep.mubr.bf16.mxu0 %v7983
    %8373 = vmatmul.mubr.bf16.gmra.mxu0 %v7982
    %v8374 = vpop.f32.mrf.mxu0
    %v8375 = vadd.f32 %v8023, %v8374
    %v8376 = vpop.f32.mrf.mxu0
    %v8377 = vadd.f32 %v8027, %v8376
    %v8378 = vpop.f32.mrf.mxu0
    %v8379 = vadd.f32 %v8023, %v8378
    %v8380 = vpop.f32.mrf.mxu0
    %v8381 = vadd.f32 %v8027, %v8380
    %8382 = vdwg.mxu0
    %v8383 = vmul.f32 %v8225, 0.5
    %v8384 = vmul.f32 %v8227, 0.5
    %v8385 = vmul.f32 %v8229, 0.5
    %v8386 = vmul.f32 %v8231, 0.5
    %v8387 = vmul.f32 %v8235, 0.5
    %v8388 = vmul.f32 %v8237, 0.5
    %v8389 = vmul.f32 %v8239, 0.5
    %v8390 = vmul.f32 %v8241, 0.5
    %v8391 = vmul.f32 %v8245, 0.5
    %v8392 = vmul.f32 %v8247, 0.5
    %v8393 = vmul.f32 %v8249, 0.5
    %v8394 = vmul.f32 %v8251, 0.5
    %v8395 = vmul.f32 %v8255, 0.5
    %v8396 = vmul.f32 %v8257, 0.5
    %v8397 = vmul.f32 %v8259, 0.5
    %v8398 = vmul.f32 %v8261, 0.5
    %v8399 = vmul.f32 %v8265, 0.5
    %v8400 = vmul.f32 %v8267, 0.5
    %v8401 = vmul.f32 %v8269, 0.5
    %v8402 = vmul.f32 %v8271, 0.5
    %v8403 = vmul.f32 %v8275, 0.5
    %v8404 = vmul.f32 %v8277, 0.5
    %v8405 = vmul.f32 %v8279, 0.5
    %v8406 = vmul.f32 %v8281, 0.5
    %v8407 = vmul.f32 %v8285, 0.5
    %v8408 = vmul.f32 %v8287, 0.5
    %v8409 = vmul.f32 %v8289, 0.5
    %v8410 = vmul.f32 %v8291, 0.5
    %v8411 = vmul.f32 %v8295, 0.5
    %v8412 = vmul.f32 %v8297, 0.5
    %v8413 = vmul.f32 %v8299, 0.5
    %v8414 = vmul.f32 %v8301, 0.5
    %v8415 = vmul.f32 %v8305, 0.5
    %v8416 = vmul.f32 %v8307, 0.5
    %v8417 = vmul.f32 %v8309, 0.5
    %v8418 = vmul.f32 %v8311, 0.5
    %v8419 = vmul.f32 %v8315, 0.5
    %v8420 = vmul.f32 %v8317, 0.5
    %v8421 = vmul.f32 %v8319, 0.5
    %v8422 = vmul.f32 %v8321, 0.5
    %v8423 = vmul.f32 %v8325, 0.5
    %v8424 = vmul.f32 %v8327, 0.5
    %v8425 = vmul.f32 %v8329, 0.5
    %v8426 = vmul.f32 %v8331, 0.5
    %v8427 = vmul.f32 %v8335, 0.5
    %v8428 = vmul.f32 %v8337, 0.5
    %v8429 = vmul.f32 %v8339, 0.5
    %v8430 = vmul.f32 %v8341, 0.5
    %v8431 = vmul.f32 %v8345, 0.5
    %v8432 = vmul.f32 %v8347, 0.5
    %v8433 = vmul.f32 %v8349, 0.5
    %v8434 = vmul.f32 %v8351, 0.5
    %v8435 = vmul.f32 %v8355, 0.5
    %v8436 = vmul.f32 %v8357, 0.5
    %v8437 = vmul.f32 %v8359, 0.5
    %v8438 = vmul.f32 %v8361, 0.5
    %v8439 = vmul.f32 %v8365, 0.5
    %v8440 = vmul.f32 %v8367, 0.5
    %v8441 = vmul.f32 %v8369, 0.5
    %v8442 = vmul.f32 %v8371, 0.5
    %v8443 = vmul.f32 %v8375, 0.5
    %v8444 = vmul.f32 %v8377, 0.5
    %v8445 = vmul.f32 %v8379, 0.5
    %v8446 = vmul.f32 %v8381, 0.5
    %v8447 = vtanh.pop %v8383
    %v8448 = vtanh.pop %v8384
    %v8449 = vtanh.pop %v8385
    %v8450 = vtanh.pop %v8386
    %v8451 = vtanh.pop %v8387
    %v8452 = vtanh.pop %v8388
    %v8453 = vtanh.pop %v8389
    %v8454 = vtanh.pop %v8390
    %v8455 = vtanh.pop %v8391
    %v8456 = vtanh.pop %v8392
    %v8457 = vtanh.pop %v8393
    %v8458 = vtanh.pop %v8394
    %v8459 = vtanh.pop %v8395
    %v8460 = vtanh.pop %v8396
    %v8461 = vtanh.pop %v8397
    %v8462 = vtanh.pop %v8398
    %v8463 = vtanh.pop %v8399
    %v8464 = vtanh.pop %v8400
    %v8465 = vtanh.pop %v8401
    %v8466 = vtanh.pop %v8402
    %v8467 = vtanh.pop %v8403
    %v8468 = vtanh.pop %v8404
    %v8469 = vtanh.pop %v8405
    %v8470 = vtanh.pop %v8406
    %v8471 = vtanh.pop %v8407
    %v8472 = vtanh.pop %v8408
    %v8473 = vtanh.pop %v8409
    %v8474 = vtanh.pop %v8410
    %v8475 = vtanh.pop %v8411
    %v8476 = vtanh.pop %v8412
    %v8477 = vtanh.pop %v8413
    %v8478 = vtanh.pop %v8414
    %v8479 = vtanh.pop %v8415
    %v8480 = vtanh.pop %v8416
    %v8481 = vtanh.pop %v8417
    %v8482 = vtanh.pop %v8418
    %v8483 = vtanh.pop %v8419
    %v8484 = vtanh.pop %v8420
    %v8485 = vtanh.pop %v8421
    %v8486 = vtanh.pop %v8422
    %v8487 = vtanh.pop %v8423
    %v8488 = vtanh.pop %v8424
    %v8489 = vtanh.pop %v8425
    %v8490 = vtanh.pop %v8426
    %v8491 = vtanh.pop %v8427
    %v8492 = vtanh.pop %v8428
    %v8493 = vtanh.pop %v8429
    %v8494 = vtanh.pop %v8430
    %v8495 = vtanh.pop %v8431
    %v8496 = vtanh.pop %v8432
    %v8497 = vtanh.pop %v8433
    %v8498 = vtanh.pop %v8434
    %v8499 = vtanh.pop %v8435
    %v8500 = vtanh.pop %v8436
    %v8501 = vtanh.pop %v8437
    %v8502 = vtanh.pop %v8438
    %v8503 = vtanh.pop %v8439
    %v8504 = vtanh.pop %v8440
    %v8505 = vtanh.pop %v8441
    %v8506 = vtanh.pop %v8442
    %v8507 = vtanh.pop %v8443
    %v8508 = vtanh.pop %v8444
    %v8509 = vtanh.pop %v8445
    %v8510 = vtanh.pop %v8446
    %v8511 = vmul.f32 %v8447, 0.5
    %v8512 = vmul.f32 %v8448, 0.5
    %v8513 = vmul.f32 %v8449, 0.5
    %v8514 = vmul.f32 %v8450, 0.5
    %v8515 = vmul.f32 %v8451, 0.5
    %v8516 = vmul.f32 %v8452, 0.5
    %v8517 = vmul.f32 %v8453, 0.5
    %v8518 = vmul.f32 %v8454, 0.5
    %v8519 = vmul.f32 %v8455, 0.5
    %v8520 = vmul.f32 %v8456, 0.5
    %v8521 = vmul.f32 %v8457, 0.5
    %v8522 = vmul.f32 %v8458, 0.5
    %v8523 = vmul.f32 %v8459, 0.5
    %v8524 = vmul.f32 %v8460, 0.5
    %v8525 = vmul.f32 %v8461, 0.5
    %v8526 = vmul.f32 %v8462, 0.5
    %v8527 = vmul.f32 %v8463, 0.5
    %v8528 = vmul.f32 %v8464, 0.5
    %v8529 = vmul.f32 %v8465, 0.5
    %v8530 = vmul.f32 %v8466, 0.5
    %v8531 = vmul.f32 %v8467, 0.5
    %v8532 = vmul.f32 %v8468, 0.5
    %v8533 = vmul.f32 %v8469, 0.5
    %v8534 = vmul.f32 %v8470, 0.5
    %v8535 = vmul.f32 %v8471, 0.5
    %v8536 = vmul.f32 %v8472, 0.5
    %v8537 = vmul.f32 %v8473, 0.5
    %v8538 = vmul.f32 %v8474, 0.5
    %v8539 = vmul.f32 %v8475, 0.5
    %v8540 = vmul.f32 %v8476, 0.5
    %v8541 = vmul.f32 %v8477, 0.5
    %v8542 = vmul.f32 %v8478, 0.5
    %v8543 = vmul.f32 %v8479, 0.5
    %v8544 = vmul.f32 %v8480, 0.5
    %v8545 = vmul.f32 %v8481, 0.5
    %v8546 = vmul.f32 %v8482, 0.5
    %v8547 = vmul.f32 %v8483, 0.5
    %v8548 = vmul.f32 %v8484, 0.5
    %v8549 = vmul.f32 %v8485, 0.5
    %v8550 = vmul.f32 %v8486, 0.5
    %v8551 = vmul.f32 %v8487, 0.5
    %v8552 = vmul.f32 %v8488, 0.5
    %v8553 = vmul.f32 %v8489, 0.5
    %v8554 = vmul.f32 %v8490, 0.5
    %v8555 = vmul.f32 %v8491, 0.5
    %v8556 = vmul.f32 %v8492, 0.5
    %v8557 = vmul.f32 %v8493, 0.5
    %v8558 = vmul.f32 %v8494, 0.5
    %v8559 = vmul.f32 %v8495, 0.5
    %v8560 = vmul.f32 %v8496, 0.5
    %v8561 = vmul.f32 %v8497, 0.5
    %v8562 = vmul.f32 %v8498, 0.5
    %v8563 = vmul.f32 %v8499, 0.5
    %v8564 = vmul.f32 %v8500, 0.5
    %v8565 = vmul.f32 %v8501, 0.5
    %v8566 = vmul.f32 %v8502, 0.5
    %v8567 = vmul.f32 %v8503, 0.5
    %v8568 = vmul.f32 %v8504, 0.5
    %v8569 = vmul.f32 %v8505, 0.5
    %v8570 = vmul.f32 %v8506, 0.5
    %v8571 = vmul.f32 %v8507, 0.5
    %v8572 = vmul.f32 %v8508, 0.5
    %v8573 = vmul.f32 %v8509, 0.5
    %v8574 = vmul.f32 %v8510, 0.5
    %v8575 = vadd.f32 %v8511, 0.5
    %v8576 = vadd.f32 %v8512, 0.5
    %v8577 = vadd.f32 %v8513, 0.5
    %v8578 = vadd.f32 %v8514, 0.5
    %v8579 = vadd.f32 %v8515, 0.5
    %v8580 = vadd.f32 %v8516, 0.5
    %v8581 = vadd.f32 %v8517, 0.5
    %v8582 = vadd.f32 %v8518, 0.5
    %v8583 = vadd.f32 %v8519, 0.5
    %v8584 = vadd.f32 %v8520, 0.5
    %v8585 = vadd.f32 %v8521, 0.5
    %v8586 = vadd.f32 %v8522, 0.5
    %v8587 = vadd.f32 %v8523, 0.5
    %v8588 = vadd.f32 %v8524, 0.5
    %v8589 = vadd.f32 %v8525, 0.5
    %v8590 = vadd.f32 %v8526, 0.5
    %v8591 = vadd.f32 %v8527, 0.5
    %v8592 = vadd.f32 %v8528, 0.5
    %v8593 = vadd.f32 %v8529, 0.5
    %v8594 = vadd.f32 %v8530, 0.5
    %v8595 = vadd.f32 %v8531, 0.5
    %v8596 = vadd.f32 %v8532, 0.5
    %v8597 = vadd.f32 %v8533, 0.5
    %v8598 = vadd.f32 %v8534, 0.5
    %v8599 = vadd.f32 %v8535, 0.5
    %v8600 = vadd.f32 %v8536, 0.5
    %v8601 = vadd.f32 %v8537, 0.5
    %v8602 = vadd.f32 %v8538, 0.5
    %v8603 = vadd.f32 %v8539, 0.5
    %v8604 = vadd.f32 %v8540, 0.5
    %v8605 = vadd.f32 %v8541, 0.5
    %v8606 = vadd.f32 %v8542, 0.5
    %v8607 = vadd.f32 %v8543, 0.5
    %v8608 = vadd.f32 %v8544, 0.5
    %v8609 = vadd.f32 %v8545, 0.5
    %v8610 = vadd.f32 %v8546, 0.5
    %v8611 = vadd.f32 %v8547, 0.5
    %v8612 = vadd.f32 %v8548, 0.5
    %v8613 = vadd.f32 %v8549, 0.5
    %v8614 = vadd.f32 %v8550, 0.5
    %v8615 = vadd.f32 %v8551, 0.5
    %v8616 = vadd.f32 %v8552, 0.5
    %v8617 = vadd.f32 %v8553, 0.5
    %v8618 = vadd.f32 %v8554, 0.5
    %v8619 = vadd.f32 %v8555, 0.5
    %v8620 = vadd.f32 %v8556, 0.5
    %v8621 = vadd.f32 %v8557, 0.5
    %v8622 = vadd.f32 %v8558, 0.5
    %v8623 = vadd.f32 %v8559, 0.5
    %v8624 = vadd.f32 %v8560, 0.5
    %v8625 = vadd.f32 %v8561, 0.5
    %v8626 = vadd.f32 %v8562, 0.5
    %v8627 = vadd.f32 %v8563, 0.5
    %v8628 = vadd.f32 %v8564, 0.5
    %v8629 = vadd.f32 %v8565, 0.5
    %v8630 = vadd.f32 %v8566, 0.5
    %v8631 = vadd.f32 %v8567, 0.5
    %v8632 = vadd.f32 %v8568, 0.5
    %v8633 = vadd.f32 %v8569, 0.5
    %v8634 = vadd.f32 %v8570, 0.5
    %v8635 = vadd.f32 %v8571, 0.5
    %v8636 = vadd.f32 %v8572, 0.5
    %v8637 = vadd.f32 %v8573, 0.5
    %v8638 = vadd.f32 %v8574, 0.5
    %v8639 = vmul.f32 %v8225, %v8575
    %v8640 = vmul.f32 %v8227, %v8576
    %v8641 = vmul.f32 %v8229, %v8577
    %v8642 = vmul.f32 %v8231, %v8578
    %v8643 = vmul.f32 %v8235, %v8579
    %v8644 = vmul.f32 %v8237, %v8580
    %v8645 = vmul.f32 %v8239, %v8581
    %v8646 = vmul.f32 %v8241, %v8582
    %v8647 = vmul.f32 %v8245, %v8583
    %v8648 = vmul.f32 %v8247, %v8584
    %v8649 = vmul.f32 %v8249, %v8585
    %v8650 = vmul.f32 %v8251, %v8586
    %v8651 = vmul.f32 %v8255, %v8587
    %v8652 = vmul.f32 %v8257, %v8588
    %v8653 = vmul.f32 %v8259, %v8589
    %v8654 = vmul.f32 %v8261, %v8590
    %v8655 = vmul.f32 %v8265, %v8591
    %v8656 = vmul.f32 %v8267, %v8592
    %v8657 = vmul.f32 %v8269, %v8593
    %v8658 = vmul.f32 %v8271, %v8594
    %v8659 = vmul.f32 %v8275, %v8595
    %v8660 = vmul.f32 %v8277, %v8596
    %v8661 = vmul.f32 %v8279, %v8597
    %v8662 = vmul.f32 %v8281, %v8598
    %v8663 = vmul.f32 %v8285, %v8599
    %v8664 = vmul.f32 %v8287, %v8600
    %v8665 = vmul.f32 %v8289, %v8601
    %v8666 = vmul.f32 %v8291, %v8602
    %v8667 = vmul.f32 %v8295, %v8603
    %v8668 = vmul.f32 %v8297, %v8604
    %v8669 = vmul.f32 %v8299, %v8605
    %v8670 = vmul.f32 %v8301, %v8606
    %v8671 = vmul.f32 %v8305, %v8607
    %v8672 = vmul.f32 %v8307, %v8608
    %v8673 = vmul.f32 %v8309, %v8609
    %v8674 = vmul.f32 %v8311, %v8610
    %v8675 = vmul.f32 %v8315, %v8611
    %v8676 = vmul.f32 %v8317, %v8612
    %v8677 = vmul.f32 %v8319, %v8613
    %v8678 = vmul.f32 %v8321, %v8614
    %v8679 = vmul.f32 %v8325, %v8615
    %v8680 = vmul.f32 %v8327, %v8616
    %v8681 = vmul.f32 %v8329, %v8617
    %v8682 = vmul.f32 %v8331, %v8618
    %v8683 = vmul.f32 %v8335, %v8619
    %v8684 = vmul.f32 %v8337, %v8620
    %v8685 = vmul.f32 %v8339, %v8621
    %v8686 = vmul.f32 %v8341, %v8622
    %v8687 = vmul.f32 %v8345, %v8623
    %v8688 = vmul.f32 %v8347, %v8624
    %v8689 = vmul.f32 %v8349, %v8625
    %v8690 = vmul.f32 %v8351, %v8626
    %v8691 = vmul.f32 %v8355, %v8627
    %v8692 = vmul.f32 %v8357, %v8628
    %v8693 = vmul.f32 %v8359, %v8629
    %v8694 = vmul.f32 %v8361, %v8630
    %v8695 = vmul.f32 %v8365, %v8631
    %v8696 = vmul.f32 %v8367, %v8632
    %v8697 = vmul.f32 %v8369, %v8633
    %v8698 = vmul.f32 %v8371, %v8634
    %v8699 = vmul.f32 %v8375, %v8635
    %v8700 = vmul.f32 %v8377, %v8636
    %v8701 = vmul.f32 %v8379, %v8637
    %v8702 = vmul.f32 %v8381, %v8638
    %v8703 = vpack.c.bf16 %v8641, %v8639
    %v8704 = vpack.c.bf16 %v8642, %v8640
    %v8705 = vpack.c.bf16 %v8645, %v8643
    %v8706 = vpack.c.bf16 %v8646, %v8644
    %v8707 = vpack.c.bf16 %v8649, %v8647
    %v8708 = vpack.c.bf16 %v8650, %v8648
    %v8709 = vpack.c.bf16 %v8653, %v8651
    %v8710 = vpack.c.bf16 %v8654, %v8652
    %v8711 = vpack.c.bf16 %v8657, %v8655
    %v8712 = vpack.c.bf16 %v8658, %v8656
    %v8713 = vpack.c.bf16 %v8661, %v8659
    %v8714 = vpack.c.bf16 %v8662, %v8660
    %v8715 = vpack.c.bf16 %v8665, %v8663
    %v8716 = vpack.c.bf16 %v8666, %v8664
    %v8717 = vpack.c.bf16 %v8669, %v8667
    %v8718 = vpack.c.bf16 %v8670, %v8668
    %v8719 = vpack.c.bf16 %v8673, %v8671
    %v8720 = vpack.c.bf16 %v8674, %v8672
    %v8721 = vpack.c.bf16 %v8677, %v8675
    %v8722 = vpack.c.bf16 %v8678, %v8676
    %v8723 = vpack.c.bf16 %v8681, %v8679
    %v8724 = vpack.c.bf16 %v8682, %v8680
    %v8725 = vpack.c.bf16 %v8685, %v8683
    %v8726 = vpack.c.bf16 %v8686, %v8684
    %v8727 = vpack.c.bf16 %v8689, %v8687
    %v8728 = vpack.c.bf16 %v8690, %v8688
    %v8729 = vpack.c.bf16 %v8693, %v8691
    %v8730 = vpack.c.bf16 %v8694, %v8692
    %v8731 = vpack.c.bf16 %v8697, %v8695
    %v8732 = vpack.c.bf16 %v8698, %v8696
    %v8733 = vpack.c.bf16 %v8701, %v8699
    %v8734 = vpack.c.bf16 %v8702, %v8700
    %s8735 = scalar_lea.vmem [#allocation7], 256
    %v8736 = vld [vmem:[%s8735] sm:$0xf]
    %v8737 = vld [vmem:[%s8735 + $0x4] sm:$0xf]
    %v8738 = vld [vmem:[%s8735 + $0x8] sm:$0xf]
    %v8739 = vld [vmem:[%s8735 + $0xc] sm:$0xf]
    %v8740 = vld [vmem:[%s8735 + $0x10] sm:$0xf]
    %v8741 = vld [vmem:[%s8735 + $0x14] sm:$0xf]
    %v8742 = vld [vmem:[%s8735 + $0x18] sm:$0xf]
    %v8743 = vld [vmem:[%s8735 + $0x1c] sm:$0xf]
    %v8744 = vld [vmem:[%s8735 + $0x20] sm:$0xf]
    %v8745 = vld [vmem:[%s8735 + $0x24] sm:$0xf]
    %v8746 = vld [vmem:[%s8735 + $0x28] sm:$0xf]
    %v8747 = vld [vmem:[%s8735 + $0x2c] sm:$0xf]
    %v8748 = vld [vmem:[%s8735 + $0x30] sm:$0xf]
    %v8749 = vld [vmem:[%s8735 + $0x34] sm:$0xf]
    %v8750 = vld [vmem:[%s8735 + $0x38] sm:$0xf]
    %v8751 = vld [vmem:[%s8735 + $0x3c] sm:$0xf]
    %v8752 = vld [vmem:[%s8735 + $0x40] sm:$0xf]
    %v8753 = vld [vmem:[%s8735 + $0x44] sm:$0xf]
    %v8754 = vld [vmem:[%s8735 + $0x48] sm:$0xf]
    %v8755 = vld [vmem:[%s8735 + $0x4c] sm:$0xf]
    %v8756 = vld [vmem:[%s8735 + $0x50] sm:$0xf]
    %v8757 = vld [vmem:[%s8735 + $0x54] sm:$0xf]
    %v8758 = vld [vmem:[%s8735 + $0x58] sm:$0xf]
    %v8759 = vld [vmem:[%s8735 + $0x5c] sm:$0xf]
    %v8760 = vld [vmem:[%s8735 + $0x60] sm:$0xf]
    %v8761 = vld [vmem:[%s8735 + $0x64] sm:$0xf]
    %v8762 = vld [vmem:[%s8735 + $0x68] sm:$0xf]
    %v8763 = vld [vmem:[%s8735 + $0x6c] sm:$0xf]
    %v8764 = vld [vmem:[%s8735 + $0x70] sm:$0xf]
    %v8765 = vld [vmem:[%s8735 + $0x74] sm:$0xf]
    %v8766 = vld [vmem:[%s8735 + $0x78] sm:$0xf]
    %v8767 = vld [vmem:[%s8735 + $0x7c] sm:$0xf]
    %v8768 = vld [vmem:[%s10 + $0x2] sm:$0x1]
    %v8769 = vlaneseq
    %v8770 = vshrl.u32 %v8769, 7
    %v8771 = vsub.s32 0, %v8770
    %v8772 = vrot.slane %v8768, %v8771
    %v8805 = vunpack.c.l.b16 %v8736
    %v8806 = vunpack.c.l.b16 %v8737
    %v8807 = vunpack.c.l.b16 %v8738
    %v8808 = vunpack.c.l.b16 %v8739
    %v8809 = vunpack.c.l.b16 %v8740
    %v8810 = vunpack.c.l.b16 %v8741
    %v8811 = vunpack.c.l.b16 %v8742
    %v8812 = vunpack.c.l.b16 %v8743
    %v8813 = vunpack.c.l.b16 %v8744
    %v8814 = vunpack.c.l.b16 %v8745
    %v8815 = vunpack.c.l.b16 %v8746
    %v8816 = vunpack.c.l.b16 %v8747
    %v8817 = vunpack.c.l.b16 %v8748
    %v8818 = vunpack.c.l.b16 %v8749
    %v8819 = vunpack.c.l.b16 %v8750
    %v8820 = vunpack.c.l.b16 %v8751
    %v8821 = vunpack.c.l.b16 %v8752
    %v8822 = vunpack.c.l.b16 %v8753
    %v8823 = vunpack.c.l.b16 %v8754
    %v8824 = vunpack.c.l.b16 %v8755
    %v8825 = vunpack.c.l.b16 %v8756
    %v8826 = vunpack.c.l.b16 %v8757
    %v8827 = vunpack.c.l.b16 %v8758
    %v8828 = vunpack.c.l.b16 %v8759
    %v8829 = vunpack.c.l.b16 %v8760
    %v8830 = vunpack.c.l.b16 %v8761
    %v8831 = vunpack.c.l.b16 %v8762
    %v8832 = vunpack.c.l.b16 %v8763
    %v8833 = vunpack.c.l.b16 %v8764
    %v8834 = vunpack.c.l.b16 %v8765
    %v8835 = vunpack.c.l.b16 %v8766
    %v8836 = vunpack.c.l.b16 %v8767
    %v8837 = vpack.c.b16 %v8806, %v8805
    %v8838 = vpack.c.b16 %v8808, %v8807
    %v8839 = vpack.c.b16 %v8810, %v8809
    %v8840 = vpack.c.b16 %v8812, %v8811
    %v8841 = vpack.c.b16 %v8814, %v8813
    %v8842 = vpack.c.b16 %v8816, %v8815
    %v8843 = vpack.c.b16 %v8818, %v8817
    %v8844 = vpack.c.b16 %v8820, %v8819
    %v8845 = vpack.c.b16 %v8822, %v8821
    %v8846 = vpack.c.b16 %v8824, %v8823
    %v8847 = vpack.c.b16 %v8826, %v8825
    %v8848 = vpack.c.b16 %v8828, %v8827
    %v8849 = vpack.c.b16 %v8830, %v8829
    %v8850 = vpack.c.b16 %v8832, %v8831
    %v8851 = vpack.c.b16 %v8834, %v8833
    %v8852 = vpack.c.b16 %v8836, %v8835
    %8869 = vmatprep.subr.bf16.mxu0 0
    %8870 = vmatpush1.bf16.msra.mxu0 %v8844
    %8871 = vmatprep.subr.bf16.mxu0 0
    %8872 = vmatpush1.bf16.msra.mxu0 %v8843
    %8873 = vmatprep.subr.bf16.mxu0 0
    %8874 = vmatpush1.bf16.msra.mxu0 %v8842
    %8875 = vmatprep.subr.bf16.mxu0 0
    %8876 = vmatpush1.bf16.msra.mxu0 %v8841
    %8877 = vmatprep.subr.bf16.mxu0 0
    %8878 = vmatpush1.bf16.msra.mxu0 %v8840
    %8879 = vmatprep.subr.bf16.mxu0 0
    %8880 = vmatpush1.bf16.msra.mxu0 %v8839
    %8881 = vmatprep.subr.bf16.mxu0 0
    %8882 = vmatpush1.bf16.msra.mxu0 %v8838
    %8883 = vmatprep.subr.bf16.mxu0 0
    %8884 = vmatpush1.bf16.msra.mxu0 %v8837
    %8885 = vmatprep.subr.bf16.mxu0 0
    %8886 = vmatpush2.bf16.msra.mxu0 %v8852
    %8887 = vmatprep.subr.bf16.mxu0 0
    %8888 = vmatpush2.bf16.msra.mxu0 %v8851
    %8889 = vmatprep.subr.bf16.mxu0 0
    %8890 = vmatpush2.bf16.msra.mxu0 %v8850
    %8891 = vmatprep.subr.bf16.mxu0 0
    %8892 = vmatpush2.bf16.msra.mxu0 %v8849
    %8893 = vmatprep.subr.bf16.mxu0 0
    %8894 = vmatpush2.bf16.msra.mxu0 %v8848
    %8895 = vmatprep.subr.bf16.mxu0 0
    %8896 = vmatpush2.bf16.msra.mxu0 %v8847
    %8897 = vmatprep.subr.bf16.mxu0 0
    %8898 = vmatpush2.bf16.msra.mxu0 %v8846
    %8899 = vmatprep.subr.bf16.mxu0 0
    %8900 = vmatpush2.bf16.msra.mxu0 %v8845
    %8901 = vmatprep.mubr.bf16.mxu0 %v8704
    %8902 = vmatmul.mubr.bf16.gmra.mxu0 %v8703
    %v8903 = vpop.f32.mrf.mxu0
    %v8904 = vadd.f32 %v8772, %v8903
    %v8905 = vpop.f32.mrf.mxu0
    %v8906 = vpop.f32.mrf.mxu0
    %v8907 = vadd.f32 %v8772, %v8906
    %v8908 = vpop.f32.mrf.mxu0
    %8909 = vmatprep.mubr.bf16.mxu0 %v8706
    %8910 = vmatmul.mubr.bf16.gmra.mxu0 %v8705
    %v8911 = vpop.f32.mrf.mxu0
    %v8912 = vadd.f32 %v8772, %v8911
    %v8913 = vpop.f32.mrf.mxu0
    %v8914 = vpop.f32.mrf.mxu0
    %v8915 = vadd.f32 %v8772, %v8914
    %v8916 = vpop.f32.mrf.mxu0
    %8917 = vmatprep.mubr.bf16.mxu0 %v8708
    %8918 = vmatmul.mubr.bf16.gmra.mxu0 %v8707
    %v8919 = vpop.f32.mrf.mxu0
    %v8920 = vadd.f32 %v8772, %v8919
    %v8921 = vpop.f32.mrf.mxu0
    %v8922 = vpop.f32.mrf.mxu0
    %v8923 = vadd.f32 %v8772, %v8922
    %v8924 = vpop.f32.mrf.mxu0
    %8925 = vmatprep.mubr.bf16.mxu0 %v8710
    %8926 = vmatmul.mubr.bf16.gmra.mxu0 %v8709
    %v8927 = vpop.f32.mrf.mxu0
    %v8928 = vadd.f32 %v8772, %v8927
    %v8929 = vpop.f32.mrf.mxu0
    %v8930 = vpop.f32.mrf.mxu0
    %v8931 = vadd.f32 %v8772, %v8930
    %v8932 = vpop.f32.mrf.mxu0
    %8933 = vmatprep.mubr.bf16.mxu0 %v8712
    %8934 = vmatmul.mubr.bf16.gmra.mxu0 %v8711
    %v8935 = vpop.f32.mrf.mxu0
    %v8936 = vadd.f32 %v8772, %v8935
    %v8937 = vpop.f32.mrf.mxu0
    %v8938 = vpop.f32.mrf.mxu0
    %v8939 = vadd.f32 %v8772, %v8938
    %v8940 = vpop.f32.mrf.mxu0
    %8941 = vmatprep.mubr.bf16.mxu0 %v8714
    %8942 = vmatmul.mubr.bf16.gmra.mxu0 %v8713
    %v8943 = vpop.f32.mrf.mxu0
    %v8944 = vadd.f32 %v8772, %v8943
    %v8945 = vpop.f32.mrf.mxu0
    %v8946 = vpop.f32.mrf.mxu0
    %v8947 = vadd.f32 %v8772, %v8946
    %v8948 = vpop.f32.mrf.mxu0
    %8949 = vmatprep.mubr.bf16.mxu0 %v8716
    %8950 = vmatmul.mubr.bf16.gmra.mxu0 %v8715
    %v8951 = vpop.f32.mrf.mxu0
    %v8952 = vadd.f32 %v8772, %v8951
    %v8953 = vpop.f32.mrf.mxu0
    %v8954 = vpop.f32.mrf.mxu0
    %v8955 = vadd.f32 %v8772, %v8954
    %v8956 = vpop.f32.mrf.mxu0
    %8957 = vmatprep.mubr.bf16.mxu0 %v8718
    %8958 = vmatmul.mubr.bf16.gmra.mxu0 %v8717
    %v8959 = vpop.f32.mrf.mxu0
    %v8960 = vadd.f32 %v8772, %v8959
    %v8961 = vpop.f32.mrf.mxu0
    %v8962 = vpop.f32.mrf.mxu0
    %v8963 = vadd.f32 %v8772, %v8962
    %v8964 = vpop.f32.mrf.mxu0
    %8965 = vmatprep.mubr.bf16.mxu0 %v8720
    %8966 = vmatmul.mubr.bf16.gmra.mxu0 %v8719
    %v8967 = vpop.f32.mrf.mxu0
    %v8968 = vadd.f32 %v8772, %v8967
    %v8969 = vpop.f32.mrf.mxu0
    %v8970 = vpop.f32.mrf.mxu0
    %v8971 = vadd.f32 %v8772, %v8970
    %v8972 = vpop.f32.mrf.mxu0
    %8973 = vmatprep.mubr.bf16.mxu0 %v8722
    %8974 = vmatmul.mubr.bf16.gmra.mxu0 %v8721
    %v8975 = vpop.f32.mrf.mxu0
    %v8976 = vadd.f32 %v8772, %v8975
    %v8977 = vpop.f32.mrf.mxu0
    %v8978 = vpop.f32.mrf.mxu0
    %v8979 = vadd.f32 %v8772, %v8978
    %v8980 = vpop.f32.mrf.mxu0
    %8981 = vmatprep.mubr.bf16.mxu0 %v8724
    %8982 = vmatmul.mubr.bf16.gmra.mxu0 %v8723
    %v8983 = vpop.f32.mrf.mxu0
    %v8984 = vadd.f32 %v8772, %v8983
    %v8985 = vpop.f32.mrf.mxu0
    %v8986 = vpop.f32.mrf.mxu0
    %v8987 = vadd.f32 %v8772, %v8986
    %v8988 = vpop.f32.mrf.mxu0
    %8989 = vmatprep.mubr.bf16.mxu0 %v8726
    %8990 = vmatmul.mubr.bf16.gmra.mxu0 %v8725
    %v8991 = vpop.f32.mrf.mxu0
    %v8992 = vadd.f32 %v8772, %v8991
    %v8993 = vpop.f32.mrf.mxu0
    %v8994 = vpop.f32.mrf.mxu0
    %v8995 = vadd.f32 %v8772, %v8994
    %v8996 = vpop.f32.mrf.mxu0
    %8997 = vmatprep.mubr.bf16.mxu0 %v8728
    %8998 = vmatmul.mubr.bf16.gmra.mxu0 %v8727
    %v8999 = vpop.f32.mrf.mxu0
    %v9000 = vadd.f32 %v8772, %v8999
    %v9001 = vpop.f32.mrf.mxu0
    %v9002 = vpop.f32.mrf.mxu0
    %v9003 = vadd.f32 %v8772, %v9002
    %v9004 = vpop.f32.mrf.mxu0
    %9005 = vmatprep.mubr.bf16.mxu0 %v8730
    %9006 = vmatmul.mubr.bf16.gmra.mxu0 %v8729
    %v9007 = vpop.f32.mrf.mxu0
    %v9008 = vadd.f32 %v8772, %v9007
    %v9009 = vpop.f32.mrf.mxu0
    %v9010 = vpop.f32.mrf.mxu0
    %v9011 = vadd.f32 %v8772, %v9010
    %v9012 = vpop.f32.mrf.mxu0
    %9013 = vmatprep.mubr.bf16.mxu0 %v8732
    %9014 = vmatmul.mubr.bf16.gmra.mxu0 %v8731
    %v9015 = vpop.f32.mrf.mxu0
    %v9016 = vadd.f32 %v8772, %v9015
    %v9017 = vpop.f32.mrf.mxu0
    %v9018 = vpop.f32.mrf.mxu0
    %v9019 = vadd.f32 %v8772, %v9018
    %v9020 = vpop.f32.mrf.mxu0
    %9021 = vmatprep.mubr.bf16.mxu0 %v8734
    %9022 = vmatmul.mubr.bf16.gmra.mxu0 %v8733
    %v9023 = vpop.f32.mrf.mxu0
    %v9024 = vadd.f32 %v8772, %v9023
    %v9025 = vpop.f32.mrf.mxu0
    %v9026 = vpop.f32.mrf.mxu0
    %v9027 = vadd.f32 %v8772, %v9026
    %v9028 = vpop.f32.mrf.mxu0
    %9029 = vdwg.mxu0
    %v9030 = vadd.f32 %v6535, %v8904
    %v9031 = vadd.f32 %v6536, %v8907
    %v9032 = vadd.f32 %v6537, %v8912
    %v9033 = vadd.f32 %v6538, %v8915
    %v9034 = vadd.f32 %v6539, %v8920
    %v9035 = vadd.f32 %v6540, %v8923
    %v9036 = vadd.f32 %v6541, %v8928
    %v9037 = vadd.f32 %v6542, %v8931
    %v9038 = vadd.f32 %v6543, %v8936
    %v9039 = vadd.f32 %v6544, %v8939
    %v9040 = vadd.f32 %v6545, %v8944
    %v9041 = vadd.f32 %v6546, %v8947
    %v9042 = vadd.f32 %v6547, %v8952
    %v9043 = vadd.f32 %v6548, %v8955
    %v9044 = vadd.f32 %v6549, %v8960
    %v9045 = vadd.f32 %v6550, %v8963
    %v9046 = vadd.f32 %v6551, %v8968
    %v9047 = vadd.f32 %v6552, %v8971
    %v9048 = vadd.f32 %v6553, %v8976
    %v9049 = vadd.f32 %v6554, %v8979
    %v9050 = vadd.f32 %v6555, %v8984
    %v9051 = vadd.f32 %v6556, %v8987
    %v9052 = vadd.f32 %v6557, %v8992
    %v9053 = vadd.f32 %v6558, %v8995
    %v9054 = vadd.f32 %v6559, %v9000
    %v9055 = vadd.f32 %v6560, %v9003
    %v9056 = vadd.f32 %v6561, %v9008
    %v9057 = vadd.f32 %v6562, %v9011
    %v9058 = vadd.f32 %v6563, %v9016
    %v9059 = vadd.f32 %v6564, %v9019
    %v9060 = vadd.f32 %v6565, %v9024
    %v9061 = vadd.f32 %v6566, %v9027
    %9062 = vadd.xlane.f32.xlu0 %v9030
    %v9063 = vpop.xlane.xlu0 %9062
    %9064 = vadd.xlane.f32.xlu0 %v9031
    %v9065 = vpop.xlane.xlu0 %9064
    %9066 = vadd.xlane.f32.xlu0 %v9032
    %v9067 = vpop.xlane.xlu0 %9066
    %9068 = vadd.xlane.f32.xlu0 %v9033
    %v9069 = vpop.xlane.xlu0 %9068
    %9070 = vadd.xlane.f32.xlu0 %v9034
    %v9071 = vpop.xlane.xlu0 %9070
    %9072 = vadd.xlane.f32.xlu0 %v9035
    %v9073 = vpop.xlane.xlu0 %9072
    %9074 = vadd.xlane.f32.xlu0 %v9036
    %v9075 = vpop.xlane.xlu0 %9074
    %9076 = vadd.xlane.f32.xlu0 %v9037
    %v9077 = vpop.xlane.xlu0 %9076
    %9078 = vadd.xlane.f32.xlu0 %v9038
    %v9079 = vpop.xlane.xlu0 %9078
    %9080 = vadd.xlane.f32.xlu0 %v9039
    %v9081 = vpop.xlane.xlu0 %9080
    %9082 = vadd.xlane.f32.xlu0 %v9040
    %v9083 = vpop.xlane.xlu0 %9082
    %9084 = vadd.xlane.f32.xlu0 %v9041
    %v9085 = vpop.xlane.xlu0 %9084
    %9086 = vadd.xlane.f32.xlu0 %v9042
    %v9087 = vpop.xlane.xlu0 %9086
    %9088 = vadd.xlane.f32.xlu0 %v9043
    %v9089 = vpop.xlane.xlu0 %9088
    %9090 = vadd.xlane.f32.xlu0 %v9044
    %v9091 = vpop.xlane.xlu0 %9090
    %9092 = vadd.xlane.f32.xlu0 %v9045
    %v9093 = vpop.xlane.xlu0 %9092
    %9094 = vadd.xlane.f32.xlu0 %v9046
    %v9095 = vpop.xlane.xlu0 %9094
    %9096 = vadd.xlane.f32.xlu0 %v9047
    %v9097 = vpop.xlane.xlu0 %9096
    %9098 = vadd.xlane.f32.xlu0 %v9048
    %v9099 = vpop.xlane.xlu0 %9098
    %9100 = vadd.xlane.f32.xlu0 %v9049
    %v9101 = vpop.xlane.xlu0 %9100
    %9102 = vadd.xlane.f32.xlu0 %v9050
    %v9103 = vpop.xlane.xlu0 %9102
    %9104 = vadd.xlane.f32.xlu0 %v9051
    %v9105 = vpop.xlane.xlu0 %9104
    %9106 = vadd.xlane.f32.xlu0 %v9052
    %v9107 = vpop.xlane.xlu0 %9106
    %9108 = vadd.xlane.f32.xlu0 %v9053
    %v9109 = vpop.xlane.xlu0 %9108
    %9110 = vadd.xlane.f32.xlu0 %v9054
    %v9111 = vpop.xlane.xlu0 %9110
    %9112 = vadd.xlane.f32.xlu0 %v9055
    %v9113 = vpop.xlane.xlu0 %9112
    %9114 = vadd.xlane.f32.xlu0 %v9056
    %v9115 = vpop.xlane.xlu0 %9114
    %9116 = vadd.xlane.f32.xlu0 %v9057
    %v9117 = vpop.xlane.xlu0 %9116
    %9118 = vadd.xlane.f32.xlu0 %v9058
    %v9119 = vpop.xlane.xlu0 %9118
    %9120 = vadd.xlane.f32.xlu0 %v9059
    %v9121 = vpop.xlane.xlu0 %9120
    %9122 = vadd.xlane.f32.xlu0 %v9060
    %v9123 = vpop.xlane.xlu0 %9122
    %9124 = vadd.xlane.f32.xlu0 %v9061
    %v9125 = vpop.xlane.xlu0 %9124
    %v9126 = vmul.f32 %v9063, %v1645
    %v9127 = vmul.f32 %v9065, %v1645
    %v9128 = vmul.f32 %v9067, %v1645
    %v9129 = vmul.f32 %v9069, %v1645
    %v9130 = vmul.f32 %v9071, %v1645
    %v9131 = vmul.f32 %v9073, %v1645
    %v9132 = vmul.f32 %v9075, %v1645
    %v9133 = vmul.f32 %v9077, %v1645
    %v9134 = vmul.f32 %v9079, %v1645
    %v9135 = vmul.f32 %v9081, %v1645
    %v9136 = vmul.f32 %v9083, %v1645
    %v9137 = vmul.f32 %v9085, %v1645
    %v9138 = vmul.f32 %v9087, %v1645
    %v9139 = vmul.f32 %v9089, %v1645
    %v9140 = vmul.f32 %v9091, %v1645
    %v9141 = vmul.f32 %v9093, %v1645
    %v9142 = vmul.f32 %v9095, %v1645
    %v9143 = vmul.f32 %v9097, %v1645
    %v9144 = vmul.f32 %v9099, %v1645
    %v9145 = vmul.f32 %v9101, %v1645
    %v9146 = vmul.f32 %v9103, %v1645
    %v9147 = vmul.f32 %v9105, %v1645
    %v9148 = vmul.f32 %v9107, %v1645
    %v9149 = vmul.f32 %v9109, %v1645
    %v9150 = vmul.f32 %v9111, %v1645
    %v9151 = vmul.f32 %v9113, %v1645
    %v9152 = vmul.f32 %v9115, %v1645
    %v9153 = vmul.f32 %v9117, %v1645
    %v9154 = vmul.f32 %v9119, %v1645
    %v9155 = vmul.f32 %v9121, %v1645
    %v9156 = vmul.f32 %v9123, %v1645
    %v9157 = vmul.f32 %v9125, %v1645
    %v9158 = vmul.f32 %v9030, %v9030
    %v9159 = vmul.f32 %v9031, %v9031
    %v9160 = vmul.f32 %v9032, %v9032
    %v9161 = vmul.f32 %v9033, %v9033
    %v9162 = vmul.f32 %v9034, %v9034
    %v9163 = vmul.f32 %v9035, %v9035
    %v9164 = vmul.f32 %v9036, %v9036
    %v9165 = vmul.f32 %v9037, %v9037
    %v9166 = vmul.f32 %v9038, %v9038
    %v9167 = vmul.f32 %v9039, %v9039
    %v9168 = vmul.f32 %v9040, %v9040
    %v9169 = vmul.f32 %v9041, %v9041
    %v9170 = vmul.f32 %v9042, %v9042
    %v9171 = vmul.f32 %v9043, %v9043
    %v9172 = vmul.f32 %v9044, %v9044
    %v9173 = vmul.f32 %v9045, %v9045
    %v9174 = vmul.f32 %v9046, %v9046
    %v9175 = vmul.f32 %v9047, %v9047
    %v9176 = vmul.f32 %v9048, %v9048
    %v9177 = vmul.f32 %v9049, %v9049
    %v9178 = vmul.f32 %v9050, %v9050
    %v9179 = vmul.f32 %v9051, %v9051
    %v9180 = vmul.f32 %v9052, %v9052
    %v9181 = vmul.f32 %v9053, %v9053
    %v9182 = vmul.f32 %v9054, %v9054
    %v9183 = vmul.f32 %v9055, %v9055
    %v9184 = vmul.f32 %v9056, %v9056
    %v9185 = vmul.f32 %v9057, %v9057
    %v9186 = vmul.f32 %v9058, %v9058
    %v9187 = vmul.f32 %v9059, %v9059
    %v9188 = vmul.f32 %v9060, %v9060
    %v9189 = vmul.f32 %v9061, %v9061
    %9190 = vadd.xlane.f32.xlu0 %v9158
    %v9191 = vpop.xlane.xlu0 %9190
    %9192 = vadd.xlane.f32.xlu0 %v9159
    %v9193 = vpop.xlane.xlu0 %9192
    %9194 = vadd.xlane.f32.xlu0 %v9160
    %v9195 = vpop.xlane.xlu0 %9194
    %9196 = vadd.xlane.f32.xlu0 %v9161
    %v9197 = vpop.xlane.xlu0 %9196
    %9198 = vadd.xlane.f32.xlu0 %v9162
    %v9199 = vpop.xlane.xlu0 %9198
    %9200 = vadd.xlane.f32.xlu0 %v9163
    %v9201 = vpop.xlane.xlu0 %9200
    %9202 = vadd.xlane.f32.xlu0 %v9164
    %v9203 = vpop.xlane.xlu0 %9202
    %9204 = vadd.xlane.f32.xlu0 %v9165
    %v9205 = vpop.xlane.xlu0 %9204
    %9206 = vadd.xlane.f32.xlu0 %v9166
    %v9207 = vpop.xlane.xlu0 %9206
    %9208 = vadd.xlane.f32.xlu0 %v9167
    %v9209 = vpop.xlane.xlu0 %9208
    %9210 = vadd.xlane.f32.xlu0 %v9168
    %v9211 = vpop.xlane.xlu0 %9210
    %9212 = vadd.xlane.f32.xlu0 %v9169
    %v9213 = vpop.xlane.xlu0 %9212
    %9214 = vadd.xlane.f32.xlu0 %v9170
    %v9215 = vpop.xlane.xlu0 %9214
    %9216 = vadd.xlane.f32.xlu0 %v9171
    %v9217 = vpop.xlane.xlu0 %9216
    %9218 = vadd.xlane.f32.xlu0 %v9172
    %v9219 = vpop.xlane.xlu0 %9218
    %9220 = vadd.xlane.f32.xlu0 %v9173
    %v9221 = vpop.xlane.xlu0 %9220
    %9222 = vadd.xlane.f32.xlu0 %v9174
    %v9223 = vpop.xlane.xlu0 %9222
    %9224 = vadd.xlane.f32.xlu0 %v9175
    %v9225 = vpop.xlane.xlu0 %9224
    %9226 = vadd.xlane.f32.xlu0 %v9176
    %v9227 = vpop.xlane.xlu0 %9226
    %9228 = vadd.xlane.f32.xlu0 %v9177
    %v9229 = vpop.xlane.xlu0 %9228
    %9230 = vadd.xlane.f32.xlu0 %v9178
    %v9231 = vpop.xlane.xlu0 %9230
    %9232 = vadd.xlane.f32.xlu0 %v9179
    %v9233 = vpop.xlane.xlu0 %9232
    %9234 = vadd.xlane.f32.xlu0 %v9180
    %v9235 = vpop.xlane.xlu0 %9234
    %9236 = vadd.xlane.f32.xlu0 %v9181
    %v9237 = vpop.xlane.xlu0 %9236
    %9238 = vadd.xlane.f32.xlu0 %v9182
    %v9239 = vpop.xlane.xlu0 %9238
    %9240 = vadd.xlane.f32.xlu0 %v9183
    %v9241 = vpop.xlane.xlu0 %9240
    %9242 = vadd.xlane.f32.xlu0 %v9184
    %v9243 = vpop.xlane.xlu0 %9242
    %9244 = vadd.xlane.f32.xlu0 %v9185
    %v9245 = vpop.xlane.xlu0 %9244
    %9246 = vadd.xlane.f32.xlu0 %v9186
    %v9247 = vpop.xlane.xlu0 %9246
    %9248 = vadd.xlane.f32.xlu0 %v9187
    %v9249 = vpop.xlane.xlu0 %9248
    %9250 = vadd.xlane.f32.xlu0 %v9188
    %v9251 = vpop.xlane.xlu0 %9250
    %9252 = vadd.xlane.f32.xlu0 %v9189
    %v9253 = vpop.xlane.xlu0 %9252
    %v9254 = vmul.f32 %v9191, %v1645
    %v9255 = vmul.f32 %v9193, %v1645
    %v9256 = vmul.f32 %v9195, %v1645
    %v9257 = vmul.f32 %v9197, %v1645
    %v9258 = vmul.f32 %v9199, %v1645
    %v9259 = vmul.f32 %v9201, %v1645
    %v9260 = vmul.f32 %v9203, %v1645
    %v9261 = vmul.f32 %v9205, %v1645
    %v9262 = vmul.f32 %v9207, %v1645
    %v9263 = vmul.f32 %v9209, %v1645
    %v9264 = vmul.f32 %v9211, %v1645
    %v9265 = vmul.f32 %v9213, %v1645
    %v9266 = vmul.f32 %v9215, %v1645
    %v9267 = vmul.f32 %v9217, %v1645
    %v9268 = vmul.f32 %v9219, %v1645
    %v9269 = vmul.f32 %v9221, %v1645
    %v9270 = vmul.f32 %v9223, %v1645
    %v9271 = vmul.f32 %v9225, %v1645
    %v9272 = vmul.f32 %v9227, %v1645
    %v9273 = vmul.f32 %v9229, %v1645
    %v9274 = vmul.f32 %v9231, %v1645
    %v9275 = vmul.f32 %v9233, %v1645
    %v9276 = vmul.f32 %v9235, %v1645
    %v9277 = vmul.f32 %v9237, %v1645
    %v9278 = vmul.f32 %v9239, %v1645
    %v9279 = vmul.f32 %v9241, %v1645
    %v9280 = vmul.f32 %v9243, %v1645
    %v9281 = vmul.f32 %v9245, %v1645
    %v9282 = vmul.f32 %v9247, %v1645
    %v9283 = vmul.f32 %v9249, %v1645
    %v9284 = vmul.f32 %v9251, %v1645
    %v9285 = vmul.f32 %v9253, %v1645
    %v9286 = vmul.f32 %v9126, %v9126
    %v9287 = vmul.f32 %v9127, %v9127
    %v9288 = vmul.f32 %v9128, %v9128
    %v9289 = vmul.f32 %v9129, %v9129
    %v9290 = vmul.f32 %v9130, %v9130
    %v9291 = vmul.f32 %v9131, %v9131
    %v9292 = vmul.f32 %v9132, %v9132
    %v9293 = vmul.f32 %v9133, %v9133
    %v9294 = vmul.f32 %v9134, %v9134
    %v9295 = vmul.f32 %v9135, %v9135
    %v9296 = vmul.f32 %v9136, %v9136
    %v9297 = vmul.f32 %v9137, %v9137
    %v9298 = vmul.f32 %v9138, %v9138
    %v9299 = vmul.f32 %v9139, %v9139
    %v9300 = vmul.f32 %v9140, %v9140
    %v9301 = vmul.f32 %v9141, %v9141
    %v9302 = vmul.f32 %v9142, %v9142
    %v9303 = vmul.f32 %v9143, %v9143
    %v9304 = vmul.f32 %v9144, %v9144
    %v9305 = vmul.f32 %v9145, %v9145
    %v9306 = vmul.f32 %v9146, %v9146
    %v9307 = vmul.f32 %v9147, %v9147
    %v9308 = vmul.f32 %v9148, %v9148
    %v9309 = vmul.f32 %v9149, %v9149
    %v9310 = vmul.f32 %v9150, %v9150
    %v9311 = vmul.f32 %v9151, %v9151
    %v9312 = vmul.f32 %v9152, %v9152
    %v9313 = vmul.f32 %v9153, %v9153
    %v9314 = vmul.f32 %v9154, %v9154
    %v9315 = vmul.f32 %v9155, %v9155
    %v9316 = vmul.f32 %v9156, %v9156
    %v9317 = vmul.f32 %v9157, %v9157
    %v9318 = vsub.f32 %v9254, %v9286
    %v9319 = vsub.f32 %v9255, %v9287
    %v9320 = vsub.f32 %v9256, %v9288
    %v9321 = vsub.f32 %v9257, %v9289
    %v9322 = vsub.f32 %v9258, %v9290
    %v9323 = vsub.f32 %v9259, %v9291
    %v9324 = vsub.f32 %v9260, %v9292
    %v9325 = vsub.f32 %v9261, %v9293
    %v9326 = vsub.f32 %v9262, %v9294
    %v9327 = vsub.f32 %v9263, %v9295
    %v9328 = vsub.f32 %v9264, %v9296
    %v9329 = vsub.f32 %v9265, %v9297
    %v9330 = vsub.f32 %v9266, %v9298
    %v9331 = vsub.f32 %v9267, %v9299
    %v9332 = vsub.f32 %v9268, %v9300
    %v9333 = vsub.f32 %v9269, %v9301
    %v9334 = vsub.f32 %v9270, %v9302
    %v9335 = vsub.f32 %v9271, %v9303
    %v9336 = vsub.f32 %v9272, %v9304
    %v9337 = vsub.f32 %v9273, %v9305
    %v9338 = vsub.f32 %v9274, %v9306
    %v9339 = vsub.f32 %v9275, %v9307
    %v9340 = vsub.f32 %v9276, %v9308
    %v9341 = vsub.f32 %v9277, %v9309
    %v9342 = vsub.f32 %v9278, %v9310
    %v9343 = vsub.f32 %v9279, %v9311
    %v9344 = vsub.f32 %v9280, %v9312
    %v9345 = vsub.f32 %v9281, %v9313
    %v9346 = vsub.f32 %v9282, %v9314
    %v9347 = vsub.f32 %v9283, %v9315
    %v9348 = vsub.f32 %v9284, %v9316
    %v9349 = vsub.f32 %v9285, %v9317
    %v9350 = vmax.f32 %v9318, 0.0
    %v9351 = vmax.f32 %v9319, 0.0
    %v9352 = vmax.f32 %v9320, 0.0
    %v9353 = vmax.f32 %v9321, 0.0
    %v9354 = vmax.f32 %v9322, 0.0
    %v9355 = vmax.f32 %v9323, 0.0
    %v9356 = vmax.f32 %v9324, 0.0
    %v9357 = vmax.f32 %v9325, 0.0
    %v9358 = vmax.f32 %v9326, 0.0
    %v9359 = vmax.f32 %v9327, 0.0
    %v9360 = vmax.f32 %v9328, 0.0
    %v9361 = vmax.f32 %v9329, 0.0
    %v9362 = vmax.f32 %v9330, 0.0
    %v9363 = vmax.f32 %v9331, 0.0
    %v9364 = vmax.f32 %v9332, 0.0
    %v9365 = vmax.f32 %v9333, 0.0
    %v9366 = vmax.f32 %v9334, 0.0
    %v9367 = vmax.f32 %v9335, 0.0
    %v9368 = vmax.f32 %v9336, 0.0
    %v9369 = vmax.f32 %v9337, 0.0
    %v9370 = vmax.f32 %v9338, 0.0
    %v9371 = vmax.f32 %v9339, 0.0
    %v9372 = vmax.f32 %v9340, 0.0
    %v9373 = vmax.f32 %v9341, 0.0
    %v9374 = vmax.f32 %v9342, 0.0
    %v9375 = vmax.f32 %v9343, 0.0
    %v9376 = vmax.f32 %v9344, 0.0
    %v9377 = vmax.f32 %v9345, 0.0
    %v9378 = vmax.f32 %v9346, 0.0
    %v9379 = vmax.f32 %v9347, 0.0
    %v9380 = vmax.f32 %v9348, 0.0
    %v9381 = vmax.f32 %v9349, 0.0
    %v9382 = vsub.f32 %v9030, %v9126
    %v9383 = vsub.f32 %v9031, %v9127
    %v9384 = vsub.f32 %v9032, %v9128
    %v9385 = vsub.f32 %v9033, %v9129
    %v9386 = vsub.f32 %v9034, %v9130
    %v9387 = vsub.f32 %v9035, %v9131
    %v9388 = vsub.f32 %v9036, %v9132
    %v9389 = vsub.f32 %v9037, %v9133
    %v9390 = vsub.f32 %v9038, %v9134
    %v9391 = vsub.f32 %v9039, %v9135
    %v9392 = vsub.f32 %v9040, %v9136
    %v9393 = vsub.f32 %v9041, %v9137
    %v9394 = vsub.f32 %v9042, %v9138
    %v9395 = vsub.f32 %v9043, %v9139
    %v9396 = vsub.f32 %v9044, %v9140
    %v9397 = vsub.f32 %v9045, %v9141
    %v9398 = vsub.f32 %v9046, %v9142
    %v9399 = vsub.f32 %v9047, %v9143
    %v9400 = vsub.f32 %v9048, %v9144
    %v9401 = vsub.f32 %v9049, %v9145
    %v9402 = vsub.f32 %v9050, %v9146
    %v9403 = vsub.f32 %v9051, %v9147
    %v9404 = vsub.f32 %v9052, %v9148
    %v9405 = vsub.f32 %v9053, %v9149
    %v9406 = vsub.f32 %v9054, %v9150
    %v9407 = vsub.f32 %v9055, %v9151
    %v9408 = vsub.f32 %v9056, %v9152
    %v9409 = vsub.f32 %v9057, %v9153
    %v9410 = vsub.f32 %v9058, %v9154
    %v9411 = vsub.f32 %v9059, %v9155
    %v9412 = vsub.f32 %v9060, %v9156
    %v9413 = vsub.f32 %v9061, %v9157
    %v9414 = vadd.f32 %v9350, 1e-05
    %v9415 = vadd.f32 %v9351, 1e-05
    %v9416 = vadd.f32 %v9352, 1e-05
    %v9417 = vadd.f32 %v9353, 1e-05
    %v9418 = vadd.f32 %v9354, 1e-05
    %v9419 = vadd.f32 %v9355, 1e-05
    %v9420 = vadd.f32 %v9356, 1e-05
    %v9421 = vadd.f32 %v9357, 1e-05
    %v9422 = vadd.f32 %v9358, 1e-05
    %v9423 = vadd.f32 %v9359, 1e-05
    %v9424 = vadd.f32 %v9360, 1e-05
    %v9425 = vadd.f32 %v9361, 1e-05
    %v9426 = vadd.f32 %v9362, 1e-05
    %v9427 = vadd.f32 %v9363, 1e-05
    %v9428 = vadd.f32 %v9364, 1e-05
    %v9429 = vadd.f32 %v9365, 1e-05
    %v9430 = vadd.f32 %v9366, 1e-05
    %v9431 = vadd.f32 %v9367, 1e-05
    %v9432 = vadd.f32 %v9368, 1e-05
    %v9433 = vadd.f32 %v9369, 1e-05
    %v9434 = vadd.f32 %v9370, 1e-05
    %v9435 = vadd.f32 %v9371, 1e-05
    %v9436 = vadd.f32 %v9372, 1e-05
    %v9437 = vadd.f32 %v9373, 1e-05
    %v9438 = vadd.f32 %v9374, 1e-05
    %v9439 = vadd.f32 %v9375, 1e-05
    %v9440 = vadd.f32 %v9376, 1e-05
    %v9441 = vadd.f32 %v9377, 1e-05
    %v9442 = vadd.f32 %v9378, 1e-05
    %v9443 = vadd.f32 %v9379, 1e-05
    %v9444 = vadd.f32 %v9380, 1e-05
    %v9445 = vadd.f32 %v9381, 1e-05
    %v9446 = vrsqrt.pop %v9414
    %v9447 = vrsqrt.pop %v9415
    %v9448 = vrsqrt.pop %v9416
    %v9449 = vrsqrt.pop %v9417
    %v9450 = vrsqrt.pop %v9418
    %v9451 = vrsqrt.pop %v9419
    %v9452 = vrsqrt.pop %v9420
    %v9453 = vrsqrt.pop %v9421
    %v9454 = vrsqrt.pop %v9422
    %v9455 = vrsqrt.pop %v9423
    %v9456 = vrsqrt.pop %v9424
    %v9457 = vrsqrt.pop %v9425
    %v9458 = vrsqrt.pop %v9426
    %v9459 = vrsqrt.pop %v9427
    %v9460 = vrsqrt.pop %v9428
    %v9461 = vrsqrt.pop %v9429
    %v9462 = vrsqrt.pop %v9430
    %v9463 = vrsqrt.pop %v9431
    %v9464 = vrsqrt.pop %v9432
    %v9465 = vrsqrt.pop %v9433
    %v9466 = vrsqrt.pop %v9434
    %v9467 = vrsqrt.pop %v9435
    %v9468 = vrsqrt.pop %v9436
    %v9469 = vrsqrt.pop %v9437
    %v9470 = vrsqrt.pop %v9438
    %v9471 = vrsqrt.pop %v9439
    %v9472 = vrsqrt.pop %v9440
    %v9473 = vrsqrt.pop %v9441
    %v9474 = vrsqrt.pop %v9442
    %v9475 = vrsqrt.pop %v9443
    %v9476 = vrsqrt.pop %v9444
    %v9477 = vrsqrt.pop %v9445
    %v9478 = vmul.f32 %v9382, %v9446
    %v9479 = vmul.f32 %v9383, %v9447
    %v9480 = vmul.f32 %v9384, %v9448
    %v9481 = vmul.f32 %v9385, %v9449
    %v9482 = vmul.f32 %v9386, %v9450
    %v9483 = vmul.f32 %v9387, %v9451
    %v9484 = vmul.f32 %v9388, %v9452
    %v9485 = vmul.f32 %v9389, %v9453
    %v9486 = vmul.f32 %v9390, %v9454
    %v9487 = vmul.f32 %v9391, %v9455
    %v9488 = vmul.f32 %v9392, %v9456
    %v9489 = vmul.f32 %v9393, %v9457
    %v9490 = vmul.f32 %v9394, %v9458
    %v9491 = vmul.f32 %v9395, %v9459
    %v9492 = vmul.f32 %v9396, %v9460
    %v9493 = vmul.f32 %v9397, %v9461
    %v9494 = vmul.f32 %v9398, %v9462
    %v9495 = vmul.f32 %v9399, %v9463
    %v9496 = vmul.f32 %v9400, %v9464
    %v9497 = vmul.f32 %v9401, %v9465
    %v9498 = vmul.f32 %v9402, %v9466
    %v9499 = vmul.f32 %v9403, %v9467
    %v9500 = vmul.f32 %v9404, %v9468
    %v9501 = vmul.f32 %v9405, %v9469
    %v9502 = vmul.f32 %v9406, %v9470
    %v9503 = vmul.f32 %v9407, %v9471
    %v9504 = vmul.f32 %v9408, %v9472
    %v9505 = vmul.f32 %v9409, %v9473
    %v9506 = vmul.f32 %v9410, %v9474
    %v9507 = vmul.f32 %v9411, %v9475
    %v9508 = vmul.f32 %v9412, %v9476
    %v9509 = vmul.f32 %v9413, %v9477
    %v9510 = vld [vmem:[%s11 + $0x3] sm:$0x1]
    %v9511 = vlaneseq
    %v9512 = vshrl.u32 %v9511, 7
    %v9513 = vsub.s32 0, %v9512
    %v9514 = vrot.slane %v9510, %v9513
    %v9515 = vmul.f32 %v9478, %v9514
    %v9516 = vmul.f32 %v9479, %v9514
    %v9517 = vmul.f32 %v9480, %v9514
    %v9518 = vmul.f32 %v9481, %v9514
    %v9519 = vmul.f32 %v9482, %v9514
    %v9520 = vmul.f32 %v9483, %v9514
    %v9521 = vmul.f32 %v9484, %v9514
    %v9522 = vmul.f32 %v9485, %v9514
    %v9523 = vmul.f32 %v9486, %v9514
    %v9524 = vmul.f32 %v9487, %v9514
    %v9525 = vmul.f32 %v9488, %v9514
    %v9526 = vmul.f32 %v9489, %v9514
    %v9527 = vmul.f32 %v9490, %v9514
    %v9528 = vmul.f32 %v9491, %v9514
    %v9529 = vmul.f32 %v9492, %v9514
    %v9530 = vmul.f32 %v9493, %v9514
    %v9531 = vmul.f32 %v9494, %v9514
    %v9532 = vmul.f32 %v9495, %v9514
    %v9533 = vmul.f32 %v9496, %v9514
    %v9534 = vmul.f32 %v9497, %v9514
    %v9535 = vmul.f32 %v9498, %v9514
    %v9536 = vmul.f32 %v9499, %v9514
    %v9537 = vmul.f32 %v9500, %v9514
    %v9538 = vmul.f32 %v9501, %v9514
    %v9539 = vmul.f32 %v9502, %v9514
    %v9540 = vmul.f32 %v9503, %v9514
    %v9541 = vmul.f32 %v9504, %v9514
    %v9542 = vmul.f32 %v9505, %v9514
    %v9543 = vmul.f32 %v9506, %v9514
    %v9544 = vmul.f32 %v9507, %v9514
    %v9545 = vmul.f32 %v9508, %v9514
    %v9546 = vmul.f32 %v9509, %v9514
    %v9547 = vld [vmem:[%s12 + $0x3] sm:$0x1]
    %v9548 = vlaneseq
    %v9549 = vshrl.u32 %v9548, 7
    %v9550 = vsub.s32 0, %v9549
    %v9551 = vrot.slane %v9547, %v9550
    %v9552 = vadd.f32 %v9515, %v9551
    %v9553 = vadd.f32 %v9516, %v9551
    %v9554 = vadd.f32 %v9517, %v9551
    %v9555 = vadd.f32 %v9518, %v9551
    %v9556 = vadd.f32 %v9519, %v9551
    %v9557 = vadd.f32 %v9520, %v9551
    %v9558 = vadd.f32 %v9521, %v9551
    %v9559 = vadd.f32 %v9522, %v9551
    %v9560 = vadd.f32 %v9523, %v9551
    %v9561 = vadd.f32 %v9524, %v9551
    %v9562 = vadd.f32 %v9525, %v9551
    %v9563 = vadd.f32 %v9526, %v9551
    %v9564 = vadd.f32 %v9527, %v9551
    %v9565 = vadd.f32 %v9528, %v9551
    %v9566 = vadd.f32 %v9529, %v9551
    %v9567 = vadd.f32 %v9530, %v9551
    %v9568 = vadd.f32 %v9531, %v9551
    %v9569 = vadd.f32 %v9532, %v9551
    %v9570 = vadd.f32 %v9533, %v9551
    %v9571 = vadd.f32 %v9534, %v9551
    %v9572 = vadd.f32 %v9535, %v9551
    %v9573 = vadd.f32 %v9536, %v9551
    %v9574 = vadd.f32 %v9537, %v9551
    %v9575 = vadd.f32 %v9538, %v9551
    %v9576 = vadd.f32 %v9539, %v9551
    %v9577 = vadd.f32 %v9540, %v9551
    %v9578 = vadd.f32 %v9541, %v9551
    %v9579 = vadd.f32 %v9542, %v9551
    %v9580 = vadd.f32 %v9543, %v9551
    %v9581 = vadd.f32 %v9544, %v9551
    %v9582 = vadd.f32 %v9545, %v9551
    %v9583 = vadd.f32 %v9546, %v9551
    %v9584 = vmul.f32 %v9552, 0.5
    %v9585 = vmul.f32 %v9553, 0.5
    %v9586 = vmul.f32 %v9554, 0.5
    %v9587 = vmul.f32 %v9555, 0.5
    %v9588 = vmul.f32 %v9556, 0.5
    %v9589 = vmul.f32 %v9557, 0.5
    %v9590 = vmul.f32 %v9558, 0.5
    %v9591 = vmul.f32 %v9559, 0.5
    %v9592 = vmul.f32 %v9560, 0.5
    %v9593 = vmul.f32 %v9561, 0.5
    %v9594 = vmul.f32 %v9562, 0.5
    %v9595 = vmul.f32 %v9563, 0.5
    %v9596 = vmul.f32 %v9564, 0.5
    %v9597 = vmul.f32 %v9565, 0.5
    %v9598 = vmul.f32 %v9566, 0.5
    %v9599 = vmul.f32 %v9567, 0.5
    %v9600 = vmul.f32 %v9568, 0.5
    %v9601 = vmul.f32 %v9569, 0.5
    %v9602 = vmul.f32 %v9570, 0.5
    %v9603 = vmul.f32 %v9571, 0.5
    %v9604 = vmul.f32 %v9572, 0.5
    %v9605 = vmul.f32 %v9573, 0.5
    %v9606 = vmul.f32 %v9574, 0.5
    %v9607 = vmul.f32 %v9575, 0.5
    %v9608 = vmul.f32 %v9576, 0.5
    %v9609 = vmul.f32 %v9577, 0.5
    %v9610 = vmul.f32 %v9578, 0.5
    %v9611 = vmul.f32 %v9579, 0.5
    %v9612 = vmul.f32 %v9580, 0.5
    %v9613 = vmul.f32 %v9581, 0.5
    %v9614 = vmul.f32 %v9582, 0.5
    %v9615 = vmul.f32 %v9583, 0.5
    %v9616 = vtanh.pop %v9584
    %v9617 = vtanh.pop %v9585
    %v9618 = vtanh.pop %v9586
    %v9619 = vtanh.pop %v9587
    %v9620 = vtanh.pop %v9588
    %v9621 = vtanh.pop %v9589
    %v9622 = vtanh.pop %v9590
    %v9623 = vtanh.pop %v9591
    %v9624 = vtanh.pop %v9592
    %v9625 = vtanh.pop %v9593
    %v9626 = vtanh.pop %v9594
    %v9627 = vtanh.pop %v9595
    %v9628 = vtanh.pop %v9596
    %v9629 = vtanh.pop %v9597
    %v9630 = vtanh.pop %v9598
    %v9631 = vtanh.pop %v9599
    %v9632 = vtanh.pop %v9600
    %v9633 = vtanh.pop %v9601
    %v9634 = vtanh.pop %v9602
    %v9635 = vtanh.pop %v9603
    %v9636 = vtanh.pop %v9604
    %v9637 = vtanh.pop %v9605
    %v9638 = vtanh.pop %v9606
    %v9639 = vtanh.pop %v9607
    %v9640 = vtanh.pop %v9608
    %v9641 = vtanh.pop %v9609
    %v9642 = vtanh.pop %v9610
    %v9643 = vtanh.pop %v9611
    %v9644 = vtanh.pop %v9612
    %v9645 = vtanh.pop %v9613
    %v9646 = vtanh.pop %v9614
    %v9647 = vtanh.pop %v9615
    %v9648 = vmul.f32 %v9616, 0.5
    %v9649 = vmul.f32 %v9617, 0.5
    %v9650 = vmul.f32 %v9618, 0.5
    %v9651 = vmul.f32 %v9619, 0.5
    %v9652 = vmul.f32 %v9620, 0.5
    %v9653 = vmul.f32 %v9621, 0.5
    %v9654 = vmul.f32 %v9622, 0.5
    %v9655 = vmul.f32 %v9623, 0.5
    %v9656 = vmul.f32 %v9624, 0.5
    %v9657 = vmul.f32 %v9625, 0.5
    %v9658 = vmul.f32 %v9626, 0.5
    %v9659 = vmul.f32 %v9627, 0.5
    %v9660 = vmul.f32 %v9628, 0.5
    %v9661 = vmul.f32 %v9629, 0.5
    %v9662 = vmul.f32 %v9630, 0.5
    %v9663 = vmul.f32 %v9631, 0.5
    %v9664 = vmul.f32 %v9632, 0.5
    %v9665 = vmul.f32 %v9633, 0.5
    %v9666 = vmul.f32 %v9634, 0.5
    %v9667 = vmul.f32 %v9635, 0.5
    %v9668 = vmul.f32 %v9636, 0.5
    %v9669 = vmul.f32 %v9637, 0.5
    %v9670 = vmul.f32 %v9638, 0.5
    %v9671 = vmul.f32 %v9639, 0.5
    %v9672 = vmul.f32 %v9640, 0.5
    %v9673 = vmul.f32 %v9641, 0.5
    %v9674 = vmul.f32 %v9642, 0.5
    %v9675 = vmul.f32 %v9643, 0.5
    %v9676 = vmul.f32 %v9644, 0.5
    %v9677 = vmul.f32 %v9645, 0.5
    %v9678 = vmul.f32 %v9646, 0.5
    %v9679 = vmul.f32 %v9647, 0.5
    %v9680 = vadd.f32 %v9648, 0.5
    %v9681 = vadd.f32 %v9649, 0.5
    %v9682 = vadd.f32 %v9650, 0.5
    %v9683 = vadd.f32 %v9651, 0.5
    %v9684 = vadd.f32 %v9652, 0.5
    %v9685 = vadd.f32 %v9653, 0.5
    %v9686 = vadd.f32 %v9654, 0.5
    %v9687 = vadd.f32 %v9655, 0.5
    %v9688 = vadd.f32 %v9656, 0.5
    %v9689 = vadd.f32 %v9657, 0.5
    %v9690 = vadd.f32 %v9658, 0.5
    %v9691 = vadd.f32 %v9659, 0.5
    %v9692 = vadd.f32 %v9660, 0.5
    %v9693 = vadd.f32 %v9661, 0.5
    %v9694 = vadd.f32 %v9662, 0.5
    %v9695 = vadd.f32 %v9663, 0.5
    %v9696 = vadd.f32 %v9664, 0.5
    %v9697 = vadd.f32 %v9665, 0.5
    %v9698 = vadd.f32 %v9666, 0.5
    %v9699 = vadd.f32 %v9667, 0.5
    %v9700 = vadd.f32 %v9668, 0.5
    %v9701 = vadd.f32 %v9669, 0.5
    %v9702 = vadd.f32 %v9670, 0.5
    %v9703 = vadd.f32 %v9671, 0.5
    %v9704 = vadd.f32 %v9672, 0.5
    %v9705 = vadd.f32 %v9673, 0.5
    %v9706 = vadd.f32 %v9674, 0.5
    %v9707 = vadd.f32 %v9675, 0.5
    %v9708 = vadd.f32 %v9676, 0.5
    %v9709 = vadd.f32 %v9677, 0.5
    %v9710 = vadd.f32 %v9678, 0.5
    %v9711 = vadd.f32 %v9679, 0.5
    %v9712 = vmul.f32 %v9552, %v9680
    %v9713 = vmul.f32 %v9553, %v9681
    %v9714 = vmul.f32 %v9554, %v9682
    %v9715 = vmul.f32 %v9555, %v9683
    %v9716 = vmul.f32 %v9556, %v9684
    %v9717 = vmul.f32 %v9557, %v9685
    %v9718 = vmul.f32 %v9558, %v9686
    %v9719 = vmul.f32 %v9559, %v9687
    %v9720 = vmul.f32 %v9560, %v9688
    %v9721 = vmul.f32 %v9561, %v9689
    %v9722 = vmul.f32 %v9562, %v9690
    %v9723 = vmul.f32 %v9563, %v9691
    %v9724 = vmul.f32 %v9564, %v9692
    %v9725 = vmul.f32 %v9565, %v9693
    %v9726 = vmul.f32 %v9566, %v9694
    %v9727 = vmul.f32 %v9567, %v9695
    %v9728 = vmul.f32 %v9568, %v9696
    %v9729 = vmul.f32 %v9569, %v9697
    %v9730 = vmul.f32 %v9570, %v9698
    %v9731 = vmul.f32 %v9571, %v9699
    %v9732 = vmul.f32 %v9572, %v9700
    %v9733 = vmul.f32 %v9573, %v9701
    %v9734 = vmul.f32 %v9574, %v9702
    %v9735 = vmul.f32 %v9575, %v9703
    %v9736 = vmul.f32 %v9576, %v9704
    %v9737 = vmul.f32 %v9577, %v9705
    %v9738 = vmul.f32 %v9578, %v9706
    %v9739 = vmul.f32 %v9579, %v9707
    %v9740 = vmul.f32 %v9580, %v9708
    %v9741 = vmul.f32 %v9581, %v9709
    %v9742 = vmul.f32 %v9582, %v9710
    %v9743 = vmul.f32 %v9583, %v9711
    %v9744 = vpack.c.bf16 %v9713, %v9712
    %v9745 = vpack.c.bf16 %v9715, %v9714
    %v9746 = vpack.c.bf16 %v9717, %v9716
    %v9747 = vpack.c.bf16 %v9719, %v9718
    %v9748 = vpack.c.bf16 %v9721, %v9720
    %v9749 = vpack.c.bf16 %v9723, %v9722
    %v9750 = vpack.c.bf16 %v9725, %v9724
    %v9751 = vpack.c.bf16 %v9727, %v9726
    %v9752 = vpack.c.bf16 %v9729, %v9728
    %v9753 = vpack.c.bf16 %v9731, %v9730
    %v9754 = vpack.c.bf16 %v9733, %v9732
    %v9755 = vpack.c.bf16 %v9735, %v9734
    %v9756 = vpack.c.bf16 %v9737, %v9736
    %v9757 = vpack.c.bf16 %v9739, %v9738
    %v9758 = vpack.c.bf16 %v9741, %v9740
    %v9759 = vpack.c.bf16 %v9743, %v9742
    %s9760 = scalar_lea.vmem [#allocation2], 384
    %v9761 = vld [vmem:[%s9760] sm:$0xff]
    %v9762 = vld [vmem:[%s9760 + $0x8] sm:$0xff]
    %v9763 = vld [vmem:[%s9760 + $0x10] sm:$0xff]
    %v9764 = vld [vmem:[%s9760 + $0x18] sm:$0xff]
    %v9765 = vld [vmem:[%s9760 + $0x20] sm:$0xff]
    %v9766 = vld [vmem:[%s9760 + $0x28] sm:$0xff]
    %v9767 = vld [vmem:[%s9760 + $0x30] sm:$0xff]
    %v9768 = vld [vmem:[%s9760 + $0x38] sm:$0xff]
    %v9769 = vld [vmem:[%s9760 + $0x40] sm:$0xff]
    %v9770 = vld [vmem:[%s9760 + $0x48] sm:$0xff]
    %v9771 = vld [vmem:[%s9760 + $0x50] sm:$0xff]
    %v9772 = vld [vmem:[%s9760 + $0x58] sm:$0xff]
    %v9773 = vld [vmem:[%s9760 + $0x60] sm:$0xff]
    %v9774 = vld [vmem:[%s9760 + $0x68] sm:$0xff]
    %v9775 = vld [vmem:[%s9760 + $0x70] sm:$0xff]
    %v9776 = vld [vmem:[%s9760 + $0x78] sm:$0xff]
    %v9793 = vunpack.c.l.b16 %v9761
    %v9794 = vunpack.c.h.b16 %v9761
    %v9795 = vunpack.c.l.b16 %v9762
    %v9796 = vunpack.c.h.b16 %v9762
    %v9797 = vunpack.c.l.b16 %v9763
    %v9798 = vunpack.c.h.b16 %v9763
    %v9799 = vunpack.c.l.b16 %v9764
    %v9800 = vunpack.c.h.b16 %v9764
    %v9801 = vunpack.c.l.b16 %v9765
    %v9802 = vunpack.c.h.b16 %v9765
    %v9803 = vunpack.c.l.b16 %v9766
    %v9804 = vunpack.c.h.b16 %v9766
    %v9805 = vunpack.c.l.b16 %v9767
    %v9806 = vunpack.c.h.b16 %v9767
    %v9807 = vunpack.c.l.b16 %v9768
    %v9808 = vunpack.c.h.b16 %v9768
    %v9809 = vunpack.c.l.b16 %v9769
    %v9810 = vunpack.c.h.b16 %v9769
    %v9811 = vunpack.c.l.b16 %v9770
    %v9812 = vunpack.c.h.b16 %v9770
    %v9813 = vunpack.c.l.b16 %v9771
    %v9814 = vunpack.c.h.b16 %v9771
    %v9815 = vunpack.c.l.b16 %v9772
    %v9816 = vunpack.c.h.b16 %v9772
    %v9817 = vunpack.c.l.b16 %v9773
    %v9818 = vunpack.c.h.b16 %v9773
    %v9819 = vunpack.c.l.b16 %v9774
    %v9820 = vunpack.c.h.b16 %v9774
    %v9821 = vunpack.c.l.b16 %v9775
    %v9822 = vunpack.c.h.b16 %v9775
    %v9823 = vunpack.c.l.b16 %v9776
    %v9824 = vunpack.c.h.b16 %v9776
    %v9825 = vpack.c.b16 %v9795, %v9793
    %v9826 = vpack.c.b16 %v9796, %v9794
    %v9827 = vpack.c.b16 %v9799, %v9797
    %v9828 = vpack.c.b16 %v9800, %v9798
    %v9829 = vpack.c.b16 %v9803, %v9801
    %v9830 = vpack.c.b16 %v9804, %v9802
    %v9831 = vpack.c.b16 %v9807, %v9805
    %v9832 = vpack.c.b16 %v9808, %v9806
    %v9833 = vpack.c.b16 %v9811, %v9809
    %v9834 = vpack.c.b16 %v9812, %v9810
    %v9835 = vpack.c.b16 %v9815, %v9813
    %v9836 = vpack.c.b16 %v9816, %v9814
    %v9837 = vpack.c.b16 %v9819, %v9817
    %v9838 = vpack.c.b16 %v9820, %v9818
    %v9839 = vpack.c.b16 %v9823, %v9821
    %v9840 = vpack.c.b16 %v9824, %v9822
    %9857 = vmatprep.subr.bf16.mxu0 %v9840
    %9858 = vmatpush1.bf16.msra.mxu0 %v9839
    %9859 = vmatprep.subr.bf16.mxu0 %v9838
    %9860 = vmatpush1.bf16.msra.mxu0 %v9837
    %9861 = vmatprep.subr.bf16.mxu0 %v9836
    %9862 = vmatpush1.bf16.msra.mxu0 %v9835
    %9863 = vmatprep.subr.bf16.mxu0 %v9834
    %9864 = vmatpush1.bf16.msra.mxu0 %v9833
    %9865 = vmatprep.subr.bf16.mxu0 %v9832
    %9866 = vmatpush1.bf16.msra.mxu0 %v9831
    %9867 = vmatprep.subr.bf16.mxu0 %v9830
    %9868 = vmatpush1.bf16.msra.mxu0 %v9829
    %9869 = vmatprep.subr.bf16.mxu0 %v9828
    %9870 = vmatpush1.bf16.msra.mxu0 %v9827
    %9871 = vmatprep.subr.bf16.mxu0 %v9826
    %9872 = vmatpush1.bf16.msra.mxu0 %v9825
    %9873 = vmatprep.subr.bf16.mxu0 0
    %9874 = vmatpush2.bf16.msra.mxu0 0
    %9875 = vmatprep.subr.bf16.mxu0 0
    %9876 = vmatpush2.bf16.msra.mxu0 0
    %9877 = vmatprep.subr.bf16.mxu0 0
    %9878 = vmatpush2.bf16.msra.mxu0 0
    %9879 = vmatprep.subr.bf16.mxu0 0
    %9880 = vmatpush2.bf16.msra.mxu0 0
    %9881 = vmatprep.subr.bf16.mxu0 0
    %9882 = vmatpush2.bf16.msra.mxu0 0
    %9883 = vmatprep.subr.bf16.mxu0 0
    %9884 = vmatpush2.bf16.msra.mxu0 0
    %9885 = vmatprep.subr.bf16.mxu0 0
    %9886 = vmatpush2.bf16.msra.mxu0 0
    %9887 = vmatprep.subr.bf16.mxu0 0
    %9888 = vmatpush2.bf16.msra.mxu0 0
    %9889 = vmatprep.mubr.bf16.mxu0 0
    %9890 = vmatmul.mubr.bf16.gmra.mxu0 %v9744
    %v9891 = vpop.f32.mrf.mxu0
    %v9892 = vadd.f32 %v1423, %v9891
    %v9893 = vpop.f32.mrf.mxu0
    %v9894 = vadd.f32 %v1425, %v9893
    %v9895 = vpop.f32.mrf.mxu0
    %v9896 = vadd.f32 %v1427, %v9895
    %v9897 = vpop.f32.mrf.mxu0
    %v9898 = vadd.f32 %v1429, %v9897
    %9899 = vmatprep.mubr.bf16.mxu0 0
    %9900 = vmatmul.mubr.bf16.gmra.mxu0 %v9745
    %v9901 = vpop.f32.mrf.mxu0
    %v9902 = vadd.f32 %v1433, %v9901
    %v9903 = vpop.f32.mrf.mxu0
    %v9904 = vadd.f32 %v1435, %v9903
    %v9905 = vpop.f32.mrf.mxu0
    %v9906 = vadd.f32 %v1437, %v9905
    %v9907 = vpop.f32.mrf.mxu0
    %v9908 = vadd.f32 %v1439, %v9907
    %9909 = vmatprep.mubr.bf16.mxu0 0
    %9910 = vmatmul.mubr.bf16.gmra.mxu0 %v9746
    %v9911 = vpop.f32.mrf.mxu0
    %v9912 = vadd.f32 %v1443, %v9911
    %v9913 = vpop.f32.mrf.mxu0
    %v9914 = vadd.f32 %v1445, %v9913
    %v9915 = vpop.f32.mrf.mxu0
    %v9916 = vadd.f32 %v1447, %v9915
    %v9917 = vpop.f32.mrf.mxu0
    %v9918 = vadd.f32 %v1449, %v9917
    %9919 = vmatprep.mubr.bf16.mxu0 0
    %9920 = vmatmul.mubr.bf16.gmra.mxu0 %v9747
    %v9921 = vpop.f32.mrf.mxu0
    %v9922 = vadd.f32 %v1453, %v9921
    %v9923 = vpop.f32.mrf.mxu0
    %v9924 = vadd.f32 %v1455, %v9923
    %v9925 = vpop.f32.mrf.mxu0
    %v9926 = vadd.f32 %v1457, %v9925
    %v9927 = vpop.f32.mrf.mxu0
    %v9928 = vadd.f32 %v1459, %v9927
    %9929 = vmatprep.mubr.bf16.mxu0 0
    %9930 = vmatmul.mubr.bf16.gmra.mxu0 %v9748
    %v9931 = vpop.f32.mrf.mxu0
    %v9932 = vadd.f32 %v1463, %v9931
    %v9933 = vpop.f32.mrf.mxu0
    %v9934 = vadd.f32 %v1465, %v9933
    %v9935 = vpop.f32.mrf.mxu0
    %v9936 = vadd.f32 %v1467, %v9935
    %v9937 = vpop.f32.mrf.mxu0
    %v9938 = vadd.f32 %v1469, %v9937
    %9939 = vmatprep.mubr.bf16.mxu0 0
    %9940 = vmatmul.mubr.bf16.gmra.mxu0 %v9749
    %v9941 = vpop.f32.mrf.mxu0
    %v9942 = vadd.f32 %v1473, %v9941
    %v9943 = vpop.f32.mrf.mxu0
    %v9944 = vadd.f32 %v1475, %v9943
    %v9945 = vpop.f32.mrf.mxu0
    %v9946 = vadd.f32 %v1477, %v9945
    %v9947 = vpop.f32.mrf.mxu0
    %v9948 = vadd.f32 %v1479, %v9947
    %9949 = vmatprep.mubr.bf16.mxu0 0
    %9950 = vmatmul.mubr.bf16.gmra.mxu0 %v9750
    %v9951 = vpop.f32.mrf.mxu0
    %v9952 = vadd.f32 %v1483, %v9951
    %v9953 = vpop.f32.mrf.mxu0
    %v9954 = vadd.f32 %v1485, %v9953
    %v9955 = vpop.f32.mrf.mxu0
    %v9956 = vadd.f32 %v1487, %v9955
    %v9957 = vpop.f32.mrf.mxu0
    %v9958 = vadd.f32 %v1489, %v9957
    %9959 = vmatprep.mubr.bf16.mxu0 0
    %9960 = vmatmul.mubr.bf16.gmra.mxu0 %v9751
    %v9961 = vpop.f32.mrf.mxu0
    %v9962 = vadd.f32 %v1493, %v9961
    %v9963 = vpop.f32.mrf.mxu0
    %v9964 = vadd.f32 %v1495, %v9963
    %v9965 = vpop.f32.mrf.mxu0
    %v9966 = vadd.f32 %v1497, %v9965
    %v9967 = vpop.f32.mrf.mxu0
    %v9968 = vadd.f32 %v1499, %v9967
    %9969 = vmatprep.mubr.bf16.mxu0 0
    %9970 = vmatmul.mubr.bf16.gmra.mxu0 %v9752
    %v9971 = vpop.f32.mrf.mxu0
    %v9972 = vadd.f32 %v1503, %v9971
    %v9973 = vpop.f32.mrf.mxu0
    %v9974 = vadd.f32 %v1505, %v9973
    %v9975 = vpop.f32.mrf.mxu0
    %v9976 = vadd.f32 %v1507, %v9975
    %v9977 = vpop.f32.mrf.mxu0
    %v9978 = vadd.f32 %v1509, %v9977
    %9979 = vmatprep.mubr.bf16.mxu0 0
    %9980 = vmatmul.mubr.bf16.gmra.mxu0 %v9753
    %v9981 = vpop.f32.mrf.mxu0
    %v9982 = vadd.f32 %v1513, %v9981
    %v9983 = vpop.f32.mrf.mxu0
    %v9984 = vadd.f32 %v1515, %v9983
    %v9985 = vpop.f32.mrf.mxu0
    %v9986 = vadd.f32 %v1517, %v9985
    %v9987 = vpop.f32.mrf.mxu0
    %v9988 = vadd.f32 %v1519, %v9987
    %9989 = vmatprep.mubr.bf16.mxu0 0
    %9990 = vmatmul.mubr.bf16.gmra.mxu0 %v9754
    %v9991 = vpop.f32.mrf.mxu0
    %v9992 = vadd.f32 %v1523, %v9991
    %v9993 = vpop.f32.mrf.mxu0
    %v9994 = vadd.f32 %v1525, %v9993
    %v9995 = vpop.f32.mrf.mxu0
    %v9996 = vadd.f32 %v1527, %v9995
    %v9997 = vpop.f32.mrf.mxu0
    %v9998 = vadd.f32 %v1529, %v9997
    %9999 = vmatprep.mubr.bf16.mxu0 0
    %10000 = vmatmul.mubr.bf16.gmra.mxu0 %v9755
    %v10001 = vpop.f32.mrf.mxu0
    %v10002 = vadd.f32 %v1533, %v10001
    %v10003 = vpop.f32.mrf.mxu0
    %v10004 = vadd.f32 %v1535, %v10003
    %v10005 = vpop.f32.mrf.mxu0
    %v10006 = vadd.f32 %v1537, %v10005
    %v10007 = vpop.f32.mrf.mxu0
    %v10008 = vadd.f32 %v1539, %v10007
    %10009 = vmatprep.mubr.bf16.mxu0 0
    %10010 = vmatmul.mubr.bf16.gmra.mxu0 %v9756
    %v10011 = vpop.f32.mrf.mxu0
    %v10012 = vadd.f32 %v1543, %v10011
    %v10013 = vpop.f32.mrf.mxu0
    %v10014 = vadd.f32 %v1545, %v10013
    %v10015 = vpop.f32.mrf.mxu0
    %v10016 = vadd.f32 %v1547, %v10015
    %v10017 = vpop.f32.mrf.mxu0
    %v10018 = vadd.f32 %v1549, %v10017
    %10019 = vmatprep.mubr.bf16.mxu0 0
    %10020 = vmatmul.mubr.bf16.gmra.mxu0 %v9757
    %v10021 = vpop.f32.mrf.mxu0
    %v10022 = vadd.f32 %v1553, %v10021
    %v10023 = vpop.f32.mrf.mxu0
    %v10024 = vadd.f32 %v1555, %v10023
    %v10025 = vpop.f32.mrf.mxu0
    %v10026 = vadd.f32 %v1557, %v10025
    %v10027 = vpop.f32.mrf.mxu0
    %v10028 = vadd.f32 %v1559, %v10027
    %10029 = vmatprep.mubr.bf16.mxu0 0
    %10030 = vmatmul.mubr.bf16.gmra.mxu0 %v9758
    %v10031 = vpop.f32.mrf.mxu0
    %v10032 = vadd.f32 %v1563, %v10031
    %v10033 = vpop.f32.mrf.mxu0
    %v10034 = vadd.f32 %v1565, %v10033
    %v10035 = vpop.f32.mrf.mxu0
    %v10036 = vadd.f32 %v1567, %v10035
    %v10037 = vpop.f32.mrf.mxu0
    %v10038 = vadd.f32 %v1569, %v10037
    %10039 = vmatprep.mubr.bf16.mxu0 0
    %10040 = vmatmul.mubr.bf16.gmra.mxu0 %v9759
    %v10041 = vpop.f32.mrf.mxu0
    %v10042 = vadd.f32 %v1573, %v10041
    %v10043 = vpop.f32.mrf.mxu0
    %v10044 = vadd.f32 %v1575, %v10043
    %v10045 = vpop.f32.mrf.mxu0
    %v10046 = vadd.f32 %v1577, %v10045
    %v10047 = vpop.f32.mrf.mxu0
    %v10048 = vadd.f32 %v1579, %v10047
    %10049 = vdwg.mxu0
    %s10050 = scalar_lea.vmem %s6, 3
    %v10051 = vld [vmem:[%s10050] ss:$4 sm:$0x3]
    %v10053 = vlaneseq
    %v10054 = vshrl.u32 %v10053, 7
    %v10055 = vsub.s32 0, %v10054
    %v10056 = vrot.slane %v10051, %v10055
    %v10057 = vlaneseq
    %v10058 = vshrl.u32 %v10057, 7
    %v10059 = vsub.s32 1, %v10058
    %v10060 = vrot.slane %v10051, %v10059
    %v10063 = vadd.f32 %v9892, %v10056
    %v10064 = vadd.f32 %v9894, %v10060
    %v10065 = vadd.f32 %v9896, %v10056
    %v10066 = vadd.f32 %v9898, %v10060
    %v10067 = vadd.f32 %v9902, %v10056
    %v10068 = vadd.f32 %v9904, %v10060
    %v10069 = vadd.f32 %v9906, %v10056
    %v10070 = vadd.f32 %v9908, %v10060
    %v10071 = vadd.f32 %v9912, %v10056
    %v10072 = vadd.f32 %v9914, %v10060
    %v10073 = vadd.f32 %v9916, %v10056
    %v10074 = vadd.f32 %v9918, %v10060
    %v10075 = vadd.f32 %v9922, %v10056
    %v10076 = vadd.f32 %v9924, %v10060
    %v10077 = vadd.f32 %v9926, %v10056
    %v10078 = vadd.f32 %v9928, %v10060
    %v10079 = vadd.f32 %v9932, %v10056
    %v10080 = vadd.f32 %v9934, %v10060
    %v10081 = vadd.f32 %v9936, %v10056
    %v10082 = vadd.f32 %v9938, %v10060
    %v10083 = vadd.f32 %v9942, %v10056
    %v10084 = vadd.f32 %v9944, %v10060
    %v10085 = vadd.f32 %v9946, %v10056
    %v10086 = vadd.f32 %v9948, %v10060
    %v10087 = vadd.f32 %v9952, %v10056
    %v10088 = vadd.f32 %v9954, %v10060
    %v10089 = vadd.f32 %v9956, %v10056
    %v10090 = vadd.f32 %v9958, %v10060
    %v10091 = vadd.f32 %v9962, %v10056
    %v10092 = vadd.f32 %v9964, %v10060
    %v10093 = vadd.f32 %v9966, %v10056
    %v10094 = vadd.f32 %v9968, %v10060
    %v10095 = vadd.f32 %v9972, %v10056
    %v10096 = vadd.f32 %v9974, %v10060
    %v10097 = vadd.f32 %v9976, %v10056
    %v10098 = vadd.f32 %v9978, %v10060
    %v10099 = vadd.f32 %v9982, %v10056
    %v10100 = vadd.f32 %v9984, %v10060
    %v10101 = vadd.f32 %v9986, %v10056
    %v10102 = vadd.f32 %v9988, %v10060
    %v10103 = vadd.f32 %v9992, %v10056
    %v10104 = vadd.f32 %v9994, %v10060
    %v10105 = vadd.f32 %v9996, %v10056
    %v10106 = vadd.f32 %v9998, %v10060
    %v10107 = vadd.f32 %v10002, %v10056
    %v10108 = vadd.f32 %v10004, %v10060
    %v10109 = vadd.f32 %v10006, %v10056
    %v10110 = vadd.f32 %v10008, %v10060
    %v10111 = vadd.f32 %v10012, %v10056
    %v10112 = vadd.f32 %v10014, %v10060
    %v10113 = vadd.f32 %v10016, %v10056
    %v10114 = vadd.f32 %v10018, %v10060
    %v10115 = vadd.f32 %v10022, %v10056
    %v10116 = vadd.f32 %v10024, %v10060
    %v10117 = vadd.f32 %v10026, %v10056
    %v10118 = vadd.f32 %v10028, %v10060
    %v10119 = vadd.f32 %v10032, %v10056
    %v10120 = vadd.f32 %v10034, %v10060
    %v10121 = vadd.f32 %v10036, %v10056
    %v10122 = vadd.f32 %v10038, %v10060
    %v10123 = vadd.f32 %v10042, %v10056
    %v10124 = vadd.f32 %v10044, %v10060
    %v10125 = vadd.f32 %v10046, %v10056
    %v10126 = vadd.f32 %v10048, %v10060
    %v10127 = vmul.f32 %v10063, 0.5
    %v10128 = vmul.f32 %v10064, 0.5
    %v10129 = vmul.f32 %v10065, 0.5
    %v10130 = vmul.f32 %v10066, 0.5
    %v10131 = vmul.f32 %v10067, 0.5
    %v10132 = vmul.f32 %v10068, 0.5
    %v10133 = vmul.f32 %v10069, 0.5
    %v10134 = vmul.f32 %v10070, 0.5
    %v10135 = vmul.f32 %v10071, 0.5
    %v10136 = vmul.f32 %v10072, 0.5
    %v10137 = vmul.f32 %v10073, 0.5
    %v10138 = vmul.f32 %v10074, 0.5
    %v10139 = vmul.f32 %v10075, 0.5
    %v10140 = vmul.f32 %v10076, 0.5
    %v10141 = vmul.f32 %v10077, 0.5
    %v10142 = vmul.f32 %v10078, 0.5
    %v10143 = vmul.f32 %v10079, 0.5
    %v10144 = vmul.f32 %v10080, 0.5
    %v10145 = vmul.f32 %v10081, 0.5
    %v10146 = vmul.f32 %v10082, 0.5
    %v10147 = vmul.f32 %v10083, 0.5
    %v10148 = vmul.f32 %v10084, 0.5
    %v10149 = vmul.f32 %v10085, 0.5
    %v10150 = vmul.f32 %v10086, 0.5
    %v10151 = vmul.f32 %v10087, 0.5
    %v10152 = vmul.f32 %v10088, 0.5
    %v10153 = vmul.f32 %v10089, 0.5
    %v10154 = vmul.f32 %v10090, 0.5
    %v10155 = vmul.f32 %v10091, 0.5
    %v10156 = vmul.f32 %v10092, 0.5
    %v10157 = vmul.f32 %v10093, 0.5
    %v10158 = vmul.f32 %v10094, 0.5
    %v10159 = vmul.f32 %v10095, 0.5
    %v10160 = vmul.f32 %v10096, 0.5
    %v10161 = vmul.f32 %v10097, 0.5
    %v10162 = vmul.f32 %v10098, 0.5
    %v10163 = vmul.f32 %v10099, 0.5
    %v10164 = vmul.f32 %v10100, 0.5
    %v10165 = vmul.f32 %v10101, 0.5
    %v10166 = vmul.f32 %v10102, 0.5
    %v10167 = vmul.f32 %v10103, 0.5
    %v10168 = vmul.f32 %v10104, 0.5
    %v10169 = vmul.f32 %v10105, 0.5
    %v10170 = vmul.f32 %v10106, 0.5
    %v10171 = vmul.f32 %v10107, 0.5
    %v10172 = vmul.f32 %v10108, 0.5
    %v10173 = vmul.f32 %v10109, 0.5
    %v10174 = vmul.f32 %v10110, 0.5
    %v10175 = vmul.f32 %v10111, 0.5
    %v10176 = vmul.f32 %v10112, 0.5
    %v10177 = vmul.f32 %v10113, 0.5
    %v10178 = vmul.f32 %v10114, 0.5
    %v10179 = vmul.f32 %v10115, 0.5
    %v10180 = vmul.f32 %v10116, 0.5
    %v10181 = vmul.f32 %v10117, 0.5
    %v10182 = vmul.f32 %v10118, 0.5
    %v10183 = vmul.f32 %v10119, 0.5
    %v10184 = vmul.f32 %v10120, 0.5
    %v10185 = vmul.f32 %v10121, 0.5
    %v10186 = vmul.f32 %v10122, 0.5
    %v10187 = vmul.f32 %v10123, 0.5
    %v10188 = vmul.f32 %v10124, 0.5
    %v10189 = vmul.f32 %v10125, 0.5
    %v10190 = vmul.f32 %v10126, 0.5
    %v10191 = vtanh.pop %v10127
    %v10192 = vtanh.pop %v10128
    %v10193 = vtanh.pop %v10129
    %v10194 = vtanh.pop %v10130
    %v10195 = vtanh.pop %v10131
    %v10196 = vtanh.pop %v10132
    %v10197 = vtanh.pop %v10133
    %v10198 = vtanh.pop %v10134
    %v10199 = vtanh.pop %v10135
    %v10200 = vtanh.pop %v10136
    %v10201 = vtanh.pop %v10137
    %v10202 = vtanh.pop %v10138
    %v10203 = vtanh.pop %v10139
    %v10204 = vtanh.pop %v10140
    %v10205 = vtanh.pop %v10141
    %v10206 = vtanh.pop %v10142
    %v10207 = vtanh.pop %v10143
    %v10208 = vtanh.pop %v10144
    %v10209 = vtanh.pop %v10145
    %v10210 = vtanh.pop %v10146
    %v10211 = vtanh.pop %v10147
    %v10212 = vtanh.pop %v10148
    %v10213 = vtanh.pop %v10149
    %v10214 = vtanh.pop %v10150
    %v10215 = vtanh.pop %v10151
    %v10216 = vtanh.pop %v10152
    %v10217 = vtanh.pop %v10153
    %v10218 = vtanh.pop %v10154
    %v10219 = vtanh.pop %v10155
    %v10220 = vtanh.pop %v10156
    %v10221 = vtanh.pop %v10157
    %v10222 = vtanh.pop %v10158
    %v10223 = vtanh.pop %v10159
    %v10224 = vtanh.pop %v10160
    %v10225 = vtanh.pop %v10161
    %v10226 = vtanh.pop %v10162
    %v10227 = vtanh.pop %v10163
    %v10228 = vtanh.pop %v10164
    %v10229 = vtanh.pop %v10165
    %v10230 = vtanh.pop %v10166
    %v10231 = vtanh.pop %v10167
    %v10232 = vtanh.pop %v10168
    %v10233 = vtanh.pop %v10169
    %v10234 = vtanh.pop %v10170
    %v10235 = vtanh.pop %v10171
    %v10236 = vtanh.pop %v10172
    %v10237 = vtanh.pop %v10173
    %v10238 = vtanh.pop %v10174
    %v10239 = vtanh.pop %v10175
    %v10240 = vtanh.pop %v10176
    %v10241 = vtanh.pop %v10177
    %v10242 = vtanh.pop %v10178
    %v10243 = vtanh.pop %v10179
    %v10244 = vtanh.pop %v10180
    %v10245 = vtanh.pop %v10181
    %v10246 = vtanh.pop %v10182
    %v10247 = vtanh.pop %v10183
    %v10248 = vtanh.pop %v10184
    %v10249 = vtanh.pop %v10185
    %v10250 = vtanh.pop %v10186
    %v10251 = vtanh.pop %v10187
    %v10252 = vtanh.pop %v10188
    %v10253 = vtanh.pop %v10189
    %v10254 = vtanh.pop %v10190
    %v10255 = vmul.f32 %v10191, 0.5
    %v10256 = vmul.f32 %v10192, 0.5
    %v10257 = vmul.f32 %v10193, 0.5
    %v10258 = vmul.f32 %v10194, 0.5
    %v10259 = vmul.f32 %v10195, 0.5
    %v10260 = vmul.f32 %v10196, 0.5
    %v10261 = vmul.f32 %v10197, 0.5
    %v10262 = vmul.f32 %v10198, 0.5
    %v10263 = vmul.f32 %v10199, 0.5
    %v10264 = vmul.f32 %v10200, 0.5
    %v10265 = vmul.f32 %v10201, 0.5
    %v10266 = vmul.f32 %v10202, 0.5
    %v10267 = vmul.f32 %v10203, 0.5
    %v10268 = vmul.f32 %v10204, 0.5
    %v10269 = vmul.f32 %v10205, 0.5
    %v10270 = vmul.f32 %v10206, 0.5
    %v10271 = vmul.f32 %v10207, 0.5
    %v10272 = vmul.f32 %v10208, 0.5
    %v10273 = vmul.f32 %v10209, 0.5
    %v10274 = vmul.f32 %v10210, 0.5
    %v10275 = vmul.f32 %v10211, 0.5
    %v10276 = vmul.f32 %v10212, 0.5
    %v10277 = vmul.f32 %v10213, 0.5
    %v10278 = vmul.f32 %v10214, 0.5
    %v10279 = vmul.f32 %v10215, 0.5
    %v10280 = vmul.f32 %v10216, 0.5
    %v10281 = vmul.f32 %v10217, 0.5
    %v10282 = vmul.f32 %v10218, 0.5
    %v10283 = vmul.f32 %v10219, 0.5
    %v10284 = vmul.f32 %v10220, 0.5
    %v10285 = vmul.f32 %v10221, 0.5
    %v10286 = vmul.f32 %v10222, 0.5
    %v10287 = vmul.f32 %v10223, 0.5
    %v10288 = vmul.f32 %v10224, 0.5
    %v10289 = vmul.f32 %v10225, 0.5
    %v10290 = vmul.f32 %v10226, 0.5
    %v10291 = vmul.f32 %v10227, 0.5
    %v10292 = vmul.f32 %v10228, 0.5
    %v10293 = vmul.f32 %v10229, 0.5
    %v10294 = vmul.f32 %v10230, 0.5
    %v10295 = vmul.f32 %v10231, 0.5
    %v10296 = vmul.f32 %v10232, 0.5
    %v10297 = vmul.f32 %v10233, 0.5
    %v10298 = vmul.f32 %v10234, 0.5
    %v10299 = vmul.f32 %v10235, 0.5
    %v10300 = vmul.f32 %v10236, 0.5
    %v10301 = vmul.f32 %v10237, 0.5
    %v10302 = vmul.f32 %v10238, 0.5
    %v10303 = vmul.f32 %v10239, 0.5
    %v10304 = vmul.f32 %v10240, 0.5
    %v10305 = vmul.f32 %v10241, 0.5
    %v10306 = vmul.f32 %v10242, 0.5
    %v10307 = vmul.f32 %v10243, 0.5
    %v10308 = vmul.f32 %v10244, 0.5
    %v10309 = vmul.f32 %v10245, 0.5
    %v10310 = vmul.f32 %v10246, 0.5
    %v10311 = vmul.f32 %v10247, 0.5
    %v10312 = vmul.f32 %v10248, 0.5
    %v10313 = vmul.f32 %v10249, 0.5
    %v10314 = vmul.f32 %v10250, 0.5
    %v10315 = vmul.f32 %v10251, 0.5
    %v10316 = vmul.f32 %v10252, 0.5
    %v10317 = vmul.f32 %v10253, 0.5
    %v10318 = vmul.f32 %v10254, 0.5
    %v10319 = vadd.f32 %v10255, 0.5
    %v10320 = vadd.f32 %v10256, 0.5
    %v10321 = vadd.f32 %v10257, 0.5
    %v10322 = vadd.f32 %v10258, 0.5
    %v10323 = vadd.f32 %v10259, 0.5
    %v10324 = vadd.f32 %v10260, 0.5
    %v10325 = vadd.f32 %v10261, 0.5
    %v10326 = vadd.f32 %v10262, 0.5
    %v10327 = vadd.f32 %v10263, 0.5
    %v10328 = vadd.f32 %v10264, 0.5
    %v10329 = vadd.f32 %v10265, 0.5
    %v10330 = vadd.f32 %v10266, 0.5
    %v10331 = vadd.f32 %v10267, 0.5
    %v10332 = vadd.f32 %v10268, 0.5
    %v10333 = vadd.f32 %v10269, 0.5
    %v10334 = vadd.f32 %v10270, 0.5
    %v10335 = vadd.f32 %v10271, 0.5
    %v10336 = vadd.f32 %v10272, 0.5
    %v10337 = vadd.f32 %v10273, 0.5
    %v10338 = vadd.f32 %v10274, 0.5
    %v10339 = vadd.f32 %v10275, 0.5
    %v10340 = vadd.f32 %v10276, 0.5
    %v10341 = vadd.f32 %v10277, 0.5
    %v10342 = vadd.f32 %v10278, 0.5
    %v10343 = vadd.f32 %v10279, 0.5
    %v10344 = vadd.f32 %v10280, 0.5
    %v10345 = vadd.f32 %v10281, 0.5
    %v10346 = vadd.f32 %v10282, 0.5
    %v10347 = vadd.f32 %v10283, 0.5
    %v10348 = vadd.f32 %v10284, 0.5
    %v10349 = vadd.f32 %v10285, 0.5
    %v10350 = vadd.f32 %v10286, 0.5
    %v10351 = vadd.f32 %v10287, 0.5
    %v10352 = vadd.f32 %v10288, 0.5
    %v10353 = vadd.f32 %v10289, 0.5
    %v10354 = vadd.f32 %v10290, 0.5
    %v10355 = vadd.f32 %v10291, 0.5
    %v10356 = vadd.f32 %v10292, 0.5
    %v10357 = vadd.f32 %v10293, 0.5
    %v10358 = vadd.f32 %v10294, 0.5
    %v10359 = vadd.f32 %v10295, 0.5
    %v10360 = vadd.f32 %v10296, 0.5
    %v10361 = vadd.f32 %v10297, 0.5
    %v10362 = vadd.f32 %v10298, 0.5
    %v10363 = vadd.f32 %v10299, 0.5
    %v10364 = vadd.f32 %v10300, 0.5
    %v10365 = vadd.f32 %v10301, 0.5
    %v10366 = vadd.f32 %v10302, 0.5
    %v10367 = vadd.f32 %v10303, 0.5
    %v10368 = vadd.f32 %v10304, 0.5
    %v10369 = vadd.f32 %v10305, 0.5
    %v10370 = vadd.f32 %v10306, 0.5
    %v10371 = vadd.f32 %v10307, 0.5
    %v10372 = vadd.f32 %v10308, 0.5
    %v10373 = vadd.f32 %v10309, 0.5
    %v10374 = vadd.f32 %v10310, 0.5
    %v10375 = vadd.f32 %v10311, 0.5
    %v10376 = vadd.f32 %v10312, 0.5
    %v10377 = vadd.f32 %v10313, 0.5
    %v10378 = vadd.f32 %v10314, 0.5
    %v10379 = vadd.f32 %v10315, 0.5
    %v10380 = vadd.f32 %v10316, 0.5
    %v10381 = vadd.f32 %v10317, 0.5
    %v10382 = vadd.f32 %v10318, 0.5
    %v10383 = vmul.f32 %v10063, %v10319
    %v10384 = vmul.f32 %v10064, %v10320
    %v10385 = vmul.f32 %v10065, %v10321
    %v10386 = vmul.f32 %v10066, %v10322
    %v10387 = vmul.f32 %v10067, %v10323
    %v10388 = vmul.f32 %v10068, %v10324
    %v10389 = vmul.f32 %v10069, %v10325
    %v10390 = vmul.f32 %v10070, %v10326
    %v10391 = vmul.f32 %v10071, %v10327
    %v10392 = vmul.f32 %v10072, %v10328
    %v10393 = vmul.f32 %v10073, %v10329
    %v10394 = vmul.f32 %v10074, %v10330
    %v10395 = vmul.f32 %v10075, %v10331
    %v10396 = vmul.f32 %v10076, %v10332
    %v10397 = vmul.f32 %v10077, %v10333
    %v10398 = vmul.f32 %v10078, %v10334
    %v10399 = vmul.f32 %v10079, %v10335
    %v10400 = vmul.f32 %v10080, %v10336
    %v10401 = vmul.f32 %v10081, %v10337
    %v10402 = vmul.f32 %v10082, %v10338
    %v10403 = vmul.f32 %v10083, %v10339
    %v10404 = vmul.f32 %v10084, %v10340
    %v10405 = vmul.f32 %v10085, %v10341
    %v10406 = vmul.f32 %v10086, %v10342
    %v10407 = vmul.f32 %v10087, %v10343
    %v10408 = vmul.f32 %v10088, %v10344
    %v10409 = vmul.f32 %v10089, %v10345
    %v10410 = vmul.f32 %v10090, %v10346
    %v10411 = vmul.f32 %v10091, %v10347
    %v10412 = vmul.f32 %v10092, %v10348
    %v10413 = vmul.f32 %v10093, %v10349
    %v10414 = vmul.f32 %v10094, %v10350
    %v10415 = vmul.f32 %v10095, %v10351
    %v10416 = vmul.f32 %v10096, %v10352
    %v10417 = vmul.f32 %v10097, %v10353
    %v10418 = vmul.f32 %v10098, %v10354
    %v10419 = vmul.f32 %v10099, %v10355
    %v10420 = vmul.f32 %v10100, %v10356
    %v10421 = vmul.f32 %v10101, %v10357
    %v10422 = vmul.f32 %v10102, %v10358
    %v10423 = vmul.f32 %v10103, %v10359
    %v10424 = vmul.f32 %v10104, %v10360
    %v10425 = vmul.f32 %v10105, %v10361
    %v10426 = vmul.f32 %v10106, %v10362
    %v10427 = vmul.f32 %v10107, %v10363
    %v10428 = vmul.f32 %v10108, %v10364
    %v10429 = vmul.f32 %v10109, %v10365
    %v10430 = vmul.f32 %v10110, %v10366
    %v10431 = vmul.f32 %v10111, %v10367
    %v10432 = vmul.f32 %v10112, %v10368
    %v10433 = vmul.f32 %v10113, %v10369
    %v10434 = vmul.f32 %v10114, %v10370
    %v10435 = vmul.f32 %v10115, %v10371
    %v10436 = vmul.f32 %v10116, %v10372
    %v10437 = vmul.f32 %v10117, %v10373
    %v10438 = vmul.f32 %v10118, %v10374
    %v10439 = vmul.f32 %v10119, %v10375
    %v10440 = vmul.f32 %v10120, %v10376
    %v10441 = vmul.f32 %v10121, %v10377
    %v10442 = vmul.f32 %v10122, %v10378
    %v10443 = vmul.f32 %v10123, %v10379
    %v10444 = vmul.f32 %v10124, %v10380
    %v10445 = vmul.f32 %v10125, %v10381
    %v10446 = vmul.f32 %v10126, %v10382
    %v10447 = vpack.c.bf16 %v10385, %v10383
    %v10448 = vpack.c.bf16 %v10386, %v10384
    %v10449 = vpack.c.bf16 %v10389, %v10387
    %v10450 = vpack.c.bf16 %v10390, %v10388
    %v10451 = vpack.c.bf16 %v10393, %v10391
    %v10452 = vpack.c.bf16 %v10394, %v10392
    %v10453 = vpack.c.bf16 %v10397, %v10395
    %v10454 = vpack.c.bf16 %v10398, %v10396
    %v10455 = vpack.c.bf16 %v10401, %v10399
    %v10456 = vpack.c.bf16 %v10402, %v10400
    %v10457 = vpack.c.bf16 %v10405, %v10403
    %v10458 = vpack.c.bf16 %v10406, %v10404
    %v10459 = vpack.c.bf16 %v10409, %v10407
    %v10460 = vpack.c.bf16 %v10410, %v10408
    %v10461 = vpack.c.bf16 %v10413, %v10411
    %v10462 = vpack.c.bf16 %v10414, %v10412
    %v10463 = vpack.c.bf16 %v10417, %v10415
    %v10464 = vpack.c.bf16 %v10418, %v10416
    %v10465 = vpack.c.bf16 %v10421, %v10419
    %v10466 = vpack.c.bf16 %v10422, %v10420
    %v10467 = vpack.c.bf16 %v10425, %v10423
    %v10468 = vpack.c.bf16 %v10426, %v10424
    %v10469 = vpack.c.bf16 %v10429, %v10427
    %v10470 = vpack.c.bf16 %v10430, %v10428
    %v10471 = vpack.c.bf16 %v10433, %v10431
    %v10472 = vpack.c.bf16 %v10434, %v10432
    %v10473 = vpack.c.bf16 %v10437, %v10435
    %v10474 = vpack.c.bf16 %v10438, %v10436
    %v10475 = vpack.c.bf16 %v10441, %v10439
    %v10476 = vpack.c.bf16 %v10442, %v10440
    %v10477 = vpack.c.bf16 %v10445, %v10443
    %v10478 = vpack.c.bf16 %v10446, %v10444
    %s10479 = scalar_lea.vmem [#allocation5], 768
    %v10480 = vld [vmem:[%s10479] sm:$0xff]
    %v10481 = vld [vmem:[%s10479 + $0x8] sm:$0xff]
    %v10482 = vld [vmem:[%s10479 + $0x10] sm:$0xff]
    %v10483 = vld [vmem:[%s10479 + $0x18] sm:$0xff]
    %v10484 = vld [vmem:[%s10479 + $0x20] sm:$0xff]
    %v10485 = vld [vmem:[%s10479 + $0x28] sm:$0xff]
    %v10486 = vld [vmem:[%s10479 + $0x30] sm:$0xff]
    %v10487 = vld [vmem:[%s10479 + $0x38] sm:$0xff]
    %v10488 = vld [vmem:[%s10479 + $0x40] sm:$0xff]
    %v10489 = vld [vmem:[%s10479 + $0x48] sm:$0xff]
    %v10490 = vld [vmem:[%s10479 + $0x50] sm:$0xff]
    %v10491 = vld [vmem:[%s10479 + $0x58] sm:$0xff]
    %v10492 = vld [vmem:[%s10479 + $0x60] sm:$0xff]
    %v10493 = vld [vmem:[%s10479 + $0x68] sm:$0xff]
    %v10494 = vld [vmem:[%s10479 + $0x70] sm:$0xff]
    %v10495 = vld [vmem:[%s10479 + $0x78] sm:$0xff]
    %v10496 = vld [vmem:[%s10479 + $0x80] sm:$0xff]
    %v10497 = vld [vmem:[%s10479 + $0x88] sm:$0xff]
    %v10498 = vld [vmem:[%s10479 + $0x90] sm:$0xff]
    %v10499 = vld [vmem:[%s10479 + $0x98] sm:$0xff]
    %v10500 = vld [vmem:[%s10479 + $0xa0] sm:$0xff]
    %v10501 = vld [vmem:[%s10479 + $0xa8] sm:$0xff]
    %v10502 = vld [vmem:[%s10479 + $0xb0] sm:$0xff]
    %v10503 = vld [vmem:[%s10479 + $0xb8] sm:$0xff]
    %v10504 = vld [vmem:[%s10479 + $0xc0] sm:$0xff]
    %v10505 = vld [vmem:[%s10479 + $0xc8] sm:$0xff]
    %v10506 = vld [vmem:[%s10479 + $0xd0] sm:$0xff]
    %v10507 = vld [vmem:[%s10479 + $0xd8] sm:$0xff]
    %v10508 = vld [vmem:[%s10479 + $0xe0] sm:$0xff]
    %v10509 = vld [vmem:[%s10479 + $0xe8] sm:$0xff]
    %v10510 = vld [vmem:[%s10479 + $0xf0] sm:$0xff]
    %v10511 = vld [vmem:[%s10479 + $0xf8] sm:$0xff]
    %s10512 = scalar_lea.vmem %s8, 3
    %v10513 = vld [vmem:[%s10512] ss:$4 sm:$0x3]
    %v10515 = vlaneseq
    %v10516 = vshrl.u32 %v10515, 7
    %v10517 = vsub.s32 0, %v10516
    %v10518 = vrot.slane %v10513, %v10517
    %v10519 = vlaneseq
    %v10520 = vshrl.u32 %v10519, 7
    %v10521 = vsub.s32 1, %v10520
    %v10522 = vrot.slane %v10513, %v10521
    %v10557 = vunpack.c.l.b16 %v10480
    %v10558 = vunpack.c.h.b16 %v10480
    %v10559 = vunpack.c.l.b16 %v10481
    %v10560 = vunpack.c.h.b16 %v10481
    %v10561 = vunpack.c.l.b16 %v10482
    %v10562 = vunpack.c.h.b16 %v10482
    %v10563 = vunpack.c.l.b16 %v10483
    %v10564 = vunpack.c.h.b16 %v10483
    %v10565 = vunpack.c.l.b16 %v10484
    %v10566 = vunpack.c.h.b16 %v10484
    %v10567 = vunpack.c.l.b16 %v10485
    %v10568 = vunpack.c.h.b16 %v10485
    %v10569 = vunpack.c.l.b16 %v10486
    %v10570 = vunpack.c.h.b16 %v10486
    %v10571 = vunpack.c.l.b16 %v10487
    %v10572 = vunpack.c.h.b16 %v10487
    %v10573 = vunpack.c.l.b16 %v10488
    %v10574 = vunpack.c.h.b16 %v10488
    %v10575 = vunpack.c.l.b16 %v10489
    %v10576 = vunpack.c.h.b16 %v10489
    %v10577 = vunpack.c.l.b16 %v10490
    %v10578 = vunpack.c.h.b16 %v10490
    %v10579 = vunpack.c.l.b16 %v10491
    %v10580 = vunpack.c.h.b16 %v10491
    %v10581 = vunpack.c.l.b16 %v10492
    %v10582 = vunpack.c.h.b16 %v10492
    %v10583 = vunpack.c.l.b16 %v10493
    %v10584 = vunpack.c.h.b16 %v10493
    %v10585 = vunpack.c.l.b16 %v10494
    %v10586 = vunpack.c.h.b16 %v10494
    %v10587 = vunpack.c.l.b16 %v10495
    %v10588 = vunpack.c.h.b16 %v10495
    %v10589 = vunpack.c.l.b16 %v10496
    %v10590 = vunpack.c.h.b16 %v10496
    %v10591 = vunpack.c.l.b16 %v10497
    %v10592 = vunpack.c.h.b16 %v10497
    %v10593 = vunpack.c.l.b16 %v10498
    %v10594 = vunpack.c.h.b16 %v10498
    %v10595 = vunpack.c.l.b16 %v10499
    %v10596 = vunpack.c.h.b16 %v10499
    %v10597 = vunpack.c.l.b16 %v10500
    %v10598 = vunpack.c.h.b16 %v10500
    %v10599 = vunpack.c.l.b16 %v10501
    %v10600 = vunpack.c.h.b16 %v10501
    %v10601 = vunpack.c.l.b16 %v10502
    %v10602 = vunpack.c.h.b16 %v10502
    %v10603 = vunpack.c.l.b16 %v10503
    %v10604 = vunpack.c.h.b16 %v10503
    %v10605 = vunpack.c.l.b16 %v10504
    %v10606 = vunpack.c.h.b16 %v10504
    %v10607 = vunpack.c.l.b16 %v10505
    %v10608 = vunpack.c.h.b16 %v10505
    %v10609 = vunpack.c.l.b16 %v10506
    %v10610 = vunpack.c.h.b16 %v10506
    %v10611 = vunpack.c.l.b16 %v10507
    %v10612 = vunpack.c.h.b16 %v10507
    %v10613 = vunpack.c.l.b16 %v10508
    %v10614 = vunpack.c.h.b16 %v10508
    %v10615 = vunpack.c.l.b16 %v10509
    %v10616 = vunpack.c.h.b16 %v10509
    %v10617 = vunpack.c.l.b16 %v10510
    %v10618 = vunpack.c.h.b16 %v10510
    %v10619 = vunpack.c.l.b16 %v10511
    %v10620 = vunpack.c.h.b16 %v10511
    %v10621 = vpack.c.b16 %v10559, %v10557
    %v10622 = vpack.c.b16 %v10560, %v10558
    %v10623 = vpack.c.b16 %v10563, %v10561
    %v10624 = vpack.c.b16 %v10564, %v10562
    %v10625 = vpack.c.b16 %v10567, %v10565
    %v10626 = vpack.c.b16 %v10568, %v10566
    %v10627 = vpack.c.b16 %v10571, %v10569
    %v10628 = vpack.c.b16 %v10572, %v10570
    %v10629 = vpack.c.b16 %v10575, %v10573
    %v10630 = vpack.c.b16 %v10576, %v10574
    %v10631 = vpack.c.b16 %v10579, %v10577
    %v10632 = vpack.c.b16 %v10580, %v10578
    %v10633 = vpack.c.b16 %v10583, %v10581
    %v10634 = vpack.c.b16 %v10584, %v10582
    %v10635 = vpack.c.b16 %v10587, %v10585
    %v10636 = vpack.c.b16 %v10588, %v10586
    %v10637 = vpack.c.b16 %v10591, %v10589
    %v10638 = vpack.c.b16 %v10592, %v10590
    %v10639 = vpack.c.b16 %v10595, %v10593
    %v10640 = vpack.c.b16 %v10596, %v10594
    %v10641 = vpack.c.b16 %v10599, %v10597
    %v10642 = vpack.c.b16 %v10600, %v10598
    %v10643 = vpack.c.b16 %v10603, %v10601
    %v10644 = vpack.c.b16 %v10604, %v10602
    %v10645 = vpack.c.b16 %v10607, %v10605
    %v10646 = vpack.c.b16 %v10608, %v10606
    %v10647 = vpack.c.b16 %v10611, %v10609
    %v10648 = vpack.c.b16 %v10612, %v10610
    %v10649 = vpack.c.b16 %v10615, %v10613
    %v10650 = vpack.c.b16 %v10616, %v10614
    %v10651 = vpack.c.b16 %v10619, %v10617
    %v10652 = vpack.c.b16 %v10620, %v10618
    %10685 = vmatprep.subr.bf16.mxu0 %v10636
    %10686 = vmatpush1.bf16.msra.mxu0 %v10635
    %10687 = vmatprep.subr.bf16.mxu0 %v10634
    %10688 = vmatpush1.bf16.msra.mxu0 %v10633
    %10689 = vmatprep.subr.bf16.mxu0 %v10632
    %10690 = vmatpush1.bf16.msra.mxu0 %v10631
    %10691 = vmatprep.subr.bf16.mxu0 %v10630
    %10692 = vmatpush1.bf16.msra.mxu0 %v10629
    %10693 = vmatprep.subr.bf16.mxu0 %v10628
    %10694 = vmatpush1.bf16.msra.mxu0 %v10627
    %10695 = vmatprep.subr.bf16.mxu0 %v10626
    %10696 = vmatpush1.bf16.msra.mxu0 %v10625
    %10697 = vmatprep.subr.bf16.mxu0 %v10624
    %10698 = vmatpush1.bf16.msra.mxu0 %v10623
    %10699 = vmatprep.subr.bf16.mxu0 %v10622
    %10700 = vmatpush1.bf16.msra.mxu0 %v10621
    %10701 = vmatprep.subr.bf16.mxu0 %v10652
    %10702 = vmatpush2.bf16.msra.mxu0 %v10651
    %10703 = vmatprep.subr.bf16.mxu0 %v10650
    %10704 = vmatpush2.bf16.msra.mxu0 %v10649
    %10705 = vmatprep.subr.bf16.mxu0 %v10648
    %10706 = vmatpush2.bf16.msra.mxu0 %v10647
    %10707 = vmatprep.subr.bf16.mxu0 %v10646
    %10708 = vmatpush2.bf16.msra.mxu0 %v10645
    %10709 = vmatprep.subr.bf16.mxu0 %v10644
    %10710 = vmatpush2.bf16.msra.mxu0 %v10643
    %10711 = vmatprep.subr.bf16.mxu0 %v10642
    %10712 = vmatpush2.bf16.msra.mxu0 %v10641
    %10713 = vmatprep.subr.bf16.mxu0 %v10640
    %10714 = vmatpush2.bf16.msra.mxu0 %v10639
    %10715 = vmatprep.subr.bf16.mxu0 %v10638
    %10716 = vmatpush2.bf16.msra.mxu0 %v10637
    %10717 = vmatprep.mubr.bf16.mxu0 %v10448
    %10718 = vmatmul.mubr.bf16.gmra.mxu0 %v10447
    %v10719 = vpop.f32.mrf.mxu0
    %v10720 = vadd.f32 %v10518, %v10719
    %v10721 = vpop.f32.mrf.mxu0
    %v10722 = vadd.f32 %v10522, %v10721
    %v10723 = vpop.f32.mrf.mxu0
    %v10724 = vadd.f32 %v10518, %v10723
    %v10725 = vpop.f32.mrf.mxu0
    %v10726 = vadd.f32 %v10522, %v10725
    %10727 = vmatprep.mubr.bf16.mxu0 %v10450
    %10728 = vmatmul.mubr.bf16.gmra.mxu0 %v10449
    %v10729 = vpop.f32.mrf.mxu0
    %v10730 = vadd.f32 %v10518, %v10729
    %v10731 = vpop.f32.mrf.mxu0
    %v10732 = vadd.f32 %v10522, %v10731
    %v10733 = vpop.f32.mrf.mxu0
    %v10734 = vadd.f32 %v10518, %v10733
    %v10735 = vpop.f32.mrf.mxu0
    %v10736 = vadd.f32 %v10522, %v10735
    %10737 = vmatprep.mubr.bf16.mxu0 %v10452
    %10738 = vmatmul.mubr.bf16.gmra.mxu0 %v10451
    %v10739 = vpop.f32.mrf.mxu0
    %v10740 = vadd.f32 %v10518, %v10739
    %v10741 = vpop.f32.mrf.mxu0
    %v10742 = vadd.f32 %v10522, %v10741
    %v10743 = vpop.f32.mrf.mxu0
    %v10744 = vadd.f32 %v10518, %v10743
    %v10745 = vpop.f32.mrf.mxu0
    %v10746 = vadd.f32 %v10522, %v10745
    %10747 = vmatprep.mubr.bf16.mxu0 %v10454
    %10748 = vmatmul.mubr.bf16.gmra.mxu0 %v10453
    %v10749 = vpop.f32.mrf.mxu0
    %v10750 = vadd.f32 %v10518, %v10749
    %v10751 = vpop.f32.mrf.mxu0
    %v10752 = vadd.f32 %v10522, %v10751
    %v10753 = vpop.f32.mrf.mxu0
    %v10754 = vadd.f32 %v10518, %v10753
    %v10755 = vpop.f32.mrf.mxu0
    %v10756 = vadd.f32 %v10522, %v10755
    %10757 = vmatprep.mubr.bf16.mxu0 %v10456
    %10758 = vmatmul.mubr.bf16.gmra.mxu0 %v10455
    %v10759 = vpop.f32.mrf.mxu0
    %v10760 = vadd.f32 %v10518, %v10759
    %v10761 = vpop.f32.mrf.mxu0
    %v10762 = vadd.f32 %v10522, %v10761
    %v10763 = vpop.f32.mrf.mxu0
    %v10764 = vadd.f32 %v10518, %v10763
    %v10765 = vpop.f32.mrf.mxu0
    %v10766 = vadd.f32 %v10522, %v10765
    %10767 = vmatprep.mubr.bf16.mxu0 %v10458
    %10768 = vmatmul.mubr.bf16.gmra.mxu0 %v10457
    %v10769 = vpop.f32.mrf.mxu0
    %v10770 = vadd.f32 %v10518, %v10769
    %v10771 = vpop.f32.mrf.mxu0
    %v10772 = vadd.f32 %v10522, %v10771
    %v10773 = vpop.f32.mrf.mxu0
    %v10774 = vadd.f32 %v10518, %v10773
    %v10775 = vpop.f32.mrf.mxu0
    %v10776 = vadd.f32 %v10522, %v10775
    %10777 = vmatprep.mubr.bf16.mxu0 %v10460
    %10778 = vmatmul.mubr.bf16.gmra.mxu0 %v10459
    %v10779 = vpop.f32.mrf.mxu0
    %v10780 = vadd.f32 %v10518, %v10779
    %v10781 = vpop.f32.mrf.mxu0
    %v10782 = vadd.f32 %v10522, %v10781
    %v10783 = vpop.f32.mrf.mxu0
    %v10784 = vadd.f32 %v10518, %v10783
    %v10785 = vpop.f32.mrf.mxu0
    %v10786 = vadd.f32 %v10522, %v10785
    %10787 = vmatprep.mubr.bf16.mxu0 %v10462
    %10788 = vmatmul.mubr.bf16.gmra.mxu0 %v10461
    %v10789 = vpop.f32.mrf.mxu0
    %v10790 = vadd.f32 %v10518, %v10789
    %v10791 = vpop.f32.mrf.mxu0
    %v10792 = vadd.f32 %v10522, %v10791
    %v10793 = vpop.f32.mrf.mxu0
    %v10794 = vadd.f32 %v10518, %v10793
    %v10795 = vpop.f32.mrf.mxu0
    %v10796 = vadd.f32 %v10522, %v10795
    %10797 = vmatprep.mubr.bf16.mxu0 %v10464
    %10798 = vmatmul.mubr.bf16.gmra.mxu0 %v10463
    %v10799 = vpop.f32.mrf.mxu0
    %v10800 = vadd.f32 %v10518, %v10799
    %v10801 = vpop.f32.mrf.mxu0
    %v10802 = vadd.f32 %v10522, %v10801
    %v10803 = vpop.f32.mrf.mxu0
    %v10804 = vadd.f32 %v10518, %v10803
    %v10805 = vpop.f32.mrf.mxu0
    %v10806 = vadd.f32 %v10522, %v10805
    %10807 = vmatprep.mubr.bf16.mxu0 %v10466
    %10808 = vmatmul.mubr.bf16.gmra.mxu0 %v10465
    %v10809 = vpop.f32.mrf.mxu0
    %v10810 = vadd.f32 %v10518, %v10809
    %v10811 = vpop.f32.mrf.mxu0
    %v10812 = vadd.f32 %v10522, %v10811
    %v10813 = vpop.f32.mrf.mxu0
    %v10814 = vadd.f32 %v10518, %v10813
    %v10815 = vpop.f32.mrf.mxu0
    %v10816 = vadd.f32 %v10522, %v10815
    %10817 = vmatprep.mubr.bf16.mxu0 %v10468
    %10818 = vmatmul.mubr.bf16.gmra.mxu0 %v10467
    %v10819 = vpop.f32.mrf.mxu0
    %v10820 = vadd.f32 %v10518, %v10819
    %v10821 = vpop.f32.mrf.mxu0
    %v10822 = vadd.f32 %v10522, %v10821
    %v10823 = vpop.f32.mrf.mxu0
    %v10824 = vadd.f32 %v10518, %v10823
    %v10825 = vpop.f32.mrf.mxu0
    %v10826 = vadd.f32 %v10522, %v10825
    %10827 = vmatprep.mubr.bf16.mxu0 %v10470
    %10828 = vmatmul.mubr.bf16.gmra.mxu0 %v10469
    %v10829 = vpop.f32.mrf.mxu0
    %v10830 = vadd.f32 %v10518, %v10829
    %v10831 = vpop.f32.mrf.mxu0
    %v10832 = vadd.f32 %v10522, %v10831
    %v10833 = vpop.f32.mrf.mxu0
    %v10834 = vadd.f32 %v10518, %v10833
    %v10835 = vpop.f32.mrf.mxu0
    %v10836 = vadd.f32 %v10522, %v10835
    %10837 = vmatprep.mubr.bf16.mxu0 %v10472
    %10838 = vmatmul.mubr.bf16.gmra.mxu0 %v10471
    %v10839 = vpop.f32.mrf.mxu0
    %v10840 = vadd.f32 %v10518, %v10839
    %v10841 = vpop.f32.mrf.mxu0
    %v10842 = vadd.f32 %v10522, %v10841
    %v10843 = vpop.f32.mrf.mxu0
    %v10844 = vadd.f32 %v10518, %v10843
    %v10845 = vpop.f32.mrf.mxu0
    %v10846 = vadd.f32 %v10522, %v10845
    %10847 = vmatprep.mubr.bf16.mxu0 %v10474
    %10848 = vmatmul.mubr.bf16.gmra.mxu0 %v10473
    %v10849 = vpop.f32.mrf.mxu0
    %v10850 = vadd.f32 %v10518, %v10849
    %v10851 = vpop.f32.mrf.mxu0
    %v10852 = vadd.f32 %v10522, %v10851
    %v10853 = vpop.f32.mrf.mxu0
    %v10854 = vadd.f32 %v10518, %v10853
    %v10855 = vpop.f32.mrf.mxu0
    %v10856 = vadd.f32 %v10522, %v10855
    %10857 = vmatprep.mubr.bf16.mxu0 %v10476
    %10858 = vmatmul.mubr.bf16.gmra.mxu0 %v10475
    %v10859 = vpop.f32.mrf.mxu0
    %v10860 = vadd.f32 %v10518, %v10859
    %v10861 = vpop.f32.mrf.mxu0
    %v10862 = vadd.f32 %v10522, %v10861
    %v10863 = vpop.f32.mrf.mxu0
    %v10864 = vadd.f32 %v10518, %v10863
    %v10865 = vpop.f32.mrf.mxu0
    %v10866 = vadd.f32 %v10522, %v10865
    %10867 = vmatprep.mubr.bf16.mxu0 %v10478
    %10868 = vmatmul.mubr.bf16.gmra.mxu0 %v10477
    %v10869 = vpop.f32.mrf.mxu0
    %v10870 = vadd.f32 %v10518, %v10869
    %v10871 = vpop.f32.mrf.mxu0
    %v10872 = vadd.f32 %v10522, %v10871
    %v10873 = vpop.f32.mrf.mxu0
    %v10874 = vadd.f32 %v10518, %v10873
    %v10875 = vpop.f32.mrf.mxu0
    %v10876 = vadd.f32 %v10522, %v10875
    %10877 = vdwg.mxu0
    %v10878 = vmul.f32 %v10720, 0.5
    %v10879 = vmul.f32 %v10722, 0.5
    %v10880 = vmul.f32 %v10724, 0.5
    %v10881 = vmul.f32 %v10726, 0.5
    %v10882 = vmul.f32 %v10730, 0.5
    %v10883 = vmul.f32 %v10732, 0.5
    %v10884 = vmul.f32 %v10734, 0.5
    %v10885 = vmul.f32 %v10736, 0.5
    %v10886 = vmul.f32 %v10740, 0.5
    %v10887 = vmul.f32 %v10742, 0.5
    %v10888 = vmul.f32 %v10744, 0.5
    %v10889 = vmul.f32 %v10746, 0.5
    %v10890 = vmul.f32 %v10750, 0.5
    %v10891 = vmul.f32 %v10752, 0.5
    %v10892 = vmul.f32 %v10754, 0.5
    %v10893 = vmul.f32 %v10756, 0.5
    %v10894 = vmul.f32 %v10760, 0.5
    %v10895 = vmul.f32 %v10762, 0.5
    %v10896 = vmul.f32 %v10764, 0.5
    %v10897 = vmul.f32 %v10766, 0.5
    %v10898 = vmul.f32 %v10770, 0.5
    %v10899 = vmul.f32 %v10772, 0.5
    %v10900 = vmul.f32 %v10774, 0.5
    %v10901 = vmul.f32 %v10776, 0.5
    %v10902 = vmul.f32 %v10780, 0.5
    %v10903 = vmul.f32 %v10782, 0.5
    %v10904 = vmul.f32 %v10784, 0.5
    %v10905 = vmul.f32 %v10786, 0.5
    %v10906 = vmul.f32 %v10790, 0.5
    %v10907 = vmul.f32 %v10792, 0.5
    %v10908 = vmul.f32 %v10794, 0.5
    %v10909 = vmul.f32 %v10796, 0.5
    %v10910 = vmul.f32 %v10800, 0.5
    %v10911 = vmul.f32 %v10802, 0.5
    %v10912 = vmul.f32 %v10804, 0.5
    %v10913 = vmul.f32 %v10806, 0.5
    %v10914 = vmul.f32 %v10810, 0.5
    %v10915 = vmul.f32 %v10812, 0.5
    %v10916 = vmul.f32 %v10814, 0.5
    %v10917 = vmul.f32 %v10816, 0.5
    %v10918 = vmul.f32 %v10820, 0.5
    %v10919 = vmul.f32 %v10822, 0.5
    %v10920 = vmul.f32 %v10824, 0.5
    %v10921 = vmul.f32 %v10826, 0.5
    %v10922 = vmul.f32 %v10830, 0.5
    %v10923 = vmul.f32 %v10832, 0.5
    %v10924 = vmul.f32 %v10834, 0.5
    %v10925 = vmul.f32 %v10836, 0.5
    %v10926 = vmul.f32 %v10840, 0.5
    %v10927 = vmul.f32 %v10842, 0.5
    %v10928 = vmul.f32 %v10844, 0.5
    %v10929 = vmul.f32 %v10846, 0.5
    %v10930 = vmul.f32 %v10850, 0.5
    %v10931 = vmul.f32 %v10852, 0.5
    %v10932 = vmul.f32 %v10854, 0.5
    %v10933 = vmul.f32 %v10856, 0.5
    %v10934 = vmul.f32 %v10860, 0.5
    %v10935 = vmul.f32 %v10862, 0.5
    %v10936 = vmul.f32 %v10864, 0.5
    %v10937 = vmul.f32 %v10866, 0.5
    %v10938 = vmul.f32 %v10870, 0.5
    %v10939 = vmul.f32 %v10872, 0.5
    %v10940 = vmul.f32 %v10874, 0.5
    %v10941 = vmul.f32 %v10876, 0.5
    %v10942 = vtanh.pop %v10878
    %v10943 = vtanh.pop %v10879
    %v10944 = vtanh.pop %v10880
    %v10945 = vtanh.pop %v10881
    %v10946 = vtanh.pop %v10882
    %v10947 = vtanh.pop %v10883
    %v10948 = vtanh.pop %v10884
    %v10949 = vtanh.pop %v10885
    %v10950 = vtanh.pop %v10886
    %v10951 = vtanh.pop %v10887
    %v10952 = vtanh.pop %v10888
    %v10953 = vtanh.pop %v10889
    %v10954 = vtanh.pop %v10890
    %v10955 = vtanh.pop %v10891
    %v10956 = vtanh.pop %v10892
    %v10957 = vtanh.pop %v10893
    %v10958 = vtanh.pop %v10894
    %v10959 = vtanh.pop %v10895
    %v10960 = vtanh.pop %v10896
    %v10961 = vtanh.pop %v10897
    %v10962 = vtanh.pop %v10898
    %v10963 = vtanh.pop %v10899
    %v10964 = vtanh.pop %v10900
    %v10965 = vtanh.pop %v10901
    %v10966 = vtanh.pop %v10902
    %v10967 = vtanh.pop %v10903
    %v10968 = vtanh.pop %v10904
    %v10969 = vtanh.pop %v10905
    %v10970 = vtanh.pop %v10906
    %v10971 = vtanh.pop %v10907
    %v10972 = vtanh.pop %v10908
    %v10973 = vtanh.pop %v10909
    %v10974 = vtanh.pop %v10910
    %v10975 = vtanh.pop %v10911
    %v10976 = vtanh.pop %v10912
    %v10977 = vtanh.pop %v10913
    %v10978 = vtanh.pop %v10914
    %v10979 = vtanh.pop %v10915
    %v10980 = vtanh.pop %v10916
    %v10981 = vtanh.pop %v10917
    %v10982 = vtanh.pop %v10918
    %v10983 = vtanh.pop %v10919
    %v10984 = vtanh.pop %v10920
    %v10985 = vtanh.pop %v10921
    %v10986 = vtanh.pop %v10922
    %v10987 = vtanh.pop %v10923
    %v10988 = vtanh.pop %v10924
    %v10989 = vtanh.pop %v10925
    %v10990 = vtanh.pop %v10926
    %v10991 = vtanh.pop %v10927
    %v10992 = vtanh.pop %v10928
    %v10993 = vtanh.pop %v10929
    %v10994 = vtanh.pop %v10930
    %v10995 = vtanh.pop %v10931
    %v10996 = vtanh.pop %v10932
    %v10997 = vtanh.pop %v10933
    %v10998 = vtanh.pop %v10934
    %v10999 = vtanh.pop %v10935
    %v11000 = vtanh.pop %v10936
    %v11001 = vtanh.pop %v10937
    %v11002 = vtanh.pop %v10938
    %v11003 = vtanh.pop %v10939
    %v11004 = vtanh.pop %v10940
    %v11005 = vtanh.pop %v10941
    %v11006 = vmul.f32 %v10942, 0.5
    %v11007 = vmul.f32 %v10943, 0.5
    %v11008 = vmul.f32 %v10944, 0.5
    %v11009 = vmul.f32 %v10945, 0.5
    %v11010 = vmul.f32 %v10946, 0.5
    %v11011 = vmul.f32 %v10947, 0.5
    %v11012 = vmul.f32 %v10948, 0.5
    %v11013 = vmul.f32 %v10949, 0.5
    %v11014 = vmul.f32 %v10950, 0.5
    %v11015 = vmul.f32 %v10951, 0.5
    %v11016 = vmul.f32 %v10952, 0.5
    %v11017 = vmul.f32 %v10953, 0.5
    %v11018 = vmul.f32 %v10954, 0.5
    %v11019 = vmul.f32 %v10955, 0.5
    %v11020 = vmul.f32 %v10956, 0.5
    %v11021 = vmul.f32 %v10957, 0.5
    %v11022 = vmul.f32 %v10958, 0.5
    %v11023 = vmul.f32 %v10959, 0.5
    %v11024 = vmul.f32 %v10960, 0.5
    %v11025 = vmul.f32 %v10961, 0.5
    %v11026 = vmul.f32 %v10962, 0.5
    %v11027 = vmul.f32 %v10963, 0.5
    %v11028 = vmul.f32 %v10964, 0.5
    %v11029 = vmul.f32 %v10965, 0.5
    %v11030 = vmul.f32 %v10966, 0.5
    %v11031 = vmul.f32 %v10967, 0.5
    %v11032 = vmul.f32 %v10968, 0.5
    %v11033 = vmul.f32 %v10969, 0.5
    %v11034 = vmul.f32 %v10970, 0.5
    %v11035 = vmul.f32 %v10971, 0.5
    %v11036 = vmul.f32 %v10972, 0.5
    %v11037 = vmul.f32 %v10973, 0.5
    %v11038 = vmul.f32 %v10974, 0.5
    %v11039 = vmul.f32 %v10975, 0.5
    %v11040 = vmul.f32 %v10976, 0.5
    %v11041 = vmul.f32 %v10977, 0.5
    %v11042 = vmul.f32 %v10978, 0.5
    %v11043 = vmul.f32 %v10979, 0.5
    %v11044 = vmul.f32 %v10980, 0.5
    %v11045 = vmul.f32 %v10981, 0.5
    %v11046 = vmul.f32 %v10982, 0.5
    %v11047 = vmul.f32 %v10983, 0.5
    %v11048 = vmul.f32 %v10984, 0.5
    %v11049 = vmul.f32 %v10985, 0.5
    %v11050 = vmul.f32 %v10986, 0.5
    %v11051 = vmul.f32 %v10987, 0.5
    %v11052 = vmul.f32 %v10988, 0.5
    %v11053 = vmul.f32 %v10989, 0.5
    %v11054 = vmul.f32 %v10990, 0.5
    %v11055 = vmul.f32 %v10991, 0.5
    %v11056 = vmul.f32 %v10992, 0.5
    %v11057 = vmul.f32 %v10993, 0.5
    %v11058 = vmul.f32 %v10994, 0.5
    %v11059 = vmul.f32 %v10995, 0.5
    %v11060 = vmul.f32 %v10996, 0.5
    %v11061 = vmul.f32 %v10997, 0.5
    %v11062 = vmul.f32 %v10998, 0.5
    %v11063 = vmul.f32 %v10999, 0.5
    %v11064 = vmul.f32 %v11000, 0.5
    %v11065 = vmul.f32 %v11001, 0.5
    %v11066 = vmul.f32 %v11002, 0.5
    %v11067 = vmul.f32 %v11003, 0.5
    %v11068 = vmul.f32 %v11004, 0.5
    %v11069 = vmul.f32 %v11005, 0.5
    %v11070 = vadd.f32 %v11006, 0.5
    %v11071 = vadd.f32 %v11007, 0.5
    %v11072 = vadd.f32 %v11008, 0.5
    %v11073 = vadd.f32 %v11009, 0.5
    %v11074 = vadd.f32 %v11010, 0.5
    %v11075 = vadd.f32 %v11011, 0.5
    %v11076 = vadd.f32 %v11012, 0.5
    %v11077 = vadd.f32 %v11013, 0.5
    %v11078 = vadd.f32 %v11014, 0.5
    %v11079 = vadd.f32 %v11015, 0.5
    %v11080 = vadd.f32 %v11016, 0.5
    %v11081 = vadd.f32 %v11017, 0.5
    %v11082 = vadd.f32 %v11018, 0.5
    %v11083 = vadd.f32 %v11019, 0.5
    %v11084 = vadd.f32 %v11020, 0.5
    %v11085 = vadd.f32 %v11021, 0.5
    %v11086 = vadd.f32 %v11022, 0.5
    %v11087 = vadd.f32 %v11023, 0.5
    %v11088 = vadd.f32 %v11024, 0.5
    %v11089 = vadd.f32 %v11025, 0.5
    %v11090 = vadd.f32 %v11026, 0.5
    %v11091 = vadd.f32 %v11027, 0.5
    %v11092 = vadd.f32 %v11028, 0.5
    %v11093 = vadd.f32 %v11029, 0.5
    %v11094 = vadd.f32 %v11030, 0.5
    %v11095 = vadd.f32 %v11031, 0.5
    %v11096 = vadd.f32 %v11032, 0.5
    %v11097 = vadd.f32 %v11033, 0.5
    %v11098 = vadd.f32 %v11034, 0.5
    %v11099 = vadd.f32 %v11035, 0.5
    %v11100 = vadd.f32 %v11036, 0.5
    %v11101 = vadd.f32 %v11037, 0.5
    %v11102 = vadd.f32 %v11038, 0.5
    %v11103 = vadd.f32 %v11039, 0.5
    %v11104 = vadd.f32 %v11040, 0.5
    %v11105 = vadd.f32 %v11041, 0.5
    %v11106 = vadd.f32 %v11042, 0.5
    %v11107 = vadd.f32 %v11043, 0.5
    %v11108 = vadd.f32 %v11044, 0.5
    %v11109 = vadd.f32 %v11045, 0.5
    %v11110 = vadd.f32 %v11046, 0.5
    %v11111 = vadd.f32 %v11047, 0.5
    %v11112 = vadd.f32 %v11048, 0.5
    %v11113 = vadd.f32 %v11049, 0.5
    %v11114 = vadd.f32 %v11050, 0.5
    %v11115 = vadd.f32 %v11051, 0.5
    %v11116 = vadd.f32 %v11052, 0.5
    %v11117 = vadd.f32 %v11053, 0.5
    %v11118 = vadd.f32 %v11054, 0.5
    %v11119 = vadd.f32 %v11055, 0.5
    %v11120 = vadd.f32 %v11056, 0.5
    %v11121 = vadd.f32 %v11057, 0.5
    %v11122 = vadd.f32 %v11058, 0.5
    %v11123 = vadd.f32 %v11059, 0.5
    %v11124 = vadd.f32 %v11060, 0.5
    %v11125 = vadd.f32 %v11061, 0.5
    %v11126 = vadd.f32 %v11062, 0.5
    %v11127 = vadd.f32 %v11063, 0.5
    %v11128 = vadd.f32 %v11064, 0.5
    %v11129 = vadd.f32 %v11065, 0.5
    %v11130 = vadd.f32 %v11066, 0.5
    %v11131 = vadd.f32 %v11067, 0.5
    %v11132 = vadd.f32 %v11068, 0.5
    %v11133 = vadd.f32 %v11069, 0.5
    %v11134 = vmul.f32 %v10720, %v11070
    %v11135 = vmul.f32 %v10722, %v11071
    %v11136 = vmul.f32 %v10724, %v11072
    %v11137 = vmul.f32 %v10726, %v11073
    %v11138 = vmul.f32 %v10730, %v11074
    %v11139 = vmul.f32 %v10732, %v11075
    %v11140 = vmul.f32 %v10734, %v11076
    %v11141 = vmul.f32 %v10736, %v11077
    %v11142 = vmul.f32 %v10740, %v11078
    %v11143 = vmul.f32 %v10742, %v11079
    %v11144 = vmul.f32 %v10744, %v11080
    %v11145 = vmul.f32 %v10746, %v11081
    %v11146 = vmul.f32 %v10750, %v11082
    %v11147 = vmul.f32 %v10752, %v11083
    %v11148 = vmul.f32 %v10754, %v11084
    %v11149 = vmul.f32 %v10756, %v11085
    %v11150 = vmul.f32 %v10760, %v11086
    %v11151 = vmul.f32 %v10762, %v11087
    %v11152 = vmul.f32 %v10764, %v11088
    %v11153 = vmul.f32 %v10766, %v11089
    %v11154 = vmul.f32 %v10770, %v11090
    %v11155 = vmul.f32 %v10772, %v11091
    %v11156 = vmul.f32 %v10774, %v11092
    %v11157 = vmul.f32 %v10776, %v11093
    %v11158 = vmul.f32 %v10780, %v11094
    %v11159 = vmul.f32 %v10782, %v11095
    %v11160 = vmul.f32 %v10784, %v11096
    %v11161 = vmul.f32 %v10786, %v11097
    %v11162 = vmul.f32 %v10790, %v11098
    %v11163 = vmul.f32 %v10792, %v11099
    %v11164 = vmul.f32 %v10794, %v11100
    %v11165 = vmul.f32 %v10796, %v11101
    %v11166 = vmul.f32 %v10800, %v11102
    %v11167 = vmul.f32 %v10802, %v11103
    %v11168 = vmul.f32 %v10804, %v11104
    %v11169 = vmul.f32 %v10806, %v11105
    %v11170 = vmul.f32 %v10810, %v11106
    %v11171 = vmul.f32 %v10812, %v11107
    %v11172 = vmul.f32 %v10814, %v11108
    %v11173 = vmul.f32 %v10816, %v11109
    %v11174 = vmul.f32 %v10820, %v11110
    %v11175 = vmul.f32 %v10822, %v11111
    %v11176 = vmul.f32 %v10824, %v11112
    %v11177 = vmul.f32 %v10826, %v11113
    %v11178 = vmul.f32 %v10830, %v11114
    %v11179 = vmul.f32 %v10832, %v11115
    %v11180 = vmul.f32 %v10834, %v11116
    %v11181 = vmul.f32 %v10836, %v11117
    %v11182 = vmul.f32 %v10840, %v11118
    %v11183 = vmul.f32 %v10842, %v11119
    %v11184 = vmul.f32 %v10844, %v11120
    %v11185 = vmul.f32 %v10846, %v11121
    %v11186 = vmul.f32 %v10850, %v11122
    %v11187 = vmul.f32 %v10852, %v11123
    %v11188 = vmul.f32 %v10854, %v11124
    %v11189 = vmul.f32 %v10856, %v11125
    %v11190 = vmul.f32 %v10860, %v11126
    %v11191 = vmul.f32 %v10862, %v11127
    %v11192 = vmul.f32 %v10864, %v11128
    %v11193 = vmul.f32 %v10866, %v11129
    %v11194 = vmul.f32 %v10870, %v11130
    %v11195 = vmul.f32 %v10872, %v11131
    %v11196 = vmul.f32 %v10874, %v11132
    %v11197 = vmul.f32 %v10876, %v11133
    %v11198 = vpack.c.bf16 %v11136, %v11134
    %v11199 = vpack.c.bf16 %v11137, %v11135
    %v11200 = vpack.c.bf16 %v11140, %v11138
    %v11201 = vpack.c.bf16 %v11141, %v11139
    %v11202 = vpack.c.bf16 %v11144, %v11142
    %v11203 = vpack.c.bf16 %v11145, %v11143
    %v11204 = vpack.c.bf16 %v11148, %v11146
    %v11205 = vpack.c.bf16 %v11149, %v11147
    %v11206 = vpack.c.bf16 %v11152, %v11150
    %v11207 = vpack.c.bf16 %v11153, %v11151
    %v11208 = vpack.c.bf16 %v11156, %v11154
    %v11209 = vpack.c.bf16 %v11157, %v11155
    %v11210 = vpack.c.bf16 %v11160, %v11158
    %v11211 = vpack.c.bf16 %v11161, %v11159
    %v11212 = vpack.c.bf16 %v11164, %v11162
    %v11213 = vpack.c.bf16 %v11165, %v11163
    %v11214 = vpack.c.bf16 %v11168, %v11166
    %v11215 = vpack.c.bf16 %v11169, %v11167
    %v11216 = vpack.c.bf16 %v11172, %v11170
    %v11217 = vpack.c.bf16 %v11173, %v11171
    %v11218 = vpack.c.bf16 %v11176, %v11174
    %v11219 = vpack.c.bf16 %v11177, %v11175
    %v11220 = vpack.c.bf16 %v11180, %v11178
    %v11221 = vpack.c.bf16 %v11181, %v11179
    %v11222 = vpack.c.bf16 %v11184, %v11182
    %v11223 = vpack.c.bf16 %v11185, %v11183
    %v11224 = vpack.c.bf16 %v11188, %v11186
    %v11225 = vpack.c.bf16 %v11189, %v11187
    %v11226 = vpack.c.bf16 %v11192, %v11190
    %v11227 = vpack.c.bf16 %v11193, %v11191
    %v11228 = vpack.c.bf16 %v11196, %v11194
    %v11229 = vpack.c.bf16 %v11197, %v11195
    %s11230 = scalar_lea.vmem [#allocation7], 384
    %v11231 = vld [vmem:[%s11230] sm:$0xf]
    %v11232 = vld [vmem:[%s11230 + $0x4] sm:$0xf]
    %v11233 = vld [vmem:[%s11230 + $0x8] sm:$0xf]
    %v11234 = vld [vmem:[%s11230 + $0xc] sm:$0xf]
    %v11235 = vld [vmem:[%s11230 + $0x10] sm:$0xf]
    %v11236 = vld [vmem:[%s11230 + $0x14] sm:$0xf]
    %v11237 = vld [vmem:[%s11230 + $0x18] sm:$0xf]
    %v11238 = vld [vmem:[%s11230 + $0x1c] sm:$0xf]
    %v11239 = vld [vmem:[%s11230 + $0x20] sm:$0xf]
    %v11240 = vld [vmem:[%s11230 + $0x24] sm:$0xf]
    %v11241 = vld [vmem:[%s11230 + $0x28] sm:$0xf]
    %v11242 = vld [vmem:[%s11230 + $0x2c] sm:$0xf]
    %v11243 = vld [vmem:[%s11230 + $0x30] sm:$0xf]
    %v11244 = vld [vmem:[%s11230 + $0x34] sm:$0xf]
    %v11245 = vld [vmem:[%s11230 + $0x38] sm:$0xf]
    %v11246 = vld [vmem:[%s11230 + $0x3c] sm:$0xf]
    %v11247 = vld [vmem:[%s11230 + $0x40] sm:$0xf]
    %v11248 = vld [vmem:[%s11230 + $0x44] sm:$0xf]
    %v11249 = vld [vmem:[%s11230 + $0x48] sm:$0xf]
    %v11250 = vld [vmem:[%s11230 + $0x4c] sm:$0xf]
    %v11251 = vld [vmem:[%s11230 + $0x50] sm:$0xf]
    %v11252 = vld [vmem:[%s11230 + $0x54] sm:$0xf]
    %v11253 = vld [vmem:[%s11230 + $0x58] sm:$0xf]
    %v11254 = vld [vmem:[%s11230 + $0x5c] sm:$0xf]
    %v11255 = vld [vmem:[%s11230 + $0x60] sm:$0xf]
    %v11256 = vld [vmem:[%s11230 + $0x64] sm:$0xf]
    %v11257 = vld [vmem:[%s11230 + $0x68] sm:$0xf]
    %v11258 = vld [vmem:[%s11230 + $0x6c] sm:$0xf]
    %v11259 = vld [vmem:[%s11230 + $0x70] sm:$0xf]
    %v11260 = vld [vmem:[%s11230 + $0x74] sm:$0xf]
    %v11261 = vld [vmem:[%s11230 + $0x78] sm:$0xf]
    %v11262 = vld [vmem:[%s11230 + $0x7c] sm:$0xf]
    %v11263 = vld [vmem:[%s10 + $0x3] sm:$0x1]
    %v11264 = vlaneseq
    %v11265 = vshrl.u32 %v11264, 7
    %v11266 = vsub.s32 0, %v11265
    %v11267 = vrot.slane %v11263, %v11266
    %v11300 = vunpack.c.l.b16 %v11231
    %v11301 = vunpack.c.l.b16 %v11232
    %v11302 = vunpack.c.l.b16 %v11233
    %v11303 = vunpack.c.l.b16 %v11234
    %v11304 = vunpack.c.l.b16 %v11235
    %v11305 = vunpack.c.l.b16 %v11236
    %v11306 = vunpack.c.l.b16 %v11237
    %v11307 = vunpack.c.l.b16 %v11238
    %v11308 = vunpack.c.l.b16 %v11239
    %v11309 = vunpack.c.l.b16 %v11240
    %v11310 = vunpack.c.l.b16 %v11241
    %v11311 = vunpack.c.l.b16 %v11242
    %v11312 = vunpack.c.l.b16 %v11243
    %v11313 = vunpack.c.l.b16 %v11244
    %v11314 = vunpack.c.l.b16 %v11245
    %v11315 = vunpack.c.l.b16 %v11246
    %v11316 = vunpack.c.l.b16 %v11247
    %v11317 = vunpack.c.l.b16 %v11248
    %v11318 = vunpack.c.l.b16 %v11249
    %v11319 = vunpack.c.l.b16 %v11250
    %v11320 = vunpack.c.l.b16 %v11251
    %v11321 = vunpack.c.l.b16 %v11252
    %v11322 = vunpack.c.l.b16 %v11253
    %v11323 = vunpack.c.l.b16 %v11254
    %v11324 = vunpack.c.l.b16 %v11255
    %v11325 = vunpack.c.l.b16 %v11256
    %v11326 = vunpack.c.l.b16 %v11257
    %v11327 = vunpack.c.l.b16 %v11258
    %v11328 = vunpack.c.l.b16 %v11259
    %v11329 = vunpack.c.l.b16 %v11260
    %v11330 = vunpack.c.l.b16 %v11261
    %v11331 = vunpack.c.l.b16 %v11262
    %v11332 = vpack.c.b16 %v11301, %v11300
    %v11333 = vpack.c.b16 %v11303, %v11302
    %v11334 = vpack.c.b16 %v11305, %v11304
    %v11335 = vpack.c.b16 %v11307, %v11306
    %v11336 = vpack.c.b16 %v11309, %v11308
    %v11337 = vpack.c.b16 %v11311, %v11310
    %v11338 = vpack.c.b16 %v11313, %v11312
    %v11339 = vpack.c.b16 %v11315, %v11314
    %v11340 = vpack.c.b16 %v11317, %v11316
    %v11341 = vpack.c.b16 %v11319, %v11318
    %v11342 = vpack.c.b16 %v11321, %v11320
    %v11343 = vpack.c.b16 %v11323, %v11322
    %v11344 = vpack.c.b16 %v11325, %v11324
    %v11345 = vpack.c.b16 %v11327, %v11326
    %v11346 = vpack.c.b16 %v11329, %v11328
    %v11347 = vpack.c.b16 %v11331, %v11330
    %11364 = vmatprep.subr.bf16.mxu0 0
    %11365 = vmatpush1.bf16.msra.mxu0 %v11339
    %11366 = vmatprep.subr.bf16.mxu0 0
    %11367 = vmatpush1.bf16.msra.mxu0 %v11338
    %11368 = vmatprep.subr.bf16.mxu0 0
    %11369 = vmatpush1.bf16.msra.mxu0 %v11337
    %11370 = vmatprep.subr.bf16.mxu0 0
    %11371 = vmatpush1.bf16.msra.mxu0 %v11336
    %11372 = vmatprep.subr.bf16.mxu0 0
    %11373 = vmatpush1.bf16.msra.mxu0 %v11335
    %11374 = vmatprep.subr.bf16.mxu0 0
    %11375 = vmatpush1.bf16.msra.mxu0 %v11334
    %11376 = vmatprep.subr.bf16.mxu0 0
    %11377 = vmatpush1.bf16.msra.mxu0 %v11333
    %11378 = vmatprep.subr.bf16.mxu0 0
    %11379 = vmatpush1.bf16.msra.mxu0 %v11332
    %11380 = vmatprep.subr.bf16.mxu0 0
    %11381 = vmatpush2.bf16.msra.mxu0 %v11347
    %11382 = vmatprep.subr.bf16.mxu0 0
    %11383 = vmatpush2.bf16.msra.mxu0 %v11346
    %11384 = vmatprep.subr.bf16.mxu0 0
    %11385 = vmatpush2.bf16.msra.mxu0 %v11345
    %11386 = vmatprep.subr.bf16.mxu0 0
    %11387 = vmatpush2.bf16.msra.mxu0 %v11344
    %11388 = vmatprep.subr.bf16.mxu0 0
    %11389 = vmatpush2.bf16.msra.mxu0 %v11343
    %11390 = vmatprep.subr.bf16.mxu0 0
    %11391 = vmatpush2.bf16.msra.mxu0 %v11342
    %11392 = vmatprep.subr.bf16.mxu0 0
    %11393 = vmatpush2.bf16.msra.mxu0 %v11341
    %11394 = vmatprep.subr.bf16.mxu0 0
    %11395 = vmatpush2.bf16.msra.mxu0 %v11340
    %11396 = vmatprep.mubr.bf16.mxu0 %v11199
    %11397 = vmatmul.mubr.bf16.gmra.mxu0 %v11198
    %v11398 = vpop.f32.mrf.mxu0
    %v11399 = vadd.f32 %v11267, %v11398
    %v11400 = vpop.f32.mrf.mxu0
    %v11401 = vpop.f32.mrf.mxu0
    %v11402 = vadd.f32 %v11267, %v11401
    %v11403 = vpop.f32.mrf.mxu0
    %11404 = vmatprep.mubr.bf16.mxu0 %v11201
    %11405 = vmatmul.mubr.bf16.gmra.mxu0 %v11200
    %v11406 = vpop.f32.mrf.mxu0
    %v11407 = vadd.f32 %v11267, %v11406
    %v11408 = vpop.f32.mrf.mxu0
    %v11409 = vpop.f32.mrf.mxu0
    %v11410 = vadd.f32 %v11267, %v11409
    %v11411 = vpop.f32.mrf.mxu0
    %11412 = vmatprep.mubr.bf16.mxu0 %v11203
    %11413 = vmatmul.mubr.bf16.gmra.mxu0 %v11202
    %v11414 = vpop.f32.mrf.mxu0
    %v11415 = vadd.f32 %v11267, %v11414
    %v11416 = vpop.f32.mrf.mxu0
    %v11417 = vpop.f32.mrf.mxu0
    %v11418 = vadd.f32 %v11267, %v11417
    %v11419 = vpop.f32.mrf.mxu0
    %11420 = vmatprep.mubr.bf16.mxu0 %v11205
    %11421 = vmatmul.mubr.bf16.gmra.mxu0 %v11204
    %v11422 = vpop.f32.mrf.mxu0
    %v11423 = vadd.f32 %v11267, %v11422
    %v11424 = vpop.f32.mrf.mxu0
    %v11425 = vpop.f32.mrf.mxu0
    %v11426 = vadd.f32 %v11267, %v11425
    %v11427 = vpop.f32.mrf.mxu0
    %11428 = vmatprep.mubr.bf16.mxu0 %v11207
    %11429 = vmatmul.mubr.bf16.gmra.mxu0 %v11206
    %v11430 = vpop.f32.mrf.mxu0
    %v11431 = vadd.f32 %v11267, %v11430
    %v11432 = vpop.f32.mrf.mxu0
    %v11433 = vpop.f32.mrf.mxu0
    %v11434 = vadd.f32 %v11267, %v11433
    %v11435 = vpop.f32.mrf.mxu0
    %11436 = vmatprep.mubr.bf16.mxu0 %v11209
    %11437 = vmatmul.mubr.bf16.gmra.mxu0 %v11208
    %v11438 = vpop.f32.mrf.mxu0
    %v11439 = vadd.f32 %v11267, %v11438
    %v11440 = vpop.f32.mrf.mxu0
    %v11441 = vpop.f32.mrf.mxu0
    %v11442 = vadd.f32 %v11267, %v11441
    %v11443 = vpop.f32.mrf.mxu0
    %11444 = vmatprep.mubr.bf16.mxu0 %v11211
    %11445 = vmatmul.mubr.bf16.gmra.mxu0 %v11210
    %v11446 = vpop.f32.mrf.mxu0
    %v11447 = vadd.f32 %v11267, %v11446
    %v11448 = vpop.f32.mrf.mxu0
    %v11449 = vpop.f32.mrf.mxu0
    %v11450 = vadd.f32 %v11267, %v11449
    %v11451 = vpop.f32.mrf.mxu0
    %11452 = vmatprep.mubr.bf16.mxu0 %v11213
    %11453 = vmatmul.mubr.bf16.gmra.mxu0 %v11212
    %v11454 = vpop.f32.mrf.mxu0
    %v11455 = vadd.f32 %v11267, %v11454
    %v11456 = vpop.f32.mrf.mxu0
    %v11457 = vpop.f32.mrf.mxu0
    %v11458 = vadd.f32 %v11267, %v11457
    %v11459 = vpop.f32.mrf.mxu0
    %11460 = vmatprep.mubr.bf16.mxu0 %v11215
    %11461 = vmatmul.mubr.bf16.gmra.mxu0 %v11214
    %v11462 = vpop.f32.mrf.mxu0
    %v11463 = vadd.f32 %v11267, %v11462
    %v11464 = vpop.f32.mrf.mxu0
    %v11465 = vpop.f32.mrf.mxu0
    %v11466 = vadd.f32 %v11267, %v11465
    %v11467 = vpop.f32.mrf.mxu0
    %11468 = vmatprep.mubr.bf16.mxu0 %v11217
    %11469 = vmatmul.mubr.bf16.gmra.mxu0 %v11216
    %v11470 = vpop.f32.mrf.mxu0
    %v11471 = vadd.f32 %v11267, %v11470
    %v11472 = vpop.f32.mrf.mxu0
    %v11473 = vpop.f32.mrf.mxu0
    %v11474 = vadd.f32 %v11267, %v11473
    %v11475 = vpop.f32.mrf.mxu0
    %11476 = vmatprep.mubr.bf16.mxu0 %v11219
    %11477 = vmatmul.mubr.bf16.gmra.mxu0 %v11218
    %v11478 = vpop.f32.mrf.mxu0
    %v11479 = vadd.f32 %v11267, %v11478
    %v11480 = vpop.f32.mrf.mxu0
    %v11481 = vpop.f32.mrf.mxu0
    %v11482 = vadd.f32 %v11267, %v11481
    %v11483 = vpop.f32.mrf.mxu0
    %11484 = vmatprep.mubr.bf16.mxu0 %v11221
    %11485 = vmatmul.mubr.bf16.gmra.mxu0 %v11220
    %v11486 = vpop.f32.mrf.mxu0
    %v11487 = vadd.f32 %v11267, %v11486
    %v11488 = vpop.f32.mrf.mxu0
    %v11489 = vpop.f32.mrf.mxu0
    %v11490 = vadd.f32 %v11267, %v11489
    %v11491 = vpop.f32.mrf.mxu0
    %11492 = vmatprep.mubr.bf16.mxu0 %v11223
    %11493 = vmatmul.mubr.bf16.gmra.mxu0 %v11222
    %v11494 = vpop.f32.mrf.mxu0
    %v11495 = vadd.f32 %v11267, %v11494
    %v11496 = vpop.f32.mrf.mxu0
    %v11497 = vpop.f32.mrf.mxu0
    %v11498 = vadd.f32 %v11267, %v11497
    %v11499 = vpop.f32.mrf.mxu0
    %11500 = vmatprep.mubr.bf16.mxu0 %v11225
    %11501 = vmatmul.mubr.bf16.gmra.mxu0 %v11224
    %v11502 = vpop.f32.mrf.mxu0
    %v11503 = vadd.f32 %v11267, %v11502
    %v11504 = vpop.f32.mrf.mxu0
    %v11505 = vpop.f32.mrf.mxu0
    %v11506 = vadd.f32 %v11267, %v11505
    %v11507 = vpop.f32.mrf.mxu0
    %11508 = vmatprep.mubr.bf16.mxu0 %v11227
    %11509 = vmatmul.mubr.bf16.gmra.mxu0 %v11226
    %v11510 = vpop.f32.mrf.mxu0
    %v11511 = vadd.f32 %v11267, %v11510
    %v11512 = vpop.f32.mrf.mxu0
    %v11513 = vpop.f32.mrf.mxu0
    %v11514 = vadd.f32 %v11267, %v11513
    %v11515 = vpop.f32.mrf.mxu0
    %11516 = vmatprep.mubr.bf16.mxu0 %v11229
    %11517 = vmatmul.mubr.bf16.gmra.mxu0 %v11228
    %v11518 = vpop.f32.mrf.mxu0
    %v11519 = vadd.f32 %v11267, %v11518
    %v11520 = vpop.f32.mrf.mxu0
    %v11521 = vpop.f32.mrf.mxu0
    %v11522 = vadd.f32 %v11267, %v11521
    %v11523 = vpop.f32.mrf.mxu0
    %11524 = vdwg.mxu0
    %v11525 = vadd.f32 %v9030, %v11399
    %v11526 = vadd.f32 %v9031, %v11402
    %v11527 = vadd.f32 %v9032, %v11407
    %v11528 = vadd.f32 %v9033, %v11410
    %v11529 = vadd.f32 %v9034, %v11415
    %v11530 = vadd.f32 %v9035, %v11418
    %v11531 = vadd.f32 %v9036, %v11423
    %v11532 = vadd.f32 %v9037, %v11426
    %v11533 = vadd.f32 %v9038, %v11431
    %v11534 = vadd.f32 %v9039, %v11434
    %v11535 = vadd.f32 %v9040, %v11439
    %v11536 = vadd.f32 %v9041, %v11442
    %v11537 = vadd.f32 %v9042, %v11447
    %v11538 = vadd.f32 %v9043, %v11450
    %v11539 = vadd.f32 %v9044, %v11455
    %v11540 = vadd.f32 %v9045, %v11458
    %v11541 = vadd.f32 %v9046, %v11463
    %v11542 = vadd.f32 %v9047, %v11466
    %v11543 = vadd.f32 %v9048, %v11471
    %v11544 = vadd.f32 %v9049, %v11474
    %v11545 = vadd.f32 %v9050, %v11479
    %v11546 = vadd.f32 %v9051, %v11482
    %v11547 = vadd.f32 %v9052, %v11487
    %v11548 = vadd.f32 %v9053, %v11490
    %v11549 = vadd.f32 %v9054, %v11495
    %v11550 = vadd.f32 %v9055, %v11498
    %v11551 = vadd.f32 %v9056, %v11503
    %v11552 = vadd.f32 %v9057, %v11506
    %v11553 = vadd.f32 %v9058, %v11511
    %v11554 = vadd.f32 %v9059, %v11514
    %v11555 = vadd.f32 %v9060, %v11519
    %v11556 = vadd.f32 %v9061, %v11522
    %v11557 = vpack.c.bf16 %v11526, %v11525
    %v11558 = vpack.c.bf16 %v11528, %v11527
    %v11559 = vpack.c.bf16 %v11530, %v11529
    %v11560 = vpack.c.bf16 %v11532, %v11531
    %v11561 = vpack.c.bf16 %v11534, %v11533
    %v11562 = vpack.c.bf16 %v11536, %v11535
    %v11563 = vpack.c.bf16 %v11538, %v11537
    %v11564 = vpack.c.bf16 %v11540, %v11539
    %v11565 = vpack.c.bf16 %v11542, %v11541
    %v11566 = vpack.c.bf16 %v11544, %v11543
    %v11567 = vpack.c.bf16 %v11546, %v11545
    %v11568 = vpack.c.bf16 %v11548, %v11547
    %v11569 = vpack.c.bf16 %v11550, %v11549
    %v11570 = vpack.c.bf16 %v11552, %v11551
    %v11571 = vpack.c.bf16 %v11554, %v11553
    %v11572 = vpack.c.bf16 %v11556, %v11555
    %v11589 = vunpack.c.l.b16 %v11557
    %v11590 = vunpack.c.h.b16 %v11557
    %v11591 = vunpack.c.l.b16 %v11558
    %v11592 = vunpack.c.h.b16 %v11558
    %v11593 = vunpack.c.l.b16 %v11559
    %v11594 = vunpack.c.h.b16 %v11559
    %v11595 = vunpack.c.l.b16 %v11560
    %v11596 = vunpack.c.h.b16 %v11560
    %v11597 = vunpack.c.l.b16 %v11561
    %v11598 = vunpack.c.h.b16 %v11561
    %v11599 = vunpack.c.l.b16 %v11562
    %v11600 = vunpack.c.h.b16 %v11562
    %v11601 = vunpack.c.l.b16 %v11563
    %v11602 = vunpack.c.h.b16 %v11563
    %v11603 = vunpack.c.l.b16 %v11564
    %v11604 = vunpack.c.h.b16 %v11564
    %v11605 = vunpack.c.l.b16 %v11565
    %v11606 = vunpack.c.h.b16 %v11565
    %v11607 = vunpack.c.l.b16 %v11566
    %v11608 = vunpack.c.h.b16 %v11566
    %v11609 = vunpack.c.l.b16 %v11567
    %v11610 = vunpack.c.h.b16 %v11567
    %v11611 = vunpack.c.l.b16 %v11568
    %v11612 = vunpack.c.h.b16 %v11568
    %v11613 = vunpack.c.l.b16 %v11569
    %v11614 = vunpack.c.h.b16 %v11569
    %v11615 = vunpack.c.l.b16 %v11570
    %v11616 = vunpack.c.h.b16 %v11570
    %v11617 = vunpack.c.l.b16 %v11571
    %v11618 = vunpack.c.h.b16 %v11571
    %v11619 = vunpack.c.l.b16 %v11572
    %v11620 = vunpack.c.h.b16 %v11572
    %v11621 = vpack.c.b16 %v11589, %v11589
    %v11622 = vpack.c.b16 %v11590, %v11590
    %v11623 = vpack.c.b16 %v11591, %v11591
    %v11624 = vpack.c.b16 %v11592, %v11592
    %v11625 = vpack.c.b16 %v11593, %v11593
    %v11626 = vpack.c.b16 %v11594, %v11594
    %v11627 = vpack.c.b16 %v11595, %v11595
    %v11628 = vpack.c.b16 %v11596, %v11596
    %v11629 = vpack.c.b16 %v11597, %v11597
    %v11630 = vpack.c.b16 %v11598, %v11598
    %v11631 = vpack.c.b16 %v11599, %v11599
    %v11632 = vpack.c.b16 %v11600, %v11600
    %v11633 = vpack.c.b16 %v11601, %v11601
    %v11634 = vpack.c.b16 %v11602, %v11602
    %v11635 = vpack.c.b16 %v11603, %v11603
    %v11636 = vpack.c.b16 %v11604, %v11604
    %v11637 = vpack.c.b16 %v11605, %v11605
    %v11638 = vpack.c.b16 %v11606, %v11606
    %v11639 = vpack.c.b16 %v11607, %v11607
    %v11640 = vpack.c.b16 %v11608, %v11608
    %v11641 = vpack.c.b16 %v11609, %v11609
    %v11642 = vpack.c.b16 %v11610, %v11610
    %v11643 = vpack.c.b16 %v11611, %v11611
    %v11644 = vpack.c.b16 %v11612, %v11612
    %v11645 = vpack.c.b16 %v11613, %v11613
    %v11646 = vpack.c.b16 %v11614, %v11614
    %v11647 = vpack.c.b16 %v11615, %v11615
    %v11648 = vpack.c.b16 %v11616, %v11616
    %v11649 = vpack.c.b16 %v11617, %v11617
    %v11650 = vpack.c.b16 %v11618, %v11618
    %v11651 = vpack.c.b16 %v11619, %v11619
    %v11652 = vpack.c.b16 %v11620, %v11620
    %11685 = vst [vmem:[#allocation8] sm:$0xf] %v11621
    %11686 = vst [vmem:[#allocation8 + $0x4] sm:$0xf] %v11622
    %11687 = vst [vmem:[#allocation8 + $0x8] sm:$0xf] %v11623
    %11688 = vst [vmem:[#allocation8 + $0xc] sm:$0xf] %v11624
    %11689 = vst [vmem:[#allocation8 + $0x10] sm:$0xf] %v11625
    %11690 = vst [vmem:[#allocation8 + $0x14] sm:$0xf] %v11626
    %11691 = vst [vmem:[#allocation8 + $0x18] sm:$0xf] %v11627
    %11692 = vst [vmem:[#allocation8 + $0x1c] sm:$0xf] %v11628
    %11693 = vst [vmem:[#allocation8 + $0x20] sm:$0xf] %v11629
    %11694 = vst [vmem:[#allocation8 + $0x24] sm:$0xf] %v11630
    %11695 = vst [vmem:[#allocation8 + $0x28] sm:$0xf] %v11631
    %11696 = vst [vmem:[#allocation8 + $0x2c] sm:$0xf] %v11632
    %11697 = vst [vmem:[#allocation8 + $0x30] sm:$0xf] %v11633
    %11698 = vst [vmem:[#allocation8 + $0x34] sm:$0xf] %v11634
    %11699 = vst [vmem:[#allocation8 + $0x38] sm:$0xf] %v11635
    %11700 = vst [vmem:[#allocation8 + $0x3c] sm:$0xf] %v11636
    %11701 = vst [vmem:[#allocation8 + $0x40] sm:$0xf] %v11637
    %11702 = vst [vmem:[#allocation8 + $0x44] sm:$0xf] %v11638
    %11703 = vst [vmem:[#allocation8 + $0x48] sm:$0xf] %v11639
    %11704 = vst [vmem:[#allocation8 + $0x4c] sm:$0xf] %v11640
    %11705 = vst [vmem:[#allocation8 + $0x50] sm:$0xf] %v11641
    %11706 = vst [vmem:[#allocation8 + $0x54] sm:$0xf] %v11642
    %11707 = vst [vmem:[#allocation8 + $0x58] sm:$0xf] %v11643
    %11708 = vst [vmem:[#allocation8 + $0x5c] sm:$0xf] %v11644
    %11709 = vst [vmem:[#allocation8 + $0x60] sm:$0xf] %v11645
    %11710 = vst [vmem:[#allocation8 + $0x64] sm:$0xf] %v11646
    %11711 = vst [vmem:[#allocation8 + $0x68] sm:$0xf] %v11647
    %11712 = vst [vmem:[#allocation8 + $0x6c] sm:$0xf] %v11648
    %11713 = vst [vmem:[#allocation8 + $0x70] sm:$0xf] %v11649
    %11714 = vst [vmem:[#allocation8 + $0x74] sm:$0xf] %v11650
    %11715 = vst [vmem:[#allocation8 + $0x78] sm:$0xf] %v11651
    %11716 = vst [vmem:[#allocation8 + $0x7c] sm:$0xf] %v11652
    // Predicated region
    $region66: #{tpu_custom_call.1} parent=1 // pred_check
      _
    $region67: #{tpu_custom_call.1} parent=1 // pred_check_branch
      %11718 = sbr.rel (0) target = $region69
    $region68: #{tpu_custom_call.1} parent=1 // pred_region
      %s11720 = ssub.s32 2048, 2048
      %11721 = vsyncadd [#allocation4], %s11720
      %s11722 = sshll.u32 [#allocation8], 4
      %s11723 = int_to_ptr.vmem [resolvable:$true] %s11722
      %11728 = dma.vmem_to_hbm [thread:$0]  %s11723, 2048, %s13, [#allocation4], 64, 64, 4
    $region69: #{tpu_custom_call.1} parent=1 // pred_fallthru
      _
    // Predicated region
    $region70: #{tpu_custom_call.1} parent=1 // pred_check
      _
    $region71: #{tpu_custom_call.1} parent=1 // pred_check_branch
      %11730 = sbr.rel (0) target = $region73
    $region72: #{tpu_custom_call.1} parent=1 // pred_region
      %11731 = dma.done [#allocation4], 2048
    $region73: #{tpu_custom_call.1} parent=1 // pred_fallthru
      _
    %11732 = vsyncpa [#allocation3], 1
    %11733 = vsyncpa [#allocation6], 1
    %11734 = vsyncpa [#allocation4], 1

</llo_original>
